<compile_context>
chip_gen: v6e
topology: v6e:2x2x1
jax: 0.10.0
libtpu: 0.0.40
codegen_flags: <defaults>
</compile_context>

<pallas_src>
import functools

import jax
import jax.numpy as jnp
from jax.experimental import pallas as pl
from jax.experimental.pallas import tpu as pltpu


def _round_up(x, m):
    return (x + m - 1) // m * m


_COMPILER_PARAMS = pltpu.CompilerParams(
    dimension_semantics=("parallel",),
    vmem_limit_bytes=32 * 1024 * 1024,   # safe on v5e/v6e/v7x (v7x phys VMEM = 64 MiB)
)


# ----------------------------------------------------------------------------
# Kernel A: fused conv1 -> conv2 -> conv3 (one image per grid step)
# ----------------------------------------------------------------------------
# Layout used inside the kernel:
#   p1  : (104,144) bf16  conv1 "super-conv" patches (rows 100..103 are zero pad)
#   a1  : (104,128)       conv1 output; row = 2x2-block index p*10+q,
#                         channel = (r2,c2,ch) intra-block position x 32 ch
#   a2  : (92,64)         conv2 output on a 10-wide row grid (col 9 = garbage)
#   a3  : (70,64)         conv3 output on a 10-wide row grid (cols 7..9 garbage)
#   out : (49,64)         valid 7x7x64 features, row = oh3*7+ow3
def _conv_stack_kernel(p1_ref, w1_ref, b1_ref, w2_ref, b2_ref, w3_ref, b3_ref,
                       o_ref):
    # ---- conv1 (8x8 stride 4), expressed as one matmul on s2d patches -------
    a1 = jnp.dot(p1_ref[0], w1_ref[...], preferred_element_type=jnp.float32)
    a1 = jnp.maximum(a1 + b1_ref[...], 0.0).astype(jnp.bfloat16)       # (104,128)

    # ---- conv2 (4x4 stride 2) == 2x2-tap stride-1 conv on the block grid ----
    acc2 = None
    for di in range(2):
        for dj in range(2):
            t = di * 2 + dj
            off = di * 10 + dj
            part = jnp.dot(a1[off:off + 92, :], w2_ref[t],
                           preferred_element_type=jnp.float32)
            acc2 = part if acc2 is None else acc2 + part
    a2 = jnp.maximum(acc2 + b2_ref[...], 0.0).astype(jnp.bfloat16)     # (92,64)

    # ---- conv3 (3x3 stride 1), per-tap accumulation -------------------------
    acc3 = None
    for ki in range(3):
        for kj in range(3):
            t = ki * 3 + kj
            off = ki * 10 + kj
            part = jnp.dot(a2[off:off + 70, :], w3_ref[t],
                           preferred_element_type=jnp.float32)
            acc3 = part if acc3 is None else acc3 + part
    a3 = jnp.maximum(acc3 + b3_ref[...], 0.0).astype(o_ref.dtype)      # (70,64)

    # ---- drop the garbage columns: write the valid 7x7 rows ------------------
    for i in range(7):
        o_ref[0, 7 * i:7 * i + 7, :] = a3[10 * i:10 * i + 7, :]


def conv_stack(p1, w1, b1, w2, b2, w3, b3):
    """p1: (B,104,144) bf16 -> (B,49,64) bf16 valid conv3 features."""
    B = p1.shape[0]
    return pl.pallas_call(
        _conv_stack_kernel,
        out_shape=jax.ShapeDtypeStruct((B, 49, 64), jnp.bfloat16),
        grid_spec=pltpu.PrefetchScalarGridSpec(
            num_scalar_prefetch=0,
            grid=(B,),                                         # >=2 parallel steps at B>=2
            in_specs=[
                pl.BlockSpec((1, 104, 144), lambda b: (b, 0, 0)),   # per-image patches
                pl.BlockSpec((144, 128), lambda b: (0, 0)),         # conv1 weight (resident)
                pl.BlockSpec((1, 128), lambda b: (0, 0)),           # conv1 bias (s2d order)
                pl.BlockSpec((4, 128, 64), lambda b: (0, 0, 0)),    # conv2 per-tap weights
                pl.BlockSpec((1, 64), lambda b: (0, 0)),            # conv2 bias
                pl.BlockSpec((9, 64, 64), lambda b: (0, 0, 0)),     # conv3 per-tap weights
                pl.BlockSpec((1, 64), lambda b: (0, 0)),            # conv3 bias
            ],
            out_specs=pl.BlockSpec((1, 49, 64), lambda b: (b, 0, 0)),
        ),
        compiler_params=_COMPILER_PARAMS,
    )(p1, w1, b1, w2, b2, w3, b3)


# ----------------------------------------------------------------------------
# Kernel B: fused fc1(+ReLU)+fc2 over batch tiles
# ----------------------------------------------------------------------------
def _fc_kernel(x_ref, w1_ref, b1_ref, w2_ref, b2_ref, o_ref):
    h = jnp.dot(x_ref[...], w1_ref[...], preferred_element_type=jnp.float32)
    h = jnp.maximum(h + b1_ref[...], 0.0).astype(w2_ref.dtype)   # fc1 + ReLU (f32 epilogue)
    out = jnp.dot(h, w2_ref[...], preferred_element_type=jnp.float32)
    o_ref[...] = (out + b2_ref[...]).astype(o_ref.dtype)         # lane-dense (128-wide)


def fused_fc(x, w1, b1, w2, b2, *, max_bm=128):
    """relu(x@w1+b1)@w2+b2 in one kernel.  x:(B,K) bf16 -> (B, w2.shape[1]) f32.

    max_bm=128 matches the v5e MXU / single-vst-slot guidance; it is also fine
    on v6e/v7x (raise to 256 there if the bundle shows MXU headroom).
    No M padding: the last grid block may be ragged (Pallas masks OOB writes
    and the garbage rows feed no cross-row reduction).
    """
    m, k = x.shape
    hdim = w1.shape[1]
    n_pad = w2.shape[1]
    bm = m if m <= max_bm else max_bm
    steps = pl.cdiv(m, bm)
    return pl.pallas_call(
        _fc_kernel,
        out_shape=jax.ShapeDtypeStruct((m, n_pad), jnp.float32),
        grid_spec=pltpu.PrefetchScalarGridSpec(
            num_scalar_prefetch=0,
            grid=(steps,),
            in_specs=[
                pl.BlockSpec((bm, k), lambda i: (i, 0)),       # activation tile
                pl.BlockSpec((k, hdim), lambda i: (0, 0)),     # fc1 weight (resident)
                pl.BlockSpec((1, hdim), lambda i: (0, 0)),
                pl.BlockSpec((hdim, n_pad), lambda i: (0, 0)), # fc2 weight (resident)
                pl.BlockSpec((1, n_pad), lambda i: (0, 0)),
            ],
            out_specs=pl.BlockSpec((bm, n_pad), lambda i: (i, 0)),
        ),
        compiler_params=_COMPILER_PARAMS,
    )(x, w1, b1, w2, b2)


# ----------------------------------------------------------------------------
# Wrapper-side layout plumbing (cheap; no compute, no patch-matrix blowup)
# ----------------------------------------------------------------------------
def conv1_patches(x_nchw, dtype=jnp.bfloat16):
    """(B,1,84,84) -> (B,104,144) bf16 patches for the in-kernel conv stack.

    Space-to-depth by 4 then a 3x3/stride-2 im2col (9 slices): each patch row
    holds the 12x12 receptive field of a 2x2 block of conv1 output pixels.
    Rows 100..103 are zero halo padding used by conv2's tap slices.
    """
    B = x_nchw.shape[0]
    xs = x_nchw.reshape(B, 21, 4, 21, 4).transpose(0, 1, 3, 2, 4)
    xs = xs.reshape(B, 21, 21, 16).astype(dtype)          # xs[b,I,J,4r+c] = x[b,4I+r,4J+c]
    slabs = []
    for a in range(3):
        for bb in range(3):
            slabs.append(xs[:, a:a + 19:2, bb:bb + 19:2, :])       # (B,10,10,16)
    p1 = jnp.stack(slabs, axis=3).reshape(B, 100, 144)
    return jnp.pad(p1, ((0, 0), (0, 4), (0, 0)))                    # (B,104,144)


# ----------------------------------------------------------------------------
# Parameters
# ----------------------------------------------------------------------------
def init_params(key, action_size):
    """PyTorch-layout f32 parameters (like an exported state dict)."""
    ks = jax.random.split(key, 10)

    def winit(k, shape, fan_in):
        return jax.random.normal(k, shape, jnp.float32) / jnp.sqrt(float(fan_in))

    return {
        "conv1_w": winit(ks[0], (32, 1, 8, 8), 1 * 8 * 8),
        "conv1_b": winit(ks[1], (32,), 1 * 8 * 8),
        "conv2_w": winit(ks[2], (64, 32, 4, 4), 32 * 4 * 4),
        "conv2_b": winit(ks[3], (64,), 32 * 4 * 4),
        "conv3_w": winit(ks[4], (64, 64, 3, 3), 64 * 3 * 3),
        "conv3_b": winit(ks[5], (64,), 64 * 3 * 3),
        "fc1_w": winit(ks[6], (512, 3136), 3136),    # PyTorch (out, in)
        "fc1_b": winit(ks[7], (512,), 3136),
        "fc2_w": winit(ks[8], (action_size, 512), 512),
        "fc2_b": winit(ks[9], (action_size,), 512),
    }


def prepare_params(raw, *, compute_dtype=jnp.bfloat16, lane=128):
    """One-time relayout of PyTorch-style params into kernel-friendly layouts."""
    # conv1: (32,1,8,8) -> (144,128) "super-conv" matrix acting on s2d patches.
    # feature f = (a*3+bb)*16 + 4r+c, output o = (r2*2+c2)*32 + ch.
    w1 = raw["conv1_w"]
    w1_mat = jnp.zeros((3, 3, 4, 4, 2, 2, 32), jnp.float32)       # (a,bb,r,c,r2,c2,ch)
    for r2 in range(2):
        for c2 in range(2):
            for di in range(2):
                for dj in range(2):
                    blk = jnp.transpose(
                        w1[:, 0, 4 * di:4 * di + 4, 4 * dj:4 * dj + 4], (1, 2, 0))
                    w1_mat = w1_mat.at[r2 + di, c2 + dj, :, :, r2, c2, :].set(blk)
    w1_mat = w1_mat.reshape(144, 128).astype(compute_dtype)
    b1_s2d = jnp.tile(raw["conv1_b"], 4).reshape(1, 128).astype(jnp.float32)

    # conv2: (64,32,4,4) -> (4,128,64) per-tap matrices on the s2d channel order.
    w2 = jnp.transpose(raw["conv2_w"], (2, 3, 1, 0))              # (ki,kj,ch,oc)
    w2 = w2.reshape(2, 2, 2, 2, 32, 64)                           # (di,r2,dj,c2,ch,oc)
    w2 = jnp.transpose(w2, (0, 2, 1, 3, 4, 5)).reshape(4, 128, 64)
    w2_mat = w2.astype(compute_dtype)

    # conv3: (64,64,3,3) -> (9,64,64) per-tap matrices.
    w3_mat = jnp.transpose(raw["conv3_w"], (2, 3, 1, 0)).reshape(9, 64, 64)
    w3_mat = w3_mat.astype(compute_dtype)

    # fc1: rows permuted so the kernel's (oh3, ow3, ch) flatten feeds it directly
    # (PyTorch flattens NCHW, i.e. (ch, oh3, ow3)).
    fc1 = raw["fc1_w"].reshape(512, 64, 7, 7)                     # (h, ch, oh3, ow3)
    fc1 = jnp.transpose(fc1, (2, 3, 1, 0)).reshape(3136, 512)     # ((oh3,ow3,ch), h)
    fc1_w = fc1.astype(compute_dtype)

    # fc2: transpose + zero-pad the action dim to 128 lanes (lane-dense store).
    a = raw["fc2_w"].shape[0]
    a_pad = _round_up(a, lane)
    fc2_w = jnp.pad(jnp.transpose(raw["fc2_w"], (1, 0)), ((0, 0), (0, a_pad - a)))
    fc2_b = jnp.pad(raw["fc2_b"], (0, a_pad - a)).reshape(1, a_pad)

    return {
        "conv1_w": w1_mat, "conv1_b": b1_s2d,
        "conv2_w": w2_mat, "conv2_b": raw["conv2_b"].reshape(1, 64).astype(jnp.float32),
        "conv3_w": w3_mat, "conv3_b": raw["conv3_b"].reshape(1, 64).astype(jnp.float32),
        "fc1_w": fc1_w, "fc1_b": raw["fc1_b"].reshape(1, 512).astype(jnp.float32),
        "fc2_w": fc2_w.astype(compute_dtype), "fc2_b": fc2_b.astype(jnp.float32),
    }


# ----------------------------------------------------------------------------
# DQN forward
# ----------------------------------------------------------------------------
def dqn_forward(params, x_nchw, *, action_size):
    """x_nchw: (B, 1, 84, 84) f32 -> (B, action_size) f32."""
    B = x_nchw.shape[0]
    p1 = conv1_patches(x_nchw)                                    # (B,104,144) bf16
    feats = conv_stack(p1,
                       params["conv1_w"], params["conv1_b"],
                       params["conv2_w"], params["conv2_b"],
                       params["conv3_w"], params["conv3_b"])      # (B,49,64) bf16
    feats = feats.reshape(B, 3136)                                # free (row-major)
    q = fused_fc(feats, params["fc1_w"], params["fc1_b"],
                 params["fc2_w"], params["fc2_b"])                # (B,128) f32
    return q[:, :action_size]


# ----------------------------------------------------------------------------
# Pure-JAX reference (f32, for correctness check only)
# ----------------------------------------------------------------------------
def dqn_reference(raw, x):
    def conv(y, w, b, stride):
        y = jax.lax.conv_general_dilated(
            y, w, (stride, stride), "VALID",
            dimension_numbers=("NCHW", "OIHW", "NCHW"))
        return jax.nn.relu(y + b.reshape(1, -1, 1, 1))

    y = conv(x, raw["conv1_w"], raw["conv1_b"], 4)
    y = conv(y, raw["conv2_w"], raw["conv2_b"], 2)
    y = conv(y, raw["conv3_w"], raw["conv3_b"], 1)
    y = y.reshape(x.shape[0], -1)
    y = jax.nn.relu(y @ raw["fc1_w"].T + raw["fc1_b"])
    return y @ raw["fc2_w"].T + raw["fc2_b"]


if __name__ == "__main__":
    action_size = 6
    key = jax.random.PRNGKey(0)
    kp, kx = jax.random.split(key)

    raw_params = init_params(kp, action_size)
    params = prepare_params(raw_params)      # one-time relayout, outside the hot path

    # conv1 expects 84x84 input so that fc1 sees exactly 3136 features.
    x = jax.random.normal(kx, (2, 1, 84, 84), jnp.float32)

    fwd = jax.jit(functools.partial(dqn_forward, action_size=action_size))
    out = fwd(params, x)
    jax.block_until_ready(out)

    assert out.shape == (2, action_size), out.shape
    assert out.dtype == jnp.float32

    # Loose check vs the f32 reference (kernel uses bf16 weights/activations
    # with f32 accumulation, so tolerate ~percent-level rounding).
    ref = dqn_reference(raw_params, x)
    err = float(jnp.max(jnp.abs(out - ref)))
    scale = float(jnp.max(jnp.abs(ref)))
    assert err <= 0.05 * scale + 0.05, f"mismatch: max_err={err}, ref_scale={scale}"

    print("KERNEL_OK")
</pallas_src>

<mosaic_0001>
module attributes {stable_mosaic.version = 11 : i64} {
  func.func @_conv_stack_kernel(%arg0: i32, %arg1: memref<1x104x144xbf16, #tpu.memory_space<vmem>>, %arg2: memref<144x128xbf16, #tpu.memory_space<vmem>>, %arg3: memref<1x128xf32, #tpu.memory_space<vmem>>, %arg4: memref<4x128x64xbf16, #tpu.memory_space<vmem>>, %arg5: memref<1x64xf32, #tpu.memory_space<vmem>>, %arg6: memref<9x64x64xbf16, #tpu.memory_space<vmem>>, %arg7: memref<1x64xf32, #tpu.memory_space<vmem>>, %arg8: memref<1x49x64xbf16, #tpu.memory_space<vmem>>) attributes {dimension_semantics = [#tpu.dimension_semantics<parallel>], iteration_bounds = array<i64: 2>, scalar_prefetch = 0 : i64, scratch_operands = 0 : i64, tpu.core_type = #tpu.core_type<tc>, window_params = [{transform_indices = @transform_0, window_bounds = array<i64: 1, 104, 144>}, {pipeline_mode = #tpu.pipeline_mode<synchronous>, transform_indices = @transform_1, window_bounds = array<i64: 144, 128>}, {pipeline_mode = #tpu.pipeline_mode<synchronous>, transform_indices = @transform_2, window_bounds = array<i64: 1, 128>}, {pipeline_mode = #tpu.pipeline_mode<synchronous>, transform_indices = @transform_3, window_bounds = array<i64: 4, 128, 64>}, {pipeline_mode = #tpu.pipeline_mode<synchronous>, transform_indices = @transform_4, window_bounds = array<i64: 1, 64>}, {pipeline_mode = #tpu.pipeline_mode<synchronous>, transform_indices = @transform_5, window_bounds = array<i64: 9, 64, 64>}, {pipeline_mode = #tpu.pipeline_mode<synchronous>, transform_indices = @transform_6, window_bounds = array<i64: 1, 64>}, {transform_indices = @transform_7, window_bounds = array<i64: 1, 49, 64>}]} {
    %c0 = arith.constant 0 : index
    %c0_0 = arith.constant 0 : index
    %c0_1 = arith.constant 0 : index
    %0 = vector.load %arg1[%c0, %c0_0, %c0_1] : memref<1x104x144xbf16, #tpu.memory_space<vmem>>, vector<1x104x144xbf16>
    %1 = vector.shape_cast %0 : vector<1x104x144xbf16> to vector<104x144xbf16>
    %c0_2 = arith.constant 0 : index
    %c0_3 = arith.constant 0 : index
    %2 = vector.load %arg2[%c0_2, %c0_3] : memref<144x128xbf16, #tpu.memory_space<vmem>>, vector<144x128xbf16>
    %cst = arith.constant dense<0.000000e+00> : vector<104x128xf32>
    %3 = tpu.matmul %1, %2, %cst {dimension_numbers = #tpu.dot_dimension_numbers<[1], [0], [0], [1], [0, 0, 1, 1], [], []>} : vector<104x144xbf16>, vector<144x128xbf16>, vector<104x128xf32> -> vector<104x128xf32>
    %c0_4 = arith.constant 0 : index
    %c0_5 = arith.constant 0 : index
    %4 = vector.load %arg3[%c0_4, %c0_5] : memref<1x128xf32, #tpu.memory_space<vmem>>, vector<1x128xf32>
    %5 = vector.broadcast %4 : vector<1x128xf32> to vector<104x128xf32>
    %6 = arith.addf %3, %5 : vector<104x128xf32>
    %cst_6 = arith.constant 0.000000e+00 : f32
    %7 = vector.broadcast %cst_6 : f32 to vector<104x128xf32>
    %8 = arith.maximumf %6, %7 : vector<104x128xf32>
    %9 = arith.truncf %8 : vector<104x128xf32> to vector<104x128xbf16>
    %10 = vector.extract_strided_slice %9 {offsets = [0, 0], sizes = [92, 128], strides = [1, 1]} : vector<104x128xbf16> to vector<92x128xbf16>
    %c0_7 = arith.constant 0 : index
    %c0_8 = arith.constant 0 : index
    %c0_9 = arith.constant 0 : index
    %11 = vector.load %arg4[%c0_7, %c0_8, %c0_9] : memref<4x128x64xbf16, #tpu.memory_space<vmem>>, vector<1x128x64xbf16>
    %12 = vector.shape_cast %11 : vector<1x128x64xbf16> to vector<128x64xbf16>
    %cst_10 = arith.constant dense<0.000000e+00> : vector<92x64xf32>
    %13 = tpu.matmul %10, %12, %cst_10 {dimension_numbers = #tpu.dot_dimension_numbers<[1], [0], [0], [1], [0, 0, 1, 1], [], []>} : vector<92x128xbf16>, vector<128x64xbf16>, vector<92x64xf32> -> vector<92x64xf32>
    %14 = vector.extract_strided_slice %9 {offsets = [1, 0], sizes = [92, 128], strides = [1, 1]} : vector<104x128xbf16> to vector<92x128xbf16>
    %c1 = arith.constant 1 : index
    %c0_11 = arith.constant 0 : index
    %c0_12 = arith.constant 0 : index
    %15 = vector.load %arg4[%c1, %c0_11, %c0_12] : memref<4x128x64xbf16, #tpu.memory_space<vmem>>, vector<1x128x64xbf16>
    %16 = vector.shape_cast %15 : vector<1x128x64xbf16> to vector<128x64xbf16>
    %cst_13 = arith.constant dense<0.000000e+00> : vector<92x64xf32>
    %17 = tpu.matmul %14, %16, %cst_13 {dimension_numbers = #tpu.dot_dimension_numbers<[1], [0], [0], [1], [0, 0, 1, 1], [], []>} : vector<92x128xbf16>, vector<128x64xbf16>, vector<92x64xf32> -> vector<92x64xf32>
    %18 = arith.addf %13, %17 : vector<92x64xf32>
    %19 = vector.extract_strided_slice %9 {offsets = [10, 0], sizes = [92, 128], strides = [1, 1]} : vector<104x128xbf16> to vector<92x128xbf16>
    %c2 = arith.constant 2 : index
    %c0_14 = arith.constant 0 : index
    %c0_15 = arith.constant 0 : index
    %20 = vector.load %arg4[%c2, %c0_14, %c0_15] : memref<4x128x64xbf16, #tpu.memory_space<vmem>>, vector<1x128x64xbf16>
    %21 = vector.shape_cast %20 : vector<1x128x64xbf16> to vector<128x64xbf16>
    %cst_16 = arith.constant dense<0.000000e+00> : vector<92x64xf32>
    %22 = tpu.matmul %19, %21, %cst_16 {dimension_numbers = #tpu.dot_dimension_numbers<[1], [0], [0], [1], [0, 0, 1, 1], [], []>} : vector<92x128xbf16>, vector<128x64xbf16>, vector<92x64xf32> -> vector<92x64xf32>
    %23 = arith.addf %18, %22 : vector<92x64xf32>
    %24 = vector.extract_strided_slice %9 {offsets = [11, 0], sizes = [92, 128], strides = [1, 1]} : vector<104x128xbf16> to vector<92x128xbf16>
    %c3 = arith.constant 3 : index
    %c0_17 = arith.constant 0 : index
    %c0_18 = arith.constant 0 : index
    %25 = vector.load %arg4[%c3, %c0_17, %c0_18] : memref<4x128x64xbf16, #tpu.memory_space<vmem>>, vector<1x128x64xbf16>
    %26 = vector.shape_cast %25 : vector<1x128x64xbf16> to vector<128x64xbf16>
    %cst_19 = arith.constant dense<0.000000e+00> : vector<92x64xf32>
    %27 = tpu.matmul %24, %26, %cst_19 {dimension_numbers = #tpu.dot_dimension_numbers<[1], [0], [0], [1], [0, 0, 1, 1], [], []>} : vector<92x128xbf16>, vector<128x64xbf16>, vector<92x64xf32> -> vector<92x64xf32>
    %28 = arith.addf %23, %27 : vector<92x64xf32>
    %c0_20 = arith.constant 0 : index
    %c0_21 = arith.constant 0 : index
    %29 = vector.load %arg5[%c0_20, %c0_21] : memref<1x64xf32, #tpu.memory_space<vmem>>, vector<1x64xf32>
    %30 = vector.broadcast %29 : vector<1x64xf32> to vector<92x64xf32>
    %31 = arith.addf %28, %30 : vector<92x64xf32>
    %cst_22 = arith.constant 0.000000e+00 : f32
    %32 = vector.broadcast %cst_22 : f32 to vector<92x64xf32>
    %33 = arith.maximumf %31, %32 : vector<92x64xf32>
    %34 = arith.truncf %33 : vector<92x64xf32> to vector<92x64xbf16>
    %35 = vector.extract_strided_slice %34 {offsets = [0, 0], sizes = [70, 64], strides = [1, 1]} : vector<92x64xbf16> to vector<70x64xbf16>
    %c0_23 = arith.constant 0 : index
    %c0_24 = arith.constant 0 : index
    %c0_25 = arith.constant 0 : index
    %36 = vector.load %arg6[%c0_23, %c0_24, %c0_25] : memref<9x64x64xbf16, #tpu.memory_space<vmem>>, vector<1x64x64xbf16>
    %37 = vector.shape_cast %36 : vector<1x64x64xbf16> to vector<64x64xbf16>
    %cst_26 = arith.constant dense<0.000000e+00> : vector<70x64xf32>
    %38 = tpu.matmul %35, %37, %cst_26 {dimension_numbers = #tpu.dot_dimension_numbers<[1], [0], [0], [1], [0, 0, 1, 1], [], []>} : vector<70x64xbf16>, vector<64x64xbf16>, vector<70x64xf32> -> vector<70x64xf32>
    %39 = vector.extract_strided_slice %34 {offsets = [1, 0], sizes = [70, 64], strides = [1, 1]} : vector<92x64xbf16> to vector<70x64xbf16>
    %c1_27 = arith.constant 1 : index
    %c0_28 = arith.constant 0 : index
    %c0_29 = arith.constant 0 : index
    %40 = vector.load %arg6[%c1_27, %c0_28, %c0_29] : memref<9x64x64xbf16, #tpu.memory_space<vmem>>, vector<1x64x64xbf16>
    %41 = vector.shape_cast %40 : vector<1x64x64xbf16> to vector<64x64xbf16>
    %cst_30 = arith.constant dense<0.000000e+00> : vector<70x64xf32>
    %42 = tpu.matmul %39, %41, %cst_30 {dimension_numbers = #tpu.dot_dimension_numbers<[1], [0], [0], [1], [0, 0, 1, 1], [], []>} : vector<70x64xbf16>, vector<64x64xbf16>, vector<70x64xf32> -> vector<70x64xf32>
    %43 = arith.addf %38, %42 : vector<70x64xf32>
    %44 = vector.extract_strided_slice %34 {offsets = [2, 0], sizes = [70, 64], strides = [1, 1]} : vector<92x64xbf16> to vector<70x64xbf16>
    %c2_31 = arith.constant 2 : index
    %c0_32 = arith.constant 0 : index
    %c0_33 = arith.constant 0 : index
    %45 = vector.load %arg6[%c2_31, %c0_32, %c0_33] : memref<9x64x64xbf16, #tpu.memory_space<vmem>>, vector<1x64x64xbf16>
    %46 = vector.shape_cast %45 : vector<1x64x64xbf16> to vector<64x64xbf16>
    %cst_34 = arith.constant dense<0.000000e+00> : vector<70x64xf32>
    %47 = tpu.matmul %44, %46, %cst_34 {dimension_numbers = #tpu.dot_dimension_numbers<[1], [0], [0], [1], [0, 0, 1, 1], [], []>} : vector<70x64xbf16>, vector<64x64xbf16>, vector<70x64xf32> -> vector<70x64xf32>
    %48 = arith.addf %43, %47 : vector<70x64xf32>
    %49 = vector.extract_strided_slice %34 {offsets = [10, 0], sizes = [70, 64], strides = [1, 1]} : vector<92x64xbf16> to vector<70x64xbf16>
    %c3_35 = arith.constant 3 : index
    %c0_36 = arith.constant 0 : index
    %c0_37 = arith.constant 0 : index
    %50 = vector.load %arg6[%c3_35, %c0_36, %c0_37] : memref<9x64x64xbf16, #tpu.memory_space<vmem>>, vector<1x64x64xbf16>
    %51 = vector.shape_cast %50 : vector<1x64x64xbf16> to vector<64x64xbf16>
    %cst_38 = arith.constant dense<0.000000e+00> : vector<70x64xf32>
    %52 = tpu.matmul %49, %51, %cst_38 {dimension_numbers = #tpu.dot_dimension_numbers<[1], [0], [0], [1], [0, 0, 1, 1], [], []>} : vector<70x64xbf16>, vector<64x64xbf16>, vector<70x64xf32> -> vector<70x64xf32>
    %53 = arith.addf %48, %52 : vector<70x64xf32>
    %54 = vector.extract_strided_slice %34 {offsets = [11, 0], sizes = [70, 64], strides = [1, 1]} : vector<92x64xbf16> to vector<70x64xbf16>
    %c4 = arith.constant 4 : index
    %c0_39 = arith.constant 0 : index
    %c0_40 = arith.constant 0 : index
    %55 = vector.load %arg6[%c4, %c0_39, %c0_40] : memref<9x64x64xbf16, #tpu.memory_space<vmem>>, vector<1x64x64xbf16>
    %56 = vector.shape_cast %55 : vector<1x64x64xbf16> to vector<64x64xbf16>
    %cst_41 = arith.constant dense<0.000000e+00> : vector<70x64xf32>
    %57 = tpu.matmul %54, %56, %cst_41 {dimension_numbers = #tpu.dot_dimension_numbers<[1], [0], [0], [1], [0, 0, 1, 1], [], []>} : vector<70x64xbf16>, vector<64x64xbf16>, vector<70x64xf32> -> vector<70x64xf32>
    %58 = arith.addf %53, %57 : vector<70x64xf32>
    %59 = vector.extract_strided_slice %34 {offsets = [12, 0], sizes = [70, 64], strides = [1, 1]} : vector<92x64xbf16> to vector<70x64xbf16>
    %c5 = arith.constant 5 : index
    %c0_42 = arith.constant 0 : index
    %c0_43 = arith.constant 0 : index
    %60 = vector.load %arg6[%c5, %c0_42, %c0_43] : memref<9x64x64xbf16, #tpu.memory_space<vmem>>, vector<1x64x64xbf16>
    %61 = vector.shape_cast %60 : vector<1x64x64xbf16> to vector<64x64xbf16>
    %cst_44 = arith.constant dense<0.000000e+00> : vector<70x64xf32>
    %62 = tpu.matmul %59, %61, %cst_44 {dimension_numbers = #tpu.dot_dimension_numbers<[1], [0], [0], [1], [0, 0, 1, 1], [], []>} : vector<70x64xbf16>, vector<64x64xbf16>, vector<70x64xf32> -> vector<70x64xf32>
    %63 = arith.addf %58, %62 : vector<70x64xf32>
    %64 = vector.extract_strided_slice %34 {offsets = [20, 0], sizes = [70, 64], strides = [1, 1]} : vector<92x64xbf16> to vector<70x64xbf16>
    %c6 = arith.constant 6 : index
    %c0_45 = arith.constant 0 : index
    %c0_46 = arith.constant 0 : index
    %65 = vector.load %arg6[%c6, %c0_45, %c0_46] : memref<9x64x64xbf16, #tpu.memory_space<vmem>>, vector<1x64x64xbf16>
    %66 = vector.shape_cast %65 : vector<1x64x64xbf16> to vector<64x64xbf16>
    %cst_47 = arith.constant dense<0.000000e+00> : vector<70x64xf32>
    %67 = tpu.matmul %64, %66, %cst_47 {dimension_numbers = #tpu.dot_dimension_numbers<[1], [0], [0], [1], [0, 0, 1, 1], [], []>} : vector<70x64xbf16>, vector<64x64xbf16>, vector<70x64xf32> -> vector<70x64xf32>
    %68 = arith.addf %63, %67 : vector<70x64xf32>
    %69 = vector.extract_strided_slice %34 {offsets = [21, 0], sizes = [70, 64], strides = [1, 1]} : vector<92x64xbf16> to vector<70x64xbf16>
    %c7 = arith.constant 7 : index
    %c0_48 = arith.constant 0 : index
    %c0_49 = arith.constant 0 : index
    %70 = vector.load %arg6[%c7, %c0_48, %c0_49] : memref<9x64x64xbf16, #tpu.memory_space<vmem>>, vector<1x64x64xbf16>
    %71 = vector.shape_cast %70 : vector<1x64x64xbf16> to vector<64x64xbf16>
    %cst_50 = arith.constant dense<0.000000e+00> : vector<70x64xf32>
    %72 = tpu.matmul %69, %71, %cst_50 {dimension_numbers = #tpu.dot_dimension_numbers<[1], [0], [0], [1], [0, 0, 1, 1], [], []>} : vector<70x64xbf16>, vector<64x64xbf16>, vector<70x64xf32> -> vector<70x64xf32>
    %73 = arith.addf %68, %72 : vector<70x64xf32>
    %74 = vector.extract_strided_slice %34 {offsets = [22, 0], sizes = [70, 64], strides = [1, 1]} : vector<92x64xbf16> to vector<70x64xbf16>
    %c8 = arith.constant 8 : index
    %c0_51 = arith.constant 0 : index
    %c0_52 = arith.constant 0 : index
    %75 = vector.load %arg6[%c8, %c0_51, %c0_52] : memref<9x64x64xbf16, #tpu.memory_space<vmem>>, vector<1x64x64xbf16>
    %76 = vector.shape_cast %75 : vector<1x64x64xbf16> to vector<64x64xbf16>
    %cst_53 = arith.constant dense<0.000000e+00> : vector<70x64xf32>
    %77 = tpu.matmul %74, %76, %cst_53 {dimension_numbers = #tpu.dot_dimension_numbers<[1], [0], [0], [1], [0, 0, 1, 1], [], []>} : vector<70x64xbf16>, vector<64x64xbf16>, vector<70x64xf32> -> vector<70x64xf32>
    %78 = arith.addf %73, %77 : vector<70x64xf32>
    %c0_54 = arith.constant 0 : index
    %c0_55 = arith.constant 0 : index
    %79 = vector.load %arg7[%c0_54, %c0_55] : memref<1x64xf32, #tpu.memory_space<vmem>>, vector<1x64xf32>
    %80 = vector.broadcast %79 : vector<1x64xf32> to vector<70x64xf32>
    %81 = arith.addf %78, %80 : vector<70x64xf32>
    %cst_56 = arith.constant 0.000000e+00 : f32
    %82 = vector.broadcast %cst_56 : f32 to vector<70x64xf32>
    %83 = arith.maximumf %81, %82 : vector<70x64xf32>
    %84 = arith.truncf %83 : vector<70x64xf32> to vector<70x64xbf16>
    %85 = vector.extract_strided_slice %84 {offsets = [0, 0], sizes = [7, 64], strides = [1, 1]} : vector<70x64xbf16> to vector<7x64xbf16>
    %c0_57 = arith.constant 0 : index
    %c0_58 = arith.constant 0 : index
    %c0_59 = arith.constant 0 : index
    %86 = vector.load %arg8[%c0_57, %c0_58, %c0_59] : memref<1x49x64xbf16, #tpu.memory_space<vmem>>, vector<1x7x64xbf16>
    %87 = vector.shape_cast %86 : vector<1x7x64xbf16> to vector<7x64xbf16>
    %88 = vector.shape_cast %85 : vector<7x64xbf16> to vector<1x7x64xbf16>
    tpu.vector_store %arg8[%c0_57, %c0_58, %c0_59], %88 {strides = array<i32>} : memref<1x49x64xbf16, #tpu.memory_space<vmem>>, vector<1x7x64xbf16>,
    %89 = vector.extract_strided_slice %84 {offsets = [10, 0], sizes = [7, 64], strides = [1, 1]} : vector<70x64xbf16> to vector<7x64xbf16>
    %c0_60 = arith.constant 0 : index
    %c7_61 = arith.constant 7 : index
    %c0_62 = arith.constant 0 : index
    %90 = vector.load %arg8[%c0_60, %c7_61, %c0_62] : memref<1x49x64xbf16, #tpu.memory_space<vmem>>, vector<1x7x64xbf16>
    %91 = vector.shape_cast %90 : vector<1x7x64xbf16> to vector<7x64xbf16>
    %92 = vector.shape_cast %89 : vector<7x64xbf16> to vector<1x7x64xbf16>
    tpu.vector_store %arg8[%c0_60, %c7_61, %c0_62], %92 {strides = array<i32>} : memref<1x49x64xbf16, #tpu.memory_space<vmem>>, vector<1x7x64xbf16>,
    %93 = vector.extract_strided_slice %84 {offsets = [20, 0], sizes = [7, 64], strides = [1, 1]} : vector<70x64xbf16> to vector<7x64xbf16>
    %c0_63 = arith.constant 0 : index
    %c14 = arith.constant 14 : index
    %c0_64 = arith.constant 0 : index
    %94 = vector.load %arg8[%c0_63, %c14, %c0_64] : memref<1x49x64xbf16, #tpu.memory_space<vmem>>, vector<1x7x64xbf16>
    %95 = vector.shape_cast %94 : vector<1x7x64xbf16> to vector<7x64xbf16>
    %96 = vector.shape_cast %93 : vector<7x64xbf16> to vector<1x7x64xbf16>
    tpu.vector_store %arg8[%c0_63, %c14, %c0_64], %96 {strides = array<i32>} : memref<1x49x64xbf16, #tpu.memory_space<vmem>>, vector<1x7x64xbf16>,
    %97 = vector.extract_strided_slice %84 {offsets = [30, 0], sizes = [7, 64], strides = [1, 1]} : vector<70x64xbf16> to vector<7x64xbf16>
    %c0_65 = arith.constant 0 : index
    %c21 = arith.constant 21 : index
    %c0_66 = arith.constant 0 : index
    %98 = vector.load %arg8[%c0_65, %c21, %c0_66] : memref<1x49x64xbf16, #tpu.memory_space<vmem>>, vector<1x7x64xbf16>
    %99 = vector.shape_cast %98 : vector<1x7x64xbf16> to vector<7x64xbf16>
    %100 = vector.shape_cast %97 : vector<7x64xbf16> to vector<1x7x64xbf16>
    tpu.vector_store %arg8[%c0_65, %c21, %c0_66], %100 {strides = array<i32>} : memref<1x49x64xbf16, #tpu.memory_space<vmem>>, vector<1x7x64xbf16>,
    %101 = vector.extract_strided_slice %84 {offsets = [40, 0], sizes = [7, 64], strides = [1, 1]} : vector<70x64xbf16> to vector<7x64xbf16>
    %c0_67 = arith.constant 0 : index
    %c28 = arith.constant 28 : index
    %c0_68 = arith.constant 0 : index
    %102 = vector.load %arg8[%c0_67, %c28, %c0_68] : memref<1x49x64xbf16, #tpu.memory_space<vmem>>, vector<1x7x64xbf16>
    %103 = vector.shape_cast %102 : vector<1x7x64xbf16> to vector<7x64xbf16>
    %104 = vector.shape_cast %101 : vector<7x64xbf16> to vector<1x7x64xbf16>
    tpu.vector_store %arg8[%c0_67, %c28, %c0_68], %104 {strides = array<i32>} : memref<1x49x64xbf16, #tpu.memory_space<vmem>>, vector<1x7x64xbf16>,
    %105 = vector.extract_strided_slice %84 {offsets = [50, 0], sizes = [7, 64], strides = [1, 1]} : vector<70x64xbf16> to vector<7x64xbf16>
    %c0_69 = arith.constant 0 : index
    %c35 = arith.constant 35 : index
    %c0_70 = arith.constant 0 : index
    %106 = vector.load %arg8[%c0_69, %c35, %c0_70] : memref<1x49x64xbf16, #tpu.memory_space<vmem>>, vector<1x7x64xbf16>
    %107 = vector.shape_cast %106 : vector<1x7x64xbf16> to vector<7x64xbf16>
    %108 = vector.shape_cast %105 : vector<7x64xbf16> to vector<1x7x64xbf16>
    tpu.vector_store %arg8[%c0_69, %c35, %c0_70], %108 {strides = array<i32>} : memref<1x49x64xbf16, #tpu.memory_space<vmem>>, vector<1x7x64xbf16>,
    %109 = vector.extract_strided_slice %84 {offsets = [60, 0], sizes = [7, 64], strides = [1, 1]} : vector<70x64xbf16> to vector<7x64xbf16>
    %c0_71 = arith.constant 0 : index
    %c42 = arith.constant 42 : index
    %c0_72 = arith.constant 0 : index
    %110 = vector.load %arg8[%c0_71, %c42, %c0_72] : memref<1x49x64xbf16, #tpu.memory_space<vmem>>, vector<1x7x64xbf16>
    %111 = vector.shape_cast %110 : vector<1x7x64xbf16> to vector<7x64xbf16>
    %112 = vector.shape_cast %109 : vector<7x64xbf16> to vector<1x7x64xbf16>
    tpu.vector_store %arg8[%c0_71, %c42, %c0_72], %112 {strides = array<i32>} : memref<1x49x64xbf16, #tpu.memory_space<vmem>>, vector<1x7x64xbf16>,
    return
  }
  func.func @transform_0(%arg0: i32) -> (i32, i32, i32) {
    %c0_i32 = arith.constant 0 : i32
    %c0_i32_0 = arith.constant 0 : i32
    %c0_i32_1 = arith.constant 0 : i32
    return %arg0, %c0_i32, %c0_i32_0 : i32, i32, i32
  }
  func.func @transform_1(%arg0: i32) -> (i32, i32) {
    %c0_i32 = arith.constant 0 : i32
    %c0_i32_0 = arith.constant 0 : i32
    %c0_i32_1 = arith.constant 0 : i32
    return %c0_i32, %c0_i32_0 : i32, i32
  }
  func.func @transform_2(%arg0: i32) -> (i32, i32) {
    %c0_i32 = arith.constant 0 : i32
    %c0_i32_0 = arith.constant 0 : i32
    %c0_i32_1 = arith.constant 0 : i32
    return %c0_i32, %c0_i32_0 : i32, i32
  }
  func.func @transform_3(%arg0: i32) -> (i32, i32, i32) {
    %c0_i32 = arith.constant 0 : i32
    %c0_i32_0 = arith.constant 0 : i32
    %c0_i32_1 = arith.constant 0 : i32
    %c0_i32_2 = arith.constant 0 : i32
    return %c0_i32, %c0_i32_0, %c0_i32_1 : i32, i32, i32
  }
  func.func @transform_4(%arg0: i32) -> (i32, i32) {
    %c0_i32 = arith.constant 0 : i32
    %c0_i32_0 = arith.constant 0 : i32
    %c0_i32_1 = arith.constant 0 : i32
    return %c0_i32, %c0_i32_0 : i32, i32
  }
  func.func @transform_5(%arg0: i32) -> (i32, i32, i32) {
    %c0_i32 = arith.constant 0 : i32
    %c0_i32_0 = arith.constant 0 : i32
    %c0_i32_1 = arith.constant 0 : i32
    %c0_i32_2 = arith.constant 0 : i32
    return %c0_i32, %c0_i32_0, %c0_i32_1 : i32, i32, i32
  }
  func.func @transform_6(%arg0: i32) -> (i32, i32) {
    %c0_i32 = arith.constant 0 : i32
    %c0_i32_0 = arith.constant 0 : i32
    %c0_i32_1 = arith.constant 0 : i32
    return %c0_i32, %c0_i32_0 : i32, i32
  }
  func.func @transform_7(%arg0: i32) -> (i32, i32, i32) {
    %c0_i32 = arith.constant 0 : i32
    %c0_i32_0 = arith.constant 0 : i32
    %c0_i32_1 = arith.constant 0 : i32
    return %arg0, %c0_i32, %c0_i32_0 : i32, i32, i32
  }
}

module attributes {stable_mosaic.version = 11 : i64} {
  func.func @_fc_kernel(%arg0: i32, %arg1: memref<2x3136xbf16, #tpu.memory_space<vmem>>, %arg2: memref<3136x512xbf16, #tpu.memory_space<vmem>>, %arg3: memref<1x512xf32, #tpu.memory_space<vmem>>, %arg4: memref<512x128xbf16, #tpu.memory_space<vmem>>, %arg5: memref<1x128xf32, #tpu.memory_space<vmem>>, %arg6: memref<2x128xf32, #tpu.memory_space<vmem>>) attributes {dimension_semantics = [#tpu.dimension_semantics<parallel>], iteration_bounds = array<i64: 1>, scalar_prefetch = 0 : i64, scratch_operands = 0 : i64, tpu.core_type = #tpu.core_type<tc>, window_params = [{transform_indices = @transform_0, window_bounds = array<i64: 2, 3136>}, {pipeline_mode = #tpu.pipeline_mode<synchronous>, transform_indices = @transform_1, window_bounds = array<i64: 3136, 512>}, {pipeline_mode = #tpu.pipeline_mode<synchronous>, transform_indices = @transform_2, window_bounds = array<i64: 1, 512>}, {pipeline_mode = #tpu.pipeline_mode<synchronous>, transform_indices = @transform_3, window_bounds = array<i64: 512, 128>}, {pipeline_mode = #tpu.pipeline_mode<synchronous>, transform_indices = @transform_4, window_bounds = array<i64: 1, 128>}, {transform_indices = @transform_5, window_bounds = array<i64: 2, 128>}]} {
    %c0 = arith.constant 0 : index
    %c0_0 = arith.constant 0 : index
    %0 = vector.load %arg1[%c0, %c0_0] : memref<2x3136xbf16, #tpu.memory_space<vmem>>, vector<2x3136xbf16>
    %c0_1 = arith.constant 0 : index
    %c0_2 = arith.constant 0 : index
    %1 = vector.load %arg2[%c0_1, %c0_2] : memref<3136x512xbf16, #tpu.memory_space<vmem>>, vector<3136x512xbf16>
    %cst = arith.constant dense<0.000000e+00> : vector<2x512xf32>
    %2 = tpu.matmul %0, %1, %cst {dimension_numbers = #tpu.dot_dimension_numbers<[1], [0], [0], [1], [0, 0, 1, 1], [], []>} : vector<2x3136xbf16>, vector<3136x512xbf16>, vector<2x512xf32> -> vector<2x512xf32>
    %c0_3 = arith.constant 0 : index
    %c0_4 = arith.constant 0 : index
    %3 = vector.load %arg3[%c0_3, %c0_4] : memref<1x512xf32, #tpu.memory_space<vmem>>, vector<1x512xf32>
    %4 = vector.broadcast %3 : vector<1x512xf32> to vector<2x512xf32>
    %5 = arith.addf %2, %4 : vector<2x512xf32>
    %cst_5 = arith.constant 0.000000e+00 : f32
    %6 = vector.broadcast %cst_5 : f32 to vector<2x512xf32>
    %7 = arith.maximumf %5, %6 : vector<2x512xf32>
    %8 = arith.truncf %7 : vector<2x512xf32> to vector<2x512xbf16>
    %c0_6 = arith.constant 0 : index
    %c0_7 = arith.constant 0 : index
    %9 = vector.load %arg4[%c0_6, %c0_7] : memref<512x128xbf16, #tpu.memory_space<vmem>>, vector<512x128xbf16>
    %cst_8 = arith.constant dense<0.000000e+00> : vector<2x128xf32>
    %10 = tpu.matmul %8, %9, %cst_8 {dimension_numbers = #tpu.dot_dimension_numbers<[1], [0], [0], [1], [0, 0, 1, 1], [], []>} : vector<2x512xbf16>, vector<512x128xbf16>, vector<2x128xf32> -> vector<2x128xf32>
    %c0_9 = arith.constant 0 : index
    %c0_10 = arith.constant 0 : index
    %11 = vector.load %arg5[%c0_9, %c0_10] : memref<1x128xf32, #tpu.memory_space<vmem>>, vector<1x128xf32>
    %12 = vector.broadcast %11 : vector<1x128xf32> to vector<2x128xf32>
    %13 = arith.addf %10, %12 : vector<2x128xf32>
    %c0_11 = arith.constant 0 : index
    %c0_12 = arith.constant 0 : index
    %14 = vector.load %arg6[%c0_11, %c0_12] : memref<2x128xf32, #tpu.memory_space<vmem>>, vector<2x128xf32>
    tpu.vector_store %arg6[%c0_11, %c0_12], %13 {strides = array<i32>} : memref<2x128xf32, #tpu.memory_space<vmem>>, vector<2x128xf32>,
    return
  }
  func.func @transform_0(%arg0: i32) -> (i32, i32) {
    %c0_i32 = arith.constant 0 : i32
    %c0_i32_0 = arith.constant 0 : i32
    return %arg0, %c0_i32 : i32, i32
  }
  func.func @transform_1(%arg0: i32) -> (i32, i32) {
    %c0_i32 = arith.constant 0 : i32
    %c0_i32_0 = arith.constant 0 : i32
    %c0_i32_1 = arith.constant 0 : i32
    return %c0_i32, %c0_i32_0 : i32, i32
  }
  func.func @transform_2(%arg0: i32) -> (i32, i32) {
    %c0_i32 = arith.constant 0 : i32
    %c0_i32_0 = arith.constant 0 : i32
    %c0_i32_1 = arith.constant 0 : i32
    return %c0_i32, %c0_i32_0 : i32, i32
  }
  func.func @transform_3(%arg0: i32) -> (i32, i32) {
    %c0_i32 = arith.constant 0 : i32
    %c0_i32_0 = arith.constant 0 : i32
    %c0_i32_1 = arith.constant 0 : i32
    return %c0_i32, %c0_i32_0 : i32, i32
  }
  func.func @transform_4(%arg0: i32) -> (i32, i32) {
    %c0_i32 = arith.constant 0 : i32
    %c0_i32_0 = arith.constant 0 : i32
    %c0_i32_1 = arith.constant 0 : i32
    return %c0_i32, %c0_i32_0 : i32, i32
  }
  func.func @transform_5(%arg0: i32) -> (i32, i32) {
    %c0_i32 = arith.constant 0 : i32
    %c0_i32_0 = arith.constant 0 : i32
    return %arg0, %c0_i32 : i32, i32
  }
}

</mosaic_0001>

<llo_original>
// kernel: dqn_forward.2
$region0: #{dqn_forward.2}
  #allocation0 [shape = 'u32[]', space=smem, size = 0x4, offset = 0x4, fixed_abs, tag = 'smem constant byte address 0x4 - core index']
  #allocation1 [shape = 'u32[144,128]{1,0:T(1,128)}', space=vmem, size = 0x12000, scoped, tag = 'internal scratch']
  %s0 = inlined_call_operand.vmem [shape: bf16[2,104,144], index: 0, kind: input, shape index: {}]
  %s1 = inlined_call_operand.vmem [shape: bf16[144,128], index: 1, kind: input, shape index: {}]
  %s2 = inlined_call_operand.vmem [shape: f32[1,128], index: 2, kind: input, shape index: {}]
  %s3 = inlined_call_operand.vmem [shape: bf16[4,128,64], index: 3, kind: input, shape index: {}]
  %s4 = inlined_call_operand.vmem [shape: f32[1,64], index: 4, kind: input, shape index: {}]
  %s5 = inlined_call_operand.vmem [shape: bf16[9,64,64], index: 5, kind: input, shape index: {}]
  %s6 = inlined_call_operand.vmem [shape: f32[1,64], index: 6, kind: input, shape index: {}]
  %s7 = inlined_call_operand.vmem [shape: bf16[2,49,64], index: 7, kind: output, shape index: {}]
  %s8 = sld [smem:[#allocation0]]
  $region61: #{dqn_forward.2} parent=0
    _
  %s10 = ssub.s32 1, %s8
  %s11 = scalar_select 0, %s10, %s8
  loop: start=0, step=1, limit=4
  $region2: #{dqn_forward.2} parent=0 // loop_pre_header
    _
  $region3: #{dqn_forward.2} parent=0 // loop_header
    %s13 = sphi 0, %s17
    %p14 = scmp.ge.s32.totalorder %s13, 4
    %s23 = sphi 0, %s25
    %s26 = sphi 0, %s23
    %s27 = sphi 0, %s26
    %s43 = sphi 0, %s27
    %s47 = sphi 0, %s47
    %s49 = sphi 0, %s47
    %s50 = sphi 0, %s49
    %s64 = sphi 0, %s50
    %s68 = sphi 0, %s68
    %s70 = sphi 0, %s68
    %s71 = sphi 0, %s70
    %s85 = sphi 0, %s71
    %s89 = sphi 0, %s89
    %s91 = sphi 0, %s89
    %s92 = sphi 0, %s91
    %s106 = sphi 0, %s92
    %s110 = sphi 0, %s110
    %s112 = sphi 0, %s110
    %s113 = sphi 0, %s112
    %s127 = sphi 0, %s113
    %s131 = sphi 0, %s131
    %s133 = sphi 0, %s131
    %s134 = sphi 0, %s133
    %s148 = sphi 0, %s134
    %s152 = sphi 0, %s152
    %s154 = sphi 0, %s152
    %s155 = sphi 0, %s154
    %s169 = sphi 0, %s155
    %s175 = sphi 0, %s177
    %s178 = sphi 0, %s175
    %s179 = sphi 0, %s178
    %s195 = sphi 0, %s179
  $region4: #{dqn_forward.2} parent=0 // loop_header_branch
    %16 = sbr.rel (%p14) target = $region8
  $region5: #{dqn_forward.2} parent=0 // loop_body
    %s18 = ssub.s32 %s13, 1
    %s19 = ssub.s32 %s13, 2
    %s20 = sadd.s32 %s13, 1
    %s21 = ssub.s32 %s13, %s20
    %p22 = scmp.eq.s32.totalorder %s21, 0
    %s24 = sadd.s32 %s23, 1
    %s25 = scalar_select %p22, %s23, %s24
    %p28 = pneg %p22
    %p29 = scmp.eq.s32.totalorder %s13, 1
    %p30 = por %p28, %p29
    %p31 = scmp.ne.s32.totalorder %s23, %s26
    %p32 = scmp.eq.s32.totalorder %s13, 0
    %p33 = por %p31, %p32
    %p34 = scmp.ne.s32.totalorder %s23, %s26
    %p35 = scmp.eq.s32.totalorder %s18, 1
    %p36 = por %p34, %p35
    %p37 = scmp.ne.s32.totalorder %s26, %s27
    %p38 = scmp.eq.s32.totalorder %s18, 0
    %p39 = por %p37, %p38
    %p40 = scmp.ne.s32.totalorder %s26, %s27
    %p41 = scmp.eq.s32.totalorder %s19, 1
    %p42 = por %p40, %p41
    %p44 = scmp.ne.s32.totalorder %s27, %s43
    %p45 = scmp.eq.s32.totalorder %s19, 0
    %p46 = por %p44, %p45
    %s48 = sadd.s32 %s47, 1
    %p51 = scmp.eq.s32.totalorder %s13, 1
    %p52 = scmp.ne.s32.totalorder %s47, %s49
    %p53 = scmp.eq.s32.totalorder %s13, 0
    %p54 = por %p52, %p53
    %p55 = scmp.ne.s32.totalorder %s47, %s49
    %p56 = scmp.eq.s32.totalorder %s18, 1
    %p57 = por %p55, %p56
    %p58 = scmp.ne.s32.totalorder %s49, %s50
    %p59 = scmp.eq.s32.totalorder %s18, 0
    %p60 = por %p58, %p59
    %p61 = scmp.ne.s32.totalorder %s49, %s50
    %p62 = scmp.eq.s32.totalorder %s19, 1
    %p63 = por %p61, %p62
    %p65 = scmp.ne.s32.totalorder %s50, %s64
    %p66 = scmp.eq.s32.totalorder %s19, 0
    %p67 = por %p65, %p66
    %s69 = sadd.s32 %s68, 1
    %p72 = scmp.eq.s32.totalorder %s13, 1
    %p73 = scmp.ne.s32.totalorder %s68, %s70
    %p74 = scmp.eq.s32.totalorder %s13, 0
    %p75 = por %p73, %p74
    %p76 = scmp.ne.s32.totalorder %s68, %s70
    %p77 = scmp.eq.s32.totalorder %s18, 1
    %p78 = por %p76, %p77
    %p79 = scmp.ne.s32.totalorder %s70, %s71
    %p80 = scmp.eq.s32.totalorder %s18, 0
    %p81 = por %p79, %p80
    %p82 = scmp.ne.s32.totalorder %s70, %s71
    %p83 = scmp.eq.s32.totalorder %s19, 1
    %p84 = por %p82, %p83
    %p86 = scmp.ne.s32.totalorder %s71, %s85
    %p87 = scmp.eq.s32.totalorder %s19, 0
    %p88 = por %p86, %p87
    %s90 = sadd.s32 %s89, 1
    %p93 = scmp.eq.s32.totalorder %s13, 1
    %p94 = scmp.ne.s32.totalorder %s89, %s91
    %p95 = scmp.eq.s32.totalorder %s13, 0
    %p96 = por %p94, %p95
    %p97 = scmp.ne.s32.totalorder %s89, %s91
    %p98 = scmp.eq.s32.totalorder %s18, 1
    %p99 = por %p97, %p98
    %p100 = scmp.ne.s32.totalorder %s91, %s92
    %p101 = scmp.eq.s32.totalorder %s18, 0
    %p102 = por %p100, %p101
    %p103 = scmp.ne.s32.totalorder %s91, %s92
    %p104 = scmp.eq.s32.totalorder %s19, 1
    %p105 = por %p103, %p104
    %p107 = scmp.ne.s32.totalorder %s92, %s106
    %p108 = scmp.eq.s32.totalorder %s19, 0
    %p109 = por %p107, %p108
    %s111 = sadd.s32 %s110, 1
    %p114 = scmp.eq.s32.totalorder %s13, 1
    %p115 = scmp.ne.s32.totalorder %s110, %s112
    %p116 = scmp.eq.s32.totalorder %s13, 0
    %p117 = por %p115, %p116
    %p118 = scmp.ne.s32.totalorder %s110, %s112
    %p119 = scmp.eq.s32.totalorder %s18, 1
    %p120 = por %p118, %p119
    %p121 = scmp.ne.s32.totalorder %s112, %s113
    %p122 = scmp.eq.s32.totalorder %s18, 0
    %p123 = por %p121, %p122
    %p124 = scmp.ne.s32.totalorder %s112, %s113
    %p125 = scmp.eq.s32.totalorder %s19, 1
    %p126 = por %p124, %p125
    %p128 = scmp.ne.s32.totalorder %s113, %s127
    %p129 = scmp.eq.s32.totalorder %s19, 0
    %p130 = por %p128, %p129
    %s132 = sadd.s32 %s131, 1
    %p135 = scmp.eq.s32.totalorder %s13, 1
    %p136 = scmp.ne.s32.totalorder %s131, %s133
    %p137 = scmp.eq.s32.totalorder %s13, 0
    %p138 = por %p136, %p137
    %p139 = scmp.ne.s32.totalorder %s131, %s133
    %p140 = scmp.eq.s32.totalorder %s18, 1
    %p141 = por %p139, %p140
    %p142 = scmp.ne.s32.totalorder %s133, %s134
    %p143 = scmp.eq.s32.totalorder %s18, 0
    %p144 = por %p142, %p143
    %p145 = scmp.ne.s32.totalorder %s133, %s134
    %p146 = scmp.eq.s32.totalorder %s19, 1
    %p147 = por %p145, %p146
    %p149 = scmp.ne.s32.totalorder %s134, %s148
    %p150 = scmp.eq.s32.totalorder %s19, 0
    %p151 = por %p149, %p150
    %s153 = sadd.s32 %s152, 1
    %p156 = scmp.eq.s32.totalorder %s13, 1
    %p157 = scmp.ne.s32.totalorder %s152, %s154
    %p158 = scmp.eq.s32.totalorder %s13, 0
    %p159 = por %p157, %p158
    %p160 = scmp.ne.s32.totalorder %s152, %s154
    %p161 = scmp.eq.s32.totalorder %s18, 1
    %p162 = por %p160, %p161
    %p163 = scmp.ne.s32.totalorder %s154, %s155
    %p164 = scmp.eq.s32.totalorder %s18, 0
    %p165 = por %p163, %p164
    %p166 = scmp.ne.s32.totalorder %s154, %s155
    %p167 = scmp.eq.s32.totalorder %s19, 1
    %p168 = por %p166, %p167
    %p170 = scmp.ne.s32.totalorder %s155, %s169
    %p171 = scmp.eq.s32.totalorder %s19, 0
    %p172 = por %p170, %p171
    %s173 = ssub.s32 %s13, %s20
    %p174 = scmp.eq.s32.totalorder %s173, 0
    %s176 = sadd.s32 %s175, 1
    %s177 = scalar_select %p174, %s175, %s176
    %p180 = pneg %p174
    %p181 = scmp.eq.s32.totalorder %s13, 1
    %p182 = por %p180, %p181
    %p183 = scmp.ne.s32.totalorder %s175, %s178
    %p184 = scmp.eq.s32.totalorder %s13, 0
    %p185 = por %p183, %p184
    %p186 = scmp.ne.s32.totalorder %s175, %s178
    %p187 = scmp.eq.s32.totalorder %s18, 1
    %p188 = por %p186, %p187
    %p189 = scmp.ne.s32.totalorder %s178, %s179
    %p190 = scmp.eq.s32.totalorder %s18, 0
    %p191 = por %p189, %p190
    %p192 = scmp.ne.s32.totalorder %s178, %s179
    %p193 = scmp.eq.s32.totalorder %s19, 1
    %p194 = por %p192, %p193
    %p196 = scmp.ne.s32.totalorder %s179, %s195
    %p197 = scmp.eq.s32.totalorder %s19, 0
    %p198 = por %p196, %p197
    %p199 = scmp.le.s32.totalorder 1, %s13
    %p200 = scmp.lt.s32.totalorder %s13, 3
    %p201 = pnand %p199, %p200
    %p202 = pneg %p201
    // Predicated region
    $region9: #{dqn_forward.2} parent=5 // pred_check
      _
    $region10: #{dqn_forward.2} parent=5 // pred_check_branch
      %204 = sbr.rel (%p201) target = $region12
    $region11: #{dqn_forward.2} parent=5 // pred_region
      %s205 = ssub.s32 %s13, 1
      // Predicated region
      $region13: #{dqn_forward.2} parent=11 // pred_check
        %p206 = pneg %p60
      $region14: #{dqn_forward.2} parent=11 // pred_check_branch
        %208 = sbr.rel (%p206) target = $region16
      $region15: #{dqn_forward.2} parent=11 // pred_region
        _
      $region16: #{dqn_forward.2} parent=11 // pred_fallthru
        _
      // Predicated region
      $region17: #{dqn_forward.2} parent=11 // pred_check
        %p209 = pneg %p81
      $region18: #{dqn_forward.2} parent=11 // pred_check_branch
        %211 = sbr.rel (%p209) target = $region20
      $region19: #{dqn_forward.2} parent=11 // pred_region
        _
      $region20: #{dqn_forward.2} parent=11 // pred_fallthru
        _
      // Predicated region
      $region21: #{dqn_forward.2} parent=11 // pred_check
        %p212 = pneg %p102
      $region22: #{dqn_forward.2} parent=11 // pred_check_branch
        %214 = sbr.rel (%p212) target = $region24
      $region23: #{dqn_forward.2} parent=11 // pred_region
        _
      $region24: #{dqn_forward.2} parent=11 // pred_fallthru
        _
      // Predicated region
      $region25: #{dqn_forward.2} parent=11 // pred_check
        %p215 = pneg %p123
      $region26: #{dqn_forward.2} parent=11 // pred_check_branch
        %217 = sbr.rel (%p215) target = $region28
      $region27: #{dqn_forward.2} parent=11 // pred_region
        _
      $region28: #{dqn_forward.2} parent=11 // pred_fallthru
        _
      // Predicated region
      $region29: #{dqn_forward.2} parent=11 // pred_check
        %p218 = pneg %p144
      $region30: #{dqn_forward.2} parent=11 // pred_check_branch
        %220 = sbr.rel (%p218) target = $region32
      $region31: #{dqn_forward.2} parent=11 // pred_region
        _
      $region32: #{dqn_forward.2} parent=11 // pred_fallthru
        _
      // Predicated region
      $region33: #{dqn_forward.2} parent=11 // pred_check
        %p221 = pneg %p165
      $region34: #{dqn_forward.2} parent=11 // pred_check_branch
        %223 = sbr.rel (%p221) target = $region36
      $region35: #{dqn_forward.2} parent=11 // pred_region
        _
      $region36: #{dqn_forward.2} parent=11 // pred_fallthru
        _
    $region12: #{dqn_forward.2} parent=5 // pred_fallthru
      _
    %p224 = scmp.lt.s32.totalorder %s13, 2
    // Predicated region
    $region37: #{dqn_forward.2} parent=5 // pred_check
      %p225 = pneg %p224
    $region38: #{dqn_forward.2} parent=5 // pred_check_branch
      %227 = sbr.rel (%p225) target = $region40
    $region39: #{dqn_forward.2} parent=5 // pred_region
      // Predicated region
      $region41: #{dqn_forward.2} parent=39 // pred_check
        %p228 = pneg %p33
      $region42: #{dqn_forward.2} parent=39 // pred_check_branch
        %230 = sbr.rel (%p228) target = $region44
      $region43: #{dqn_forward.2} parent=39 // pred_region
        %p231 = scmp.lt.s32.totalorder %s13, 1
        %s232 = scalar_select %p231, %s13, 1
        %s233 = smul.addr %s232, 26
        %s234 = smul.addr %s233, 4
        %s235 = scalar_lea.vmem %s0, %s234
      $region44: #{dqn_forward.2} parent=39 // pred_fallthru
        _
    $region40: #{dqn_forward.2} parent=5 // pred_fallthru
      _
    %p236 = scmp.le.s32.totalorder 1, %s13
    %p237 = scmp.lt.s32.totalorder %s13, 3
    %p238 = pnand %p236, %p237
    %p239 = pneg %p238
    // Predicated region
    $region45: #{dqn_forward.2} parent=5 // pred_check
      _
    $region46: #{dqn_forward.2} parent=5 // pred_check_branch
      %241 = sbr.rel (%p238) target = $region48
    $region47: #{dqn_forward.2} parent=5 // pred_region
      %s242 = ssub.s32 %s13, 1
      %p243 = scmp.lt.s32.totalorder %s18, 1
      %s244 = scalar_select %p243, %s18, 1
      %s245 = smul.addr %s244, 26
      %s246 = smul.addr %s245, 4
      %s247 = scalar_lea.vmem %s0, %s246
      %p248 = pneg %p39
      %p249 = pneg %p36
      %p250 = pneg %p60
      %p251 = pneg %p57
      %p252 = pneg %p81
      %p253 = pneg %p78
      %p254 = pneg %p102
      %p255 = pneg %p99
      %p256 = pneg %p123
      %p257 = pneg %p120
      %p258 = pneg %p144
      %p259 = pneg %p141
      %p260 = pneg %p165
      %p261 = pneg %p162
      %p262 = pneg %p191
      %p263 = pneg %p188
      %p264 = scmp.lt.s32.totalorder %s18, 1
      %s265 = scalar_select %p264, %s18, 1
      %s266 = smul.addr %s265, 7
      %s267 = smul.addr %s266, 4
      %s268 = scalar_lea.vmem %s7, %s267
      %p269 = scmp.lt.s32.totalorder %s18, 1
      %s270 = scalar_select %p269, %s18, 1
      %s271 = smul.addr %s270, 26
      %s272 = smul.addr %s271, 4
      %s273 = scalar_lea.vmem %s0, %s272
      %p274 = scmp.lt.s32.totalorder %s18, 1
      %s275 = scalar_select %p274, %s18, 1
      %s276 = smul.addr %s275, 7
      %s277 = smul.addr %s276, 4
      %s278 = scalar_lea.vmem %s7, %s277
      %v280 = vld [vmem:[%s273] sm:$0xff]
      %v281 = vld [vmem:[%s273 + $0x8] sm:$0xff]
      %v282 = vld [vmem:[%s273 + $0x10] sm:$0xff]
      %v283 = vld [vmem:[%s273 + $0x18] sm:$0xff]
      %v284 = vld [vmem:[%s273 + $0x20] sm:$0xff]
      %v285 = vld [vmem:[%s273 + $0x28] sm:$0xff]
      %v286 = vld [vmem:[%s273 + $0x30] sm:$0xff]
      %v287 = vld [vmem:[%s273 + $0x38] sm:$0xff]
      %v288 = vld [vmem:[%s273 + $0x40] sm:$0xff]
      %v289 = vld [vmem:[%s273 + $0x48] sm:$0xff]
      %v290 = vld [vmem:[%s273 + $0x50] sm:$0xff]
      %v291 = vld [vmem:[%s273 + $0x58] sm:$0xff]
      %v292 = vld [vmem:[%s273 + $0x60] sm:$0xff]
      %v293 = vld [vmem:[%s1] sm:$0xf]
      %v294 = vld [vmem:[%s1 + $0x4] sm:$0xf]
      %v295 = vld [vmem:[%s1 + $0x8] sm:$0xf]
      %v296 = vld [vmem:[%s1 + $0xc] sm:$0xf]
      %v297 = vld [vmem:[%s1 + $0x10] sm:$0xf]
      %v298 = vld [vmem:[%s1 + $0x14] sm:$0xf]
      %v299 = vld [vmem:[%s1 + $0x18] sm:$0xf]
      %v300 = vld [vmem:[%s1 + $0x1c] sm:$0xf]
      %v301 = vld [vmem:[%s1 + $0x20] sm:$0xf]
      %v302 = vld [vmem:[%s1 + $0x24] sm:$0xf]
      %v303 = vld [vmem:[%s1 + $0x28] sm:$0xf]
      %v304 = vld [vmem:[%s1 + $0x2c] sm:$0xf]
      %v305 = vld [vmem:[%s1 + $0x30] sm:$0xf]
      %v306 = vld [vmem:[%s1 + $0x34] sm:$0xf]
      %v307 = vld [vmem:[%s1 + $0x38] sm:$0xf]
      %v308 = vld [vmem:[%s1 + $0x3c] sm:$0xf]
      %v309 = vld [vmem:[%s1 + $0x40] sm:$0xf]
      %v310 = vld [vmem:[%s1 + $0x44] sm:$0xf]
      %v311 = vld [vmem:[%s2] sm:$0x1]
      %v313 = vlaneseq
      %v314 = vshrl.u32 %v313, 7
      %v315 = vsub.s32 0, %v314
      %v316 = vrot.slane %v311, %v315
      %v331 = vunpack.c.l.b16 %v280
      %v332 = vunpack.c.h.b16 %v280
      %v333 = vunpack.c.l.b16 %v281
      %v334 = vunpack.c.h.b16 %v281
      %v335 = vunpack.c.l.b16 %v282
      %v336 = vunpack.c.h.b16 %v282
      %v337 = vunpack.c.l.b16 %v283
      %v338 = vunpack.c.h.b16 %v283
      %v339 = vunpack.c.l.b16 %v284
      %v340 = vunpack.c.h.b16 %v284
      %v341 = vunpack.c.l.b16 %v285
      %v342 = vunpack.c.h.b16 %v285
      %v343 = vunpack.c.l.b16 %v286
      %v344 = vunpack.c.h.b16 %v286
      %v345 = vunpack.c.l.b16 %v287
      %v346 = vunpack.c.h.b16 %v287
      %v347 = vunpack.c.l.b16 %v288
      %v348 = vunpack.c.h.b16 %v288
      %v349 = vunpack.c.l.b16 %v289
      %v350 = vunpack.c.h.b16 %v289
      %v351 = vunpack.c.l.b16 %v290
      %v352 = vunpack.c.h.b16 %v290
      %v353 = vunpack.c.l.b16 %v291
      %v354 = vunpack.c.h.b16 %v291
      %v355 = vunpack.c.l.b16 %v292
      %v356 = vunpack.c.h.b16 %v292
      %v357 = vpack.c.b16 %v333, %v331
      %v358 = vpack.c.b16 %v334, %v332
      %v359 = vpack.c.b16 %v337, %v335
      %v360 = vpack.c.b16 %v338, %v336
      %v361 = vpack.c.b16 %v341, %v339
      %v362 = vpack.c.b16 %v342, %v340
      %v363 = vpack.c.b16 %v345, %v343
      %v364 = vpack.c.b16 %v346, %v344
      %v365 = vpack.c.b16 %v349, %v347
      %v366 = vpack.c.b16 %v350, %v348
      %v367 = vpack.c.b16 %v353, %v351
      %v368 = vpack.c.b16 %v354, %v352
      %v369 = vpack.c.b16 %v355, %v355
      %v370 = vpack.c.b16 %v356, %v356
      %v396 = vunpack.c.l.b16 %v293
      %v397 = vunpack.c.l.b16 %v294
      %v398 = vunpack.c.l.b16 %v295
      %v399 = vunpack.c.l.b16 %v296
      %v400 = vunpack.c.l.b16 %v297
      %v401 = vunpack.c.l.b16 %v298
      %v402 = vunpack.c.l.b16 %v299
      %v403 = vunpack.c.l.b16 %v300
      %v404 = vunpack.c.l.b16 %v301
      %v405 = vunpack.c.l.b16 %v302
      %v406 = vunpack.c.l.b16 %v303
      %v407 = vunpack.c.l.b16 %v304
      %v408 = vunpack.c.l.b16 %v305
      %v409 = vunpack.c.l.b16 %v306
      %v410 = vunpack.c.l.b16 %v307
      %v411 = vunpack.c.l.b16 %v308
      %v412 = vunpack.c.l.b16 %v309
      %v413 = vunpack.c.l.b16 %v310
      %v414 = vpack.c.b16 %v397, %v396
      %v415 = vpack.c.b16 %v399, %v398
      %v416 = vpack.c.b16 %v401, %v400
      %v417 = vpack.c.b16 %v403, %v402
      %v418 = vpack.c.b16 %v405, %v404
      %v419 = vpack.c.b16 %v407, %v406
      %v420 = vpack.c.b16 %v409, %v408
      %v421 = vpack.c.b16 %v411, %v410
      %v422 = vpack.c.b16 %v413, %v412
      %vm432 = vcmask 130048
      %v434 = vsel %vm432, %v358, 0
      %v437 = vsel %vm432, %v360, 0
      %v440 = vsel %vm432, %v362, 0
      %v443 = vsel %vm432, %v364, 0
      %v446 = vsel %vm432, %v366, 0
      %v449 = vsel %vm432, %v368, 0
      %v452 = vsel %vm432, %v370, 0
      %454 = vmatprep.subr.bf16.mxu0 0
      %455 = vmatpush1.bf16.msra.mxu0 %v421
      %456 = vmatprep.subr.bf16.mxu0 0
      %457 = vmatpush1.bf16.msra.mxu0 %v420
      %458 = vmatprep.subr.bf16.mxu0 0
      %459 = vmatpush1.bf16.msra.mxu0 %v419
      %460 = vmatprep.subr.bf16.mxu0 0
      %461 = vmatpush1.bf16.msra.mxu0 %v418
      %462 = vmatprep.subr.bf16.mxu0 0
      %463 = vmatpush1.bf16.msra.mxu0 %v417
      %464 = vmatprep.subr.bf16.mxu0 0
      %465 = vmatpush1.bf16.msra.mxu0 %v416
      %466 = vmatprep.subr.bf16.mxu0 0
      %467 = vmatpush1.bf16.msra.mxu0 %v415
      %468 = vmatprep.subr.bf16.mxu0 0
      %469 = vmatpush1.bf16.msra.mxu0 %v414
      %470 = vmatprep.subr.bf16.mxu0 0
      %471 = vmatpush2.bf16.msra.mxu0 0
      %472 = vmatprep.subr.bf16.mxu0 0
      %473 = vmatpush2.bf16.msra.mxu0 0
      %474 = vmatprep.subr.bf16.mxu0 0
      %475 = vmatpush2.bf16.msra.mxu0 0
      %476 = vmatprep.subr.bf16.mxu0 0
      %477 = vmatpush2.bf16.msra.mxu0 0
      %478 = vmatprep.subr.bf16.mxu0 0
      %479 = vmatpush2.bf16.msra.mxu0 0
      %480 = vmatprep.subr.bf16.mxu0 0
      %481 = vmatpush2.bf16.msra.mxu0 0
      %482 = vmatprep.subr.bf16.mxu0 0
      %483 = vmatpush2.bf16.msra.mxu0 0
      %484 = vmatprep.subr.bf16.mxu0 0
      %485 = vmatpush2.bf16.msra.mxu0 %v422
      %486 = vmatprep.mubr.bf16.mxu0 %v434
      %487 = vmatmul.mubr.bf16.gmra.mxu0 %v357
      %v488 = vpop.f32.mrf.mxu0
      %v489 = vadd.f32 %v316, %v488
      %v490 = vpop.f32.mrf.mxu0
      %v491 = vpop.f32.mrf.mxu0
      %v492 = vadd.f32 %v316, %v491
      %v493 = vpop.f32.mrf.mxu0
      %494 = vmatprep.mubr.bf16.mxu0 %v437
      %495 = vmatmul.mubr.bf16.gmra.mxu0 %v359
      %v496 = vpop.f32.mrf.mxu0
      %v497 = vadd.f32 %v316, %v496
      %v498 = vpop.f32.mrf.mxu0
      %v499 = vpop.f32.mrf.mxu0
      %v500 = vadd.f32 %v316, %v499
      %v501 = vpop.f32.mrf.mxu0
      %502 = vmatprep.mubr.bf16.mxu0 %v440
      %503 = vmatmul.mubr.bf16.gmra.mxu0 %v361
      %v504 = vpop.f32.mrf.mxu0
      %v505 = vadd.f32 %v316, %v504
      %v506 = vpop.f32.mrf.mxu0
      %v507 = vpop.f32.mrf.mxu0
      %v508 = vadd.f32 %v316, %v507
      %v509 = vpop.f32.mrf.mxu0
      %510 = vmatprep.mubr.bf16.mxu0 %v443
      %511 = vmatmul.mubr.bf16.gmra.mxu0 %v363
      %v512 = vpop.f32.mrf.mxu0
      %v513 = vadd.f32 %v316, %v512
      %v514 = vpop.f32.mrf.mxu0
      %v515 = vpop.f32.mrf.mxu0
      %v516 = vadd.f32 %v316, %v515
      %v517 = vpop.f32.mrf.mxu0
      %518 = vmatprep.mubr.bf16.mxu0 %v446
      %519 = vmatmul.mubr.bf16.gmra.mxu0 %v365
      %v520 = vpop.f32.mrf.mxu0
      %v521 = vadd.f32 %v316, %v520
      %v522 = vpop.f32.mrf.mxu0
      %v523 = vpop.f32.mrf.mxu0
      %v524 = vadd.f32 %v316, %v523
      %v525 = vpop.f32.mrf.mxu0
      %526 = vmatprep.mubr.bf16.mxu0 %v449
      %527 = vmatmul.mubr.bf16.gmra.mxu0 %v367
      %v528 = vpop.f32.mrf.mxu0
      %v529 = vadd.f32 %v316, %v528
      %v530 = vpop.f32.mrf.mxu0
      %v531 = vpop.f32.mrf.mxu0
      %v532 = vadd.f32 %v316, %v531
      %v533 = vpop.f32.mrf.mxu0
      %534 = vmatprep.mubr.bf16.mxu0 %v452
      %535 = vmatmul.mubr.bf16.gmra.mxu0 %v369
      %v536 = vpop.f32.mrf.mxu0
      %v537 = vadd.f32 %v316, %v536
      %v538 = vpop.f32.mrf.mxu0
      %v539 = vpop.f32.mrf.mxu0
      %v540 = vpop.f32.mrf.mxu0
      %541 = vdwg.mxu0
      %v542 = vmax.f32 %v489, 0.0
      %v543 = vmax.f32 %v492, 0.0
      %v544 = vmax.f32 %v497, 0.0
      %v545 = vmax.f32 %v500, 0.0
      %v546 = vmax.f32 %v505, 0.0
      %v547 = vmax.f32 %v508, 0.0
      %v548 = vmax.f32 %v513, 0.0
      %v549 = vmax.f32 %v516, 0.0
      %v550 = vmax.f32 %v521, 0.0
      %v551 = vmax.f32 %v524, 0.0
      %v552 = vmax.f32 %v529, 0.0
      %v553 = vmax.f32 %v532, 0.0
      %v554 = vmax.f32 %v537, 0.0
      %v555 = vpack.c.bf16 %v543, %v542
      %v556 = vpack.c.bf16 %v545, %v544
      %v557 = vpack.c.bf16 %v547, %v546
      %v558 = vpack.c.bf16 %v549, %v548
      %v559 = vpack.c.bf16 %v551, %v550
      %v560 = vpack.c.bf16 %v553, %v552
      %v561 = vpack.c.bf16 %v554, %v554
      %v562 = vld [vmem:[%s3] sm:$0xf]
      %v563 = vld [vmem:[%s3 + $0x4] sm:$0xf]
      %v564 = vld [vmem:[%s3 + $0x8] sm:$0xf]
      %v565 = vld [vmem:[%s3 + $0xc] sm:$0xf]
      %v566 = vld [vmem:[%s3 + $0x10] sm:$0xf]
      %v567 = vld [vmem:[%s3 + $0x14] sm:$0xf]
      %v568 = vld [vmem:[%s3 + $0x18] sm:$0xf]
      %v569 = vld [vmem:[%s3 + $0x1c] sm:$0xf]
      %v570 = vld [vmem:[%s3 + $0x20] sm:$0xf]
      %v571 = vld [vmem:[%s3 + $0x24] sm:$0xf]
      %v572 = vld [vmem:[%s3 + $0x28] sm:$0xf]
      %v573 = vld [vmem:[%s3 + $0x2c] sm:$0xf]
      %v574 = vld [vmem:[%s3 + $0x30] sm:$0xf]
      %v575 = vld [vmem:[%s3 + $0x34] sm:$0xf]
      %v576 = vld [vmem:[%s3 + $0x38] sm:$0xf]
      %v577 = vld [vmem:[%s3 + $0x3c] sm:$0xf]
      %s578 = scalar_lea.vmem %s3, 64
      %v579 = vld [vmem:[%s578] sm:$0xf]
      %v580 = vld [vmem:[%s578 + $0x4] sm:$0xf]
      %v581 = vld [vmem:[%s578 + $0x8] sm:$0xf]
      %v582 = vld [vmem:[%s578 + $0xc] sm:$0xf]
      %v583 = vld [vmem:[%s578 + $0x10] sm:$0xf]
      %v584 = vld [vmem:[%s578 + $0x14] sm:$0xf]
      %v585 = vld [vmem:[%s578 + $0x18] sm:$0xf]
      %v586 = vld [vmem:[%s578 + $0x1c] sm:$0xf]
      %v587 = vld [vmem:[%s578 + $0x20] sm:$0xf]
      %v588 = vld [vmem:[%s578 + $0x24] sm:$0xf]
      %v589 = vld [vmem:[%s578 + $0x28] sm:$0xf]
      %v590 = vld [vmem:[%s578 + $0x2c] sm:$0xf]
      %v591 = vld [vmem:[%s578 + $0x30] sm:$0xf]
      %v592 = vld [vmem:[%s578 + $0x34] sm:$0xf]
      %v593 = vld [vmem:[%s578 + $0x38] sm:$0xf]
      %v594 = vld [vmem:[%s578 + $0x3c] sm:$0xf]
      %vm595 = vsmask.f32 7424
      %v597 = vshrl.u32 %v555, 16
      %v599 = vshll.u32 %v555, 16
      %v601 = vrot.slane %v599, 1
      %v602 = vor.u32 %v597, %v601
      %v604 = vshll.u32 %v556, 16
      %v606 = vrot.slane %v604, 1
      %v607 = vsel %vm595, %v602, %v606
      %v608 = vshrl.u32 %v556, 16
      %v610 = vor.u32 %v608, %v606
      %v612 = vshll.u32 %v557, 16
      %v614 = vrot.slane %v612, 1
      %v615 = vsel %vm595, %v610, %v614
      %v616 = vshrl.u32 %v557, 16
      %v618 = vor.u32 %v616, %v614
      %v620 = vshll.u32 %v558, 16
      %v622 = vrot.slane %v620, 1
      %v623 = vsel %vm595, %v618, %v622
      %v624 = vshrl.u32 %v558, 16
      %v626 = vor.u32 %v624, %v622
      %v628 = vshll.u32 %v559, 16
      %v630 = vrot.slane %v628, 1
      %v631 = vsel %vm595, %v626, %v630
      %v632 = vshrl.u32 %v559, 16
      %v634 = vor.u32 %v632, %v630
      %v636 = vshll.u32 %v560, 16
      %v638 = vrot.slane %v636, 1
      %v639 = vsel %vm595, %v634, %v638
      %v640 = vshrl.u32 %v560, 16
      %v642 = vor.u32 %v640, %v638
      %v665 = vunpack.c.l.b16 %v579
      %v666 = vunpack.c.l.b16 %v580
      %v667 = vunpack.c.l.b16 %v581
      %v668 = vunpack.c.l.b16 %v582
      %v669 = vunpack.c.l.b16 %v583
      %v670 = vunpack.c.l.b16 %v584
      %v671 = vunpack.c.l.b16 %v585
      %v672 = vunpack.c.l.b16 %v586
      %v673 = vunpack.c.l.b16 %v587
      %v674 = vunpack.c.l.b16 %v588
      %v675 = vunpack.c.l.b16 %v589
      %v676 = vunpack.c.l.b16 %v590
      %v677 = vunpack.c.l.b16 %v591
      %v678 = vunpack.c.l.b16 %v592
      %v679 = vunpack.c.l.b16 %v593
      %v680 = vunpack.c.l.b16 %v594
      %v681 = vpack.c.b16 %v666, %v665
      %v682 = vpack.c.b16 %v668, %v667
      %v683 = vpack.c.b16 %v670, %v669
      %v684 = vpack.c.b16 %v672, %v671
      %v685 = vpack.c.b16 %v674, %v673
      %v686 = vpack.c.b16 %v676, %v675
      %v687 = vpack.c.b16 %v678, %v677
      %v688 = vpack.c.b16 %v680, %v679
      %697 = vmatprep.subr.bf16.mxu0 0
      %698 = vmatpush1.bf16.msra.mxu0 %v688
      %699 = vmatprep.subr.bf16.mxu0 0
      %700 = vmatpush1.bf16.msra.mxu0 %v687
      %701 = vmatprep.subr.bf16.mxu0 0
      %702 = vmatpush1.bf16.msra.mxu0 %v686
      %703 = vmatprep.subr.bf16.mxu0 0
      %704 = vmatpush1.bf16.msra.mxu0 %v685
      %705 = vmatprep.subr.bf16.mxu0 0
      %706 = vmatpush1.bf16.msra.mxu0 %v684
      %707 = vmatprep.subr.bf16.mxu0 0
      %708 = vmatpush1.bf16.msra.mxu0 %v683
      %709 = vmatprep.subr.bf16.mxu0 0
      %710 = vmatpush1.bf16.msra.mxu0 %v682
      %711 = vmatprep.subr.bf16.mxu0 0
      %712 = vmatpush1.bf16.msra.mxu0 %v681
      %713 = vmatprep.subr.bf16.mxu0 0
      %714 = vmatpush2.bf16.msra.mxu0 0
      %715 = vmatprep.subr.bf16.mxu0 0
      %716 = vmatpush2.bf16.msra.mxu0 0
      %717 = vmatprep.subr.bf16.mxu0 0
      %718 = vmatpush2.bf16.msra.mxu0 0
      %719 = vmatprep.subr.bf16.mxu0 0
      %720 = vmatpush2.bf16.msra.mxu0 0
      %721 = vmatprep.subr.bf16.mxu0 0
      %722 = vmatpush2.bf16.msra.mxu0 0
      %723 = vmatprep.subr.bf16.mxu0 0
      %724 = vmatpush2.bf16.msra.mxu0 0
      %725 = vmatprep.subr.bf16.mxu0 0
      %726 = vmatpush2.bf16.msra.mxu0 0
      %727 = vmatprep.subr.bf16.mxu0 0
      %728 = vmatpush2.bf16.msra.mxu0 0
      %729 = vmatprep.mubr.bf16.mxu0 0
      %730 = vmatmul.mubr.bf16.gmra.mxu0 %v607
      %v731 = vpop.f32.mrf.mxu0
      %v732 = vadd.f32 0.0, %v731
      %v733 = vpop.f32.mrf.mxu0
      %v734 = vpop.f32.mrf.mxu0
      %v735 = vadd.f32 0.0, %v734
      %v736 = vpop.f32.mrf.mxu0
      %737 = vmatprep.mubr.bf16.mxu0 0
      %738 = vmatmul.mubr.bf16.gmra.mxu0 %v615
      %v739 = vpop.f32.mrf.mxu0
      %v740 = vadd.f32 0.0, %v739
      %v741 = vpop.f32.mrf.mxu0
      %v742 = vpop.f32.mrf.mxu0
      %v743 = vadd.f32 0.0, %v742
      %v744 = vpop.f32.mrf.mxu0
      %745 = vmatprep.mubr.bf16.mxu0 0
      %746 = vmatmul.mubr.bf16.gmra.mxu0 %v623
      %v747 = vpop.f32.mrf.mxu0
      %v748 = vadd.f32 0.0, %v747
      %v749 = vpop.f32.mrf.mxu0
      %v750 = vpop.f32.mrf.mxu0
      %v751 = vadd.f32 0.0, %v750
      %v752 = vpop.f32.mrf.mxu0
      %753 = vmatprep.mubr.bf16.mxu0 0
      %754 = vmatmul.mubr.bf16.gmra.mxu0 %v631
      %v755 = vpop.f32.mrf.mxu0
      %v756 = vadd.f32 0.0, %v755
      %v757 = vpop.f32.mrf.mxu0
      %v758 = vpop.f32.mrf.mxu0
      %v759 = vadd.f32 0.0, %v758
      %v760 = vpop.f32.mrf.mxu0
      %761 = vmatprep.mubr.bf16.mxu0 0
      %762 = vmatmul.mubr.bf16.gmra.mxu0 %v639
      %v763 = vpop.f32.mrf.mxu0
      %v764 = vadd.f32 0.0, %v763
      %v765 = vpop.f32.mrf.mxu0
      %v766 = vpop.f32.mrf.mxu0
      %v767 = vadd.f32 0.0, %v766
      %v768 = vpop.f32.mrf.mxu0
      %769 = vmatprep.mubr.bf16.mxu0 0
      %770 = vmatmul.mubr.bf16.gmra.mxu0 %v642
      %v771 = vpop.f32.mrf.mxu0
      %v772 = vadd.f32 0.0, %v771
      %v773 = vpop.f32.mrf.mxu0
      %v774 = vpop.f32.mrf.mxu0
      %v775 = vadd.f32 0.0, %v774
      %v776 = vpop.f32.mrf.mxu0
      %777 = vdwg.mxu0
      %v794 = vunpack.c.l.b16 %v562
      %v795 = vunpack.c.l.b16 %v563
      %v796 = vunpack.c.l.b16 %v564
      %v797 = vunpack.c.l.b16 %v565
      %v798 = vunpack.c.l.b16 %v566
      %v799 = vunpack.c.l.b16 %v567
      %v800 = vunpack.c.l.b16 %v568
      %v801 = vunpack.c.l.b16 %v569
      %v802 = vunpack.c.l.b16 %v570
      %v803 = vunpack.c.l.b16 %v571
      %v804 = vunpack.c.l.b16 %v572
      %v805 = vunpack.c.l.b16 %v573
      %v806 = vunpack.c.l.b16 %v574
      %v807 = vunpack.c.l.b16 %v575
      %v808 = vunpack.c.l.b16 %v576
      %v809 = vunpack.c.l.b16 %v577
      %v810 = vpack.c.b16 %v795, %v794
      %v811 = vpack.c.b16 %v797, %v796
      %v812 = vpack.c.b16 %v799, %v798
      %v813 = vpack.c.b16 %v801, %v800
      %v814 = vpack.c.b16 %v803, %v802
      %v815 = vpack.c.b16 %v805, %v804
      %v816 = vpack.c.b16 %v807, %v806
      %v817 = vpack.c.b16 %v809, %v808
      %826 = vmatprep.subr.bf16.mxu0 0
      %827 = vmatpush1.bf16.msra.mxu0 %v817
      %828 = vmatprep.subr.bf16.mxu0 0
      %829 = vmatpush1.bf16.msra.mxu0 %v816
      %830 = vmatprep.subr.bf16.mxu0 0
      %831 = vmatpush1.bf16.msra.mxu0 %v815
      %832 = vmatprep.subr.bf16.mxu0 0
      %833 = vmatpush1.bf16.msra.mxu0 %v814
      %834 = vmatprep.subr.bf16.mxu0 0
      %835 = vmatpush1.bf16.msra.mxu0 %v813
      %836 = vmatprep.subr.bf16.mxu0 0
      %837 = vmatpush1.bf16.msra.mxu0 %v812
      %838 = vmatprep.subr.bf16.mxu0 0
      %839 = vmatpush1.bf16.msra.mxu0 %v811
      %840 = vmatprep.subr.bf16.mxu0 0
      %841 = vmatpush1.bf16.msra.mxu0 %v810
      %842 = vmatprep.subr.bf16.mxu0 0
      %843 = vmatpush2.bf16.msra.mxu0 0
      %844 = vmatprep.subr.bf16.mxu0 0
      %845 = vmatpush2.bf16.msra.mxu0 0
      %846 = vmatprep.subr.bf16.mxu0 0
      %847 = vmatpush2.bf16.msra.mxu0 0
      %848 = vmatprep.subr.bf16.mxu0 0
      %849 = vmatpush2.bf16.msra.mxu0 0
      %850 = vmatprep.subr.bf16.mxu0 0
      %851 = vmatpush2.bf16.msra.mxu0 0
      %852 = vmatprep.subr.bf16.mxu0 0
      %853 = vmatpush2.bf16.msra.mxu0 0
      %854 = vmatprep.subr.bf16.mxu0 0
      %855 = vmatpush2.bf16.msra.mxu0 0
      %856 = vmatprep.subr.bf16.mxu0 0
      %857 = vmatpush2.bf16.msra.mxu0 0
      %858 = vmatprep.mubr.bf16.mxu0 0
      %859 = vmatmul.mubr.bf16.gmra.mxu0 %v555
      %v860 = vpop.f32.mrf.mxu0
      %v861 = vadd.f32 %v732, %v860
      %v862 = vpop.f32.mrf.mxu0
      %v863 = vpop.f32.mrf.mxu0
      %v864 = vadd.f32 %v735, %v863
      %v865 = vpop.f32.mrf.mxu0
      %866 = vmatprep.mubr.bf16.mxu0 0
      %867 = vmatmul.mubr.bf16.gmra.mxu0 %v556
      %v868 = vpop.f32.mrf.mxu0
      %v869 = vadd.f32 %v740, %v868
      %v870 = vpop.f32.mrf.mxu0
      %v871 = vpop.f32.mrf.mxu0
      %v872 = vadd.f32 %v743, %v871
      %v873 = vpop.f32.mrf.mxu0
      %874 = vmatprep.mubr.bf16.mxu0 0
      %875 = vmatmul.mubr.bf16.gmra.mxu0 %v557
      %v876 = vpop.f32.mrf.mxu0
      %v877 = vadd.f32 %v748, %v876
      %v878 = vpop.f32.mrf.mxu0
      %v879 = vpop.f32.mrf.mxu0
      %v880 = vadd.f32 %v751, %v879
      %v881 = vpop.f32.mrf.mxu0
      %882 = vmatprep.mubr.bf16.mxu0 0
      %883 = vmatmul.mubr.bf16.gmra.mxu0 %v558
      %v884 = vpop.f32.mrf.mxu0
      %v885 = vadd.f32 %v756, %v884
      %v886 = vpop.f32.mrf.mxu0
      %v887 = vpop.f32.mrf.mxu0
      %v888 = vadd.f32 %v759, %v887
      %v889 = vpop.f32.mrf.mxu0
      %890 = vmatprep.mubr.bf16.mxu0 0
      %891 = vmatmul.mubr.bf16.gmra.mxu0 %v559
      %v892 = vpop.f32.mrf.mxu0
      %v893 = vadd.f32 %v764, %v892
      %v894 = vpop.f32.mrf.mxu0
      %v895 = vpop.f32.mrf.mxu0
      %v896 = vadd.f32 %v767, %v895
      %v897 = vpop.f32.mrf.mxu0
      %898 = vmatprep.mubr.bf16.mxu0 0
      %899 = vmatmul.mubr.bf16.gmra.mxu0 %v560
      %v900 = vpop.f32.mrf.mxu0
      %v901 = vadd.f32 %v772, %v900
      %v902 = vpop.f32.mrf.mxu0
      %v903 = vpop.f32.mrf.mxu0
      %v904 = vadd.f32 %v775, %v903
      %v905 = vpop.f32.mrf.mxu0
      %906 = vdwg.mxu0
      %s907 = scalar_lea.vmem %s3, 128
      %v908 = vld [vmem:[%s907] sm:$0xf]
      %v909 = vld [vmem:[%s907 + $0x4] sm:$0xf]
      %v910 = vld [vmem:[%s907 + $0x8] sm:$0xf]
      %v911 = vld [vmem:[%s907 + $0xc] sm:$0xf]
      %v912 = vld [vmem:[%s907 + $0x10] sm:$0xf]
      %v913 = vld [vmem:[%s907 + $0x14] sm:$0xf]
      %v914 = vld [vmem:[%s907 + $0x18] sm:$0xf]
      %v915 = vld [vmem:[%s907 + $0x1c] sm:$0xf]
      %v916 = vld [vmem:[%s907 + $0x20] sm:$0xf]
      %v917 = vld [vmem:[%s907 + $0x24] sm:$0xf]
      %v918 = vld [vmem:[%s907 + $0x28] sm:$0xf]
      %v919 = vld [vmem:[%s907 + $0x2c] sm:$0xf]
      %v920 = vld [vmem:[%s907 + $0x30] sm:$0xf]
      %v921 = vld [vmem:[%s907 + $0x34] sm:$0xf]
      %v922 = vld [vmem:[%s907 + $0x38] sm:$0xf]
      %v923 = vld [vmem:[%s907 + $0x3c] sm:$0xf]
      %vm931 = vcmask 1042432
      %v932 = vrot.slane %v555, 5
      %v933 = vrot.slane %v556, 5
      %v934 = vsel %vm931, %v932, %v933
      %v935 = vrot.slane %v557, 5
      %v936 = vsel %vm931, %v933, %v935
      %v937 = vrot.slane %v558, 5
      %v938 = vsel %vm931, %v935, %v937
      %v939 = vrot.slane %v559, 5
      %v940 = vsel %vm931, %v937, %v939
      %v941 = vrot.slane %v560, 5
      %v942 = vsel %vm931, %v939, %v941
      %v943 = vrot.slane %v561, 5
      %v944 = vsel %vm931, %v941, %v943
      %v967 = vunpack.c.l.b16 %v908
      %v968 = vunpack.c.l.b16 %v909
      %v969 = vunpack.c.l.b16 %v910
      %v970 = vunpack.c.l.b16 %v911
      %v971 = vunpack.c.l.b16 %v912
      %v972 = vunpack.c.l.b16 %v913
      %v973 = vunpack.c.l.b16 %v914
      %v974 = vunpack.c.l.b16 %v915
      %v975 = vunpack.c.l.b16 %v916
      %v976 = vunpack.c.l.b16 %v917
      %v977 = vunpack.c.l.b16 %v918
      %v978 = vunpack.c.l.b16 %v919
      %v979 = vunpack.c.l.b16 %v920
      %v980 = vunpack.c.l.b16 %v921
      %v981 = vunpack.c.l.b16 %v922
      %v982 = vunpack.c.l.b16 %v923
      %v983 = vpack.c.b16 %v968, %v967
      %v984 = vpack.c.b16 %v970, %v969
      %v985 = vpack.c.b16 %v972, %v971
      %v986 = vpack.c.b16 %v974, %v973
      %v987 = vpack.c.b16 %v976, %v975
      %v988 = vpack.c.b16 %v978, %v977
      %v989 = vpack.c.b16 %v980, %v979
      %v990 = vpack.c.b16 %v982, %v981
      %999 = vmatprep.subr.bf16.mxu0 0
      %1000 = vmatpush1.bf16.msra.mxu0 %v990
      %1001 = vmatprep.subr.bf16.mxu0 0
      %1002 = vmatpush1.bf16.msra.mxu0 %v989
      %1003 = vmatprep.subr.bf16.mxu0 0
      %1004 = vmatpush1.bf16.msra.mxu0 %v988
      %1005 = vmatprep.subr.bf16.mxu0 0
      %1006 = vmatpush1.bf16.msra.mxu0 %v987
      %1007 = vmatprep.subr.bf16.mxu0 0
      %1008 = vmatpush1.bf16.msra.mxu0 %v986
      %1009 = vmatprep.subr.bf16.mxu0 0
      %1010 = vmatpush1.bf16.msra.mxu0 %v985
      %1011 = vmatprep.subr.bf16.mxu0 0
      %1012 = vmatpush1.bf16.msra.mxu0 %v984
      %1013 = vmatprep.subr.bf16.mxu0 0
      %1014 = vmatpush1.bf16.msra.mxu0 %v983
      %1015 = vmatprep.subr.bf16.mxu0 0
      %1016 = vmatpush2.bf16.msra.mxu0 0
      %1017 = vmatprep.subr.bf16.mxu0 0
      %1018 = vmatpush2.bf16.msra.mxu0 0
      %1019 = vmatprep.subr.bf16.mxu0 0
      %1020 = vmatpush2.bf16.msra.mxu0 0
      %1021 = vmatprep.subr.bf16.mxu0 0
      %1022 = vmatpush2.bf16.msra.mxu0 0
      %1023 = vmatprep.subr.bf16.mxu0 0
      %1024 = vmatpush2.bf16.msra.mxu0 0
      %1025 = vmatprep.subr.bf16.mxu0 0
      %1026 = vmatpush2.bf16.msra.mxu0 0
      %1027 = vmatprep.subr.bf16.mxu0 0
      %1028 = vmatpush2.bf16.msra.mxu0 0
      %1029 = vmatprep.subr.bf16.mxu0 0
      %1030 = vmatpush2.bf16.msra.mxu0 0
      %1031 = vmatprep.mubr.bf16.mxu0 0
      %1032 = vmatmul.mubr.bf16.gmra.mxu0 %v934
      %v1033 = vpop.f32.mrf.mxu0
      %v1034 = vadd.f32 0.0, %v1033
      %v1035 = vpop.f32.mrf.mxu0
      %v1036 = vpop.f32.mrf.mxu0
      %v1037 = vadd.f32 0.0, %v1036
      %v1038 = vpop.f32.mrf.mxu0
      %1039 = vmatprep.mubr.bf16.mxu0 0
      %1040 = vmatmul.mubr.bf16.gmra.mxu0 %v936
      %v1041 = vpop.f32.mrf.mxu0
      %v1042 = vadd.f32 0.0, %v1041
      %v1043 = vpop.f32.mrf.mxu0
      %v1044 = vpop.f32.mrf.mxu0
      %v1045 = vadd.f32 0.0, %v1044
      %v1046 = vpop.f32.mrf.mxu0
      %1047 = vmatprep.mubr.bf16.mxu0 0
      %1048 = vmatmul.mubr.bf16.gmra.mxu0 %v938
      %v1049 = vpop.f32.mrf.mxu0
      %v1050 = vadd.f32 0.0, %v1049
      %v1051 = vpop.f32.mrf.mxu0
      %v1052 = vpop.f32.mrf.mxu0
      %v1053 = vadd.f32 0.0, %v1052
      %v1054 = vpop.f32.mrf.mxu0
      %1055 = vmatprep.mubr.bf16.mxu0 0
      %1056 = vmatmul.mubr.bf16.gmra.mxu0 %v940
      %v1057 = vpop.f32.mrf.mxu0
      %v1058 = vadd.f32 0.0, %v1057
      %v1059 = vpop.f32.mrf.mxu0
      %v1060 = vpop.f32.mrf.mxu0
      %v1061 = vadd.f32 0.0, %v1060
      %v1062 = vpop.f32.mrf.mxu0
      %1063 = vmatprep.mubr.bf16.mxu0 0
      %1064 = vmatmul.mubr.bf16.gmra.mxu0 %v942
      %v1065 = vpop.f32.mrf.mxu0
      %v1066 = vadd.f32 0.0, %v1065
      %v1067 = vpop.f32.mrf.mxu0
      %v1068 = vpop.f32.mrf.mxu0
      %v1069 = vadd.f32 0.0, %v1068
      %v1070 = vpop.f32.mrf.mxu0
      %1071 = vmatprep.mubr.bf16.mxu0 0
      %1072 = vmatmul.mubr.bf16.gmra.mxu0 %v944
      %v1073 = vpop.f32.mrf.mxu0
      %v1074 = vadd.f32 0.0, %v1073
      %v1075 = vpop.f32.mrf.mxu0
      %v1076 = vpop.f32.mrf.mxu0
      %v1077 = vadd.f32 0.0, %v1076
      %v1078 = vpop.f32.mrf.mxu0
      %1079 = vdwg.mxu0
      %v1080 = vadd.f32 %v861, %v1034
      %v1081 = vadd.f32 %v864, %v1037
      %v1082 = vadd.f32 %v869, %v1042
      %v1083 = vadd.f32 %v872, %v1045
      %v1084 = vadd.f32 %v877, %v1050
      %v1085 = vadd.f32 %v880, %v1053
      %v1086 = vadd.f32 %v885, %v1058
      %v1087 = vadd.f32 %v888, %v1061
      %v1088 = vadd.f32 %v893, %v1066
      %v1089 = vadd.f32 %v896, %v1069
      %v1090 = vadd.f32 %v901, %v1074
      %v1091 = vadd.f32 %v904, %v1077
      %s1092 = scalar_lea.vmem %s3, 192
      %v1093 = vld [vmem:[%s1092] sm:$0xf]
      %v1094 = vld [vmem:[%s1092 + $0x4] sm:$0xf]
      %v1095 = vld [vmem:[%s1092 + $0x8] sm:$0xf]
      %v1096 = vld [vmem:[%s1092 + $0xc] sm:$0xf]
      %v1097 = vld [vmem:[%s1092 + $0x10] sm:$0xf]
      %v1098 = vld [vmem:[%s1092 + $0x14] sm:$0xf]
      %v1099 = vld [vmem:[%s1092 + $0x18] sm:$0xf]
      %v1100 = vld [vmem:[%s1092 + $0x1c] sm:$0xf]
      %v1101 = vld [vmem:[%s1092 + $0x20] sm:$0xf]
      %v1102 = vld [vmem:[%s1092 + $0x24] sm:$0xf]
      %v1103 = vld [vmem:[%s1092 + $0x28] sm:$0xf]
      %v1104 = vld [vmem:[%s1092 + $0x2c] sm:$0xf]
      %v1105 = vld [vmem:[%s1092 + $0x30] sm:$0xf]
      %v1106 = vld [vmem:[%s1092 + $0x34] sm:$0xf]
      %v1107 = vld [vmem:[%s1092 + $0x38] sm:$0xf]
      %v1108 = vld [vmem:[%s1092 + $0x3c] sm:$0xf]
      %vm1109 = vsmask.f32 2304
      %v1110 = vrot.slane %v597, 5
      %v1111 = vrot.slane %v599, 6
      %v1112 = vor.u32 %v1110, %v1111
      %v1113 = vrot.slane %v608, 5
      %v1114 = vrot.slane %v604, 6
      %v1115 = vor.u32 %v1113, %v1114
      %v1116 = vsel %vm1109, %v1112, %v1115
      %v1117 = vrot.slane %v616, 5
      %v1118 = vrot.slane %v612, 6
      %v1119 = vor.u32 %v1117, %v1118
      %v1120 = vsel %vm1109, %v1115, %v1119
      %v1121 = vrot.slane %v624, 5
      %v1122 = vrot.slane %v620, 6
      %v1123 = vor.u32 %v1121, %v1122
      %v1124 = vsel %vm1109, %v1119, %v1123
      %v1125 = vrot.slane %v632, 5
      %v1126 = vrot.slane %v628, 6
      %v1127 = vor.u32 %v1125, %v1126
      %v1128 = vsel %vm1109, %v1123, %v1127
      %v1129 = vrot.slane %v640, 5
      %v1130 = vrot.slane %v636, 6
      %v1131 = vor.u32 %v1129, %v1130
      %v1132 = vsel %vm1109, %v1127, %v1131
      %v1134 = vshrl.u32 %v561, 16
      %v1136 = vrot.slane %v1134, 5
      %v1137 = vshll.u32 %v561, 16
      %v1139 = vrot.slane %v1137, 6
      %v1140 = vor.u32 %v1136, %v1139
      %v1141 = vsel %vm1109, %v1131, %v1140
      %v1164 = vunpack.c.l.b16 %v1093
      %v1165 = vunpack.c.l.b16 %v1094
      %v1166 = vunpack.c.l.b16 %v1095
      %v1167 = vunpack.c.l.b16 %v1096
      %v1168 = vunpack.c.l.b16 %v1097
      %v1169 = vunpack.c.l.b16 %v1098
      %v1170 = vunpack.c.l.b16 %v1099
      %v1171 = vunpack.c.l.b16 %v1100
      %v1172 = vunpack.c.l.b16 %v1101
      %v1173 = vunpack.c.l.b16 %v1102
      %v1174 = vunpack.c.l.b16 %v1103
      %v1175 = vunpack.c.l.b16 %v1104
      %v1176 = vunpack.c.l.b16 %v1105
      %v1177 = vunpack.c.l.b16 %v1106
      %v1178 = vunpack.c.l.b16 %v1107
      %v1179 = vunpack.c.l.b16 %v1108
      %v1180 = vpack.c.b16 %v1165, %v1164
      %v1181 = vpack.c.b16 %v1167, %v1166
      %v1182 = vpack.c.b16 %v1169, %v1168
      %v1183 = vpack.c.b16 %v1171, %v1170
      %v1184 = vpack.c.b16 %v1173, %v1172
      %v1185 = vpack.c.b16 %v1175, %v1174
      %v1186 = vpack.c.b16 %v1177, %v1176
      %v1187 = vpack.c.b16 %v1179, %v1178
      %1196 = vmatprep.subr.bf16.mxu0 0
      %1197 = vmatpush1.bf16.msra.mxu0 %v1187
      %1198 = vmatprep.subr.bf16.mxu0 0
      %1199 = vmatpush1.bf16.msra.mxu0 %v1186
      %1200 = vmatprep.subr.bf16.mxu0 0
      %1201 = vmatpush1.bf16.msra.mxu0 %v1185
      %1202 = vmatprep.subr.bf16.mxu0 0
      %1203 = vmatpush1.bf16.msra.mxu0 %v1184
      %1204 = vmatprep.subr.bf16.mxu0 0
      %1205 = vmatpush1.bf16.msra.mxu0 %v1183
      %1206 = vmatprep.subr.bf16.mxu0 0
      %1207 = vmatpush1.bf16.msra.mxu0 %v1182
      %1208 = vmatprep.subr.bf16.mxu0 0
      %1209 = vmatpush1.bf16.msra.mxu0 %v1181
      %1210 = vmatprep.subr.bf16.mxu0 0
      %1211 = vmatpush1.bf16.msra.mxu0 %v1180
      %1212 = vmatprep.subr.bf16.mxu0 0
      %1213 = vmatpush2.bf16.msra.mxu0 0
      %1214 = vmatprep.subr.bf16.mxu0 0
      %1215 = vmatpush2.bf16.msra.mxu0 0
      %1216 = vmatprep.subr.bf16.mxu0 0
      %1217 = vmatpush2.bf16.msra.mxu0 0
      %1218 = vmatprep.subr.bf16.mxu0 0
      %1219 = vmatpush2.bf16.msra.mxu0 0
      %1220 = vmatprep.subr.bf16.mxu0 0
      %1221 = vmatpush2.bf16.msra.mxu0 0
      %1222 = vmatprep.subr.bf16.mxu0 0
      %1223 = vmatpush2.bf16.msra.mxu0 0
      %1224 = vmatprep.subr.bf16.mxu0 0
      %1225 = vmatpush2.bf16.msra.mxu0 0
      %1226 = vmatprep.subr.bf16.mxu0 0
      %1227 = vmatpush2.bf16.msra.mxu0 0
      %1228 = vmatprep.mubr.bf16.mxu0 0
      %1229 = vmatmul.mubr.bf16.gmra.mxu0 %v1116
      %v1230 = vpop.f32.mrf.mxu0
      %v1231 = vadd.f32 0.0, %v1230
      %v1232 = vpop.f32.mrf.mxu0
      %v1233 = vpop.f32.mrf.mxu0
      %v1234 = vadd.f32 0.0, %v1233
      %v1235 = vpop.f32.mrf.mxu0
      %1236 = vmatprep.mubr.bf16.mxu0 0
      %1237 = vmatmul.mubr.bf16.gmra.mxu0 %v1120
      %v1238 = vpop.f32.mrf.mxu0
      %v1239 = vadd.f32 0.0, %v1238
      %v1240 = vpop.f32.mrf.mxu0
      %v1241 = vpop.f32.mrf.mxu0
      %v1242 = vadd.f32 0.0, %v1241
      %v1243 = vpop.f32.mrf.mxu0
      %1244 = vmatprep.mubr.bf16.mxu0 0
      %1245 = vmatmul.mubr.bf16.gmra.mxu0 %v1124
      %v1246 = vpop.f32.mrf.mxu0
      %v1247 = vadd.f32 0.0, %v1246
      %v1248 = vpop.f32.mrf.mxu0
      %v1249 = vpop.f32.mrf.mxu0
      %v1250 = vadd.f32 0.0, %v1249
      %v1251 = vpop.f32.mrf.mxu0
      %1252 = vmatprep.mubr.bf16.mxu0 0
      %1253 = vmatmul.mubr.bf16.gmra.mxu0 %v1128
      %v1254 = vpop.f32.mrf.mxu0
      %v1255 = vadd.f32 0.0, %v1254
      %v1256 = vpop.f32.mrf.mxu0
      %v1257 = vpop.f32.mrf.mxu0
      %v1258 = vadd.f32 0.0, %v1257
      %v1259 = vpop.f32.mrf.mxu0
      %1260 = vmatprep.mubr.bf16.mxu0 0
      %1261 = vmatmul.mubr.bf16.gmra.mxu0 %v1132
      %v1262 = vpop.f32.mrf.mxu0
      %v1263 = vadd.f32 0.0, %v1262
      %v1264 = vpop.f32.mrf.mxu0
      %v1265 = vpop.f32.mrf.mxu0
      %v1266 = vadd.f32 0.0, %v1265
      %v1267 = vpop.f32.mrf.mxu0
      %1268 = vmatprep.mubr.bf16.mxu0 0
      %1269 = vmatmul.mubr.bf16.gmra.mxu0 %v1141
      %v1270 = vpop.f32.mrf.mxu0
      %v1271 = vadd.f32 0.0, %v1270
      %v1272 = vpop.f32.mrf.mxu0
      %v1273 = vpop.f32.mrf.mxu0
      %v1274 = vadd.f32 0.0, %v1273
      %v1275 = vpop.f32.mrf.mxu0
      %1276 = vdwg.mxu0
      %v1277 = vadd.f32 %v1080, %v1231
      %v1278 = vadd.f32 %v1081, %v1234
      %v1279 = vadd.f32 %v1082, %v1239
      %v1280 = vadd.f32 %v1083, %v1242
      %v1281 = vadd.f32 %v1084, %v1247
      %v1282 = vadd.f32 %v1085, %v1250
      %v1283 = vadd.f32 %v1086, %v1255
      %v1284 = vadd.f32 %v1087, %v1258
      %v1285 = vadd.f32 %v1088, %v1263
      %v1286 = vadd.f32 %v1089, %v1266
      %v1287 = vadd.f32 %v1090, %v1271
      %v1288 = vadd.f32 %v1091, %v1274
      %v1289 = vld [vmem:[%s4] sm:$0x1]
      %v1291 = vlaneseq
      %v1292 = vshrl.u32 %v1291, 7
      %v1293 = vsub.s32 0, %v1292
      %v1294 = vrot.slane %v1289, %v1293
      %v1296 = vadd.f32 %v1277, %v1294
      %v1297 = vadd.f32 %v1278, %v1294
      %v1298 = vadd.f32 %v1279, %v1294
      %v1299 = vadd.f32 %v1280, %v1294
      %v1300 = vadd.f32 %v1281, %v1294
      %v1301 = vadd.f32 %v1282, %v1294
      %v1302 = vadd.f32 %v1283, %v1294
      %v1303 = vadd.f32 %v1284, %v1294
      %v1304 = vadd.f32 %v1285, %v1294
      %v1305 = vadd.f32 %v1286, %v1294
      %v1306 = vadd.f32 %v1287, %v1294
      %v1307 = vadd.f32 %v1288, %v1294
      %v1308 = vmax.f32 %v1296, 0.0
      %v1309 = vmax.f32 %v1297, 0.0
      %v1310 = vmax.f32 %v1298, 0.0
      %v1311 = vmax.f32 %v1299, 0.0
      %v1312 = vmax.f32 %v1300, 0.0
      %v1313 = vmax.f32 %v1301, 0.0
      %v1314 = vmax.f32 %v1302, 0.0
      %v1315 = vmax.f32 %v1303, 0.0
      %v1316 = vmax.f32 %v1304, 0.0
      %v1317 = vmax.f32 %v1305, 0.0
      %v1318 = vmax.f32 %v1306, 0.0
      %v1319 = vmax.f32 %v1307, 0.0
      %v1320 = vpack.c.bf16 %v1309, %v1308
      %v1321 = vpack.c.bf16 %v1311, %v1310
      %v1322 = vpack.c.bf16 %v1313, %v1312
      %v1323 = vpack.c.bf16 %v1315, %v1314
      %v1324 = vpack.c.bf16 %v1317, %v1316
      %v1325 = vpack.c.bf16 %v1319, %v1318
      %v1326 = vld [vmem:[%s5] sm:$0xf]
      %v1327 = vld [vmem:[%s5 + $0x4] sm:$0xf]
      %v1328 = vld [vmem:[%s5 + $0x8] sm:$0xf]
      %v1329 = vld [vmem:[%s5 + $0xc] sm:$0xf]
      %v1330 = vld [vmem:[%s5 + $0x10] sm:$0xf]
      %v1331 = vld [vmem:[%s5 + $0x14] sm:$0xf]
      %v1332 = vld [vmem:[%s5 + $0x18] sm:$0xf]
      %v1333 = vld [vmem:[%s5 + $0x1c] sm:$0xf]
      %s1334 = scalar_lea.vmem %s5, 32
      %v1335 = vld [vmem:[%s1334] sm:$0xf]
      %v1336 = vld [vmem:[%s1334 + $0x4] sm:$0xf]
      %v1337 = vld [vmem:[%s1334 + $0x8] sm:$0xf]
      %v1338 = vld [vmem:[%s1334 + $0xc] sm:$0xf]
      %v1339 = vld [vmem:[%s1334 + $0x10] sm:$0xf]
      %v1340 = vld [vmem:[%s1334 + $0x14] sm:$0xf]
      %v1341 = vld [vmem:[%s1334 + $0x18] sm:$0xf]
      %v1342 = vld [vmem:[%s1334 + $0x1c] sm:$0xf]
      %v1344 = vshrl.u32 %v1320, 16
      %v1346 = vshll.u32 %v1320, 16
      %v1348 = vrot.slane %v1346, 1
      %v1349 = vor.u32 %v1344, %v1348
      %v1351 = vshll.u32 %v1321, 16
      %v1353 = vrot.slane %v1351, 1
      %v1354 = vsel %vm595, %v1349, %v1353
      %v1355 = vshrl.u32 %v1321, 16
      %v1357 = vor.u32 %v1355, %v1353
      %v1359 = vshll.u32 %v1322, 16
      %v1361 = vrot.slane %v1359, 1
      %v1362 = vsel %vm595, %v1357, %v1361
      %v1363 = vshrl.u32 %v1322, 16
      %v1365 = vor.u32 %v1363, %v1361
      %v1367 = vshll.u32 %v1323, 16
      %v1369 = vrot.slane %v1367, 1
      %v1370 = vsel %vm595, %v1365, %v1369
      %v1371 = vshrl.u32 %v1323, 16
      %v1373 = vor.u32 %v1371, %v1369
      %v1375 = vshll.u32 %v1324, 16
      %v1377 = vrot.slane %v1375, 1
      %v1378 = vsel %vm595, %v1373, %v1377
      %v1379 = vshrl.u32 %v1324, 16
      %v1381 = vor.u32 %v1379, %v1377
      %v1390 = vunpack.c.l.b16 %v1335
      %v1391 = vunpack.c.l.b16 %v1336
      %v1392 = vunpack.c.l.b16 %v1337
      %v1393 = vunpack.c.l.b16 %v1338
      %v1394 = vunpack.c.l.b16 %v1339
      %v1395 = vunpack.c.l.b16 %v1340
      %v1396 = vunpack.c.l.b16 %v1341
      %v1397 = vunpack.c.l.b16 %v1342
      %v1398 = vpack.c.b16 %v1391, %v1390
      %v1399 = vpack.c.b16 %v1393, %v1392
      %v1400 = vpack.c.b16 %v1395, %v1394
      %v1401 = vpack.c.b16 %v1397, %v1396
      %vm1406 = vcmask 523264
      %v1408 = vsel %vm1406, %v1354, 0
      %v1411 = vsel %vm1406, %v1362, 0
      %v1414 = vsel %vm1406, %v1370, 0
      %v1417 = vsel %vm1406, %v1378, 0
      %v1420 = vsel %vm1406, %v1381, 0
      %1422 = vmatprep.subr.bf16.mxu0 0
      %1423 = vmatpush1.bf16.msra.mxu0 0
      %1424 = vmatprep.subr.bf16.mxu0 0
      %1425 = vmatpush1.bf16.msra.mxu0 0
      %1426 = vmatprep.subr.bf16.mxu0 0
      %1427 = vmatpush1.bf16.msra.mxu0 0
      %1428 = vmatprep.subr.bf16.mxu0 0
      %1429 = vmatpush1.bf16.msra.mxu0 0
      %1430 = vmatprep.subr.bf16.mxu0 0
      %1431 = vmatpush1.bf16.msra.mxu0 %v1401
      %1432 = vmatprep.subr.bf16.mxu0 0
      %1433 = vmatpush1.bf16.msra.mxu0 %v1400
      %1434 = vmatprep.subr.bf16.mxu0 0
      %1435 = vmatpush1.bf16.msra.mxu0 %v1399
      %1436 = vmatprep.subr.bf16.mxu0 0
      %1437 = vmatpush1.bf16.msra.mxu0 %v1398
      %1438 = vmatprep.subr.bf16.mxu0 0
      %1439 = vmatpush2.bf16.msra.mxu0 0
      %1440 = vmatprep.subr.bf16.mxu0 0
      %1441 = vmatpush2.bf16.msra.mxu0 0
      %1442 = vmatprep.subr.bf16.mxu0 0
      %1443 = vmatpush2.bf16.msra.mxu0 0
      %1444 = vmatprep.subr.bf16.mxu0 0
      %1445 = vmatpush2.bf16.msra.mxu0 0
      %1446 = vmatprep.subr.bf16.mxu0 0
      %1447 = vmatpush2.bf16.msra.mxu0 0
      %1448 = vmatprep.subr.bf16.mxu0 0
      %1449 = vmatpush2.bf16.msra.mxu0 0
      %1450 = vmatprep.subr.bf16.mxu0 0
      %1451 = vmatpush2.bf16.msra.mxu0 0
      %1452 = vmatprep.subr.bf16.mxu0 0
      %1453 = vmatpush2.bf16.msra.mxu0 0
      %1454 = vmatprep.mubr.bf16.mxu0 0
      %1455 = vmatmul.mubr.bf16.gmra.mxu0 %v1408
      %v1456 = vpop.f32.mrf.mxu0
      %v1457 = vadd.f32 0.0, %v1456
      %v1458 = vpop.f32.mrf.mxu0
      %v1459 = vpop.f32.mrf.mxu0
      %v1460 = vadd.f32 0.0, %v1459
      %v1461 = vpop.f32.mrf.mxu0
      %1462 = vmatprep.mubr.bf16.mxu0 0
      %1463 = vmatmul.mubr.bf16.gmra.mxu0 %v1411
      %v1464 = vpop.f32.mrf.mxu0
      %v1465 = vadd.f32 0.0, %v1464
      %v1466 = vpop.f32.mrf.mxu0
      %v1467 = vpop.f32.mrf.mxu0
      %v1468 = vadd.f32 0.0, %v1467
      %v1469 = vpop.f32.mrf.mxu0
      %1470 = vmatprep.mubr.bf16.mxu0 0
      %1471 = vmatmul.mubr.bf16.gmra.mxu0 %v1414
      %v1472 = vpop.f32.mrf.mxu0
      %v1473 = vadd.f32 0.0, %v1472
      %v1474 = vpop.f32.mrf.mxu0
      %v1475 = vpop.f32.mrf.mxu0
      %v1476 = vadd.f32 0.0, %v1475
      %v1477 = vpop.f32.mrf.mxu0
      %1478 = vmatprep.mubr.bf16.mxu0 0
      %1479 = vmatmul.mubr.bf16.gmra.mxu0 %v1417
      %v1480 = vpop.f32.mrf.mxu0
      %v1481 = vadd.f32 0.0, %v1480
      %v1482 = vpop.f32.mrf.mxu0
      %v1483 = vpop.f32.mrf.mxu0
      %v1484 = vadd.f32 0.0, %v1483
      %v1485 = vpop.f32.mrf.mxu0
      %1486 = vmatprep.mubr.bf16.mxu0 0
      %1487 = vmatmul.mubr.bf16.gmra.mxu0 %v1420
      %v1488 = vpop.f32.mrf.mxu0
      %v1489 = vadd.f32 0.0, %v1488
      %v1490 = vpop.f32.mrf.mxu0
      %v1491 = vpop.f32.mrf.mxu0
      %v1492 = vpop.f32.mrf.mxu0
      %1493 = vdwg.mxu0
      %v1502 = vunpack.c.l.b16 %v1326
      %v1503 = vunpack.c.l.b16 %v1327
      %v1504 = vunpack.c.l.b16 %v1328
      %v1505 = vunpack.c.l.b16 %v1329
      %v1506 = vunpack.c.l.b16 %v1330
      %v1507 = vunpack.c.l.b16 %v1331
      %v1508 = vunpack.c.l.b16 %v1332
      %v1509 = vunpack.c.l.b16 %v1333
      %v1510 = vpack.c.b16 %v1503, %v1502
      %v1511 = vpack.c.b16 %v1505, %v1504
      %v1512 = vpack.c.b16 %v1507, %v1506
      %v1513 = vpack.c.b16 %v1509, %v1508
      %v1518 = vsel %vm1406, %v1320, 0
      %v1520 = vsel %vm1406, %v1321, 0
      %v1522 = vsel %vm1406, %v1322, 0
      %v1524 = vsel %vm1406, %v1323, 0
      %v1526 = vsel %vm1406, %v1324, 0
      %1528 = vmatprep.subr.bf16.mxu0 0
      %1529 = vmatpush1.bf16.msra.mxu0 0
      %1530 = vmatprep.subr.bf16.mxu0 0
      %1531 = vmatpush1.bf16.msra.mxu0 0
      %1532 = vmatprep.subr.bf16.mxu0 0
      %1533 = vmatpush1.bf16.msra.mxu0 0
      %1534 = vmatprep.subr.bf16.mxu0 0
      %1535 = vmatpush1.bf16.msra.mxu0 0
      %1536 = vmatprep.subr.bf16.mxu0 0
      %1537 = vmatpush1.bf16.msra.mxu0 %v1513
      %1538 = vmatprep.subr.bf16.mxu0 0
      %1539 = vmatpush1.bf16.msra.mxu0 %v1512
      %1540 = vmatprep.subr.bf16.mxu0 0
      %1541 = vmatpush1.bf16.msra.mxu0 %v1511
      %1542 = vmatprep.subr.bf16.mxu0 0
      %1543 = vmatpush1.bf16.msra.mxu0 %v1510
      %1544 = vmatprep.subr.bf16.mxu0 0
      %1545 = vmatpush2.bf16.msra.mxu0 0
      %1546 = vmatprep.subr.bf16.mxu0 0
      %1547 = vmatpush2.bf16.msra.mxu0 0
      %1548 = vmatprep.subr.bf16.mxu0 0
      %1549 = vmatpush2.bf16.msra.mxu0 0
      %1550 = vmatprep.subr.bf16.mxu0 0
      %1551 = vmatpush2.bf16.msra.mxu0 0
      %1552 = vmatprep.subr.bf16.mxu0 0
      %1553 = vmatpush2.bf16.msra.mxu0 0
      %1554 = vmatprep.subr.bf16.mxu0 0
      %1555 = vmatpush2.bf16.msra.mxu0 0
      %1556 = vmatprep.subr.bf16.mxu0 0
      %1557 = vmatpush2.bf16.msra.mxu0 0
      %1558 = vmatprep.subr.bf16.mxu0 0
      %1559 = vmatpush2.bf16.msra.mxu0 0
      %1560 = vmatprep.mubr.bf16.mxu0 0
      %1561 = vmatmul.mubr.bf16.gmra.mxu0 %v1518
      %v1562 = vpop.f32.mrf.mxu0
      %v1563 = vadd.f32 %v1457, %v1562
      %v1564 = vpop.f32.mrf.mxu0
      %v1565 = vpop.f32.mrf.mxu0
      %v1566 = vadd.f32 %v1460, %v1565
      %v1567 = vpop.f32.mrf.mxu0
      %1568 = vmatprep.mubr.bf16.mxu0 0
      %1569 = vmatmul.mubr.bf16.gmra.mxu0 %v1520
      %v1570 = vpop.f32.mrf.mxu0
      %v1571 = vadd.f32 %v1465, %v1570
      %v1572 = vpop.f32.mrf.mxu0
      %v1573 = vpop.f32.mrf.mxu0
      %v1574 = vadd.f32 %v1468, %v1573
      %v1575 = vpop.f32.mrf.mxu0
      %1576 = vmatprep.mubr.bf16.mxu0 0
      %1577 = vmatmul.mubr.bf16.gmra.mxu0 %v1522
      %v1578 = vpop.f32.mrf.mxu0
      %v1579 = vadd.f32 %v1473, %v1578
      %v1580 = vpop.f32.mrf.mxu0
      %v1581 = vpop.f32.mrf.mxu0
      %v1582 = vadd.f32 %v1476, %v1581
      %v1583 = vpop.f32.mrf.mxu0
      %1584 = vmatprep.mubr.bf16.mxu0 0
      %1585 = vmatmul.mubr.bf16.gmra.mxu0 %v1524
      %v1586 = vpop.f32.mrf.mxu0
      %v1587 = vadd.f32 %v1481, %v1586
      %v1588 = vpop.f32.mrf.mxu0
      %v1589 = vpop.f32.mrf.mxu0
      %v1590 = vadd.f32 %v1484, %v1589
      %v1591 = vpop.f32.mrf.mxu0
      %1592 = vmatprep.mubr.bf16.mxu0 0
      %1593 = vmatmul.mubr.bf16.gmra.mxu0 %v1526
      %v1594 = vpop.f32.mrf.mxu0
      %v1595 = vadd.f32 %v1489, %v1594
      %v1596 = vpop.f32.mrf.mxu0
      %v1597 = vpop.f32.mrf.mxu0
      %v1598 = vpop.f32.mrf.mxu0
      %1599 = vdwg.mxu0
      %s1600 = scalar_lea.vmem %s5, 64
      %v1601 = vld [vmem:[%s1600] sm:$0xf]
      %v1602 = vld [vmem:[%s1600 + $0x4] sm:$0xf]
      %v1603 = vld [vmem:[%s1600 + $0x8] sm:$0xf]
      %v1604 = vld [vmem:[%s1600 + $0xc] sm:$0xf]
      %v1605 = vld [vmem:[%s1600 + $0x10] sm:$0xf]
      %v1606 = vld [vmem:[%s1600 + $0x14] sm:$0xf]
      %v1607 = vld [vmem:[%s1600 + $0x18] sm:$0xf]
      %v1608 = vld [vmem:[%s1600 + $0x1c] sm:$0xf]
      %vm1614 = vcmask 1046528
      %v1615 = vrot.slane %v1320, 1
      %v1616 = vrot.slane %v1321, 1
      %v1617 = vsel %vm1614, %v1615, %v1616
      %v1618 = vrot.slane %v1322, 1
      %v1619 = vsel %vm1614, %v1616, %v1618
      %v1620 = vrot.slane %v1323, 1
      %v1621 = vsel %vm1614, %v1618, %v1620
      %v1622 = vrot.slane %v1324, 1
      %v1623 = vsel %vm1614, %v1620, %v1622
      %v1632 = vunpack.c.l.b16 %v1601
      %v1633 = vunpack.c.l.b16 %v1602
      %v1634 = vunpack.c.l.b16 %v1603
      %v1635 = vunpack.c.l.b16 %v1604
      %v1636 = vunpack.c.l.b16 %v1605
      %v1637 = vunpack.c.l.b16 %v1606
      %v1638 = vunpack.c.l.b16 %v1607
      %v1639 = vunpack.c.l.b16 %v1608
      %v1640 = vpack.c.b16 %v1633, %v1632
      %v1641 = vpack.c.b16 %v1635, %v1634
      %v1642 = vpack.c.b16 %v1637, %v1636
      %v1643 = vpack.c.b16 %v1639, %v1638
      %v1649 = vsel %vm1406, %v1617, 0
      %v1652 = vsel %vm1406, %v1619, 0
      %v1655 = vsel %vm1406, %v1621, 0
      %v1658 = vsel %vm1406, %v1623, 0
      %v1661 = vsel %vm1406, %v1622, 0
      %1663 = vmatprep.subr.bf16.mxu0 0
      %1664 = vmatpush1.bf16.msra.mxu0 0
      %1665 = vmatprep.subr.bf16.mxu0 0
      %1666 = vmatpush1.bf16.msra.mxu0 0
      %1667 = vmatprep.subr.bf16.mxu0 0
      %1668 = vmatpush1.bf16.msra.mxu0 0
      %1669 = vmatprep.subr.bf16.mxu0 0
      %1670 = vmatpush1.bf16.msra.mxu0 0
      %1671 = vmatprep.subr.bf16.mxu0 0
      %1672 = vmatpush1.bf16.msra.mxu0 %v1643
      %1673 = vmatprep.subr.bf16.mxu0 0
      %1674 = vmatpush1.bf16.msra.mxu0 %v1642
      %1675 = vmatprep.subr.bf16.mxu0 0
      %1676 = vmatpush1.bf16.msra.mxu0 %v1641
      %1677 = vmatprep.subr.bf16.mxu0 0
      %1678 = vmatpush1.bf16.msra.mxu0 %v1640
      %1679 = vmatprep.subr.bf16.mxu0 0
      %1680 = vmatpush2.bf16.msra.mxu0 0
      %1681 = vmatprep.subr.bf16.mxu0 0
      %1682 = vmatpush2.bf16.msra.mxu0 0
      %1683 = vmatprep.subr.bf16.mxu0 0
      %1684 = vmatpush2.bf16.msra.mxu0 0
      %1685 = vmatprep.subr.bf16.mxu0 0
      %1686 = vmatpush2.bf16.msra.mxu0 0
      %1687 = vmatprep.subr.bf16.mxu0 0
      %1688 = vmatpush2.bf16.msra.mxu0 0
      %1689 = vmatprep.subr.bf16.mxu0 0
      %1690 = vmatpush2.bf16.msra.mxu0 0
      %1691 = vmatprep.subr.bf16.mxu0 0
      %1692 = vmatpush2.bf16.msra.mxu0 0
      %1693 = vmatprep.subr.bf16.mxu0 0
      %1694 = vmatpush2.bf16.msra.mxu0 0
      %1695 = vmatprep.mubr.bf16.mxu0 0
      %1696 = vmatmul.mubr.bf16.gmra.mxu0 %v1649
      %v1697 = vpop.f32.mrf.mxu0
      %v1698 = vadd.f32 0.0, %v1697
      %v1699 = vpop.f32.mrf.mxu0
      %v1700 = vpop.f32.mrf.mxu0
      %v1701 = vadd.f32 0.0, %v1700
      %v1702 = vpop.f32.mrf.mxu0
      %1703 = vmatprep.mubr.bf16.mxu0 0
      %1704 = vmatmul.mubr.bf16.gmra.mxu0 %v1652
      %v1705 = vpop.f32.mrf.mxu0
      %v1706 = vadd.f32 0.0, %v1705
      %v1707 = vpop.f32.mrf.mxu0
      %v1708 = vpop.f32.mrf.mxu0
      %v1709 = vadd.f32 0.0, %v1708
      %v1710 = vpop.f32.mrf.mxu0
      %1711 = vmatprep.mubr.bf16.mxu0 0
      %1712 = vmatmul.mubr.bf16.gmra.mxu0 %v1655
      %v1713 = vpop.f32.mrf.mxu0
      %v1714 = vadd.f32 0.0, %v1713
      %v1715 = vpop.f32.mrf.mxu0
      %v1716 = vpop.f32.mrf.mxu0
      %v1717 = vadd.f32 0.0, %v1716
      %v1718 = vpop.f32.mrf.mxu0
      %1719 = vmatprep.mubr.bf16.mxu0 0
      %1720 = vmatmul.mubr.bf16.gmra.mxu0 %v1658
      %v1721 = vpop.f32.mrf.mxu0
      %v1722 = vadd.f32 0.0, %v1721
      %v1723 = vpop.f32.mrf.mxu0
      %v1724 = vpop.f32.mrf.mxu0
      %v1725 = vadd.f32 0.0, %v1724
      %v1726 = vpop.f32.mrf.mxu0
      %1727 = vmatprep.mubr.bf16.mxu0 0
      %1728 = vmatmul.mubr.bf16.gmra.mxu0 %v1661
      %v1729 = vpop.f32.mrf.mxu0
      %v1730 = vadd.f32 0.0, %v1729
      %v1731 = vpop.f32.mrf.mxu0
      %v1732 = vpop.f32.mrf.mxu0
      %v1733 = vpop.f32.mrf.mxu0
      %1734 = vdwg.mxu0
      %v1735 = vadd.f32 %v1563, %v1698
      %v1736 = vadd.f32 %v1566, %v1701
      %v1737 = vadd.f32 %v1571, %v1706
      %v1738 = vadd.f32 %v1574, %v1709
      %v1739 = vadd.f32 %v1579, %v1714
      %v1740 = vadd.f32 %v1582, %v1717
      %v1741 = vadd.f32 %v1587, %v1722
      %v1742 = vadd.f32 %v1590, %v1725
      %v1743 = vadd.f32 %v1595, %v1730
      %s1744 = scalar_lea.vmem %s5, 96
      %v1745 = vld [vmem:[%s1744] sm:$0xf]
      %v1746 = vld [vmem:[%s1744 + $0x4] sm:$0xf]
      %v1747 = vld [vmem:[%s1744 + $0x8] sm:$0xf]
      %v1748 = vld [vmem:[%s1744 + $0xc] sm:$0xf]
      %v1749 = vld [vmem:[%s1744 + $0x10] sm:$0xf]
      %v1750 = vld [vmem:[%s1744 + $0x14] sm:$0xf]
      %v1751 = vld [vmem:[%s1744 + $0x18] sm:$0xf]
      %v1752 = vld [vmem:[%s1744 + $0x1c] sm:$0xf]
      %v1753 = vrot.slane %v1320, 5
      %v1754 = vrot.slane %v1321, 5
      %v1755 = vsel %vm931, %v1753, %v1754
      %v1756 = vrot.slane %v1322, 5
      %v1757 = vsel %vm931, %v1754, %v1756
      %v1758 = vrot.slane %v1323, 5
      %v1759 = vsel %vm931, %v1756, %v1758
      %v1760 = vrot.slane %v1324, 5
      %v1761 = vsel %vm931, %v1758, %v1760
      %v1770 = vunpack.c.l.b16 %v1745
      %v1771 = vunpack.c.l.b16 %v1746
      %v1772 = vunpack.c.l.b16 %v1747
      %v1773 = vunpack.c.l.b16 %v1748
      %v1774 = vunpack.c.l.b16 %v1749
      %v1775 = vunpack.c.l.b16 %v1750
      %v1776 = vunpack.c.l.b16 %v1751
      %v1777 = vunpack.c.l.b16 %v1752
      %v1778 = vpack.c.b16 %v1771, %v1770
      %v1779 = vpack.c.b16 %v1773, %v1772
      %v1780 = vpack.c.b16 %v1775, %v1774
      %v1781 = vpack.c.b16 %v1777, %v1776
      %v1787 = vsel %vm1406, %v1755, 0
      %v1790 = vsel %vm1406, %v1757, 0
      %v1793 = vsel %vm1406, %v1759, 0
      %v1796 = vsel %vm1406, %v1761, 0
      %v1799 = vsel %vm1406, %v1760, 0
      %1801 = vmatprep.subr.bf16.mxu0 0
      %1802 = vmatpush1.bf16.msra.mxu0 0
      %1803 = vmatprep.subr.bf16.mxu0 0
      %1804 = vmatpush1.bf16.msra.mxu0 0
      %1805 = vmatprep.subr.bf16.mxu0 0
      %1806 = vmatpush1.bf16.msra.mxu0 0
      %1807 = vmatprep.subr.bf16.mxu0 0
      %1808 = vmatpush1.bf16.msra.mxu0 0
      %1809 = vmatprep.subr.bf16.mxu0 0
      %1810 = vmatpush1.bf16.msra.mxu0 %v1781
      %1811 = vmatprep.subr.bf16.mxu0 0
      %1812 = vmatpush1.bf16.msra.mxu0 %v1780
      %1813 = vmatprep.subr.bf16.mxu0 0
      %1814 = vmatpush1.bf16.msra.mxu0 %v1779
      %1815 = vmatprep.subr.bf16.mxu0 0
      %1816 = vmatpush1.bf16.msra.mxu0 %v1778
      %1817 = vmatprep.subr.bf16.mxu0 0
      %1818 = vmatpush2.bf16.msra.mxu0 0
      %1819 = vmatprep.subr.bf16.mxu0 0
      %1820 = vmatpush2.bf16.msra.mxu0 0
      %1821 = vmatprep.subr.bf16.mxu0 0
      %1822 = vmatpush2.bf16.msra.mxu0 0
      %1823 = vmatprep.subr.bf16.mxu0 0
      %1824 = vmatpush2.bf16.msra.mxu0 0
      %1825 = vmatprep.subr.bf16.mxu0 0
      %1826 = vmatpush2.bf16.msra.mxu0 0
      %1827 = vmatprep.subr.bf16.mxu0 0
      %1828 = vmatpush2.bf16.msra.mxu0 0
      %1829 = vmatprep.subr.bf16.mxu0 0
      %1830 = vmatpush2.bf16.msra.mxu0 0
      %1831 = vmatprep.subr.bf16.mxu0 0
      %1832 = vmatpush2.bf16.msra.mxu0 0
      %1833 = vmatprep.mubr.bf16.mxu0 0
      %1834 = vmatmul.mubr.bf16.gmra.mxu0 %v1787
      %v1835 = vpop.f32.mrf.mxu0
      %v1836 = vadd.f32 0.0, %v1835
      %v1837 = vpop.f32.mrf.mxu0
      %v1838 = vpop.f32.mrf.mxu0
      %v1839 = vadd.f32 0.0, %v1838
      %v1840 = vpop.f32.mrf.mxu0
      %1841 = vmatprep.mubr.bf16.mxu0 0
      %1842 = vmatmul.mubr.bf16.gmra.mxu0 %v1790
      %v1843 = vpop.f32.mrf.mxu0
      %v1844 = vadd.f32 0.0, %v1843
      %v1845 = vpop.f32.mrf.mxu0
      %v1846 = vpop.f32.mrf.mxu0
      %v1847 = vadd.f32 0.0, %v1846
      %v1848 = vpop.f32.mrf.mxu0
      %1849 = vmatprep.mubr.bf16.mxu0 0
      %1850 = vmatmul.mubr.bf16.gmra.mxu0 %v1793
      %v1851 = vpop.f32.mrf.mxu0
      %v1852 = vadd.f32 0.0, %v1851
      %v1853 = vpop.f32.mrf.mxu0
      %v1854 = vpop.f32.mrf.mxu0
      %v1855 = vadd.f32 0.0, %v1854
      %v1856 = vpop.f32.mrf.mxu0
      %1857 = vmatprep.mubr.bf16.mxu0 0
      %1858 = vmatmul.mubr.bf16.gmra.mxu0 %v1796
      %v1859 = vpop.f32.mrf.mxu0
      %v1860 = vadd.f32 0.0, %v1859
      %v1861 = vpop.f32.mrf.mxu0
      %v1862 = vpop.f32.mrf.mxu0
      %v1863 = vadd.f32 0.0, %v1862
      %v1864 = vpop.f32.mrf.mxu0
      %1865 = vmatprep.mubr.bf16.mxu0 0
      %1866 = vmatmul.mubr.bf16.gmra.mxu0 %v1799
      %v1867 = vpop.f32.mrf.mxu0
      %v1868 = vadd.f32 0.0, %v1867
      %v1869 = vpop.f32.mrf.mxu0
      %v1870 = vpop.f32.mrf.mxu0
      %v1871 = vpop.f32.mrf.mxu0
      %1872 = vdwg.mxu0
      %v1873 = vadd.f32 %v1735, %v1836
      %v1874 = vadd.f32 %v1736, %v1839
      %v1875 = vadd.f32 %v1737, %v1844
      %v1876 = vadd.f32 %v1738, %v1847
      %v1877 = vadd.f32 %v1739, %v1852
      %v1878 = vadd.f32 %v1740, %v1855
      %v1879 = vadd.f32 %v1741, %v1860
      %v1880 = vadd.f32 %v1742, %v1863
      %v1881 = vadd.f32 %v1743, %v1868
      %s1882 = scalar_lea.vmem %s5, 128
      %v1883 = vld [vmem:[%s1882] sm:$0xf]
      %v1884 = vld [vmem:[%s1882 + $0x4] sm:$0xf]
      %v1885 = vld [vmem:[%s1882 + $0x8] sm:$0xf]
      %v1886 = vld [vmem:[%s1882 + $0xc] sm:$0xf]
      %v1887 = vld [vmem:[%s1882 + $0x10] sm:$0xf]
      %v1888 = vld [vmem:[%s1882 + $0x14] sm:$0xf]
      %v1889 = vld [vmem:[%s1882 + $0x18] sm:$0xf]
      %v1890 = vld [vmem:[%s1882 + $0x1c] sm:$0xf]
      %v1891 = vrot.slane %v1344, 5
      %v1892 = vrot.slane %v1346, 6
      %v1893 = vor.u32 %v1891, %v1892
      %v1894 = vrot.slane %v1355, 5
      %v1895 = vrot.slane %v1351, 6
      %v1896 = vor.u32 %v1894, %v1895
      %v1897 = vsel %vm1109, %v1893, %v1896
      %v1898 = vrot.slane %v1363, 5
      %v1899 = vrot.slane %v1359, 6
      %v1900 = vor.u32 %v1898, %v1899
      %v1901 = vsel %vm1109, %v1896, %v1900
      %v1902 = vrot.slane %v1371, 5
      %v1903 = vrot.slane %v1367, 6
      %v1904 = vor.u32 %v1902, %v1903
      %v1905 = vsel %vm1109, %v1900, %v1904
      %v1906 = vrot.slane %v1379, 5
      %v1907 = vrot.slane %v1375, 6
      %v1908 = vor.u32 %v1906, %v1907
      %v1909 = vsel %vm1109, %v1904, %v1908
      %v1911 = vshll.u32 %v1325, 16
      %v1913 = vrot.slane %v1911, 6
      %v1914 = vsel %vm1109, %v1908, %v1913
      %v1923 = vunpack.c.l.b16 %v1883
      %v1924 = vunpack.c.l.b16 %v1884
      %v1925 = vunpack.c.l.b16 %v1885
      %v1926 = vunpack.c.l.b16 %v1886
      %v1927 = vunpack.c.l.b16 %v1887
      %v1928 = vunpack.c.l.b16 %v1888
      %v1929 = vunpack.c.l.b16 %v1889
      %v1930 = vunpack.c.l.b16 %v1890
      %v1931 = vpack.c.b16 %v1924, %v1923
      %v1932 = vpack.c.b16 %v1926, %v1925
      %v1933 = vpack.c.b16 %v1928, %v1927
      %v1934 = vpack.c.b16 %v1930, %v1929
      %v1940 = vsel %vm1406, %v1897, 0
      %v1943 = vsel %vm1406, %v1901, 0
      %v1946 = vsel %vm1406, %v1905, 0
      %v1949 = vsel %vm1406, %v1909, 0
      %v1952 = vsel %vm1406, %v1914, 0
      %1954 = vmatprep.subr.bf16.mxu0 0
      %1955 = vmatpush1.bf16.msra.mxu0 0
      %1956 = vmatprep.subr.bf16.mxu0 0
      %1957 = vmatpush1.bf16.msra.mxu0 0
      %1958 = vmatprep.subr.bf16.mxu0 0
      %1959 = vmatpush1.bf16.msra.mxu0 0
      %1960 = vmatprep.subr.bf16.mxu0 0
      %1961 = vmatpush1.bf16.msra.mxu0 0
      %1962 = vmatprep.subr.bf16.mxu0 0
      %1963 = vmatpush1.bf16.msra.mxu0 %v1934
      %1964 = vmatprep.subr.bf16.mxu0 0
      %1965 = vmatpush1.bf16.msra.mxu0 %v1933
      %1966 = vmatprep.subr.bf16.mxu0 0
      %1967 = vmatpush1.bf16.msra.mxu0 %v1932
      %1968 = vmatprep.subr.bf16.mxu0 0
      %1969 = vmatpush1.bf16.msra.mxu0 %v1931
      %1970 = vmatprep.subr.bf16.mxu0 0
      %1971 = vmatpush2.bf16.msra.mxu0 0
      %1972 = vmatprep.subr.bf16.mxu0 0
      %1973 = vmatpush2.bf16.msra.mxu0 0
      %1974 = vmatprep.subr.bf16.mxu0 0
      %1975 = vmatpush2.bf16.msra.mxu0 0
      %1976 = vmatprep.subr.bf16.mxu0 0
      %1977 = vmatpush2.bf16.msra.mxu0 0
      %1978 = vmatprep.subr.bf16.mxu0 0
      %1979 = vmatpush2.bf16.msra.mxu0 0
      %1980 = vmatprep.subr.bf16.mxu0 0
      %1981 = vmatpush2.bf16.msra.mxu0 0
      %1982 = vmatprep.subr.bf16.mxu0 0
      %1983 = vmatpush2.bf16.msra.mxu0 0
      %1984 = vmatprep.subr.bf16.mxu0 0
      %1985 = vmatpush2.bf16.msra.mxu0 0
      %1986 = vmatprep.mubr.bf16.mxu0 0
      %1987 = vmatmul.mubr.bf16.gmra.mxu0 %v1940
      %v1988 = vpop.f32.mrf.mxu0
      %v1989 = vadd.f32 0.0, %v1988
      %v1990 = vpop.f32.mrf.mxu0
      %v1991 = vpop.f32.mrf.mxu0
      %v1992 = vadd.f32 0.0, %v1991
      %v1993 = vpop.f32.mrf.mxu0
      %1994 = vmatprep.mubr.bf16.mxu0 0
      %1995 = vmatmul.mubr.bf16.gmra.mxu0 %v1943
      %v1996 = vpop.f32.mrf.mxu0
      %v1997 = vadd.f32 0.0, %v1996
      %v1998 = vpop.f32.mrf.mxu0
      %v1999 = vpop.f32.mrf.mxu0
      %v2000 = vadd.f32 0.0, %v1999
      %v2001 = vpop.f32.mrf.mxu0
      %2002 = vmatprep.mubr.bf16.mxu0 0
      %2003 = vmatmul.mubr.bf16.gmra.mxu0 %v1946
      %v2004 = vpop.f32.mrf.mxu0
      %v2005 = vadd.f32 0.0, %v2004
      %v2006 = vpop.f32.mrf.mxu0
      %v2007 = vpop.f32.mrf.mxu0
      %v2008 = vadd.f32 0.0, %v2007
      %v2009 = vpop.f32.mrf.mxu0
      %2010 = vmatprep.mubr.bf16.mxu0 0
      %2011 = vmatmul.mubr.bf16.gmra.mxu0 %v1949
      %v2012 = vpop.f32.mrf.mxu0
      %v2013 = vadd.f32 0.0, %v2012
      %v2014 = vpop.f32.mrf.mxu0
      %v2015 = vpop.f32.mrf.mxu0
      %v2016 = vadd.f32 0.0, %v2015
      %v2017 = vpop.f32.mrf.mxu0
      %2018 = vmatprep.mubr.bf16.mxu0 0
      %2019 = vmatmul.mubr.bf16.gmra.mxu0 %v1952
      %v2020 = vpop.f32.mrf.mxu0
      %v2021 = vadd.f32 0.0, %v2020
      %v2022 = vpop.f32.mrf.mxu0
      %v2023 = vpop.f32.mrf.mxu0
      %v2024 = vpop.f32.mrf.mxu0
      %2025 = vdwg.mxu0
      %v2026 = vadd.f32 %v1873, %v1989
      %v2027 = vadd.f32 %v1874, %v1992
      %v2028 = vadd.f32 %v1875, %v1997
      %v2029 = vadd.f32 %v1876, %v2000
      %v2030 = vadd.f32 %v1877, %v2005
      %v2031 = vadd.f32 %v1878, %v2008
      %v2032 = vadd.f32 %v1879, %v2013
      %v2033 = vadd.f32 %v1880, %v2016
      %v2034 = vadd.f32 %v1881, %v2021
      %s2035 = scalar_lea.vmem %s5, 160
      %v2036 = vld [vmem:[%s2035] sm:$0xf]
      %v2037 = vld [vmem:[%s2035 + $0x4] sm:$0xf]
      %v2038 = vld [vmem:[%s2035 + $0x8] sm:$0xf]
      %v2039 = vld [vmem:[%s2035 + $0xc] sm:$0xf]
      %v2040 = vld [vmem:[%s2035 + $0x10] sm:$0xf]
      %v2041 = vld [vmem:[%s2035 + $0x14] sm:$0xf]
      %v2042 = vld [vmem:[%s2035 + $0x18] sm:$0xf]
      %v2043 = vld [vmem:[%s2035 + $0x1c] sm:$0xf]
      %vm2045 = vcmask 1041408
      %v2046 = vrot.slane %v1320, 6
      %v2047 = vrot.slane %v1321, 6
      %v2048 = vsel %vm2045, %v2046, %v2047
      %v2049 = vrot.slane %v1322, 6
      %v2050 = vsel %vm2045, %v2047, %v2049
      %v2051 = vrot.slane %v1323, 6
      %v2052 = vsel %vm2045, %v2049, %v2051
      %v2053 = vrot.slane %v1324, 6
      %v2054 = vsel %vm2045, %v2051, %v2053
      %v2055 = vrot.slane %v1325, 6
      %v2056 = vsel %vm2045, %v2053, %v2055
      %v2065 = vunpack.c.l.b16 %v2036
      %v2066 = vunpack.c.l.b16 %v2037
      %v2067 = vunpack.c.l.b16 %v2038
      %v2068 = vunpack.c.l.b16 %v2039
      %v2069 = vunpack.c.l.b16 %v2040
      %v2070 = vunpack.c.l.b16 %v2041
      %v2071 = vunpack.c.l.b16 %v2042
      %v2072 = vunpack.c.l.b16 %v2043
      %v2073 = vpack.c.b16 %v2066, %v2065
      %v2074 = vpack.c.b16 %v2068, %v2067
      %v2075 = vpack.c.b16 %v2070, %v2069
      %v2076 = vpack.c.b16 %v2072, %v2071
      %v2082 = vsel %vm1406, %v2048, 0
      %v2085 = vsel %vm1406, %v2050, 0
      %v2088 = vsel %vm1406, %v2052, 0
      %v2091 = vsel %vm1406, %v2054, 0
      %v2094 = vsel %vm1406, %v2056, 0
      %2096 = vmatprep.subr.bf16.mxu0 0
      %2097 = vmatpush1.bf16.msra.mxu0 0
      %2098 = vmatprep.subr.bf16.mxu0 0
      %2099 = vmatpush1.bf16.msra.mxu0 0
      %2100 = vmatprep.subr.bf16.mxu0 0
      %2101 = vmatpush1.bf16.msra.mxu0 0
      %2102 = vmatprep.subr.bf16.mxu0 0
      %2103 = vmatpush1.bf16.msra.mxu0 0
      %2104 = vmatprep.subr.bf16.mxu0 0
      %2105 = vmatpush1.bf16.msra.mxu0 %v2076
      %2106 = vmatprep.subr.bf16.mxu0 0
      %2107 = vmatpush1.bf16.msra.mxu0 %v2075
      %2108 = vmatprep.subr.bf16.mxu0 0
      %2109 = vmatpush1.bf16.msra.mxu0 %v2074
      %2110 = vmatprep.subr.bf16.mxu0 0
      %2111 = vmatpush1.bf16.msra.mxu0 %v2073
      %2112 = vmatprep.subr.bf16.mxu0 0
      %2113 = vmatpush2.bf16.msra.mxu0 0
      %2114 = vmatprep.subr.bf16.mxu0 0
      %2115 = vmatpush2.bf16.msra.mxu0 0
      %2116 = vmatprep.subr.bf16.mxu0 0
      %2117 = vmatpush2.bf16.msra.mxu0 0
      %2118 = vmatprep.subr.bf16.mxu0 0
      %2119 = vmatpush2.bf16.msra.mxu0 0
      %2120 = vmatprep.subr.bf16.mxu0 0
      %2121 = vmatpush2.bf16.msra.mxu0 0
      %2122 = vmatprep.subr.bf16.mxu0 0
      %2123 = vmatpush2.bf16.msra.mxu0 0
      %2124 = vmatprep.subr.bf16.mxu0 0
      %2125 = vmatpush2.bf16.msra.mxu0 0
      %2126 = vmatprep.subr.bf16.mxu0 0
      %2127 = vmatpush2.bf16.msra.mxu0 0
      %2128 = vmatprep.mubr.bf16.mxu0 0
      %2129 = vmatmul.mubr.bf16.gmra.mxu0 %v2082
      %v2130 = vpop.f32.mrf.mxu0
      %v2131 = vadd.f32 0.0, %v2130
      %v2132 = vpop.f32.mrf.mxu0
      %v2133 = vpop.f32.mrf.mxu0
      %v2134 = vadd.f32 0.0, %v2133
      %v2135 = vpop.f32.mrf.mxu0
      %2136 = vmatprep.mubr.bf16.mxu0 0
      %2137 = vmatmul.mubr.bf16.gmra.mxu0 %v2085
      %v2138 = vpop.f32.mrf.mxu0
      %v2139 = vadd.f32 0.0, %v2138
      %v2140 = vpop.f32.mrf.mxu0
      %v2141 = vpop.f32.mrf.mxu0
      %v2142 = vadd.f32 0.0, %v2141
      %v2143 = vpop.f32.mrf.mxu0
      %2144 = vmatprep.mubr.bf16.mxu0 0
      %2145 = vmatmul.mubr.bf16.gmra.mxu0 %v2088
      %v2146 = vpop.f32.mrf.mxu0
      %v2147 = vadd.f32 0.0, %v2146
      %v2148 = vpop.f32.mrf.mxu0
      %v2149 = vpop.f32.mrf.mxu0
      %v2150 = vadd.f32 0.0, %v2149
      %v2151 = vpop.f32.mrf.mxu0
      %2152 = vmatprep.mubr.bf16.mxu0 0
      %2153 = vmatmul.mubr.bf16.gmra.mxu0 %v2091
      %v2154 = vpop.f32.mrf.mxu0
      %v2155 = vadd.f32 0.0, %v2154
      %v2156 = vpop.f32.mrf.mxu0
      %v2157 = vpop.f32.mrf.mxu0
      %v2158 = vadd.f32 0.0, %v2157
      %v2159 = vpop.f32.mrf.mxu0
      %2160 = vmatprep.mubr.bf16.mxu0 0
      %2161 = vmatmul.mubr.bf16.gmra.mxu0 %v2094
      %v2162 = vpop.f32.mrf.mxu0
      %v2163 = vadd.f32 0.0, %v2162
      %v2164 = vpop.f32.mrf.mxu0
      %v2165 = vpop.f32.mrf.mxu0
      %v2166 = vpop.f32.mrf.mxu0
      %2167 = vdwg.mxu0
      %v2168 = vadd.f32 %v2026, %v2131
      %v2169 = vadd.f32 %v2027, %v2134
      %v2170 = vadd.f32 %v2028, %v2139
      %v2171 = vadd.f32 %v2029, %v2142
      %v2172 = vadd.f32 %v2030, %v2147
      %v2173 = vadd.f32 %v2031, %v2150
      %v2174 = vadd.f32 %v2032, %v2155
      %v2175 = vadd.f32 %v2033, %v2158
      %v2176 = vadd.f32 %v2034, %v2163
      %s2177 = scalar_lea.vmem %s5, 192
      %v2178 = vld [vmem:[%s2177] sm:$0xf]
      %v2179 = vld [vmem:[%s2177 + $0x4] sm:$0xf]
      %v2180 = vld [vmem:[%s2177 + $0x8] sm:$0xf]
      %v2181 = vld [vmem:[%s2177 + $0xc] sm:$0xf]
      %v2182 = vld [vmem:[%s2177 + $0x10] sm:$0xf]
      %v2183 = vld [vmem:[%s2177 + $0x14] sm:$0xf]
      %v2184 = vld [vmem:[%s2177 + $0x18] sm:$0xf]
      %v2185 = vld [vmem:[%s2177 + $0x1c] sm:$0xf]
      %vm2186 = vcmask 1045504
      %v2187 = vrot.slane %v1321, 2
      %v2188 = vrot.slane %v1322, 2
      %v2189 = vsel %vm2186, %v2187, %v2188
      %v2190 = vrot.slane %v1323, 2
      %v2191 = vsel %vm2186, %v2188, %v2190
      %v2192 = vrot.slane %v1324, 2
      %v2193 = vsel %vm2186, %v2190, %v2192
      %v2194 = vrot.slane %v1325, 2
      %v2195 = vsel %vm2186, %v2192, %v2194
      %v2204 = vunpack.c.l.b16 %v2178
      %v2205 = vunpack.c.l.b16 %v2179
      %v2206 = vunpack.c.l.b16 %v2180
      %v2207 = vunpack.c.l.b16 %v2181
      %v2208 = vunpack.c.l.b16 %v2182
      %v2209 = vunpack.c.l.b16 %v2183
      %v2210 = vunpack.c.l.b16 %v2184
      %v2211 = vunpack.c.l.b16 %v2185
      %v2212 = vpack.c.b16 %v2205, %v2204
      %v2213 = vpack.c.b16 %v2207, %v2206
      %v2214 = vpack.c.b16 %v2209, %v2208
      %v2215 = vpack.c.b16 %v2211, %v2210
      %v2221 = vsel %vm1406, %v2189, 0
      %v2224 = vsel %vm1406, %v2191, 0
      %v2227 = vsel %vm1406, %v2193, 0
      %v2230 = vsel %vm1406, %v2195, 0
      %v2233 = vsel %vm1406, %v2194, 0
      %2235 = vmatprep.subr.bf16.mxu0 0
      %2236 = vmatpush1.bf16.msra.mxu0 0
      %2237 = vmatprep.subr.bf16.mxu0 0
      %2238 = vmatpush1.bf16.msra.mxu0 0
      %2239 = vmatprep.subr.bf16.mxu0 0
      %2240 = vmatpush1.bf16.msra.mxu0 0
      %2241 = vmatprep.subr.bf16.mxu0 0
      %2242 = vmatpush1.bf16.msra.mxu0 0
      %2243 = vmatprep.subr.bf16.mxu0 0
      %2244 = vmatpush1.bf16.msra.mxu0 %v2215
      %2245 = vmatprep.subr.bf16.mxu0 0
      %2246 = vmatpush1.bf16.msra.mxu0 %v2214
      %2247 = vmatprep.subr.bf16.mxu0 0
      %2248 = vmatpush1.bf16.msra.mxu0 %v2213
      %2249 = vmatprep.subr.bf16.mxu0 0
      %2250 = vmatpush1.bf16.msra.mxu0 %v2212
      %2251 = vmatprep.subr.bf16.mxu0 0
      %2252 = vmatpush2.bf16.msra.mxu0 0
      %2253 = vmatprep.subr.bf16.mxu0 0
      %2254 = vmatpush2.bf16.msra.mxu0 0
      %2255 = vmatprep.subr.bf16.mxu0 0
      %2256 = vmatpush2.bf16.msra.mxu0 0
      %2257 = vmatprep.subr.bf16.mxu0 0
      %2258 = vmatpush2.bf16.msra.mxu0 0
      %2259 = vmatprep.subr.bf16.mxu0 0
      %2260 = vmatpush2.bf16.msra.mxu0 0
      %2261 = vmatprep.subr.bf16.mxu0 0
      %2262 = vmatpush2.bf16.msra.mxu0 0
      %2263 = vmatprep.subr.bf16.mxu0 0
      %2264 = vmatpush2.bf16.msra.mxu0 0
      %2265 = vmatprep.subr.bf16.mxu0 0
      %2266 = vmatpush2.bf16.msra.mxu0 0
      %2267 = vmatprep.mubr.bf16.mxu0 0
      %2268 = vmatmul.mubr.bf16.gmra.mxu0 %v2221
      %v2269 = vpop.f32.mrf.mxu0
      %v2270 = vadd.f32 0.0, %v2269
      %v2271 = vpop.f32.mrf.mxu0
      %v2272 = vpop.f32.mrf.mxu0
      %v2273 = vadd.f32 0.0, %v2272
      %v2274 = vpop.f32.mrf.mxu0
      %2275 = vmatprep.mubr.bf16.mxu0 0
      %2276 = vmatmul.mubr.bf16.gmra.mxu0 %v2224
      %v2277 = vpop.f32.mrf.mxu0
      %v2278 = vadd.f32 0.0, %v2277
      %v2279 = vpop.f32.mrf.mxu0
      %v2280 = vpop.f32.mrf.mxu0
      %v2281 = vadd.f32 0.0, %v2280
      %v2282 = vpop.f32.mrf.mxu0
      %2283 = vmatprep.mubr.bf16.mxu0 0
      %2284 = vmatmul.mubr.bf16.gmra.mxu0 %v2227
      %v2285 = vpop.f32.mrf.mxu0
      %v2286 = vadd.f32 0.0, %v2285
      %v2287 = vpop.f32.mrf.mxu0
      %v2288 = vpop.f32.mrf.mxu0
      %v2289 = vadd.f32 0.0, %v2288
      %v2290 = vpop.f32.mrf.mxu0
      %2291 = vmatprep.mubr.bf16.mxu0 0
      %2292 = vmatmul.mubr.bf16.gmra.mxu0 %v2230
      %v2293 = vpop.f32.mrf.mxu0
      %v2294 = vadd.f32 0.0, %v2293
      %v2295 = vpop.f32.mrf.mxu0
      %v2296 = vpop.f32.mrf.mxu0
      %v2297 = vadd.f32 0.0, %v2296
      %v2298 = vpop.f32.mrf.mxu0
      %2299 = vmatprep.mubr.bf16.mxu0 0
      %2300 = vmatmul.mubr.bf16.gmra.mxu0 %v2233
      %v2301 = vpop.f32.mrf.mxu0
      %v2302 = vadd.f32 0.0, %v2301
      %v2303 = vpop.f32.mrf.mxu0
      %v2304 = vpop.f32.mrf.mxu0
      %v2305 = vpop.f32.mrf.mxu0
      %2306 = vdwg.mxu0
      %v2307 = vadd.f32 %v2168, %v2270
      %v2308 = vadd.f32 %v2169, %v2273
      %v2309 = vadd.f32 %v2170, %v2278
      %v2310 = vadd.f32 %v2171, %v2281
      %v2311 = vadd.f32 %v2172, %v2286
      %v2312 = vadd.f32 %v2173, %v2289
      %v2313 = vadd.f32 %v2174, %v2294
      %v2314 = vadd.f32 %v2175, %v2297
      %v2315 = vadd.f32 %v2176, %v2302
      %s2316 = scalar_lea.vmem %s5, 224
      %v2317 = vld [vmem:[%s2316] sm:$0xf]
      %v2318 = vld [vmem:[%s2316 + $0x4] sm:$0xf]
      %v2319 = vld [vmem:[%s2316 + $0x8] sm:$0xf]
      %v2320 = vld [vmem:[%s2316 + $0xc] sm:$0xf]
      %v2321 = vld [vmem:[%s2316 + $0x10] sm:$0xf]
      %v2322 = vld [vmem:[%s2316 + $0x14] sm:$0xf]
      %v2323 = vld [vmem:[%s2316 + $0x18] sm:$0xf]
      %v2324 = vld [vmem:[%s2316 + $0x1c] sm:$0xf]
      %vm2325 = vsmask.f32 5376
      %v2326 = vrot.slane %v1355, 2
      %v2327 = vrot.slane %v1351, 3
      %v2328 = vor.u32 %v2326, %v2327
      %v2329 = vrot.slane %v1363, 2
      %v2330 = vrot.slane %v1359, 3
      %v2331 = vor.u32 %v2329, %v2330
      %v2332 = vsel %vm2325, %v2328, %v2331
      %v2333 = vrot.slane %v1371, 2
      %v2334 = vrot.slane %v1367, 3
      %v2335 = vor.u32 %v2333, %v2334
      %v2336 = vsel %vm2325, %v2331, %v2335
      %v2337 = vrot.slane %v1379, 2
      %v2338 = vrot.slane %v1375, 3
      %v2339 = vor.u32 %v2337, %v2338
      %v2340 = vsel %vm2325, %v2335, %v2339
      %v2341 = vshrl.u32 %v1325, 16
      %v2343 = vrot.slane %v2341, 2
      %v2344 = vrot.slane %v1911, 3
      %v2345 = vor.u32 %v2343, %v2344
      %v2346 = vsel %vm2325, %v2339, %v2345
      %v2355 = vunpack.c.l.b16 %v2317
      %v2356 = vunpack.c.l.b16 %v2318
      %v2357 = vunpack.c.l.b16 %v2319
      %v2358 = vunpack.c.l.b16 %v2320
      %v2359 = vunpack.c.l.b16 %v2321
      %v2360 = vunpack.c.l.b16 %v2322
      %v2361 = vunpack.c.l.b16 %v2323
      %v2362 = vunpack.c.l.b16 %v2324
      %v2363 = vpack.c.b16 %v2356, %v2355
      %v2364 = vpack.c.b16 %v2358, %v2357
      %v2365 = vpack.c.b16 %v2360, %v2359
      %v2366 = vpack.c.b16 %v2362, %v2361
      %v2372 = vsel %vm1406, %v2332, 0
      %v2375 = vsel %vm1406, %v2336, 0
      %v2378 = vsel %vm1406, %v2340, 0
      %v2381 = vsel %vm1406, %v2346, 0
      %v2384 = vsel %vm1406, %v2345, 0
      %2386 = vmatprep.subr.bf16.mxu0 0
      %2387 = vmatpush1.bf16.msra.mxu0 0
      %2388 = vmatprep.subr.bf16.mxu0 0
      %2389 = vmatpush1.bf16.msra.mxu0 0
      %2390 = vmatprep.subr.bf16.mxu0 0
      %2391 = vmatpush1.bf16.msra.mxu0 0
      %2392 = vmatprep.subr.bf16.mxu0 0
      %2393 = vmatpush1.bf16.msra.mxu0 0
      %2394 = vmatprep.subr.bf16.mxu0 0
      %2395 = vmatpush1.bf16.msra.mxu0 %v2366
      %2396 = vmatprep.subr.bf16.mxu0 0
      %2397 = vmatpush1.bf16.msra.mxu0 %v2365
      %2398 = vmatprep.subr.bf16.mxu0 0
      %2399 = vmatpush1.bf16.msra.mxu0 %v2364
      %2400 = vmatprep.subr.bf16.mxu0 0
      %2401 = vmatpush1.bf16.msra.mxu0 %v2363
      %2402 = vmatprep.subr.bf16.mxu0 0
      %2403 = vmatpush2.bf16.msra.mxu0 0
      %2404 = vmatprep.subr.bf16.mxu0 0
      %2405 = vmatpush2.bf16.msra.mxu0 0
      %2406 = vmatprep.subr.bf16.mxu0 0
      %2407 = vmatpush2.bf16.msra.mxu0 0
      %2408 = vmatprep.subr.bf16.mxu0 0
      %2409 = vmatpush2.bf16.msra.mxu0 0
      %2410 = vmatprep.subr.bf16.mxu0 0
      %2411 = vmatpush2.bf16.msra.mxu0 0
      %2412 = vmatprep.subr.bf16.mxu0 0
      %2413 = vmatpush2.bf16.msra.mxu0 0
      %2414 = vmatprep.subr.bf16.mxu0 0
      %2415 = vmatpush2.bf16.msra.mxu0 0
      %2416 = vmatprep.subr.bf16.mxu0 0
      %2417 = vmatpush2.bf16.msra.mxu0 0
      %2418 = vmatprep.mubr.bf16.mxu0 0
      %2419 = vmatmul.mubr.bf16.gmra.mxu0 %v2372
      %v2420 = vpop.f32.mrf.mxu0
      %v2421 = vadd.f32 0.0, %v2420
      %v2422 = vpop.f32.mrf.mxu0
      %v2423 = vpop.f32.mrf.mxu0
      %v2424 = vadd.f32 0.0, %v2423
      %v2425 = vpop.f32.mrf.mxu0
      %2426 = vmatprep.mubr.bf16.mxu0 0
      %2427 = vmatmul.mubr.bf16.gmra.mxu0 %v2375
      %v2428 = vpop.f32.mrf.mxu0
      %v2429 = vadd.f32 0.0, %v2428
      %v2430 = vpop.f32.mrf.mxu0
      %v2431 = vpop.f32.mrf.mxu0
      %v2432 = vadd.f32 0.0, %v2431
      %v2433 = vpop.f32.mrf.mxu0
      %2434 = vmatprep.mubr.bf16.mxu0 0
      %2435 = vmatmul.mubr.bf16.gmra.mxu0 %v2378
      %v2436 = vpop.f32.mrf.mxu0
      %v2437 = vadd.f32 0.0, %v2436
      %v2438 = vpop.f32.mrf.mxu0
      %v2439 = vpop.f32.mrf.mxu0
      %v2440 = vadd.f32 0.0, %v2439
      %v2441 = vpop.f32.mrf.mxu0
      %2442 = vmatprep.mubr.bf16.mxu0 0
      %2443 = vmatmul.mubr.bf16.gmra.mxu0 %v2381
      %v2444 = vpop.f32.mrf.mxu0
      %v2445 = vadd.f32 0.0, %v2444
      %v2446 = vpop.f32.mrf.mxu0
      %v2447 = vpop.f32.mrf.mxu0
      %v2448 = vadd.f32 0.0, %v2447
      %v2449 = vpop.f32.mrf.mxu0
      %2450 = vmatprep.mubr.bf16.mxu0 0
      %2451 = vmatmul.mubr.bf16.gmra.mxu0 %v2384
      %v2452 = vpop.f32.mrf.mxu0
      %v2453 = vadd.f32 0.0, %v2452
      %v2454 = vpop.f32.mrf.mxu0
      %v2455 = vpop.f32.mrf.mxu0
      %v2456 = vpop.f32.mrf.mxu0
      %2457 = vdwg.mxu0
      %v2458 = vadd.f32 %v2307, %v2421
      %v2459 = vadd.f32 %v2308, %v2424
      %v2460 = vadd.f32 %v2309, %v2429
      %v2461 = vadd.f32 %v2310, %v2432
      %v2462 = vadd.f32 %v2311, %v2437
      %v2463 = vadd.f32 %v2312, %v2440
      %v2464 = vadd.f32 %v2313, %v2445
      %v2465 = vadd.f32 %v2314, %v2448
      %v2466 = vadd.f32 %v2315, %v2453
      %s2467 = scalar_lea.vmem %s5, 256
      %v2468 = vld [vmem:[%s2467] sm:$0xf]
      %v2469 = vld [vmem:[%s2467 + $0x4] sm:$0xf]
      %v2470 = vld [vmem:[%s2467 + $0x8] sm:$0xf]
      %v2471 = vld [vmem:[%s2467 + $0xc] sm:$0xf]
      %v2472 = vld [vmem:[%s2467 + $0x10] sm:$0xf]
      %v2473 = vld [vmem:[%s2467 + $0x14] sm:$0xf]
      %v2474 = vld [vmem:[%s2467 + $0x18] sm:$0xf]
      %v2475 = vld [vmem:[%s2467 + $0x1c] sm:$0xf]
      %vm2476 = vcmask 1044480
      %v2477 = vrot.slane %v1321, 3
      %v2478 = vrot.slane %v1322, 3
      %v2479 = vsel %vm2476, %v2477, %v2478
      %v2480 = vrot.slane %v1323, 3
      %v2481 = vsel %vm2476, %v2478, %v2480
      %v2482 = vrot.slane %v1324, 3
      %v2483 = vsel %vm2476, %v2480, %v2482
      %v2484 = vrot.slane %v1325, 3
      %v2485 = vsel %vm2476, %v2482, %v2484
      %v2494 = vunpack.c.l.b16 %v2468
      %v2495 = vunpack.c.l.b16 %v2469
      %v2496 = vunpack.c.l.b16 %v2470
      %v2497 = vunpack.c.l.b16 %v2471
      %v2498 = vunpack.c.l.b16 %v2472
      %v2499 = vunpack.c.l.b16 %v2473
      %v2500 = vunpack.c.l.b16 %v2474
      %v2501 = vunpack.c.l.b16 %v2475
      %v2502 = vpack.c.b16 %v2495, %v2494
      %v2503 = vpack.c.b16 %v2497, %v2496
      %v2504 = vpack.c.b16 %v2499, %v2498
      %v2505 = vpack.c.b16 %v2501, %v2500
      %v2511 = vsel %vm1406, %v2479, 0
      %v2514 = vsel %vm1406, %v2481, 0
      %v2517 = vsel %vm1406, %v2483, 0
      %v2520 = vsel %vm1406, %v2485, 0
      %v2523 = vsel %vm1406, %v2484, 0
      %2525 = vmatprep.subr.bf16.mxu0 0
      %2526 = vmatpush1.bf16.msra.mxu0 0
      %2527 = vmatprep.subr.bf16.mxu0 0
      %2528 = vmatpush1.bf16.msra.mxu0 0
      %2529 = vmatprep.subr.bf16.mxu0 0
      %2530 = vmatpush1.bf16.msra.mxu0 0
      %2531 = vmatprep.subr.bf16.mxu0 0
      %2532 = vmatpush1.bf16.msra.mxu0 0
      %2533 = vmatprep.subr.bf16.mxu0 0
      %2534 = vmatpush1.bf16.msra.mxu0 %v2505
      %2535 = vmatprep.subr.bf16.mxu0 0
      %2536 = vmatpush1.bf16.msra.mxu0 %v2504
      %2537 = vmatprep.subr.bf16.mxu0 0
      %2538 = vmatpush1.bf16.msra.mxu0 %v2503
      %2539 = vmatprep.subr.bf16.mxu0 0
      %2540 = vmatpush1.bf16.msra.mxu0 %v2502
      %2541 = vmatprep.subr.bf16.mxu0 0
      %2542 = vmatpush2.bf16.msra.mxu0 0
      %2543 = vmatprep.subr.bf16.mxu0 0
      %2544 = vmatpush2.bf16.msra.mxu0 0
      %2545 = vmatprep.subr.bf16.mxu0 0
      %2546 = vmatpush2.bf16.msra.mxu0 0
      %2547 = vmatprep.subr.bf16.mxu0 0
      %2548 = vmatpush2.bf16.msra.mxu0 0
      %2549 = vmatprep.subr.bf16.mxu0 0
      %2550 = vmatpush2.bf16.msra.mxu0 0
      %2551 = vmatprep.subr.bf16.mxu0 0
      %2552 = vmatpush2.bf16.msra.mxu0 0
      %2553 = vmatprep.subr.bf16.mxu0 0
      %2554 = vmatpush2.bf16.msra.mxu0 0
      %2555 = vmatprep.subr.bf16.mxu0 0
      %2556 = vmatpush2.bf16.msra.mxu0 0
      %2557 = vmatprep.mubr.bf16.mxu0 0
      %2558 = vmatmul.mubr.bf16.gmra.mxu0 %v2511
      %v2559 = vpop.f32.mrf.mxu0
      %v2560 = vadd.f32 0.0, %v2559
      %v2561 = vpop.f32.mrf.mxu0
      %v2562 = vpop.f32.mrf.mxu0
      %v2563 = vadd.f32 0.0, %v2562
      %v2564 = vpop.f32.mrf.mxu0
      %2565 = vmatprep.mubr.bf16.mxu0 0
      %2566 = vmatmul.mubr.bf16.gmra.mxu0 %v2514
      %v2567 = vpop.f32.mrf.mxu0
      %v2568 = vadd.f32 0.0, %v2567
      %v2569 = vpop.f32.mrf.mxu0
      %v2570 = vpop.f32.mrf.mxu0
      %v2571 = vadd.f32 0.0, %v2570
      %v2572 = vpop.f32.mrf.mxu0
      %2573 = vmatprep.mubr.bf16.mxu0 0
      %2574 = vmatmul.mubr.bf16.gmra.mxu0 %v2517
      %v2575 = vpop.f32.mrf.mxu0
      %v2576 = vadd.f32 0.0, %v2575
      %v2577 = vpop.f32.mrf.mxu0
      %v2578 = vpop.f32.mrf.mxu0
      %v2579 = vadd.f32 0.0, %v2578
      %v2580 = vpop.f32.mrf.mxu0
      %2581 = vmatprep.mubr.bf16.mxu0 0
      %2582 = vmatmul.mubr.bf16.gmra.mxu0 %v2520
      %v2583 = vpop.f32.mrf.mxu0
      %v2584 = vadd.f32 0.0, %v2583
      %v2585 = vpop.f32.mrf.mxu0
      %v2586 = vpop.f32.mrf.mxu0
      %v2587 = vadd.f32 0.0, %v2586
      %v2588 = vpop.f32.mrf.mxu0
      %2589 = vmatprep.mubr.bf16.mxu0 0
      %2590 = vmatmul.mubr.bf16.gmra.mxu0 %v2523
      %v2591 = vpop.f32.mrf.mxu0
      %v2592 = vadd.f32 0.0, %v2591
      %v2593 = vpop.f32.mrf.mxu0
      %v2594 = vpop.f32.mrf.mxu0
      %v2595 = vpop.f32.mrf.mxu0
      %2596 = vdwg.mxu0
      %v2597 = vadd.f32 %v2458, %v2560
      %v2598 = vadd.f32 %v2459, %v2563
      %v2599 = vadd.f32 %v2460, %v2568
      %v2600 = vadd.f32 %v2461, %v2571
      %v2601 = vadd.f32 %v2462, %v2576
      %v2602 = vadd.f32 %v2463, %v2579
      %v2603 = vadd.f32 %v2464, %v2584
      %v2604 = vadd.f32 %v2465, %v2587
      %v2605 = vadd.f32 %v2466, %v2592
      %v2606 = vld [vmem:[%s6] sm:$0x1]
      %v2608 = vlaneseq
      %v2609 = vshrl.u32 %v2608, 7
      %v2610 = vsub.s32 0, %v2609
      %v2611 = vrot.slane %v2606, %v2610
      %v2613 = vadd.f32 %v2597, %v2611
      %v2614 = vadd.f32 %v2598, %v2611
      %v2615 = vadd.f32 %v2599, %v2611
      %v2616 = vadd.f32 %v2600, %v2611
      %v2617 = vadd.f32 %v2601, %v2611
      %v2618 = vadd.f32 %v2602, %v2611
      %v2619 = vadd.f32 %v2603, %v2611
      %v2620 = vadd.f32 %v2604, %v2611
      %v2621 = vadd.f32 %v2605, %v2611
      %v2622 = vmax.f32 %v2613, 0.0
      %v2623 = vmax.f32 %v2614, 0.0
      %v2624 = vmax.f32 %v2615, 0.0
      %v2625 = vmax.f32 %v2616, 0.0
      %v2626 = vmax.f32 %v2617, 0.0
      %v2627 = vmax.f32 %v2618, 0.0
      %v2628 = vmax.f32 %v2619, 0.0
      %v2629 = vmax.f32 %v2620, 0.0
      %v2630 = vmax.f32 %v2621, 0.0
      %v2631 = vpack.c.bf16 %v2623, %v2622
      %v2632 = vpack.c.bf16 %v2625, %v2624
      %v2633 = vpack.c.bf16 %v2627, %v2626
      %v2634 = vpack.c.bf16 %v2629, %v2628
      %v2635 = vpack.c.bf16 %v2630, %v2630
      %vm2636 = vcmask 519168
      %vm2637 = vsmask.f32 3328
      %vm2638 = vmand %vm2636, %vm2637
      %v2639 = vld [vmem:[%s278] sm:$0xf]
      %v2640 = vsel %vm2638, %v2631, %v2639
      %2641 = vst [vmem:[%s278] sm:$0xf] %v2640
      %v2644 = vunpack.c.h.b16 %v2631
      %v2645 = vunpack.c.l.b16 %v2632
      %v2646 = vpack.c.b16 %v2644, %v2644
      %v2647 = vpack.c.b16 %v2645, %v2645
      %vm2648 = vsmask.f32 6416
      %vm2649 = vmor %vm1109, %vm2648
      %v2651 = vshll.u32 %v2646, 16
      %v2653 = vrot.slane %v2651, 6
      %v2654 = vshrl.u32 %v2646, 16
      %v2656 = vrot.slane %v2654, 5
      %v2657 = vor.u32 %v2656, %v2653
      %v2658 = vrot.slane %v2657, 4
      %v2660 = vshll.u32 %v2647, 16
      %v2662 = vrot.slane %v2660, 6
      %v2663 = vsel %vm2649, %v2658, %v2662
      %vm2666 = vcmask 519171
      %vm2667 = vsmask.f32 7950
      %vm2668 = vmand %vm2666, %vm2667
      %v2669 = vld [vmem:[%s278] sm:$0x8]
      %v2670 = vsel %vm2668, %v2653, %v2669
      %2671 = vst [vmem:[%s278] sm:$0x8] %v2670
      %vm2672 = vcmask 518144
      %2673 = vst.msk [vmem:[%s278 + $0x4] sm:$0x7] %vm2672, %v2663
      %v2674 = vunpack.c.h.b16 %v2632
      %v2675 = vpack.c.b16 %v2674, %v2674
      %vm2676 = vcmask 1040384
      %vm2677 = vcmask 1044484
      %vm2678 = vmor %vm2676, %vm2677
      %v2679 = vrot.slane %v2647, 7
      %v2680 = vrot.slane %v2679, 4
      %v2681 = vrot.slane %v2675, 7
      %v2682 = vsel %vm2678, %v2680, %v2681
      %vm2685 = vcmask 519171
      %2686 = vst.msk [vmem:[%s278 + $0x4] sm:$0x8] %vm2685, %v2679
      %vm2687 = vcmask 518144
      %vm2688 = vmand %vm2687, %vm1109
      %v2689 = vld [vmem:[%s278 + $0x8] sm:$0x7]
      %v2690 = vsel %vm2688, %v2682, %v2689
      %2691 = vst [vmem:[%s278 + $0x8] sm:$0x7] %v2690
      %v2693 = vunpack.c.l.b16 %v2633
      %v2694 = vpack.c.b16 %v2693, %v2693
      %vm2695 = vsmask.f32 7440
      %vm2696 = vmor %vm2637, %vm2695
      %v2698 = vshrl.u32 %v2675, 16
      %v2700 = vrot.slane %v2698, 4
      %v2701 = vshll.u32 %v2675, 16
      %v2703 = vrot.slane %v2701, 5
      %v2704 = vor.u32 %v2700, %v2703
      %v2705 = vrot.slane %v2704, 4
      %v2707 = vshll.u32 %v2694, 16
      %v2709 = vrot.slane %v2707, 5
      %v2710 = vsel %vm2696, %v2705, %v2709
      %v2711 = vshrl.u32 %v2694, 16
      %v2713 = vrot.slane %v2711, 4
      %v2714 = vor.u32 %v2713, %v2709
      %v2715 = vrot.slane %v2714, 4
      %vm2718 = vcmask 519170
      %vm2719 = vsmask.f32 7946
      %vm2720 = vmand %vm2718, %vm2719
      %v2721 = vld [vmem:[%s278 + $0x8] sm:$0xc]
      %v2722 = vsel %vm2720, %v2710, %v2721
      %2723 = vst [vmem:[%s278 + $0x8] sm:$0xc] %v2722
      %vm2724 = vcmask 517120
      %2725 = vst.msk [vmem:[%s278 + $0xc] sm:$0x3] %vm2724, %v2715
      %v2726 = vunpack.c.h.b16 %v2633
      %v2727 = vpack.c.b16 %v2726, %v2726
      %v2728 = vrot.slane %v2727, 6
      %v2729 = vrot.slane %v2728, 4
      %vm2732 = vcmask 519170
      %2733 = vst.msk [vmem:[%s278 + $0xc] sm:$0xc] %vm2732, %v2728
      %vm2734 = vcmask 517120
      %vm2735 = vsmask.f32 1280
      %vm2736 = vmand %vm2734, %vm2735
      %v2737 = vld [vmem:[%s278 + $0x10] sm:$0x3]
      %v2738 = vsel %vm2736, %v2729, %v2737
      %2739 = vst [vmem:[%s278 + $0x10] sm:$0x3] %v2738
      %v2741 = vunpack.c.l.b16 %v2634
      %v2742 = vunpack.c.h.b16 %v2634
      %v2743 = vpack.c.b16 %v2741, %v2741
      %v2744 = vpack.c.b16 %v2742, %v2742
      %vm2745 = vsmask.f32 256
      %vm2746 = vsmask.f32 4368
      %vm2747 = vmor %vm2745, %vm2746
      %v2749 = vshrl.u32 %v2743, 16
      %v2751 = vrot.slane %v2749, 7
      %v2752 = vshll.u32 %v2743, 16
      %v2754 = vor.u32 %v2751, %v2752
      %v2755 = vrot.slane %v2751, 4
      %v2757 = vshll.u32 %v2744, 16
      %v2759 = vsel %vm2747, %v2755, %v2757
      %vm2762 = vcmask 519169
      %vm2763 = vsmask.f32 7942
      %vm2764 = vmand %vm2762, %vm2763
      %v2765 = vld [vmem:[%s278 + $0x10] sm:$0xe]
      %v2766 = vsel %vm2764, %v2754, %v2765
      %2767 = vst [vmem:[%s278 + $0x10] sm:$0xe] %v2766
      %vm2768 = vcmask 516096
      %2769 = vst.msk [vmem:[%s278 + $0x14] sm:$0x1] %vm2768, %v2759
      %v2771 = vunpack.c.l.b16 %v2635
      %v2772 = vpack.c.b16 %v2771, %v2771
      %vm2773 = vcmask 1046532
      %vm2774 = vmor %vm931, %vm2773
      %v2775 = vrot.slane %v2744, 5
      %v2776 = vrot.slane %v2775, 4
      %v2777 = vrot.slane %v2772, 5
      %v2778 = vsel %vm2774, %v2776, %v2777
      %v2779 = vrot.slane %v2777, 4
      %vm2782 = vcmask 519169
      %2783 = vst.msk [vmem:[%s278 + $0x14] sm:$0xe] %vm2782, %v2778
      %vm2784 = vcmask 516096
      %vm2785 = vmand %vm2784, %vm2745
      %v2786 = vld [vmem:[%s278 + $0x18] sm:$0x1]
      %v2787 = vsel %vm2785, %v2779, %v2786
      %2788 = vst [vmem:[%s278 + $0x18] sm:$0x1] %v2787
      %p2789 = scmp.lt.s32.totalorder %s18, 1
      %s2790 = scalar_select %p2789, %s18, 1
      %s2791 = smul.addr %s2790, 7
      %s2792 = smul.addr %s2791, 4
      %s2793 = scalar_lea.vmem %s7, %s2792
      // Predicated region
      $region49: #{dqn_forward.2} parent=47 // pred_check
        %p2794 = pneg %p188
      $region50: #{dqn_forward.2} parent=47 // pred_check_branch
        %2796 = sbr.rel (%p2794) target = $region52
      $region51: #{dqn_forward.2} parent=47 // pred_region
        _
      $region52: #{dqn_forward.2} parent=47 // pred_fallthru
        _
    $region48: #{dqn_forward.2} parent=5 // pred_fallthru
      _
    %p2797 = scmp.le.s32.totalorder 2, %s13
    // Predicated region
    $region53: #{dqn_forward.2} parent=5 // pred_check
      %p2798 = pneg %p2797
    $region54: #{dqn_forward.2} parent=5 // pred_check_branch
      %2800 = sbr.rel (%p2798) target = $region56
    $region55: #{dqn_forward.2} parent=5 // pred_region
      %s2801 = ssub.s32 %s13, 2
      // Predicated region
      $region57: #{dqn_forward.2} parent=55 // pred_check
        %p2802 = pneg %p194
      $region58: #{dqn_forward.2} parent=55 // pred_check_branch
        %2804 = sbr.rel (%p2802) target = $region60
      $region59: #{dqn_forward.2} parent=55 // pred_region
        %p2805 = scmp.lt.s32.totalorder %s19, 1
        %s2806 = scalar_select %p2805, %s19, 1
        %s2807 = smul.addr %s2806, 7
        %s2808 = smul.addr %s2807, 4
        %s2809 = scalar_lea.vmem %s7, %s2808
      $region60: #{dqn_forward.2} parent=55 // pred_fallthru
        _
    $region56: #{dqn_forward.2} parent=5 // pred_fallthru
      _
  $region6: #{dqn_forward.2} parent=0 // loop_footer
    %s17 = sadd.s32 1, %s13
  $region7: #{dqn_forward.2} parent=0 // loop_footer_branch
    %12 = sbr.rel target = $region3
  $region8: #{dqn_forward.2} parent=0 // loop_exit
    _

// kernel: dqn_forward.3
$region0: #{dqn_forward.3}
  #allocation0 [shape = 'u32[]', space=smem, size = 0x4, offset = 0x4, fixed_abs, tag = 'smem constant byte address 0x4 - core index']
  #allocation1 [shape = 'u32[144,128]{1,0:T(1,128)}', space=vmem, size = 0x12000, scoped, tag = 'internal scratch']
  %s0 = inlined_call_operand.vmem [shape: bf16[2,3136], index: 0, kind: input, shape index: {}]
  %s1 = inlined_call_operand.vmem [shape: bf16[3136,512], index: 1, kind: input, shape index: {}]
  %s2 = inlined_call_operand.vmem [shape: f32[1,512], index: 2, kind: input, shape index: {}]
  %s3 = inlined_call_operand.vmem [shape: bf16[512,128], index: 3, kind: input, shape index: {}]
  %s4 = inlined_call_operand.vmem [shape: f32[1,128], index: 4, kind: input, shape index: {}]
  %s5 = inlined_call_operand.hbm [shape: f32[2,128], index: 5, kind: output, shape index: {}]
  %s6 = sld [smem:[#allocation0]]
  $region30: #{dqn_forward.3} parent=0
    _
  %s8 = ssub.s32 1, %s6
  %s9 = scalar_select 0, %s8, %s6
  $region1: #{dqn_forward.3} parent=0
    #allocation2 [shape = 'u8[1024]{0}', space=vmem, size = 0x400, scoped, tag = 'output window, operand 0, single buffered']
    #allocation3 [shape = 's32[1]{0}', space=sflag, size = 0x4, scoped, tag = 'scoped memory for dqn_forward.3']
    %10 = vsyncpa [#allocation3], 0
    // Predicated region
    $region2: #{dqn_forward.3} parent=1 // pred_check
      _
    $region3: #{dqn_forward.3} parent=1 // pred_check_branch
      %12 = sbr.rel (0) target = $region5
    $region4: #{dqn_forward.3} parent=1 // pred_region
      _
    $region5: #{dqn_forward.3} parent=1 // pred_fallthru
      _
    // Predicated region
    $region6: #{dqn_forward.3} parent=1 // pred_check
      _
    $region7: #{dqn_forward.3} parent=1 // pred_check_branch
      %14 = sbr.rel (0) target = $region9
    $region8: #{dqn_forward.3} parent=1 // pred_region
      _
    $region9: #{dqn_forward.3} parent=1 // pred_fallthru
      _
    // Predicated region
    $region10: #{dqn_forward.3} parent=1 // pred_check
      _
    $region11: #{dqn_forward.3} parent=1 // pred_check_branch
      %16 = sbr.rel (0) target = $region13
    $region12: #{dqn_forward.3} parent=1 // pred_region
      _
    $region13: #{dqn_forward.3} parent=1 // pred_fallthru
      _
    // Predicated region
    $region14: #{dqn_forward.3} parent=1 // pred_check
      _
    $region15: #{dqn_forward.3} parent=1 // pred_check_branch
      %18 = sbr.rel (0) target = $region17
    $region16: #{dqn_forward.3} parent=1 // pred_region
      _
    $region17: #{dqn_forward.3} parent=1 // pred_fallthru
      _
    // Predicated region
    $region18: #{dqn_forward.3} parent=1 // pred_check
      _
    $region19: #{dqn_forward.3} parent=1 // pred_check_branch
      %20 = sbr.rel (0) target = $region21
    $region20: #{dqn_forward.3} parent=1 // pred_region
      _
    $region21: #{dqn_forward.3} parent=1 // pred_fallthru
      _
    %v22 = vld [vmem:[%s0] sm:$0xff]
    %v23 = vld [vmem:[%s0 + $0x8] sm:$0xff]
    %v24 = vld [vmem:[%s0 + $0x10] sm:$0xff]
    %v25 = vld [vmem:[%s0 + $0x18] sm:$0x1]
    %v26 = vld [vmem:[%s1] sm:$0xff]
    %v27 = vld [vmem:[%s1 + $0x8] sm:$0xff]
    %v28 = vld [vmem:[%s1 + $0x10] sm:$0xff]
    %v29 = vld [vmem:[%s1 + $0x18] sm:$0xff]
    %v30 = vld [vmem:[%s1 + $0x20] sm:$0xff]
    %v31 = vld [vmem:[%s1 + $0x28] sm:$0xff]
    %v32 = vld [vmem:[%s1 + $0x30] sm:$0xff]
    %v33 = vld [vmem:[%s1 + $0x38] sm:$0xff]
    %v34 = vld [vmem:[%s1 + $0x40] sm:$0xff]
    %v35 = vld [vmem:[%s1 + $0x48] sm:$0xff]
    %v36 = vld [vmem:[%s1 + $0x50] sm:$0xff]
    %v37 = vld [vmem:[%s1 + $0x58] sm:$0xff]
    %v38 = vld [vmem:[%s1 + $0x60] sm:$0xff]
    %v39 = vld [vmem:[%s1 + $0x68] sm:$0xff]
    %v40 = vld [vmem:[%s1 + $0x70] sm:$0xff]
    %v41 = vld [vmem:[%s1 + $0x78] sm:$0xff]
    %v42 = vld [vmem:[%s1 + $0x80] sm:$0xff]
    %v43 = vld [vmem:[%s1 + $0x88] sm:$0xff]
    %v44 = vld [vmem:[%s1 + $0x90] sm:$0xff]
    %v45 = vld [vmem:[%s1 + $0x98] sm:$0xff]
    %v46 = vld [vmem:[%s1 + $0xa0] sm:$0xff]
    %v47 = vld [vmem:[%s1 + $0xa8] sm:$0xff]
    %v48 = vld [vmem:[%s1 + $0xb0] sm:$0xff]
    %v49 = vld [vmem:[%s1 + $0xb8] sm:$0xff]
    %v50 = vld [vmem:[%s1 + $0xc0] sm:$0xff]
    %v51 = vld [vmem:[%s1 + $0xc8] sm:$0xff]
    %v52 = vld [vmem:[%s1 + $0xd0] sm:$0xff]
    %v53 = vld [vmem:[%s1 + $0xd8] sm:$0xff]
    %v54 = vld [vmem:[%s1 + $0xe0] sm:$0xff]
    %v55 = vld [vmem:[%s1 + $0xe8] sm:$0xff]
    %v56 = vld [vmem:[%s1 + $0xf0] sm:$0xff]
    %v57 = vld [vmem:[%s1 + $0xf8] sm:$0xff]
    %v58 = vld [vmem:[%s1 + $0x100] sm:$0xff]
    %v59 = vld [vmem:[%s1 + $0x108] sm:$0xff]
    %v60 = vld [vmem:[%s1 + $0x110] sm:$0xff]
    %v61 = vld [vmem:[%s1 + $0x118] sm:$0xff]
    %v62 = vld [vmem:[%s1 + $0x120] sm:$0xff]
    %v63 = vld [vmem:[%s1 + $0x128] sm:$0xff]
    %v64 = vld [vmem:[%s1 + $0x130] sm:$0xff]
    %v65 = vld [vmem:[%s1 + $0x138] sm:$0xff]
    %v66 = vld [vmem:[%s1 + $0x140] sm:$0xff]
    %v67 = vld [vmem:[%s1 + $0x148] sm:$0xff]
    %v68 = vld [vmem:[%s1 + $0x150] sm:$0xff]
    %v69 = vld [vmem:[%s1 + $0x158] sm:$0xff]
    %v70 = vld [vmem:[%s1 + $0x160] sm:$0xff]
    %v71 = vld [vmem:[%s1 + $0x168] sm:$0xff]
    %v72 = vld [vmem:[%s1 + $0x170] sm:$0xff]
    %v73 = vld [vmem:[%s1 + $0x178] sm:$0xff]
    %v74 = vld [vmem:[%s1 + $0x180] sm:$0xff]
    %v75 = vld [vmem:[%s1 + $0x188] sm:$0xff]
    %v76 = vld [vmem:[%s1 + $0x190] sm:$0xff]
    %v77 = vld [vmem:[%s1 + $0x198] sm:$0xff]
    %v78 = vld [vmem:[%s1 + $0x1a0] sm:$0xff]
    %v79 = vld [vmem:[%s1 + $0x1a8] sm:$0xff]
    %v80 = vld [vmem:[%s1 + $0x1b0] sm:$0xff]
    %v81 = vld [vmem:[%s1 + $0x1b8] sm:$0xff]
    %v82 = vld [vmem:[%s1 + $0x1c0] sm:$0xff]
    %v83 = vld [vmem:[%s1 + $0x1c8] sm:$0xff]
    %v84 = vld [vmem:[%s1 + $0x1d0] sm:$0xff]
    %v85 = vld [vmem:[%s1 + $0x1d8] sm:$0xff]
    %v86 = vld [vmem:[%s1 + $0x1e0] sm:$0xff]
    %v87 = vld [vmem:[%s1 + $0x1e8] sm:$0xff]
    %v88 = vld [vmem:[%s1 + $0x1f0] sm:$0xff]
    %v89 = vld [vmem:[%s1 + $0x1f8] sm:$0xff]
    %v90 = vld [vmem:[%s1 + $0x200] sm:$0xff]
    %v91 = vld [vmem:[%s1 + $0x208] sm:$0xff]
    %v92 = vld [vmem:[%s1 + $0x210] sm:$0xff]
    %v93 = vld [vmem:[%s1 + $0x218] sm:$0xff]
    %v94 = vld [vmem:[%s1 + $0x220] sm:$0xff]
    %v95 = vld [vmem:[%s1 + $0x228] sm:$0xff]
    %v96 = vld [vmem:[%s1 + $0x230] sm:$0xff]
    %v97 = vld [vmem:[%s1 + $0x238] sm:$0xff]
    %v98 = vld [vmem:[%s1 + $0x240] sm:$0xff]
    %v99 = vld [vmem:[%s1 + $0x248] sm:$0xff]
    %v100 = vld [vmem:[%s1 + $0x250] sm:$0xff]
    %v101 = vld [vmem:[%s1 + $0x258] sm:$0xff]
    %v102 = vld [vmem:[%s1 + $0x260] sm:$0xff]
    %v103 = vld [vmem:[%s1 + $0x268] sm:$0xff]
    %v104 = vld [vmem:[%s1 + $0x270] sm:$0xff]
    %v105 = vld [vmem:[%s1 + $0x278] sm:$0xff]
    %v106 = vld [vmem:[%s1 + $0x280] sm:$0xff]
    %v107 = vld [vmem:[%s1 + $0x288] sm:$0xff]
    %v108 = vld [vmem:[%s1 + $0x290] sm:$0xff]
    %v109 = vld [vmem:[%s1 + $0x298] sm:$0xff]
    %v110 = vld [vmem:[%s1 + $0x2a0] sm:$0xff]
    %v111 = vld [vmem:[%s1 + $0x2a8] sm:$0xff]
    %v112 = vld [vmem:[%s1 + $0x2b0] sm:$0xff]
    %v113 = vld [vmem:[%s1 + $0x2b8] sm:$0xff]
    %v114 = vld [vmem:[%s1 + $0x2c0] sm:$0xff]
    %v115 = vld [vmem:[%s1 + $0x2c8] sm:$0xff]
    %v116 = vld [vmem:[%s1 + $0x2d0] sm:$0xff]
    %v117 = vld [vmem:[%s1 + $0x2d8] sm:$0xff]
    %v118 = vld [vmem:[%s1 + $0x2e0] sm:$0xff]
    %v119 = vld [vmem:[%s1 + $0x2e8] sm:$0xff]
    %v120 = vld [vmem:[%s1 + $0x2f0] sm:$0xff]
    %v121 = vld [vmem:[%s1 + $0x2f8] sm:$0xff]
    %v122 = vld [vmem:[%s1 + $0x300] sm:$0xff]
    %v123 = vld [vmem:[%s1 + $0x308] sm:$0xff]
    %v124 = vld [vmem:[%s1 + $0x310] sm:$0xff]
    %v125 = vld [vmem:[%s1 + $0x318] sm:$0xff]
    %v126 = vld [vmem:[%s1 + $0x320] sm:$0xff]
    %v127 = vld [vmem:[%s1 + $0x328] sm:$0xff]
    %v128 = vld [vmem:[%s1 + $0x330] sm:$0xff]
    %v129 = vld [vmem:[%s1 + $0x338] sm:$0xff]
    %v130 = vld [vmem:[%s1 + $0x340] sm:$0xff]
    %v131 = vld [vmem:[%s1 + $0x348] sm:$0xff]
    %v132 = vld [vmem:[%s1 + $0x350] sm:$0xff]
    %v133 = vld [vmem:[%s1 + $0x358] sm:$0xff]
    %v134 = vld [vmem:[%s1 + $0x360] sm:$0xff]
    %v135 = vld [vmem:[%s1 + $0x368] sm:$0xff]
    %v136 = vld [vmem:[%s1 + $0x370] sm:$0xff]
    %v137 = vld [vmem:[%s1 + $0x378] sm:$0xff]
    %v138 = vld [vmem:[%s1 + $0x380] sm:$0xff]
    %v139 = vld [vmem:[%s1 + $0x388] sm:$0xff]
    %v140 = vld [vmem:[%s1 + $0x390] sm:$0xff]
    %v141 = vld [vmem:[%s1 + $0x398] sm:$0xff]
    %v142 = vld [vmem:[%s1 + $0x3a0] sm:$0xff]
    %v143 = vld [vmem:[%s1 + $0x3a8] sm:$0xff]
    %v144 = vld [vmem:[%s1 + $0x3b0] sm:$0xff]
    %v145 = vld [vmem:[%s1 + $0x3b8] sm:$0xff]
    %v146 = vld [vmem:[%s1 + $0x3c0] sm:$0xff]
    %v147 = vld [vmem:[%s1 + $0x3c8] sm:$0xff]
    %v148 = vld [vmem:[%s1 + $0x3d0] sm:$0xff]
    %v149 = vld [vmem:[%s1 + $0x3d8] sm:$0xff]
    %v150 = vld [vmem:[%s1 + $0x3e0] sm:$0xff]
    %v151 = vld [vmem:[%s1 + $0x3e8] sm:$0xff]
    %v152 = vld [vmem:[%s1 + $0x3f0] sm:$0xff]
    %v153 = vld [vmem:[%s1 + $0x3f8] sm:$0xff]
    %v154 = vld [vmem:[%s1 + $0x400] sm:$0xff]
    %v155 = vld [vmem:[%s1 + $0x408] sm:$0xff]
    %v156 = vld [vmem:[%s1 + $0x410] sm:$0xff]
    %v157 = vld [vmem:[%s1 + $0x418] sm:$0xff]
    %v158 = vld [vmem:[%s1 + $0x420] sm:$0xff]
    %v159 = vld [vmem:[%s1 + $0x428] sm:$0xff]
    %v160 = vld [vmem:[%s1 + $0x430] sm:$0xff]
    %v161 = vld [vmem:[%s1 + $0x438] sm:$0xff]
    %v162 = vld [vmem:[%s1 + $0x440] sm:$0xff]
    %v163 = vld [vmem:[%s1 + $0x448] sm:$0xff]
    %v164 = vld [vmem:[%s1 + $0x450] sm:$0xff]
    %v165 = vld [vmem:[%s1 + $0x458] sm:$0xff]
    %v166 = vld [vmem:[%s1 + $0x460] sm:$0xff]
    %v167 = vld [vmem:[%s1 + $0x468] sm:$0xff]
    %v168 = vld [vmem:[%s1 + $0x470] sm:$0xff]
    %v169 = vld [vmem:[%s1 + $0x478] sm:$0xff]
    %v170 = vld [vmem:[%s1 + $0x480] sm:$0xff]
    %v171 = vld [vmem:[%s1 + $0x488] sm:$0xff]
    %v172 = vld [vmem:[%s1 + $0x490] sm:$0xff]
    %v173 = vld [vmem:[%s1 + $0x498] sm:$0xff]
    %v174 = vld [vmem:[%s1 + $0x4a0] sm:$0xff]
    %v175 = vld [vmem:[%s1 + $0x4a8] sm:$0xff]
    %v176 = vld [vmem:[%s1 + $0x4b0] sm:$0xff]
    %v177 = vld [vmem:[%s1 + $0x4b8] sm:$0xff]
    %v178 = vld [vmem:[%s1 + $0x4c0] sm:$0xff]
    %v179 = vld [vmem:[%s1 + $0x4c8] sm:$0xff]
    %v180 = vld [vmem:[%s1 + $0x4d0] sm:$0xff]
    %v181 = vld [vmem:[%s1 + $0x4d8] sm:$0xff]
    %v182 = vld [vmem:[%s1 + $0x4e0] sm:$0xff]
    %v183 = vld [vmem:[%s1 + $0x4e8] sm:$0xff]
    %v184 = vld [vmem:[%s1 + $0x4f0] sm:$0xff]
    %v185 = vld [vmem:[%s1 + $0x4f8] sm:$0xff]
    %v186 = vld [vmem:[%s1 + $0x500] sm:$0xff]
    %v187 = vld [vmem:[%s1 + $0x508] sm:$0xff]
    %v188 = vld [vmem:[%s1 + $0x510] sm:$0xff]
    %v189 = vld [vmem:[%s1 + $0x518] sm:$0xff]
    %v190 = vld [vmem:[%s1 + $0x520] sm:$0xff]
    %v191 = vld [vmem:[%s1 + $0x528] sm:$0xff]
    %v192 = vld [vmem:[%s1 + $0x530] sm:$0xff]
    %v193 = vld [vmem:[%s1 + $0x538] sm:$0xff]
    %v194 = vld [vmem:[%s1 + $0x540] sm:$0xff]
    %v195 = vld [vmem:[%s1 + $0x548] sm:$0xff]
    %v196 = vld [vmem:[%s1 + $0x550] sm:$0xff]
    %v197 = vld [vmem:[%s1 + $0x558] sm:$0xff]
    %v198 = vld [vmem:[%s1 + $0x560] sm:$0xff]
    %v199 = vld [vmem:[%s1 + $0x568] sm:$0xff]
    %v200 = vld [vmem:[%s1 + $0x570] sm:$0xff]
    %v201 = vld [vmem:[%s1 + $0x578] sm:$0xff]
    %v202 = vld [vmem:[%s1 + $0x580] sm:$0xff]
    %v203 = vld [vmem:[%s1 + $0x588] sm:$0xff]
    %v204 = vld [vmem:[%s1 + $0x590] sm:$0xff]
    %v205 = vld [vmem:[%s1 + $0x598] sm:$0xff]
    %v206 = vld [vmem:[%s1 + $0x5a0] sm:$0xff]
    %v207 = vld [vmem:[%s1 + $0x5a8] sm:$0xff]
    %v208 = vld [vmem:[%s1 + $0x5b0] sm:$0xff]
    %v209 = vld [vmem:[%s1 + $0x5b8] sm:$0xff]
    %v210 = vld [vmem:[%s1 + $0x5c0] sm:$0xff]
    %v211 = vld [vmem:[%s1 + $0x5c8] sm:$0xff]
    %v212 = vld [vmem:[%s1 + $0x5d0] sm:$0xff]
    %v213 = vld [vmem:[%s1 + $0x5d8] sm:$0xff]
    %v214 = vld [vmem:[%s1 + $0x5e0] sm:$0xff]
    %v215 = vld [vmem:[%s1 + $0x5e8] sm:$0xff]
    %v216 = vld [vmem:[%s1 + $0x5f0] sm:$0xff]
    %v217 = vld [vmem:[%s1 + $0x5f8] sm:$0xff]
    %v218 = vld [vmem:[%s1 + $0x600] sm:$0xff]
    %v219 = vld [vmem:[%s1 + $0x608] sm:$0xff]
    %v220 = vld [vmem:[%s1 + $0x610] sm:$0xff]
    %v221 = vld [vmem:[%s1 + $0x618] sm:$0xff]
    %v222 = vld [vmem:[%s1 + $0x620] sm:$0xff]
    %v223 = vld [vmem:[%s1 + $0x628] sm:$0xff]
    %v224 = vld [vmem:[%s1 + $0x630] sm:$0xff]
    %v225 = vld [vmem:[%s1 + $0x638] sm:$0xff]
    %v226 = vld [vmem:[%s1 + $0x640] sm:$0xff]
    %v227 = vld [vmem:[%s1 + $0x648] sm:$0xff]
    %v228 = vld [vmem:[%s1 + $0x650] sm:$0xff]
    %v229 = vld [vmem:[%s1 + $0x658] sm:$0xff]
    %v230 = vld [vmem:[%s1 + $0x660] sm:$0xff]
    %v231 = vld [vmem:[%s1 + $0x668] sm:$0xff]
    %v232 = vld [vmem:[%s1 + $0x670] sm:$0xff]
    %v233 = vld [vmem:[%s1 + $0x678] sm:$0xff]
    %v234 = vld [vmem:[%s1 + $0x680] sm:$0xff]
    %v235 = vld [vmem:[%s1 + $0x688] sm:$0xff]
    %v236 = vld [vmem:[%s1 + $0x690] sm:$0xff]
    %v237 = vld [vmem:[%s1 + $0x698] sm:$0xff]
    %v238 = vld [vmem:[%s1 + $0x6a0] sm:$0xff]
    %v239 = vld [vmem:[%s1 + $0x6a8] sm:$0xff]
    %v240 = vld [vmem:[%s1 + $0x6b0] sm:$0xff]
    %v241 = vld [vmem:[%s1 + $0x6b8] sm:$0xff]
    %v242 = vld [vmem:[%s1 + $0x6c0] sm:$0xff]
    %v243 = vld [vmem:[%s1 + $0x6c8] sm:$0xff]
    %v244 = vld [vmem:[%s1 + $0x6d0] sm:$0xff]
    %v245 = vld [vmem:[%s1 + $0x6d8] sm:$0xff]
    %v246 = vld [vmem:[%s1 + $0x6e0] sm:$0xff]
    %v247 = vld [vmem:[%s1 + $0x6e8] sm:$0xff]
    %v248 = vld [vmem:[%s1 + $0x6f0] sm:$0xff]
    %v249 = vld [vmem:[%s1 + $0x6f8] sm:$0xff]
    %v250 = vld [vmem:[%s1 + $0x700] sm:$0xff]
    %v251 = vld [vmem:[%s1 + $0x708] sm:$0xff]
    %v252 = vld [vmem:[%s1 + $0x710] sm:$0xff]
    %v253 = vld [vmem:[%s1 + $0x718] sm:$0xff]
    %v254 = vld [vmem:[%s1 + $0x720] sm:$0xff]
    %v255 = vld [vmem:[%s1 + $0x728] sm:$0xff]
    %v256 = vld [vmem:[%s1 + $0x730] sm:$0xff]
    %v257 = vld [vmem:[%s1 + $0x738] sm:$0xff]
    %v258 = vld [vmem:[%s1 + $0x740] sm:$0xff]
    %v259 = vld [vmem:[%s1 + $0x748] sm:$0xff]
    %v260 = vld [vmem:[%s1 + $0x750] sm:$0xff]
    %v261 = vld [vmem:[%s1 + $0x758] sm:$0xff]
    %v262 = vld [vmem:[%s1 + $0x760] sm:$0xff]
    %v263 = vld [vmem:[%s1 + $0x768] sm:$0xff]
    %v264 = vld [vmem:[%s1 + $0x770] sm:$0xff]
    %v265 = vld [vmem:[%s1 + $0x778] sm:$0xff]
    %v266 = vld [vmem:[%s1 + $0x780] sm:$0xff]
    %v267 = vld [vmem:[%s1 + $0x788] sm:$0xff]
    %v268 = vld [vmem:[%s1 + $0x790] sm:$0xff]
    %v269 = vld [vmem:[%s1 + $0x798] sm:$0xff]
    %v270 = vld [vmem:[%s1 + $0x7a0] sm:$0xff]
    %v271 = vld [vmem:[%s1 + $0x7a8] sm:$0xff]
    %v272 = vld [vmem:[%s1 + $0x7b0] sm:$0xff]
    %v273 = vld [vmem:[%s1 + $0x7b8] sm:$0xff]
    %v274 = vld [vmem:[%s1 + $0x7c0] sm:$0xff]
    %v275 = vld [vmem:[%s1 + $0x7c8] sm:$0xff]
    %v276 = vld [vmem:[%s1 + $0x7d0] sm:$0xff]
    %v277 = vld [vmem:[%s1 + $0x7d8] sm:$0xff]
    %v278 = vld [vmem:[%s1 + $0x7e0] sm:$0xff]
    %v279 = vld [vmem:[%s1 + $0x7e8] sm:$0xff]
    %v280 = vld [vmem:[%s1 + $0x7f0] sm:$0xff]
    %v281 = vld [vmem:[%s1 + $0x7f8] sm:$0xff]
    %v282 = vld [vmem:[%s1 + $0x800] sm:$0xff]
    %v283 = vld [vmem:[%s1 + $0x808] sm:$0xff]
    %v284 = vld [vmem:[%s1 + $0x810] sm:$0xff]
    %v285 = vld [vmem:[%s1 + $0x818] sm:$0xff]
    %v286 = vld [vmem:[%s1 + $0x820] sm:$0xff]
    %v287 = vld [vmem:[%s1 + $0x828] sm:$0xff]
    %v288 = vld [vmem:[%s1 + $0x830] sm:$0xff]
    %v289 = vld [vmem:[%s1 + $0x838] sm:$0xff]
    %v290 = vld [vmem:[%s1 + $0x840] sm:$0xff]
    %v291 = vld [vmem:[%s1 + $0x848] sm:$0xff]
    %v292 = vld [vmem:[%s1 + $0x850] sm:$0xff]
    %v293 = vld [vmem:[%s1 + $0x858] sm:$0xff]
    %v294 = vld [vmem:[%s1 + $0x860] sm:$0xff]
    %v295 = vld [vmem:[%s1 + $0x868] sm:$0xff]
    %v296 = vld [vmem:[%s1 + $0x870] sm:$0xff]
    %v297 = vld [vmem:[%s1 + $0x878] sm:$0xff]
    %v298 = vld [vmem:[%s1 + $0x880] sm:$0xff]
    %v299 = vld [vmem:[%s1 + $0x888] sm:$0xff]
    %v300 = vld [vmem:[%s1 + $0x890] sm:$0xff]
    %v301 = vld [vmem:[%s1 + $0x898] sm:$0xff]
    %v302 = vld [vmem:[%s1 + $0x8a0] sm:$0xff]
    %v303 = vld [vmem:[%s1 + $0x8a8] sm:$0xff]
    %v304 = vld [vmem:[%s1 + $0x8b0] sm:$0xff]
    %v305 = vld [vmem:[%s1 + $0x8b8] sm:$0xff]
    %v306 = vld [vmem:[%s1 + $0x8c0] sm:$0xff]
    %v307 = vld [vmem:[%s1 + $0x8c8] sm:$0xff]
    %v308 = vld [vmem:[%s1 + $0x8d0] sm:$0xff]
    %v309 = vld [vmem:[%s1 + $0x8d8] sm:$0xff]
    %v310 = vld [vmem:[%s1 + $0x8e0] sm:$0xff]
    %v311 = vld [vmem:[%s1 + $0x8e8] sm:$0xff]
    %v312 = vld [vmem:[%s1 + $0x8f0] sm:$0xff]
    %v313 = vld [vmem:[%s1 + $0x8f8] sm:$0xff]
    %v314 = vld [vmem:[%s1 + $0x900] sm:$0xff]
    %v315 = vld [vmem:[%s1 + $0x908] sm:$0xff]
    %v316 = vld [vmem:[%s1 + $0x910] sm:$0xff]
    %v317 = vld [vmem:[%s1 + $0x918] sm:$0xff]
    %v318 = vld [vmem:[%s1 + $0x920] sm:$0xff]
    %v319 = vld [vmem:[%s1 + $0x928] sm:$0xff]
    %v320 = vld [vmem:[%s1 + $0x930] sm:$0xff]
    %v321 = vld [vmem:[%s1 + $0x938] sm:$0xff]
    %v322 = vld [vmem:[%s1 + $0x940] sm:$0xff]
    %v323 = vld [vmem:[%s1 + $0x948] sm:$0xff]
    %v324 = vld [vmem:[%s1 + $0x950] sm:$0xff]
    %v325 = vld [vmem:[%s1 + $0x958] sm:$0xff]
    %v326 = vld [vmem:[%s1 + $0x960] sm:$0xff]
    %v327 = vld [vmem:[%s1 + $0x968] sm:$0xff]
    %v328 = vld [vmem:[%s1 + $0x970] sm:$0xff]
    %v329 = vld [vmem:[%s1 + $0x978] sm:$0xff]
    %v330 = vld [vmem:[%s1 + $0x980] sm:$0xff]
    %v331 = vld [vmem:[%s1 + $0x988] sm:$0xff]
    %v332 = vld [vmem:[%s1 + $0x990] sm:$0xff]
    %v333 = vld [vmem:[%s1 + $0x998] sm:$0xff]
    %v334 = vld [vmem:[%s1 + $0x9a0] sm:$0xff]
    %v335 = vld [vmem:[%s1 + $0x9a8] sm:$0xff]
    %v336 = vld [vmem:[%s1 + $0x9b0] sm:$0xff]
    %v337 = vld [vmem:[%s1 + $0x9b8] sm:$0xff]
    %v338 = vld [vmem:[%s1 + $0x9c0] sm:$0xff]
    %v339 = vld [vmem:[%s1 + $0x9c8] sm:$0xff]
    %v340 = vld [vmem:[%s1 + $0x9d0] sm:$0xff]
    %v341 = vld [vmem:[%s1 + $0x9d8] sm:$0xff]
    %v342 = vld [vmem:[%s1 + $0x9e0] sm:$0xff]
    %v343 = vld [vmem:[%s1 + $0x9e8] sm:$0xff]
    %v344 = vld [vmem:[%s1 + $0x9f0] sm:$0xff]
    %v345 = vld [vmem:[%s1 + $0x9f8] sm:$0xff]
    %v346 = vld [vmem:[%s1 + $0xa00] sm:$0xff]
    %v347 = vld [vmem:[%s1 + $0xa08] sm:$0xff]
    %v348 = vld [vmem:[%s1 + $0xa10] sm:$0xff]
    %v349 = vld [vmem:[%s1 + $0xa18] sm:$0xff]
    %v350 = vld [vmem:[%s1 + $0xa20] sm:$0xff]
    %v351 = vld [vmem:[%s1 + $0xa28] sm:$0xff]
    %v352 = vld [vmem:[%s1 + $0xa30] sm:$0xff]
    %v353 = vld [vmem:[%s1 + $0xa38] sm:$0xff]
    %v354 = vld [vmem:[%s1 + $0xa40] sm:$0xff]
    %v355 = vld [vmem:[%s1 + $0xa48] sm:$0xff]
    %v356 = vld [vmem:[%s1 + $0xa50] sm:$0xff]
    %v357 = vld [vmem:[%s1 + $0xa58] sm:$0xff]
    %v358 = vld [vmem:[%s1 + $0xa60] sm:$0xff]
    %v359 = vld [vmem:[%s1 + $0xa68] sm:$0xff]
    %v360 = vld [vmem:[%s1 + $0xa70] sm:$0xff]
    %v361 = vld [vmem:[%s1 + $0xa78] sm:$0xff]
    %v362 = vld [vmem:[%s1 + $0xa80] sm:$0xff]
    %v363 = vld [vmem:[%s1 + $0xa88] sm:$0xff]
    %v364 = vld [vmem:[%s1 + $0xa90] sm:$0xff]
    %v365 = vld [vmem:[%s1 + $0xa98] sm:$0xff]
    %v366 = vld [vmem:[%s1 + $0xaa0] sm:$0xff]
    %v367 = vld [vmem:[%s1 + $0xaa8] sm:$0xff]
    %v368 = vld [vmem:[%s1 + $0xab0] sm:$0xff]
    %v369 = vld [vmem:[%s1 + $0xab8] sm:$0xff]
    %v370 = vld [vmem:[%s1 + $0xac0] sm:$0xff]
    %v371 = vld [vmem:[%s1 + $0xac8] sm:$0xff]
    %v372 = vld [vmem:[%s1 + $0xad0] sm:$0xff]
    %v373 = vld [vmem:[%s1 + $0xad8] sm:$0xff]
    %v374 = vld [vmem:[%s1 + $0xae0] sm:$0xff]
    %v375 = vld [vmem:[%s1 + $0xae8] sm:$0xff]
    %v376 = vld [vmem:[%s1 + $0xaf0] sm:$0xff]
    %v377 = vld [vmem:[%s1 + $0xaf8] sm:$0xff]
    %v378 = vld [vmem:[%s1 + $0xb00] sm:$0xff]
    %v379 = vld [vmem:[%s1 + $0xb08] sm:$0xff]
    %v380 = vld [vmem:[%s1 + $0xb10] sm:$0xff]
    %v381 = vld [vmem:[%s1 + $0xb18] sm:$0xff]
    %v382 = vld [vmem:[%s1 + $0xb20] sm:$0xff]
    %v383 = vld [vmem:[%s1 + $0xb28] sm:$0xff]
    %v384 = vld [vmem:[%s1 + $0xb30] sm:$0xff]
    %v385 = vld [vmem:[%s1 + $0xb38] sm:$0xff]
    %v386 = vld [vmem:[%s1 + $0xb40] sm:$0xff]
    %v387 = vld [vmem:[%s1 + $0xb48] sm:$0xff]
    %v388 = vld [vmem:[%s1 + $0xb50] sm:$0xff]
    %v389 = vld [vmem:[%s1 + $0xb58] sm:$0xff]
    %v390 = vld [vmem:[%s1 + $0xb60] sm:$0xff]
    %v391 = vld [vmem:[%s1 + $0xb68] sm:$0xff]
    %v392 = vld [vmem:[%s1 + $0xb70] sm:$0xff]
    %v393 = vld [vmem:[%s1 + $0xb78] sm:$0xff]
    %v394 = vld [vmem:[%s1 + $0xb80] sm:$0xff]
    %v395 = vld [vmem:[%s1 + $0xb88] sm:$0xff]
    %v396 = vld [vmem:[%s1 + $0xb90] sm:$0xff]
    %v397 = vld [vmem:[%s1 + $0xb98] sm:$0xff]
    %v398 = vld [vmem:[%s1 + $0xba0] sm:$0xff]
    %v399 = vld [vmem:[%s1 + $0xba8] sm:$0xff]
    %v400 = vld [vmem:[%s1 + $0xbb0] sm:$0xff]
    %v401 = vld [vmem:[%s1 + $0xbb8] sm:$0xff]
    %v402 = vld [vmem:[%s1 + $0xbc0] sm:$0xff]
    %v403 = vld [vmem:[%s1 + $0xbc8] sm:$0xff]
    %v404 = vld [vmem:[%s1 + $0xbd0] sm:$0xff]
    %v405 = vld [vmem:[%s1 + $0xbd8] sm:$0xff]
    %v406 = vld [vmem:[%s1 + $0xbe0] sm:$0xff]
    %v407 = vld [vmem:[%s1 + $0xbe8] sm:$0xff]
    %v408 = vld [vmem:[%s1 + $0xbf0] sm:$0xff]
    %v409 = vld [vmem:[%s1 + $0xbf8] sm:$0xff]
    %v410 = vld [vmem:[%s1 + $0xc00] sm:$0xff]
    %v411 = vld [vmem:[%s1 + $0xc08] sm:$0xff]
    %v412 = vld [vmem:[%s1 + $0xc10] sm:$0xff]
    %v413 = vld [vmem:[%s1 + $0xc18] sm:$0xff]
    %v414 = vld [vmem:[%s1 + $0xc20] sm:$0xff]
    %v415 = vld [vmem:[%s1 + $0xc28] sm:$0xff]
    %v416 = vld [vmem:[%s1 + $0xc30] sm:$0xff]
    %v417 = vld [vmem:[%s1 + $0xc38] sm:$0xff]
    %v418 = vld [vmem:[%s1 + $0xc40] sm:$0xff]
    %v419 = vld [vmem:[%s1 + $0xc48] sm:$0xff]
    %v420 = vld [vmem:[%s1 + $0xc50] sm:$0xff]
    %v421 = vld [vmem:[%s1 + $0xc58] sm:$0xff]
    %v422 = vld [vmem:[%s1 + $0xc60] sm:$0xff]
    %v423 = vld [vmem:[%s1 + $0xc68] sm:$0xff]
    %v424 = vld [vmem:[%s1 + $0xc70] sm:$0xff]
    %v425 = vld [vmem:[%s1 + $0xc78] sm:$0xff]
    %v426 = vld [vmem:[%s1 + $0xc80] sm:$0xff]
    %v427 = vld [vmem:[%s1 + $0xc88] sm:$0xff]
    %v428 = vld [vmem:[%s1 + $0xc90] sm:$0xff]
    %v429 = vld [vmem:[%s1 + $0xc98] sm:$0xff]
    %v430 = vld [vmem:[%s1 + $0xca0] sm:$0xff]
    %v431 = vld [vmem:[%s1 + $0xca8] sm:$0xff]
    %v432 = vld [vmem:[%s1 + $0xcb0] sm:$0xff]
    %v433 = vld [vmem:[%s1 + $0xcb8] sm:$0xff]
    %v434 = vld [vmem:[%s1 + $0xcc0] sm:$0xff]
    %v435 = vld [vmem:[%s1 + $0xcc8] sm:$0xff]
    %v436 = vld [vmem:[%s1 + $0xcd0] sm:$0xff]
    %v437 = vld [vmem:[%s1 + $0xcd8] sm:$0xff]
    %v438 = vld [vmem:[%s1 + $0xce0] sm:$0xff]
    %v439 = vld [vmem:[%s1 + $0xce8] sm:$0xff]
    %v440 = vld [vmem:[%s1 + $0xcf0] sm:$0xff]
    %v441 = vld [vmem:[%s1 + $0xcf8] sm:$0xff]
    %v442 = vld [vmem:[%s1 + $0xd00] sm:$0xff]
    %v443 = vld [vmem:[%s1 + $0xd08] sm:$0xff]
    %v444 = vld [vmem:[%s1 + $0xd10] sm:$0xff]
    %v445 = vld [vmem:[%s1 + $0xd18] sm:$0xff]
    %v446 = vld [vmem:[%s1 + $0xd20] sm:$0xff]
    %v447 = vld [vmem:[%s1 + $0xd28] sm:$0xff]
    %v448 = vld [vmem:[%s1 + $0xd30] sm:$0xff]
    %v449 = vld [vmem:[%s1 + $0xd38] sm:$0xff]
    %v450 = vld [vmem:[%s1 + $0xd40] sm:$0xff]
    %v451 = vld [vmem:[%s1 + $0xd48] sm:$0xff]
    %v452 = vld [vmem:[%s1 + $0xd50] sm:$0xff]
    %v453 = vld [vmem:[%s1 + $0xd58] sm:$0xff]
    %v454 = vld [vmem:[%s1 + $0xd60] sm:$0xff]
    %v455 = vld [vmem:[%s1 + $0xd68] sm:$0xff]
    %v456 = vld [vmem:[%s1 + $0xd70] sm:$0xff]
    %v457 = vld [vmem:[%s1 + $0xd78] sm:$0xff]
    %v458 = vld [vmem:[%s1 + $0xd80] sm:$0xff]
    %v459 = vld [vmem:[%s1 + $0xd88] sm:$0xff]
    %v460 = vld [vmem:[%s1 + $0xd90] sm:$0xff]
    %v461 = vld [vmem:[%s1 + $0xd98] sm:$0xff]
    %v462 = vld [vmem:[%s1 + $0xda0] sm:$0xff]
    %v463 = vld [vmem:[%s1 + $0xda8] sm:$0xff]
    %v464 = vld [vmem:[%s1 + $0xdb0] sm:$0xff]
    %v465 = vld [vmem:[%s1 + $0xdb8] sm:$0xff]
    %v466 = vld [vmem:[%s1 + $0xdc0] sm:$0xff]
    %v467 = vld [vmem:[%s1 + $0xdc8] sm:$0xff]
    %v468 = vld [vmem:[%s1 + $0xdd0] sm:$0xff]
    %v469 = vld [vmem:[%s1 + $0xdd8] sm:$0xff]
    %v470 = vld [vmem:[%s1 + $0xde0] sm:$0xff]
    %v471 = vld [vmem:[%s1 + $0xde8] sm:$0xff]
    %v472 = vld [vmem:[%s1 + $0xdf0] sm:$0xff]
    %v473 = vld [vmem:[%s1 + $0xdf8] sm:$0xff]
    %v474 = vld [vmem:[%s1 + $0xe00] sm:$0xff]
    %v475 = vld [vmem:[%s1 + $0xe08] sm:$0xff]
    %v476 = vld [vmem:[%s1 + $0xe10] sm:$0xff]
    %v477 = vld [vmem:[%s1 + $0xe18] sm:$0xff]
    %v478 = vld [vmem:[%s1 + $0xe20] sm:$0xff]
    %v479 = vld [vmem:[%s1 + $0xe28] sm:$0xff]
    %v480 = vld [vmem:[%s1 + $0xe30] sm:$0xff]
    %v481 = vld [vmem:[%s1 + $0xe38] sm:$0xff]
    %v482 = vld [vmem:[%s1 + $0xe40] sm:$0xff]
    %v483 = vld [vmem:[%s1 + $0xe48] sm:$0xff]
    %v484 = vld [vmem:[%s1 + $0xe50] sm:$0xff]
    %v485 = vld [vmem:[%s1 + $0xe58] sm:$0xff]
    %v486 = vld [vmem:[%s1 + $0xe60] sm:$0xff]
    %v487 = vld [vmem:[%s1 + $0xe68] sm:$0xff]
    %v488 = vld [vmem:[%s1 + $0xe70] sm:$0xff]
    %v489 = vld [vmem:[%s1 + $0xe78] sm:$0xff]
    %v490 = vld [vmem:[%s1 + $0xe80] sm:$0xff]
    %v491 = vld [vmem:[%s1 + $0xe88] sm:$0xff]
    %v492 = vld [vmem:[%s1 + $0xe90] sm:$0xff]
    %v493 = vld [vmem:[%s1 + $0xe98] sm:$0xff]
    %v494 = vld [vmem:[%s1 + $0xea0] sm:$0xff]
    %v495 = vld [vmem:[%s1 + $0xea8] sm:$0xff]
    %v496 = vld [vmem:[%s1 + $0xeb0] sm:$0xff]
    %v497 = vld [vmem:[%s1 + $0xeb8] sm:$0xff]
    %v498 = vld [vmem:[%s1 + $0xec0] sm:$0xff]
    %v499 = vld [vmem:[%s1 + $0xec8] sm:$0xff]
    %v500 = vld [vmem:[%s1 + $0xed0] sm:$0xff]
    %v501 = vld [vmem:[%s1 + $0xed8] sm:$0xff]
    %v502 = vld [vmem:[%s1 + $0xee0] sm:$0xff]
    %v503 = vld [vmem:[%s1 + $0xee8] sm:$0xff]
    %v504 = vld [vmem:[%s1 + $0xef0] sm:$0xff]
    %v505 = vld [vmem:[%s1 + $0xef8] sm:$0xff]
    %v506 = vld [vmem:[%s1 + $0xf00] sm:$0xff]
    %v507 = vld [vmem:[%s1 + $0xf08] sm:$0xff]
    %v508 = vld [vmem:[%s1 + $0xf10] sm:$0xff]
    %v509 = vld [vmem:[%s1 + $0xf18] sm:$0xff]
    %v510 = vld [vmem:[%s1 + $0xf20] sm:$0xff]
    %v511 = vld [vmem:[%s1 + $0xf28] sm:$0xff]
    %v512 = vld [vmem:[%s1 + $0xf30] sm:$0xff]
    %v513 = vld [vmem:[%s1 + $0xf38] sm:$0xff]
    %v514 = vld [vmem:[%s1 + $0xf40] sm:$0xff]
    %v515 = vld [vmem:[%s1 + $0xf48] sm:$0xff]
    %v516 = vld [vmem:[%s1 + $0xf50] sm:$0xff]
    %v517 = vld [vmem:[%s1 + $0xf58] sm:$0xff]
    %v518 = vld [vmem:[%s1 + $0xf60] sm:$0xff]
    %v519 = vld [vmem:[%s1 + $0xf68] sm:$0xff]
    %v520 = vld [vmem:[%s1 + $0xf70] sm:$0xff]
    %v521 = vld [vmem:[%s1 + $0xf78] sm:$0xff]
    %v522 = vld [vmem:[%s1 + $0xf80] sm:$0xff]
    %v523 = vld [vmem:[%s1 + $0xf88] sm:$0xff]
    %v524 = vld [vmem:[%s1 + $0xf90] sm:$0xff]
    %v525 = vld [vmem:[%s1 + $0xf98] sm:$0xff]
    %v526 = vld [vmem:[%s1 + $0xfa0] sm:$0xff]
    %v527 = vld [vmem:[%s1 + $0xfa8] sm:$0xff]
    %v528 = vld [vmem:[%s1 + $0xfb0] sm:$0xff]
    %v529 = vld [vmem:[%s1 + $0xfb8] sm:$0xff]
    %v530 = vld [vmem:[%s1 + $0xfc0] sm:$0xff]
    %v531 = vld [vmem:[%s1 + $0xfc8] sm:$0xff]
    %v532 = vld [vmem:[%s1 + $0xfd0] sm:$0xff]
    %v533 = vld [vmem:[%s1 + $0xfd8] sm:$0xff]
    %v534 = vld [vmem:[%s1 + $0xfe0] sm:$0xff]
    %v535 = vld [vmem:[%s1 + $0xfe8] sm:$0xff]
    %v536 = vld [vmem:[%s1 + $0xff0] sm:$0xff]
    %v537 = vld [vmem:[%s1 + $0xff8] sm:$0xff]
    %v538 = vld [vmem:[%s1 + $0x1000] sm:$0xff]
    %v539 = vld [vmem:[%s1 + $0x1008] sm:$0xff]
    %v540 = vld [vmem:[%s1 + $0x1010] sm:$0xff]
    %v541 = vld [vmem:[%s1 + $0x1018] sm:$0xff]
    %v542 = vld [vmem:[%s1 + $0x1020] sm:$0xff]
    %v543 = vld [vmem:[%s1 + $0x1028] sm:$0xff]
    %v544 = vld [vmem:[%s1 + $0x1030] sm:$0xff]
    %v545 = vld [vmem:[%s1 + $0x1038] sm:$0xff]
    %v546 = vld [vmem:[%s1 + $0x1040] sm:$0xff]
    %v547 = vld [vmem:[%s1 + $0x1048] sm:$0xff]
    %v548 = vld [vmem:[%s1 + $0x1050] sm:$0xff]
    %v549 = vld [vmem:[%s1 + $0x1058] sm:$0xff]
    %v550 = vld [vmem:[%s1 + $0x1060] sm:$0xff]
    %v551 = vld [vmem:[%s1 + $0x1068] sm:$0xff]
    %v552 = vld [vmem:[%s1 + $0x1070] sm:$0xff]
    %v553 = vld [vmem:[%s1 + $0x1078] sm:$0xff]
    %v554 = vld [vmem:[%s1 + $0x1080] sm:$0xff]
    %v555 = vld [vmem:[%s1 + $0x1088] sm:$0xff]
    %v556 = vld [vmem:[%s1 + $0x1090] sm:$0xff]
    %v557 = vld [vmem:[%s1 + $0x1098] sm:$0xff]
    %v558 = vld [vmem:[%s1 + $0x10a0] sm:$0xff]
    %v559 = vld [vmem:[%s1 + $0x10a8] sm:$0xff]
    %v560 = vld [vmem:[%s1 + $0x10b0] sm:$0xff]
    %v561 = vld [vmem:[%s1 + $0x10b8] sm:$0xff]
    %v562 = vld [vmem:[%s1 + $0x10c0] sm:$0xff]
    %v563 = vld [vmem:[%s1 + $0x10c8] sm:$0xff]
    %v564 = vld [vmem:[%s1 + $0x10d0] sm:$0xff]
    %v565 = vld [vmem:[%s1 + $0x10d8] sm:$0xff]
    %v566 = vld [vmem:[%s1 + $0x10e0] sm:$0xff]
    %v567 = vld [vmem:[%s1 + $0x10e8] sm:$0xff]
    %v568 = vld [vmem:[%s1 + $0x10f0] sm:$0xff]
    %v569 = vld [vmem:[%s1 + $0x10f8] sm:$0xff]
    %v570 = vld [vmem:[%s1 + $0x1100] sm:$0xff]
    %v571 = vld [vmem:[%s1 + $0x1108] sm:$0xff]
    %v572 = vld [vmem:[%s1 + $0x1110] sm:$0xff]
    %v573 = vld [vmem:[%s1 + $0x1118] sm:$0xff]
    %v574 = vld [vmem:[%s1 + $0x1120] sm:$0xff]
    %v575 = vld [vmem:[%s1 + $0x1128] sm:$0xff]
    %v576 = vld [vmem:[%s1 + $0x1130] sm:$0xff]
    %v577 = vld [vmem:[%s1 + $0x1138] sm:$0xff]
    %v578 = vld [vmem:[%s1 + $0x1140] sm:$0xff]
    %v579 = vld [vmem:[%s1 + $0x1148] sm:$0xff]
    %v580 = vld [vmem:[%s1 + $0x1150] sm:$0xff]
    %v581 = vld [vmem:[%s1 + $0x1158] sm:$0xff]
    %v582 = vld [vmem:[%s1 + $0x1160] sm:$0xff]
    %v583 = vld [vmem:[%s1 + $0x1168] sm:$0xff]
    %v584 = vld [vmem:[%s1 + $0x1170] sm:$0xff]
    %v585 = vld [vmem:[%s1 + $0x1178] sm:$0xff]
    %v586 = vld [vmem:[%s1 + $0x1180] sm:$0xff]
    %v587 = vld [vmem:[%s1 + $0x1188] sm:$0xff]
    %v588 = vld [vmem:[%s1 + $0x1190] sm:$0xff]
    %v589 = vld [vmem:[%s1 + $0x1198] sm:$0xff]
    %v590 = vld [vmem:[%s1 + $0x11a0] sm:$0xff]
    %v591 = vld [vmem:[%s1 + $0x11a8] sm:$0xff]
    %v592 = vld [vmem:[%s1 + $0x11b0] sm:$0xff]
    %v593 = vld [vmem:[%s1 + $0x11b8] sm:$0xff]
    %v594 = vld [vmem:[%s1 + $0x11c0] sm:$0xff]
    %v595 = vld [vmem:[%s1 + $0x11c8] sm:$0xff]
    %v596 = vld [vmem:[%s1 + $0x11d0] sm:$0xff]
    %v597 = vld [vmem:[%s1 + $0x11d8] sm:$0xff]
    %v598 = vld [vmem:[%s1 + $0x11e0] sm:$0xff]
    %v599 = vld [vmem:[%s1 + $0x11e8] sm:$0xff]
    %v600 = vld [vmem:[%s1 + $0x11f0] sm:$0xff]
    %v601 = vld [vmem:[%s1 + $0x11f8] sm:$0xff]
    %v602 = vld [vmem:[%s1 + $0x1200] sm:$0xff]
    %v603 = vld [vmem:[%s1 + $0x1208] sm:$0xff]
    %v604 = vld [vmem:[%s1 + $0x1210] sm:$0xff]
    %v605 = vld [vmem:[%s1 + $0x1218] sm:$0xff]
    %v606 = vld [vmem:[%s1 + $0x1220] sm:$0xff]
    %v607 = vld [vmem:[%s1 + $0x1228] sm:$0xff]
    %v608 = vld [vmem:[%s1 + $0x1230] sm:$0xff]
    %v609 = vld [vmem:[%s1 + $0x1238] sm:$0xff]
    %v610 = vld [vmem:[%s1 + $0x1240] sm:$0xff]
    %v611 = vld [vmem:[%s1 + $0x1248] sm:$0xff]
    %v612 = vld [vmem:[%s1 + $0x1250] sm:$0xff]
    %v613 = vld [vmem:[%s1 + $0x1258] sm:$0xff]
    %v614 = vld [vmem:[%s1 + $0x1260] sm:$0xff]
    %v615 = vld [vmem:[%s1 + $0x1268] sm:$0xff]
    %v616 = vld [vmem:[%s1 + $0x1270] sm:$0xff]
    %v617 = vld [vmem:[%s1 + $0x1278] sm:$0xff]
    %v618 = vld [vmem:[%s1 + $0x1280] sm:$0xff]
    %v619 = vld [vmem:[%s1 + $0x1288] sm:$0xff]
    %v620 = vld [vmem:[%s1 + $0x1290] sm:$0xff]
    %v621 = vld [vmem:[%s1 + $0x1298] sm:$0xff]
    %v622 = vld [vmem:[%s1 + $0x12a0] sm:$0xff]
    %v623 = vld [vmem:[%s1 + $0x12a8] sm:$0xff]
    %v624 = vld [vmem:[%s1 + $0x12b0] sm:$0xff]
    %v625 = vld [vmem:[%s1 + $0x12b8] sm:$0xff]
    %v626 = vld [vmem:[%s1 + $0x12c0] sm:$0xff]
    %v627 = vld [vmem:[%s1 + $0x12c8] sm:$0xff]
    %v628 = vld [vmem:[%s1 + $0x12d0] sm:$0xff]
    %v629 = vld [vmem:[%s1 + $0x12d8] sm:$0xff]
    %v630 = vld [vmem:[%s1 + $0x12e0] sm:$0xff]
    %v631 = vld [vmem:[%s1 + $0x12e8] sm:$0xff]
    %v632 = vld [vmem:[%s1 + $0x12f0] sm:$0xff]
    %v633 = vld [vmem:[%s1 + $0x12f8] sm:$0xff]
    %v634 = vld [vmem:[%s1 + $0x1300] sm:$0xff]
    %v635 = vld [vmem:[%s1 + $0x1308] sm:$0xff]
    %v636 = vld [vmem:[%s1 + $0x1310] sm:$0xff]
    %v637 = vld [vmem:[%s1 + $0x1318] sm:$0xff]
    %v638 = vld [vmem:[%s1 + $0x1320] sm:$0xff]
    %v639 = vld [vmem:[%s1 + $0x1328] sm:$0xff]
    %v640 = vld [vmem:[%s1 + $0x1330] sm:$0xff]
    %v641 = vld [vmem:[%s1 + $0x1338] sm:$0xff]
    %v642 = vld [vmem:[%s1 + $0x1340] sm:$0xff]
    %v643 = vld [vmem:[%s1 + $0x1348] sm:$0xff]
    %v644 = vld [vmem:[%s1 + $0x1350] sm:$0xff]
    %v645 = vld [vmem:[%s1 + $0x1358] sm:$0xff]
    %v646 = vld [vmem:[%s1 + $0x1360] sm:$0xff]
    %v647 = vld [vmem:[%s1 + $0x1368] sm:$0xff]
    %v648 = vld [vmem:[%s1 + $0x1370] sm:$0xff]
    %v649 = vld [vmem:[%s1 + $0x1378] sm:$0xff]
    %v650 = vld [vmem:[%s1 + $0x1380] sm:$0xff]
    %v651 = vld [vmem:[%s1 + $0x1388] sm:$0xff]
    %v652 = vld [vmem:[%s1 + $0x1390] sm:$0xff]
    %v653 = vld [vmem:[%s1 + $0x1398] sm:$0xff]
    %v654 = vld [vmem:[%s1 + $0x13a0] sm:$0xff]
    %v655 = vld [vmem:[%s1 + $0x13a8] sm:$0xff]
    %v656 = vld [vmem:[%s1 + $0x13b0] sm:$0xff]
    %v657 = vld [vmem:[%s1 + $0x13b8] sm:$0xff]
    %v658 = vld [vmem:[%s1 + $0x13c0] sm:$0xff]
    %v659 = vld [vmem:[%s1 + $0x13c8] sm:$0xff]
    %v660 = vld [vmem:[%s1 + $0x13d0] sm:$0xff]
    %v661 = vld [vmem:[%s1 + $0x13d8] sm:$0xff]
    %v662 = vld [vmem:[%s1 + $0x13e0] sm:$0xff]
    %v663 = vld [vmem:[%s1 + $0x13e8] sm:$0xff]
    %v664 = vld [vmem:[%s1 + $0x13f0] sm:$0xff]
    %v665 = vld [vmem:[%s1 + $0x13f8] sm:$0xff]
    %v666 = vld [vmem:[%s1 + $0x1400] sm:$0xff]
    %v667 = vld [vmem:[%s1 + $0x1408] sm:$0xff]
    %v668 = vld [vmem:[%s1 + $0x1410] sm:$0xff]
    %v669 = vld [vmem:[%s1 + $0x1418] sm:$0xff]
    %v670 = vld [vmem:[%s1 + $0x1420] sm:$0xff]
    %v671 = vld [vmem:[%s1 + $0x1428] sm:$0xff]
    %v672 = vld [vmem:[%s1 + $0x1430] sm:$0xff]
    %v673 = vld [vmem:[%s1 + $0x1438] sm:$0xff]
    %v674 = vld [vmem:[%s1 + $0x1440] sm:$0xff]
    %v675 = vld [vmem:[%s1 + $0x1448] sm:$0xff]
    %v676 = vld [vmem:[%s1 + $0x1450] sm:$0xff]
    %v677 = vld [vmem:[%s1 + $0x1458] sm:$0xff]
    %v678 = vld [vmem:[%s1 + $0x1460] sm:$0xff]
    %v679 = vld [vmem:[%s1 + $0x1468] sm:$0xff]
    %v680 = vld [vmem:[%s1 + $0x1470] sm:$0xff]
    %v681 = vld [vmem:[%s1 + $0x1478] sm:$0xff]
    %v682 = vld [vmem:[%s1 + $0x1480] sm:$0xff]
    %v683 = vld [vmem:[%s1 + $0x1488] sm:$0xff]
    %v684 = vld [vmem:[%s1 + $0x1490] sm:$0xff]
    %v685 = vld [vmem:[%s1 + $0x1498] sm:$0xff]
    %v686 = vld [vmem:[%s1 + $0x14a0] sm:$0xff]
    %v687 = vld [vmem:[%s1 + $0x14a8] sm:$0xff]
    %v688 = vld [vmem:[%s1 + $0x14b0] sm:$0xff]
    %v689 = vld [vmem:[%s1 + $0x14b8] sm:$0xff]
    %v690 = vld [vmem:[%s1 + $0x14c0] sm:$0xff]
    %v691 = vld [vmem:[%s1 + $0x14c8] sm:$0xff]
    %v692 = vld [vmem:[%s1 + $0x14d0] sm:$0xff]
    %v693 = vld [vmem:[%s1 + $0x14d8] sm:$0xff]
    %v694 = vld [vmem:[%s1 + $0x14e0] sm:$0xff]
    %v695 = vld [vmem:[%s1 + $0x14e8] sm:$0xff]
    %v696 = vld [vmem:[%s1 + $0x14f0] sm:$0xff]
    %v697 = vld [vmem:[%s1 + $0x14f8] sm:$0xff]
    %v698 = vld [vmem:[%s1 + $0x1500] sm:$0xff]
    %v699 = vld [vmem:[%s1 + $0x1508] sm:$0xff]
    %v700 = vld [vmem:[%s1 + $0x1510] sm:$0xff]
    %v701 = vld [vmem:[%s1 + $0x1518] sm:$0xff]
    %v702 = vld [vmem:[%s1 + $0x1520] sm:$0xff]
    %v703 = vld [vmem:[%s1 + $0x1528] sm:$0xff]
    %v704 = vld [vmem:[%s1 + $0x1530] sm:$0xff]
    %v705 = vld [vmem:[%s1 + $0x1538] sm:$0xff]
    %v706 = vld [vmem:[%s1 + $0x1540] sm:$0xff]
    %v707 = vld [vmem:[%s1 + $0x1548] sm:$0xff]
    %v708 = vld [vmem:[%s1 + $0x1550] sm:$0xff]
    %v709 = vld [vmem:[%s1 + $0x1558] sm:$0xff]
    %v710 = vld [vmem:[%s1 + $0x1560] sm:$0xff]
    %v711 = vld [vmem:[%s1 + $0x1568] sm:$0xff]
    %v712 = vld [vmem:[%s1 + $0x1570] sm:$0xff]
    %v713 = vld [vmem:[%s1 + $0x1578] sm:$0xff]
    %v714 = vld [vmem:[%s1 + $0x1580] sm:$0xff]
    %v715 = vld [vmem:[%s1 + $0x1588] sm:$0xff]
    %v716 = vld [vmem:[%s1 + $0x1590] sm:$0xff]
    %v717 = vld [vmem:[%s1 + $0x1598] sm:$0xff]
    %v718 = vld [vmem:[%s1 + $0x15a0] sm:$0xff]
    %v719 = vld [vmem:[%s1 + $0x15a8] sm:$0xff]
    %v720 = vld [vmem:[%s1 + $0x15b0] sm:$0xff]
    %v721 = vld [vmem:[%s1 + $0x15b8] sm:$0xff]
    %v722 = vld [vmem:[%s1 + $0x15c0] sm:$0xff]
    %v723 = vld [vmem:[%s1 + $0x15c8] sm:$0xff]
    %v724 = vld [vmem:[%s1 + $0x15d0] sm:$0xff]
    %v725 = vld [vmem:[%s1 + $0x15d8] sm:$0xff]
    %v726 = vld [vmem:[%s1 + $0x15e0] sm:$0xff]
    %v727 = vld [vmem:[%s1 + $0x15e8] sm:$0xff]
    %v728 = vld [vmem:[%s1 + $0x15f0] sm:$0xff]
    %v729 = vld [vmem:[%s1 + $0x15f8] sm:$0xff]
    %v730 = vld [vmem:[%s1 + $0x1600] sm:$0xff]
    %v731 = vld [vmem:[%s1 + $0x1608] sm:$0xff]
    %v732 = vld [vmem:[%s1 + $0x1610] sm:$0xff]
    %v733 = vld [vmem:[%s1 + $0x1618] sm:$0xff]
    %v734 = vld [vmem:[%s1 + $0x1620] sm:$0xff]
    %v735 = vld [vmem:[%s1 + $0x1628] sm:$0xff]
    %v736 = vld [vmem:[%s1 + $0x1630] sm:$0xff]
    %v737 = vld [vmem:[%s1 + $0x1638] sm:$0xff]
    %v738 = vld [vmem:[%s1 + $0x1640] sm:$0xff]
    %v739 = vld [vmem:[%s1 + $0x1648] sm:$0xff]
    %v740 = vld [vmem:[%s1 + $0x1650] sm:$0xff]
    %v741 = vld [vmem:[%s1 + $0x1658] sm:$0xff]
    %v742 = vld [vmem:[%s1 + $0x1660] sm:$0xff]
    %v743 = vld [vmem:[%s1 + $0x1668] sm:$0xff]
    %v744 = vld [vmem:[%s1 + $0x1670] sm:$0xff]
    %v745 = vld [vmem:[%s1 + $0x1678] sm:$0xff]
    %v746 = vld [vmem:[%s1 + $0x1680] sm:$0xff]
    %v747 = vld [vmem:[%s1 + $0x1688] sm:$0xff]
    %v748 = vld [vmem:[%s1 + $0x1690] sm:$0xff]
    %v749 = vld [vmem:[%s1 + $0x1698] sm:$0xff]
    %v750 = vld [vmem:[%s1 + $0x16a0] sm:$0xff]
    %v751 = vld [vmem:[%s1 + $0x16a8] sm:$0xff]
    %v752 = vld [vmem:[%s1 + $0x16b0] sm:$0xff]
    %v753 = vld [vmem:[%s1 + $0x16b8] sm:$0xff]
    %v754 = vld [vmem:[%s1 + $0x16c0] sm:$0xff]
    %v755 = vld [vmem:[%s1 + $0x16c8] sm:$0xff]
    %v756 = vld [vmem:[%s1 + $0x16d0] sm:$0xff]
    %v757 = vld [vmem:[%s1 + $0x16d8] sm:$0xff]
    %v758 = vld [vmem:[%s1 + $0x16e0] sm:$0xff]
    %v759 = vld [vmem:[%s1 + $0x16e8] sm:$0xff]
    %v760 = vld [vmem:[%s1 + $0x16f0] sm:$0xff]
    %v761 = vld [vmem:[%s1 + $0x16f8] sm:$0xff]
    %v762 = vld [vmem:[%s1 + $0x1700] sm:$0xff]
    %v763 = vld [vmem:[%s1 + $0x1708] sm:$0xff]
    %v764 = vld [vmem:[%s1 + $0x1710] sm:$0xff]
    %v765 = vld [vmem:[%s1 + $0x1718] sm:$0xff]
    %v766 = vld [vmem:[%s1 + $0x1720] sm:$0xff]
    %v767 = vld [vmem:[%s1 + $0x1728] sm:$0xff]
    %v768 = vld [vmem:[%s1 + $0x1730] sm:$0xff]
    %v769 = vld [vmem:[%s1 + $0x1738] sm:$0xff]
    %v770 = vld [vmem:[%s1 + $0x1740] sm:$0xff]
    %v771 = vld [vmem:[%s1 + $0x1748] sm:$0xff]
    %v772 = vld [vmem:[%s1 + $0x1750] sm:$0xff]
    %v773 = vld [vmem:[%s1 + $0x1758] sm:$0xff]
    %v774 = vld [vmem:[%s1 + $0x1760] sm:$0xff]
    %v775 = vld [vmem:[%s1 + $0x1768] sm:$0xff]
    %v776 = vld [vmem:[%s1 + $0x1770] sm:$0xff]
    %v777 = vld [vmem:[%s1 + $0x1778] sm:$0xff]
    %v778 = vld [vmem:[%s1 + $0x1780] sm:$0xff]
    %v779 = vld [vmem:[%s1 + $0x1788] sm:$0xff]
    %v780 = vld [vmem:[%s1 + $0x1790] sm:$0xff]
    %v781 = vld [vmem:[%s1 + $0x1798] sm:$0xff]
    %v782 = vld [vmem:[%s1 + $0x17a0] sm:$0xff]
    %v783 = vld [vmem:[%s1 + $0x17a8] sm:$0xff]
    %v784 = vld [vmem:[%s1 + $0x17b0] sm:$0xff]
    %v785 = vld [vmem:[%s1 + $0x17b8] sm:$0xff]
    %v786 = vld [vmem:[%s1 + $0x17c0] sm:$0xff]
    %v787 = vld [vmem:[%s1 + $0x17c8] sm:$0xff]
    %v788 = vld [vmem:[%s1 + $0x17d0] sm:$0xff]
    %v789 = vld [vmem:[%s1 + $0x17d8] sm:$0xff]
    %v790 = vld [vmem:[%s1 + $0x17e0] sm:$0xff]
    %v791 = vld [vmem:[%s1 + $0x17e8] sm:$0xff]
    %v792 = vld [vmem:[%s1 + $0x17f0] sm:$0xff]
    %v793 = vld [vmem:[%s1 + $0x17f8] sm:$0xff]
    %v794 = vld [vmem:[%s1 + $0x1800] sm:$0xff]
    %v795 = vld [vmem:[%s1 + $0x1808] sm:$0xff]
    %v796 = vld [vmem:[%s1 + $0x1810] sm:$0xff]
    %v797 = vld [vmem:[%s1 + $0x1818] sm:$0xff]
    %v798 = vld [vmem:[%s1 + $0x1820] sm:$0xff]
    %v799 = vld [vmem:[%s1 + $0x1828] sm:$0xff]
    %v800 = vld [vmem:[%s1 + $0x1830] sm:$0xff]
    %v801 = vld [vmem:[%s1 + $0x1838] sm:$0xff]
    %v802 = vld [vmem:[%s1 + $0x1840] sm:$0xff]
    %v803 = vld [vmem:[%s1 + $0x1848] sm:$0xff]
    %v804 = vld [vmem:[%s1 + $0x1850] sm:$0xff]
    %v805 = vld [vmem:[%s1 + $0x1858] sm:$0xff]
    %v806 = vld [vmem:[%s1 + $0x1860] sm:$0xff]
    %v807 = vld [vmem:[%s1 + $0x1868] sm:$0xff]
    %v808 = vld [vmem:[%s1 + $0x1870] sm:$0xff]
    %v809 = vld [vmem:[%s1 + $0x1878] sm:$0xff]
    %v810 = vld [vmem:[%s2] sm:$0xf]
    %v812 = vlaneseq
    %v813 = vshrl.u32 %v812, 7
    %v814 = vsub.s32 0, %v813
    %v815 = vrot.slane %v810, %v814
    %v816 = vlaneseq
    %v817 = vshrl.u32 %v816, 7
    %v818 = vsub.s32 1, %v817
    %v819 = vrot.slane %v810, %v818
    %v820 = vlaneseq
    %v821 = vshrl.u32 %v820, 7
    %v822 = vsub.s32 2, %v821
    %v823 = vrot.slane %v810, %v822
    %v824 = vlaneseq
    %v825 = vshrl.u32 %v824, 7
    %v826 = vsub.s32 3, %v825
    %v827 = vrot.slane %v810, %v826
    %v836 = vcombine.high %v22, %v22
    %v838 = vunpack.c.l.s4 1966171168
    %v839 = vunpack.c.0.s8 %v838
    %v840 = vlaneseq
    %v841 = vshrl.u32 %v840, 7
    %v842 = vsub.s32 %v839, %v841
    %v843 = vrot.slane %v22, %v842
    %v845 = vunpack.c.l.s4 1966171168
    %v846 = vunpack.c.0.s8 %v845
    %v847 = vlaneseq
    %v848 = vshrl.u32 %v847, 7
    %v849 = vsub.s32 %v846, %v848
    %v850 = vrot.slane %v836, %v849
    %v851 = vcombine.high %v843, %v843
    %v852 = vcombine.high %v850, %v850
    %v854 = vunpack.c.l.s4 1966171168
    %v855 = vunpack.c.0.s8 %v854
    %v856 = vlaneseq
    %v857 = vshrl.u32 %v856, 7
    %v858 = vsub.s32 %v855, %v857
    %v859 = vrot.slane %v843, %v858
    %v861 = vunpack.c.l.s4 1966171168
    %v862 = vunpack.c.0.s8 %v861
    %v863 = vlaneseq
    %v864 = vshrl.u32 %v863, 7
    %v865 = vsub.s32 %v862, %v864
    %v866 = vrot.slane %v850, %v865
    %v868 = vunpack.c.l.s4 1966171168
    %v869 = vunpack.c.0.s8 %v868
    %v870 = vlaneseq
    %v871 = vshrl.u32 %v870, 7
    %v872 = vsub.s32 %v869, %v871
    %v873 = vrot.slane %v851, %v872
    %v875 = vunpack.c.l.s4 1966171168
    %v876 = vunpack.c.0.s8 %v875
    %v877 = vlaneseq
    %v878 = vshrl.u32 %v877, 7
    %v879 = vsub.s32 %v876, %v878
    %v880 = vrot.slane %v852, %v879
    %v881 = vcombine.high %v859, %v859
    %v882 = vcombine.high %v866, %v866
    %v883 = vcombine.high %v873, %v873
    %v884 = vcombine.high %v880, %v880
    %v885 = vcombine.high %v23, %v23
    %v887 = vunpack.c.l.s4 1966171168
    %v888 = vunpack.c.0.s8 %v887
    %v889 = vlaneseq
    %v890 = vshrl.u32 %v889, 7
    %v891 = vsub.s32 %v888, %v890
    %v892 = vrot.slane %v23, %v891
    %v894 = vunpack.c.l.s4 1966171168
    %v895 = vunpack.c.0.s8 %v894
    %v896 = vlaneseq
    %v897 = vshrl.u32 %v896, 7
    %v898 = vsub.s32 %v895, %v897
    %v899 = vrot.slane %v885, %v898
    %v900 = vcombine.high %v892, %v892
    %v901 = vcombine.high %v899, %v899
    %v903 = vunpack.c.l.s4 1966171168
    %v904 = vunpack.c.0.s8 %v903
    %v905 = vlaneseq
    %v906 = vshrl.u32 %v905, 7
    %v907 = vsub.s32 %v904, %v906
    %v908 = vrot.slane %v892, %v907
    %v910 = vunpack.c.l.s4 1966171168
    %v911 = vunpack.c.0.s8 %v910
    %v912 = vlaneseq
    %v913 = vshrl.u32 %v912, 7
    %v914 = vsub.s32 %v911, %v913
    %v915 = vrot.slane %v899, %v914
    %v917 = vunpack.c.l.s4 1966171168
    %v918 = vunpack.c.0.s8 %v917
    %v919 = vlaneseq
    %v920 = vshrl.u32 %v919, 7
    %v921 = vsub.s32 %v918, %v920
    %v922 = vrot.slane %v900, %v921
    %v924 = vunpack.c.l.s4 1966171168
    %v925 = vunpack.c.0.s8 %v924
    %v926 = vlaneseq
    %v927 = vshrl.u32 %v926, 7
    %v928 = vsub.s32 %v925, %v927
    %v929 = vrot.slane %v901, %v928
    %v930 = vcombine.high %v908, %v908
    %v931 = vcombine.high %v915, %v915
    %v932 = vcombine.high %v922, %v922
    %v933 = vcombine.high %v929, %v929
    %v934 = vcombine.high %v24, %v24
    %v936 = vunpack.c.l.s4 1966171168
    %v937 = vunpack.c.0.s8 %v936
    %v938 = vlaneseq
    %v939 = vshrl.u32 %v938, 7
    %v940 = vsub.s32 %v937, %v939
    %v941 = vrot.slane %v24, %v940
    %v943 = vunpack.c.l.s4 1966171168
    %v944 = vunpack.c.0.s8 %v943
    %v945 = vlaneseq
    %v946 = vshrl.u32 %v945, 7
    %v947 = vsub.s32 %v944, %v946
    %v948 = vrot.slane %v934, %v947
    %v949 = vcombine.high %v941, %v941
    %v950 = vcombine.high %v948, %v948
    %v952 = vunpack.c.l.s4 1966171168
    %v953 = vunpack.c.0.s8 %v952
    %v954 = vlaneseq
    %v955 = vshrl.u32 %v954, 7
    %v956 = vsub.s32 %v953, %v955
    %v957 = vrot.slane %v941, %v956
    %v959 = vunpack.c.l.s4 1966171168
    %v960 = vunpack.c.0.s8 %v959
    %v961 = vlaneseq
    %v962 = vshrl.u32 %v961, 7
    %v963 = vsub.s32 %v960, %v962
    %v964 = vrot.slane %v948, %v963
    %v966 = vunpack.c.l.s4 1966171168
    %v967 = vunpack.c.0.s8 %v966
    %v968 = vlaneseq
    %v969 = vshrl.u32 %v968, 7
    %v970 = vsub.s32 %v967, %v969
    %v971 = vrot.slane %v949, %v970
    %v973 = vunpack.c.l.s4 1966171168
    %v974 = vunpack.c.0.s8 %v973
    %v975 = vlaneseq
    %v976 = vshrl.u32 %v975, 7
    %v977 = vsub.s32 %v974, %v976
    %v978 = vrot.slane %v950, %v977
    %v979 = vcombine.high %v957, %v957
    %v980 = vcombine.high %v964, %v964
    %v981 = vcombine.high %v971, %v971
    %v982 = vcombine.high %v978, %v978
    %v984 = vunpack.c.l.s4 1966171168
    %v985 = vunpack.c.0.s8 %v984
    %v986 = vlaneseq
    %v987 = vshrl.u32 %v986, 7
    %v988 = vsub.s32 %v985, %v987
    %v989 = vrot.slane %v25, %v988
    %v991 = vunpack.c.l.s4 1966171168
    %v992 = vunpack.c.0.s8 %v991
    %v993 = vlaneseq
    %v994 = vshrl.u32 %v993, 7
    %v995 = vsub.s32 %v992, %v994
    %v996 = vrot.slane %v989, %v995
    %v1805 = vunpack.c.l.b16 %v26
    %v1806 = vunpack.c.h.b16 %v26
    %v1807 = vunpack.c.l.b16 %v27
    %v1808 = vunpack.c.h.b16 %v27
    %v1809 = vunpack.c.l.b16 %v28
    %v1810 = vunpack.c.h.b16 %v28
    %v1811 = vunpack.c.l.b16 %v29
    %v1812 = vunpack.c.h.b16 %v29
    %v1813 = vunpack.c.l.b16 %v30
    %v1814 = vunpack.c.h.b16 %v30
    %v1815 = vunpack.c.l.b16 %v31
    %v1816 = vunpack.c.h.b16 %v31
    %v1817 = vunpack.c.l.b16 %v32
    %v1818 = vunpack.c.h.b16 %v32
    %v1819 = vunpack.c.l.b16 %v33
    %v1820 = vunpack.c.h.b16 %v33
    %v1821 = vunpack.c.l.b16 %v34
    %v1822 = vunpack.c.h.b16 %v34
    %v1823 = vunpack.c.l.b16 %v35
    %v1824 = vunpack.c.h.b16 %v35
    %v1825 = vunpack.c.l.b16 %v36
    %v1826 = vunpack.c.h.b16 %v36
    %v1827 = vunpack.c.l.b16 %v37
    %v1828 = vunpack.c.h.b16 %v37
    %v1829 = vunpack.c.l.b16 %v38
    %v1830 = vunpack.c.h.b16 %v38
    %v1831 = vunpack.c.l.b16 %v39
    %v1832 = vunpack.c.h.b16 %v39
    %v1833 = vunpack.c.l.b16 %v40
    %v1834 = vunpack.c.h.b16 %v40
    %v1835 = vunpack.c.l.b16 %v41
    %v1836 = vunpack.c.h.b16 %v41
    %v1837 = vunpack.c.l.b16 %v42
    %v1838 = vunpack.c.h.b16 %v42
    %v1839 = vunpack.c.l.b16 %v43
    %v1840 = vunpack.c.h.b16 %v43
    %v1841 = vunpack.c.l.b16 %v44
    %v1842 = vunpack.c.h.b16 %v44
    %v1843 = vunpack.c.l.b16 %v45
    %v1844 = vunpack.c.h.b16 %v45
    %v1845 = vunpack.c.l.b16 %v46
    %v1846 = vunpack.c.h.b16 %v46
    %v1847 = vunpack.c.l.b16 %v47
    %v1848 = vunpack.c.h.b16 %v47
    %v1849 = vunpack.c.l.b16 %v48
    %v1850 = vunpack.c.h.b16 %v48
    %v1851 = vunpack.c.l.b16 %v49
    %v1852 = vunpack.c.h.b16 %v49
    %v1853 = vunpack.c.l.b16 %v50
    %v1854 = vunpack.c.h.b16 %v50
    %v1855 = vunpack.c.l.b16 %v51
    %v1856 = vunpack.c.h.b16 %v51
    %v1857 = vunpack.c.l.b16 %v52
    %v1858 = vunpack.c.h.b16 %v52
    %v1859 = vunpack.c.l.b16 %v53
    %v1860 = vunpack.c.h.b16 %v53
    %v1861 = vunpack.c.l.b16 %v54
    %v1862 = vunpack.c.h.b16 %v54
    %v1863 = vunpack.c.l.b16 %v55
    %v1864 = vunpack.c.h.b16 %v55
    %v1865 = vunpack.c.l.b16 %v56
    %v1866 = vunpack.c.h.b16 %v56
    %v1867 = vunpack.c.l.b16 %v57
    %v1868 = vunpack.c.h.b16 %v57
    %v1869 = vunpack.c.l.b16 %v58
    %v1870 = vunpack.c.h.b16 %v58
    %v1871 = vunpack.c.l.b16 %v59
    %v1872 = vunpack.c.h.b16 %v59
    %v1873 = vunpack.c.l.b16 %v60
    %v1874 = vunpack.c.h.b16 %v60
    %v1875 = vunpack.c.l.b16 %v61
    %v1876 = vunpack.c.h.b16 %v61
    %v1877 = vunpack.c.l.b16 %v62
    %v1878 = vunpack.c.h.b16 %v62
    %v1879 = vunpack.c.l.b16 %v63
    %v1880 = vunpack.c.h.b16 %v63
    %v1881 = vunpack.c.l.b16 %v64
    %v1882 = vunpack.c.h.b16 %v64
    %v1883 = vunpack.c.l.b16 %v65
    %v1884 = vunpack.c.h.b16 %v65
    %v1885 = vunpack.c.l.b16 %v66
    %v1886 = vunpack.c.h.b16 %v66
    %v1887 = vunpack.c.l.b16 %v67
    %v1888 = vunpack.c.h.b16 %v67
    %v1889 = vunpack.c.l.b16 %v68
    %v1890 = vunpack.c.h.b16 %v68
    %v1891 = vunpack.c.l.b16 %v69
    %v1892 = vunpack.c.h.b16 %v69
    %v1893 = vunpack.c.l.b16 %v70
    %v1894 = vunpack.c.h.b16 %v70
    %v1895 = vunpack.c.l.b16 %v71
    %v1896 = vunpack.c.h.b16 %v71
    %v1897 = vunpack.c.l.b16 %v72
    %v1898 = vunpack.c.h.b16 %v72
    %v1899 = vunpack.c.l.b16 %v73
    %v1900 = vunpack.c.h.b16 %v73
    %v1901 = vunpack.c.l.b16 %v74
    %v1902 = vunpack.c.h.b16 %v74
    %v1903 = vunpack.c.l.b16 %v75
    %v1904 = vunpack.c.h.b16 %v75
    %v1905 = vunpack.c.l.b16 %v76
    %v1906 = vunpack.c.h.b16 %v76
    %v1907 = vunpack.c.l.b16 %v77
    %v1908 = vunpack.c.h.b16 %v77
    %v1909 = vunpack.c.l.b16 %v78
    %v1910 = vunpack.c.h.b16 %v78
    %v1911 = vunpack.c.l.b16 %v79
    %v1912 = vunpack.c.h.b16 %v79
    %v1913 = vunpack.c.l.b16 %v80
    %v1914 = vunpack.c.h.b16 %v80
    %v1915 = vunpack.c.l.b16 %v81
    %v1916 = vunpack.c.h.b16 %v81
    %v1917 = vunpack.c.l.b16 %v82
    %v1918 = vunpack.c.h.b16 %v82
    %v1919 = vunpack.c.l.b16 %v83
    %v1920 = vunpack.c.h.b16 %v83
    %v1921 = vunpack.c.l.b16 %v84
    %v1922 = vunpack.c.h.b16 %v84
    %v1923 = vunpack.c.l.b16 %v85
    %v1924 = vunpack.c.h.b16 %v85
    %v1925 = vunpack.c.l.b16 %v86
    %v1926 = vunpack.c.h.b16 %v86
    %v1927 = vunpack.c.l.b16 %v87
    %v1928 = vunpack.c.h.b16 %v87
    %v1929 = vunpack.c.l.b16 %v88
    %v1930 = vunpack.c.h.b16 %v88
    %v1931 = vunpack.c.l.b16 %v89
    %v1932 = vunpack.c.h.b16 %v89
    %v1933 = vunpack.c.l.b16 %v90
    %v1934 = vunpack.c.h.b16 %v90
    %v1935 = vunpack.c.l.b16 %v91
    %v1936 = vunpack.c.h.b16 %v91
    %v1937 = vunpack.c.l.b16 %v92
    %v1938 = vunpack.c.h.b16 %v92
    %v1939 = vunpack.c.l.b16 %v93
    %v1940 = vunpack.c.h.b16 %v93
    %v1941 = vunpack.c.l.b16 %v94
    %v1942 = vunpack.c.h.b16 %v94
    %v1943 = vunpack.c.l.b16 %v95
    %v1944 = vunpack.c.h.b16 %v95
    %v1945 = vunpack.c.l.b16 %v96
    %v1946 = vunpack.c.h.b16 %v96
    %v1947 = vunpack.c.l.b16 %v97
    %v1948 = vunpack.c.h.b16 %v97
    %v1949 = vunpack.c.l.b16 %v98
    %v1950 = vunpack.c.h.b16 %v98
    %v1951 = vunpack.c.l.b16 %v99
    %v1952 = vunpack.c.h.b16 %v99
    %v1953 = vunpack.c.l.b16 %v100
    %v1954 = vunpack.c.h.b16 %v100
    %v1955 = vunpack.c.l.b16 %v101
    %v1956 = vunpack.c.h.b16 %v101
    %v1957 = vunpack.c.l.b16 %v102
    %v1958 = vunpack.c.h.b16 %v102
    %v1959 = vunpack.c.l.b16 %v103
    %v1960 = vunpack.c.h.b16 %v103
    %v1961 = vunpack.c.l.b16 %v104
    %v1962 = vunpack.c.h.b16 %v104
    %v1963 = vunpack.c.l.b16 %v105
    %v1964 = vunpack.c.h.b16 %v105
    %v1965 = vunpack.c.l.b16 %v106
    %v1966 = vunpack.c.h.b16 %v106
    %v1967 = vunpack.c.l.b16 %v107
    %v1968 = vunpack.c.h.b16 %v107
    %v1969 = vunpack.c.l.b16 %v108
    %v1970 = vunpack.c.h.b16 %v108
    %v1971 = vunpack.c.l.b16 %v109
    %v1972 = vunpack.c.h.b16 %v109
    %v1973 = vunpack.c.l.b16 %v110
    %v1974 = vunpack.c.h.b16 %v110
    %v1975 = vunpack.c.l.b16 %v111
    %v1976 = vunpack.c.h.b16 %v111
    %v1977 = vunpack.c.l.b16 %v112
    %v1978 = vunpack.c.h.b16 %v112
    %v1979 = vunpack.c.l.b16 %v113
    %v1980 = vunpack.c.h.b16 %v113
    %v1981 = vunpack.c.l.b16 %v114
    %v1982 = vunpack.c.h.b16 %v114
    %v1983 = vunpack.c.l.b16 %v115
    %v1984 = vunpack.c.h.b16 %v115
    %v1985 = vunpack.c.l.b16 %v116
    %v1986 = vunpack.c.h.b16 %v116
    %v1987 = vunpack.c.l.b16 %v117
    %v1988 = vunpack.c.h.b16 %v117
    %v1989 = vunpack.c.l.b16 %v118
    %v1990 = vunpack.c.h.b16 %v118
    %v1991 = vunpack.c.l.b16 %v119
    %v1992 = vunpack.c.h.b16 %v119
    %v1993 = vunpack.c.l.b16 %v120
    %v1994 = vunpack.c.h.b16 %v120
    %v1995 = vunpack.c.l.b16 %v121
    %v1996 = vunpack.c.h.b16 %v121
    %v1997 = vunpack.c.l.b16 %v122
    %v1998 = vunpack.c.h.b16 %v122
    %v1999 = vunpack.c.l.b16 %v123
    %v2000 = vunpack.c.h.b16 %v123
    %v2001 = vunpack.c.l.b16 %v124
    %v2002 = vunpack.c.h.b16 %v124
    %v2003 = vunpack.c.l.b16 %v125
    %v2004 = vunpack.c.h.b16 %v125
    %v2005 = vunpack.c.l.b16 %v126
    %v2006 = vunpack.c.h.b16 %v126
    %v2007 = vunpack.c.l.b16 %v127
    %v2008 = vunpack.c.h.b16 %v127
    %v2009 = vunpack.c.l.b16 %v128
    %v2010 = vunpack.c.h.b16 %v128
    %v2011 = vunpack.c.l.b16 %v129
    %v2012 = vunpack.c.h.b16 %v129
    %v2013 = vunpack.c.l.b16 %v130
    %v2014 = vunpack.c.h.b16 %v130
    %v2015 = vunpack.c.l.b16 %v131
    %v2016 = vunpack.c.h.b16 %v131
    %v2017 = vunpack.c.l.b16 %v132
    %v2018 = vunpack.c.h.b16 %v132
    %v2019 = vunpack.c.l.b16 %v133
    %v2020 = vunpack.c.h.b16 %v133
    %v2021 = vunpack.c.l.b16 %v134
    %v2022 = vunpack.c.h.b16 %v134
    %v2023 = vunpack.c.l.b16 %v135
    %v2024 = vunpack.c.h.b16 %v135
    %v2025 = vunpack.c.l.b16 %v136
    %v2026 = vunpack.c.h.b16 %v136
    %v2027 = vunpack.c.l.b16 %v137
    %v2028 = vunpack.c.h.b16 %v137
    %v2029 = vunpack.c.l.b16 %v138
    %v2030 = vunpack.c.h.b16 %v138
    %v2031 = vunpack.c.l.b16 %v139
    %v2032 = vunpack.c.h.b16 %v139
    %v2033 = vunpack.c.l.b16 %v140
    %v2034 = vunpack.c.h.b16 %v140
    %v2035 = vunpack.c.l.b16 %v141
    %v2036 = vunpack.c.h.b16 %v141
    %v2037 = vunpack.c.l.b16 %v142
    %v2038 = vunpack.c.h.b16 %v142
    %v2039 = vunpack.c.l.b16 %v143
    %v2040 = vunpack.c.h.b16 %v143
    %v2041 = vunpack.c.l.b16 %v144
    %v2042 = vunpack.c.h.b16 %v144
    %v2043 = vunpack.c.l.b16 %v145
    %v2044 = vunpack.c.h.b16 %v145
    %v2045 = vunpack.c.l.b16 %v146
    %v2046 = vunpack.c.h.b16 %v146
    %v2047 = vunpack.c.l.b16 %v147
    %v2048 = vunpack.c.h.b16 %v147
    %v2049 = vunpack.c.l.b16 %v148
    %v2050 = vunpack.c.h.b16 %v148
    %v2051 = vunpack.c.l.b16 %v149
    %v2052 = vunpack.c.h.b16 %v149
    %v2053 = vunpack.c.l.b16 %v150
    %v2054 = vunpack.c.h.b16 %v150
    %v2055 = vunpack.c.l.b16 %v151
    %v2056 = vunpack.c.h.b16 %v151
    %v2057 = vunpack.c.l.b16 %v152
    %v2058 = vunpack.c.h.b16 %v152
    %v2059 = vunpack.c.l.b16 %v153
    %v2060 = vunpack.c.h.b16 %v153
    %v2061 = vunpack.c.l.b16 %v154
    %v2062 = vunpack.c.h.b16 %v154
    %v2063 = vunpack.c.l.b16 %v155
    %v2064 = vunpack.c.h.b16 %v155
    %v2065 = vunpack.c.l.b16 %v156
    %v2066 = vunpack.c.h.b16 %v156
    %v2067 = vunpack.c.l.b16 %v157
    %v2068 = vunpack.c.h.b16 %v157
    %v2069 = vunpack.c.l.b16 %v158
    %v2070 = vunpack.c.h.b16 %v158
    %v2071 = vunpack.c.l.b16 %v159
    %v2072 = vunpack.c.h.b16 %v159
    %v2073 = vunpack.c.l.b16 %v160
    %v2074 = vunpack.c.h.b16 %v160
    %v2075 = vunpack.c.l.b16 %v161
    %v2076 = vunpack.c.h.b16 %v161
    %v2077 = vunpack.c.l.b16 %v162
    %v2078 = vunpack.c.h.b16 %v162
    %v2079 = vunpack.c.l.b16 %v163
    %v2080 = vunpack.c.h.b16 %v163
    %v2081 = vunpack.c.l.b16 %v164
    %v2082 = vunpack.c.h.b16 %v164
    %v2083 = vunpack.c.l.b16 %v165
    %v2084 = vunpack.c.h.b16 %v165
    %v2085 = vunpack.c.l.b16 %v166
    %v2086 = vunpack.c.h.b16 %v166
    %v2087 = vunpack.c.l.b16 %v167
    %v2088 = vunpack.c.h.b16 %v167
    %v2089 = vunpack.c.l.b16 %v168
    %v2090 = vunpack.c.h.b16 %v168
    %v2091 = vunpack.c.l.b16 %v169
    %v2092 = vunpack.c.h.b16 %v169
    %v2093 = vunpack.c.l.b16 %v170
    %v2094 = vunpack.c.h.b16 %v170
    %v2095 = vunpack.c.l.b16 %v171
    %v2096 = vunpack.c.h.b16 %v171
    %v2097 = vunpack.c.l.b16 %v172
    %v2098 = vunpack.c.h.b16 %v172
    %v2099 = vunpack.c.l.b16 %v173
    %v2100 = vunpack.c.h.b16 %v173
    %v2101 = vunpack.c.l.b16 %v174
    %v2102 = vunpack.c.h.b16 %v174
    %v2103 = vunpack.c.l.b16 %v175
    %v2104 = vunpack.c.h.b16 %v175
    %v2105 = vunpack.c.l.b16 %v176
    %v2106 = vunpack.c.h.b16 %v176
    %v2107 = vunpack.c.l.b16 %v177
    %v2108 = vunpack.c.h.b16 %v177
    %v2109 = vunpack.c.l.b16 %v178
    %v2110 = vunpack.c.h.b16 %v178
    %v2111 = vunpack.c.l.b16 %v179
    %v2112 = vunpack.c.h.b16 %v179
    %v2113 = vunpack.c.l.b16 %v180
    %v2114 = vunpack.c.h.b16 %v180
    %v2115 = vunpack.c.l.b16 %v181
    %v2116 = vunpack.c.h.b16 %v181
    %v2117 = vunpack.c.l.b16 %v182
    %v2118 = vunpack.c.h.b16 %v182
    %v2119 = vunpack.c.l.b16 %v183
    %v2120 = vunpack.c.h.b16 %v183
    %v2121 = vunpack.c.l.b16 %v184
    %v2122 = vunpack.c.h.b16 %v184
    %v2123 = vunpack.c.l.b16 %v185
    %v2124 = vunpack.c.h.b16 %v185
    %v2125 = vunpack.c.l.b16 %v186
    %v2126 = vunpack.c.h.b16 %v186
    %v2127 = vunpack.c.l.b16 %v187
    %v2128 = vunpack.c.h.b16 %v187
    %v2129 = vunpack.c.l.b16 %v188
    %v2130 = vunpack.c.h.b16 %v188
    %v2131 = vunpack.c.l.b16 %v189
    %v2132 = vunpack.c.h.b16 %v189
    %v2133 = vunpack.c.l.b16 %v190
    %v2134 = vunpack.c.h.b16 %v190
    %v2135 = vunpack.c.l.b16 %v191
    %v2136 = vunpack.c.h.b16 %v191
    %v2137 = vunpack.c.l.b16 %v192
    %v2138 = vunpack.c.h.b16 %v192
    %v2139 = vunpack.c.l.b16 %v193
    %v2140 = vunpack.c.h.b16 %v193
    %v2141 = vunpack.c.l.b16 %v194
    %v2142 = vunpack.c.h.b16 %v194
    %v2143 = vunpack.c.l.b16 %v195
    %v2144 = vunpack.c.h.b16 %v195
    %v2145 = vunpack.c.l.b16 %v196
    %v2146 = vunpack.c.h.b16 %v196
    %v2147 = vunpack.c.l.b16 %v197
    %v2148 = vunpack.c.h.b16 %v197
    %v2149 = vunpack.c.l.b16 %v198
    %v2150 = vunpack.c.h.b16 %v198
    %v2151 = vunpack.c.l.b16 %v199
    %v2152 = vunpack.c.h.b16 %v199
    %v2153 = vunpack.c.l.b16 %v200
    %v2154 = vunpack.c.h.b16 %v200
    %v2155 = vunpack.c.l.b16 %v201
    %v2156 = vunpack.c.h.b16 %v201
    %v2157 = vunpack.c.l.b16 %v202
    %v2158 = vunpack.c.h.b16 %v202
    %v2159 = vunpack.c.l.b16 %v203
    %v2160 = vunpack.c.h.b16 %v203
    %v2161 = vunpack.c.l.b16 %v204
    %v2162 = vunpack.c.h.b16 %v204
    %v2163 = vunpack.c.l.b16 %v205
    %v2164 = vunpack.c.h.b16 %v205
    %v2165 = vunpack.c.l.b16 %v206
    %v2166 = vunpack.c.h.b16 %v206
    %v2167 = vunpack.c.l.b16 %v207
    %v2168 = vunpack.c.h.b16 %v207
    %v2169 = vunpack.c.l.b16 %v208
    %v2170 = vunpack.c.h.b16 %v208
    %v2171 = vunpack.c.l.b16 %v209
    %v2172 = vunpack.c.h.b16 %v209
    %v2173 = vunpack.c.l.b16 %v210
    %v2174 = vunpack.c.h.b16 %v210
    %v2175 = vunpack.c.l.b16 %v211
    %v2176 = vunpack.c.h.b16 %v211
    %v2177 = vunpack.c.l.b16 %v212
    %v2178 = vunpack.c.h.b16 %v212
    %v2179 = vunpack.c.l.b16 %v213
    %v2180 = vunpack.c.h.b16 %v213
    %v2181 = vunpack.c.l.b16 %v214
    %v2182 = vunpack.c.h.b16 %v214
    %v2183 = vunpack.c.l.b16 %v215
    %v2184 = vunpack.c.h.b16 %v215
    %v2185 = vunpack.c.l.b16 %v216
    %v2186 = vunpack.c.h.b16 %v216
    %v2187 = vunpack.c.l.b16 %v217
    %v2188 = vunpack.c.h.b16 %v217
    %v2189 = vunpack.c.l.b16 %v218
    %v2190 = vunpack.c.h.b16 %v218
    %v2191 = vunpack.c.l.b16 %v219
    %v2192 = vunpack.c.h.b16 %v219
    %v2193 = vunpack.c.l.b16 %v220
    %v2194 = vunpack.c.h.b16 %v220
    %v2195 = vunpack.c.l.b16 %v221
    %v2196 = vunpack.c.h.b16 %v221
    %v2197 = vunpack.c.l.b16 %v222
    %v2198 = vunpack.c.h.b16 %v222
    %v2199 = vunpack.c.l.b16 %v223
    %v2200 = vunpack.c.h.b16 %v223
    %v2201 = vunpack.c.l.b16 %v224
    %v2202 = vunpack.c.h.b16 %v224
    %v2203 = vunpack.c.l.b16 %v225
    %v2204 = vunpack.c.h.b16 %v225
    %v2205 = vunpack.c.l.b16 %v226
    %v2206 = vunpack.c.h.b16 %v226
    %v2207 = vunpack.c.l.b16 %v227
    %v2208 = vunpack.c.h.b16 %v227
    %v2209 = vunpack.c.l.b16 %v228
    %v2210 = vunpack.c.h.b16 %v228
    %v2211 = vunpack.c.l.b16 %v229
    %v2212 = vunpack.c.h.b16 %v229
    %v2213 = vunpack.c.l.b16 %v230
    %v2214 = vunpack.c.h.b16 %v230
    %v2215 = vunpack.c.l.b16 %v231
    %v2216 = vunpack.c.h.b16 %v231
    %v2217 = vunpack.c.l.b16 %v232
    %v2218 = vunpack.c.h.b16 %v232
    %v2219 = vunpack.c.l.b16 %v233
    %v2220 = vunpack.c.h.b16 %v233
    %v2221 = vunpack.c.l.b16 %v234
    %v2222 = vunpack.c.h.b16 %v234
    %v2223 = vunpack.c.l.b16 %v235
    %v2224 = vunpack.c.h.b16 %v235
    %v2225 = vunpack.c.l.b16 %v236
    %v2226 = vunpack.c.h.b16 %v236
    %v2227 = vunpack.c.l.b16 %v237
    %v2228 = vunpack.c.h.b16 %v237
    %v2229 = vunpack.c.l.b16 %v238
    %v2230 = vunpack.c.h.b16 %v238
    %v2231 = vunpack.c.l.b16 %v239
    %v2232 = vunpack.c.h.b16 %v239
    %v2233 = vunpack.c.l.b16 %v240
    %v2234 = vunpack.c.h.b16 %v240
    %v2235 = vunpack.c.l.b16 %v241
    %v2236 = vunpack.c.h.b16 %v241
    %v2237 = vunpack.c.l.b16 %v242
    %v2238 = vunpack.c.h.b16 %v242
    %v2239 = vunpack.c.l.b16 %v243
    %v2240 = vunpack.c.h.b16 %v243
    %v2241 = vunpack.c.l.b16 %v244
    %v2242 = vunpack.c.h.b16 %v244
    %v2243 = vunpack.c.l.b16 %v245
    %v2244 = vunpack.c.h.b16 %v245
    %v2245 = vunpack.c.l.b16 %v246
    %v2246 = vunpack.c.h.b16 %v246
    %v2247 = vunpack.c.l.b16 %v247
    %v2248 = vunpack.c.h.b16 %v247
    %v2249 = vunpack.c.l.b16 %v248
    %v2250 = vunpack.c.h.b16 %v248
    %v2251 = vunpack.c.l.b16 %v249
    %v2252 = vunpack.c.h.b16 %v249
    %v2253 = vunpack.c.l.b16 %v250
    %v2254 = vunpack.c.h.b16 %v250
    %v2255 = vunpack.c.l.b16 %v251
    %v2256 = vunpack.c.h.b16 %v251
    %v2257 = vunpack.c.l.b16 %v252
    %v2258 = vunpack.c.h.b16 %v252
    %v2259 = vunpack.c.l.b16 %v253
    %v2260 = vunpack.c.h.b16 %v253
    %v2261 = vunpack.c.l.b16 %v254
    %v2262 = vunpack.c.h.b16 %v254
    %v2263 = vunpack.c.l.b16 %v255
    %v2264 = vunpack.c.h.b16 %v255
    %v2265 = vunpack.c.l.b16 %v256
    %v2266 = vunpack.c.h.b16 %v256
    %v2267 = vunpack.c.l.b16 %v257
    %v2268 = vunpack.c.h.b16 %v257
    %v2269 = vunpack.c.l.b16 %v258
    %v2270 = vunpack.c.h.b16 %v258
    %v2271 = vunpack.c.l.b16 %v259
    %v2272 = vunpack.c.h.b16 %v259
    %v2273 = vunpack.c.l.b16 %v260
    %v2274 = vunpack.c.h.b16 %v260
    %v2275 = vunpack.c.l.b16 %v261
    %v2276 = vunpack.c.h.b16 %v261
    %v2277 = vunpack.c.l.b16 %v262
    %v2278 = vunpack.c.h.b16 %v262
    %v2279 = vunpack.c.l.b16 %v263
    %v2280 = vunpack.c.h.b16 %v263
    %v2281 = vunpack.c.l.b16 %v264
    %v2282 = vunpack.c.h.b16 %v264
    %v2283 = vunpack.c.l.b16 %v265
    %v2284 = vunpack.c.h.b16 %v265
    %v2285 = vunpack.c.l.b16 %v266
    %v2286 = vunpack.c.h.b16 %v266
    %v2287 = vunpack.c.l.b16 %v267
    %v2288 = vunpack.c.h.b16 %v267
    %v2289 = vunpack.c.l.b16 %v268
    %v2290 = vunpack.c.h.b16 %v268
    %v2291 = vunpack.c.l.b16 %v269
    %v2292 = vunpack.c.h.b16 %v269
    %v2293 = vunpack.c.l.b16 %v270
    %v2294 = vunpack.c.h.b16 %v270
    %v2295 = vunpack.c.l.b16 %v271
    %v2296 = vunpack.c.h.b16 %v271
    %v2297 = vunpack.c.l.b16 %v272
    %v2298 = vunpack.c.h.b16 %v272
    %v2299 = vunpack.c.l.b16 %v273
    %v2300 = vunpack.c.h.b16 %v273
    %v2301 = vunpack.c.l.b16 %v274
    %v2302 = vunpack.c.h.b16 %v274
    %v2303 = vunpack.c.l.b16 %v275
    %v2304 = vunpack.c.h.b16 %v275
    %v2305 = vunpack.c.l.b16 %v276
    %v2306 = vunpack.c.h.b16 %v276
    %v2307 = vunpack.c.l.b16 %v277
    %v2308 = vunpack.c.h.b16 %v277
    %v2309 = vunpack.c.l.b16 %v278
    %v2310 = vunpack.c.h.b16 %v278
    %v2311 = vunpack.c.l.b16 %v279
    %v2312 = vunpack.c.h.b16 %v279
    %v2313 = vunpack.c.l.b16 %v280
    %v2314 = vunpack.c.h.b16 %v280
    %v2315 = vunpack.c.l.b16 %v281
    %v2316 = vunpack.c.h.b16 %v281
    %v2317 = vunpack.c.l.b16 %v282
    %v2318 = vunpack.c.h.b16 %v282
    %v2319 = vunpack.c.l.b16 %v283
    %v2320 = vunpack.c.h.b16 %v283
    %v2321 = vunpack.c.l.b16 %v284
    %v2322 = vunpack.c.h.b16 %v284
    %v2323 = vunpack.c.l.b16 %v285
    %v2324 = vunpack.c.h.b16 %v285
    %v2325 = vunpack.c.l.b16 %v286
    %v2326 = vunpack.c.h.b16 %v286
    %v2327 = vunpack.c.l.b16 %v287
    %v2328 = vunpack.c.h.b16 %v287
    %v2329 = vunpack.c.l.b16 %v288
    %v2330 = vunpack.c.h.b16 %v288
    %v2331 = vunpack.c.l.b16 %v289
    %v2332 = vunpack.c.h.b16 %v289
    %v2333 = vunpack.c.l.b16 %v290
    %v2334 = vunpack.c.h.b16 %v290
    %v2335 = vunpack.c.l.b16 %v291
    %v2336 = vunpack.c.h.b16 %v291
    %v2337 = vunpack.c.l.b16 %v292
    %v2338 = vunpack.c.h.b16 %v292
    %v2339 = vunpack.c.l.b16 %v293
    %v2340 = vunpack.c.h.b16 %v293
    %v2341 = vunpack.c.l.b16 %v294
    %v2342 = vunpack.c.h.b16 %v294
    %v2343 = vunpack.c.l.b16 %v295
    %v2344 = vunpack.c.h.b16 %v295
    %v2345 = vunpack.c.l.b16 %v296
    %v2346 = vunpack.c.h.b16 %v296
    %v2347 = vunpack.c.l.b16 %v297
    %v2348 = vunpack.c.h.b16 %v297
    %v2349 = vunpack.c.l.b16 %v298
    %v2350 = vunpack.c.h.b16 %v298
    %v2351 = vunpack.c.l.b16 %v299
    %v2352 = vunpack.c.h.b16 %v299
    %v2353 = vunpack.c.l.b16 %v300
    %v2354 = vunpack.c.h.b16 %v300
    %v2355 = vunpack.c.l.b16 %v301
    %v2356 = vunpack.c.h.b16 %v301
    %v2357 = vunpack.c.l.b16 %v302
    %v2358 = vunpack.c.h.b16 %v302
    %v2359 = vunpack.c.l.b16 %v303
    %v2360 = vunpack.c.h.b16 %v303
    %v2361 = vunpack.c.l.b16 %v304
    %v2362 = vunpack.c.h.b16 %v304
    %v2363 = vunpack.c.l.b16 %v305
    %v2364 = vunpack.c.h.b16 %v305
    %v2365 = vunpack.c.l.b16 %v306
    %v2366 = vunpack.c.h.b16 %v306
    %v2367 = vunpack.c.l.b16 %v307
    %v2368 = vunpack.c.h.b16 %v307
    %v2369 = vunpack.c.l.b16 %v308
    %v2370 = vunpack.c.h.b16 %v308
    %v2371 = vunpack.c.l.b16 %v309
    %v2372 = vunpack.c.h.b16 %v309
    %v2373 = vunpack.c.l.b16 %v310
    %v2374 = vunpack.c.h.b16 %v310
    %v2375 = vunpack.c.l.b16 %v311
    %v2376 = vunpack.c.h.b16 %v311
    %v2377 = vunpack.c.l.b16 %v312
    %v2378 = vunpack.c.h.b16 %v312
    %v2379 = vunpack.c.l.b16 %v313
    %v2380 = vunpack.c.h.b16 %v313
    %v2381 = vunpack.c.l.b16 %v314
    %v2382 = vunpack.c.h.b16 %v314
    %v2383 = vunpack.c.l.b16 %v315
    %v2384 = vunpack.c.h.b16 %v315
    %v2385 = vunpack.c.l.b16 %v316
    %v2386 = vunpack.c.h.b16 %v316
    %v2387 = vunpack.c.l.b16 %v317
    %v2388 = vunpack.c.h.b16 %v317
    %v2389 = vunpack.c.l.b16 %v318
    %v2390 = vunpack.c.h.b16 %v318
    %v2391 = vunpack.c.l.b16 %v319
    %v2392 = vunpack.c.h.b16 %v319
    %v2393 = vunpack.c.l.b16 %v320
    %v2394 = vunpack.c.h.b16 %v320
    %v2395 = vunpack.c.l.b16 %v321
    %v2396 = vunpack.c.h.b16 %v321
    %v2397 = vunpack.c.l.b16 %v322
    %v2398 = vunpack.c.h.b16 %v322
    %v2399 = vunpack.c.l.b16 %v323
    %v2400 = vunpack.c.h.b16 %v323
    %v2401 = vunpack.c.l.b16 %v324
    %v2402 = vunpack.c.h.b16 %v324
    %v2403 = vunpack.c.l.b16 %v325
    %v2404 = vunpack.c.h.b16 %v325
    %v2405 = vunpack.c.l.b16 %v326
    %v2406 = vunpack.c.h.b16 %v326
    %v2407 = vunpack.c.l.b16 %v327
    %v2408 = vunpack.c.h.b16 %v327
    %v2409 = vunpack.c.l.b16 %v328
    %v2410 = vunpack.c.h.b16 %v328
    %v2411 = vunpack.c.l.b16 %v329
    %v2412 = vunpack.c.h.b16 %v329
    %v2413 = vunpack.c.l.b16 %v330
    %v2414 = vunpack.c.h.b16 %v330
    %v2415 = vunpack.c.l.b16 %v331
    %v2416 = vunpack.c.h.b16 %v331
    %v2417 = vunpack.c.l.b16 %v332
    %v2418 = vunpack.c.h.b16 %v332
    %v2419 = vunpack.c.l.b16 %v333
    %v2420 = vunpack.c.h.b16 %v333
    %v2421 = vunpack.c.l.b16 %v334
    %v2422 = vunpack.c.h.b16 %v334
    %v2423 = vunpack.c.l.b16 %v335
    %v2424 = vunpack.c.h.b16 %v335
    %v2425 = vunpack.c.l.b16 %v336
    %v2426 = vunpack.c.h.b16 %v336
    %v2427 = vunpack.c.l.b16 %v337
    %v2428 = vunpack.c.h.b16 %v337
    %v2429 = vunpack.c.l.b16 %v338
    %v2430 = vunpack.c.h.b16 %v338
    %v2431 = vunpack.c.l.b16 %v339
    %v2432 = vunpack.c.h.b16 %v339
    %v2433 = vunpack.c.l.b16 %v340
    %v2434 = vunpack.c.h.b16 %v340
    %v2435 = vunpack.c.l.b16 %v341
    %v2436 = vunpack.c.h.b16 %v341
    %v2437 = vunpack.c.l.b16 %v342
    %v2438 = vunpack.c.h.b16 %v342
    %v2439 = vunpack.c.l.b16 %v343
    %v2440 = vunpack.c.h.b16 %v343
    %v2441 = vunpack.c.l.b16 %v344
    %v2442 = vunpack.c.h.b16 %v344
    %v2443 = vunpack.c.l.b16 %v345
    %v2444 = vunpack.c.h.b16 %v345
    %v2445 = vunpack.c.l.b16 %v346
    %v2446 = vunpack.c.h.b16 %v346
    %v2447 = vunpack.c.l.b16 %v347
    %v2448 = vunpack.c.h.b16 %v347
    %v2449 = vunpack.c.l.b16 %v348
    %v2450 = vunpack.c.h.b16 %v348
    %v2451 = vunpack.c.l.b16 %v349
    %v2452 = vunpack.c.h.b16 %v349
    %v2453 = vunpack.c.l.b16 %v350
    %v2454 = vunpack.c.h.b16 %v350
    %v2455 = vunpack.c.l.b16 %v351
    %v2456 = vunpack.c.h.b16 %v351
    %v2457 = vunpack.c.l.b16 %v352
    %v2458 = vunpack.c.h.b16 %v352
    %v2459 = vunpack.c.l.b16 %v353
    %v2460 = vunpack.c.h.b16 %v353
    %v2461 = vunpack.c.l.b16 %v354
    %v2462 = vunpack.c.h.b16 %v354
    %v2463 = vunpack.c.l.b16 %v355
    %v2464 = vunpack.c.h.b16 %v355
    %v2465 = vunpack.c.l.b16 %v356
    %v2466 = vunpack.c.h.b16 %v356
    %v2467 = vunpack.c.l.b16 %v357
    %v2468 = vunpack.c.h.b16 %v357
    %v2469 = vunpack.c.l.b16 %v358
    %v2470 = vunpack.c.h.b16 %v358
    %v2471 = vunpack.c.l.b16 %v359
    %v2472 = vunpack.c.h.b16 %v359
    %v2473 = vunpack.c.l.b16 %v360
    %v2474 = vunpack.c.h.b16 %v360
    %v2475 = vunpack.c.l.b16 %v361
    %v2476 = vunpack.c.h.b16 %v361
    %v2477 = vunpack.c.l.b16 %v362
    %v2478 = vunpack.c.h.b16 %v362
    %v2479 = vunpack.c.l.b16 %v363
    %v2480 = vunpack.c.h.b16 %v363
    %v2481 = vunpack.c.l.b16 %v364
    %v2482 = vunpack.c.h.b16 %v364
    %v2483 = vunpack.c.l.b16 %v365
    %v2484 = vunpack.c.h.b16 %v365
    %v2485 = vunpack.c.l.b16 %v366
    %v2486 = vunpack.c.h.b16 %v366
    %v2487 = vunpack.c.l.b16 %v367
    %v2488 = vunpack.c.h.b16 %v367
    %v2489 = vunpack.c.l.b16 %v368
    %v2490 = vunpack.c.h.b16 %v368
    %v2491 = vunpack.c.l.b16 %v369
    %v2492 = vunpack.c.h.b16 %v369
    %v2493 = vunpack.c.l.b16 %v370
    %v2494 = vunpack.c.h.b16 %v370
    %v2495 = vunpack.c.l.b16 %v371
    %v2496 = vunpack.c.h.b16 %v371
    %v2497 = vunpack.c.l.b16 %v372
    %v2498 = vunpack.c.h.b16 %v372
    %v2499 = vunpack.c.l.b16 %v373
    %v2500 = vunpack.c.h.b16 %v373
    %v2501 = vunpack.c.l.b16 %v374
    %v2502 = vunpack.c.h.b16 %v374
    %v2503 = vunpack.c.l.b16 %v375
    %v2504 = vunpack.c.h.b16 %v375
    %v2505 = vunpack.c.l.b16 %v376
    %v2506 = vunpack.c.h.b16 %v376
    %v2507 = vunpack.c.l.b16 %v377
    %v2508 = vunpack.c.h.b16 %v377
    %v2509 = vunpack.c.l.b16 %v378
    %v2510 = vunpack.c.h.b16 %v378
    %v2511 = vunpack.c.l.b16 %v379
    %v2512 = vunpack.c.h.b16 %v379
    %v2513 = vunpack.c.l.b16 %v380
    %v2514 = vunpack.c.h.b16 %v380
    %v2515 = vunpack.c.l.b16 %v381
    %v2516 = vunpack.c.h.b16 %v381
    %v2517 = vunpack.c.l.b16 %v382
    %v2518 = vunpack.c.h.b16 %v382
    %v2519 = vunpack.c.l.b16 %v383
    %v2520 = vunpack.c.h.b16 %v383
    %v2521 = vunpack.c.l.b16 %v384
    %v2522 = vunpack.c.h.b16 %v384
    %v2523 = vunpack.c.l.b16 %v385
    %v2524 = vunpack.c.h.b16 %v385
    %v2525 = vunpack.c.l.b16 %v386
    %v2526 = vunpack.c.h.b16 %v386
    %v2527 = vunpack.c.l.b16 %v387
    %v2528 = vunpack.c.h.b16 %v387
    %v2529 = vunpack.c.l.b16 %v388
    %v2530 = vunpack.c.h.b16 %v388
    %v2531 = vunpack.c.l.b16 %v389
    %v2532 = vunpack.c.h.b16 %v389
    %v2533 = vunpack.c.l.b16 %v390
    %v2534 = vunpack.c.h.b16 %v390
    %v2535 = vunpack.c.l.b16 %v391
    %v2536 = vunpack.c.h.b16 %v391
    %v2537 = vunpack.c.l.b16 %v392
    %v2538 = vunpack.c.h.b16 %v392
    %v2539 = vunpack.c.l.b16 %v393
    %v2540 = vunpack.c.h.b16 %v393
    %v2541 = vunpack.c.l.b16 %v394
    %v2542 = vunpack.c.h.b16 %v394
    %v2543 = vunpack.c.l.b16 %v395
    %v2544 = vunpack.c.h.b16 %v395
    %v2545 = vunpack.c.l.b16 %v396
    %v2546 = vunpack.c.h.b16 %v396
    %v2547 = vunpack.c.l.b16 %v397
    %v2548 = vunpack.c.h.b16 %v397
    %v2549 = vunpack.c.l.b16 %v398
    %v2550 = vunpack.c.h.b16 %v398
    %v2551 = vunpack.c.l.b16 %v399
    %v2552 = vunpack.c.h.b16 %v399
    %v2553 = vunpack.c.l.b16 %v400
    %v2554 = vunpack.c.h.b16 %v400
    %v2555 = vunpack.c.l.b16 %v401
    %v2556 = vunpack.c.h.b16 %v401
    %v2557 = vunpack.c.l.b16 %v402
    %v2558 = vunpack.c.h.b16 %v402
    %v2559 = vunpack.c.l.b16 %v403
    %v2560 = vunpack.c.h.b16 %v403
    %v2561 = vunpack.c.l.b16 %v404
    %v2562 = vunpack.c.h.b16 %v404
    %v2563 = vunpack.c.l.b16 %v405
    %v2564 = vunpack.c.h.b16 %v405
    %v2565 = vunpack.c.l.b16 %v406
    %v2566 = vunpack.c.h.b16 %v406
    %v2567 = vunpack.c.l.b16 %v407
    %v2568 = vunpack.c.h.b16 %v407
    %v2569 = vunpack.c.l.b16 %v408
    %v2570 = vunpack.c.h.b16 %v408
    %v2571 = vunpack.c.l.b16 %v409
    %v2572 = vunpack.c.h.b16 %v409
    %v2573 = vunpack.c.l.b16 %v410
    %v2574 = vunpack.c.h.b16 %v410
    %v2575 = vunpack.c.l.b16 %v411
    %v2576 = vunpack.c.h.b16 %v411
    %v2577 = vunpack.c.l.b16 %v412
    %v2578 = vunpack.c.h.b16 %v412
    %v2579 = vunpack.c.l.b16 %v413
    %v2580 = vunpack.c.h.b16 %v413
    %v2581 = vunpack.c.l.b16 %v414
    %v2582 = vunpack.c.h.b16 %v414
    %v2583 = vunpack.c.l.b16 %v415
    %v2584 = vunpack.c.h.b16 %v415
    %v2585 = vunpack.c.l.b16 %v416
    %v2586 = vunpack.c.h.b16 %v416
    %v2587 = vunpack.c.l.b16 %v417
    %v2588 = vunpack.c.h.b16 %v417
    %v2589 = vunpack.c.l.b16 %v418
    %v2590 = vunpack.c.h.b16 %v418
    %v2591 = vunpack.c.l.b16 %v419
    %v2592 = vunpack.c.h.b16 %v419
    %v2593 = vunpack.c.l.b16 %v420
    %v2594 = vunpack.c.h.b16 %v420
    %v2595 = vunpack.c.l.b16 %v421
    %v2596 = vunpack.c.h.b16 %v421
    %v2597 = vunpack.c.l.b16 %v422
    %v2598 = vunpack.c.h.b16 %v422
    %v2599 = vunpack.c.l.b16 %v423
    %v2600 = vunpack.c.h.b16 %v423
    %v2601 = vunpack.c.l.b16 %v424
    %v2602 = vunpack.c.h.b16 %v424
    %v2603 = vunpack.c.l.b16 %v425
    %v2604 = vunpack.c.h.b16 %v425
    %v2605 = vunpack.c.l.b16 %v426
    %v2606 = vunpack.c.h.b16 %v426
    %v2607 = vunpack.c.l.b16 %v427
    %v2608 = vunpack.c.h.b16 %v427
    %v2609 = vunpack.c.l.b16 %v428
    %v2610 = vunpack.c.h.b16 %v428
    %v2611 = vunpack.c.l.b16 %v429
    %v2612 = vunpack.c.h.b16 %v429
    %v2613 = vunpack.c.l.b16 %v430
    %v2614 = vunpack.c.h.b16 %v430
    %v2615 = vunpack.c.l.b16 %v431
    %v2616 = vunpack.c.h.b16 %v431
    %v2617 = vunpack.c.l.b16 %v432
    %v2618 = vunpack.c.h.b16 %v432
    %v2619 = vunpack.c.l.b16 %v433
    %v2620 = vunpack.c.h.b16 %v433
    %v2621 = vunpack.c.l.b16 %v434
    %v2622 = vunpack.c.h.b16 %v434
    %v2623 = vunpack.c.l.b16 %v435
    %v2624 = vunpack.c.h.b16 %v435
    %v2625 = vunpack.c.l.b16 %v436
    %v2626 = vunpack.c.h.b16 %v436
    %v2627 = vunpack.c.l.b16 %v437
    %v2628 = vunpack.c.h.b16 %v437
    %v2629 = vunpack.c.l.b16 %v438
    %v2630 = vunpack.c.h.b16 %v438
    %v2631 = vunpack.c.l.b16 %v439
    %v2632 = vunpack.c.h.b16 %v439
    %v2633 = vunpack.c.l.b16 %v440
    %v2634 = vunpack.c.h.b16 %v440
    %v2635 = vunpack.c.l.b16 %v441
    %v2636 = vunpack.c.h.b16 %v441
    %v2637 = vunpack.c.l.b16 %v442
    %v2638 = vunpack.c.h.b16 %v442
    %v2639 = vunpack.c.l.b16 %v443
    %v2640 = vunpack.c.h.b16 %v443
    %v2641 = vunpack.c.l.b16 %v444
    %v2642 = vunpack.c.h.b16 %v444
    %v2643 = vunpack.c.l.b16 %v445
    %v2644 = vunpack.c.h.b16 %v445
    %v2645 = vunpack.c.l.b16 %v446
    %v2646 = vunpack.c.h.b16 %v446
    %v2647 = vunpack.c.l.b16 %v447
    %v2648 = vunpack.c.h.b16 %v447
    %v2649 = vunpack.c.l.b16 %v448
    %v2650 = vunpack.c.h.b16 %v448
    %v2651 = vunpack.c.l.b16 %v449
    %v2652 = vunpack.c.h.b16 %v449
    %v2653 = vunpack.c.l.b16 %v450
    %v2654 = vunpack.c.h.b16 %v450
    %v2655 = vunpack.c.l.b16 %v451
    %v2656 = vunpack.c.h.b16 %v451
    %v2657 = vunpack.c.l.b16 %v452
    %v2658 = vunpack.c.h.b16 %v452
    %v2659 = vunpack.c.l.b16 %v453
    %v2660 = vunpack.c.h.b16 %v453
    %v2661 = vunpack.c.l.b16 %v454
    %v2662 = vunpack.c.h.b16 %v454
    %v2663 = vunpack.c.l.b16 %v455
    %v2664 = vunpack.c.h.b16 %v455
    %v2665 = vunpack.c.l.b16 %v456
    %v2666 = vunpack.c.h.b16 %v456
    %v2667 = vunpack.c.l.b16 %v457
    %v2668 = vunpack.c.h.b16 %v457
    %v2669 = vunpack.c.l.b16 %v458
    %v2670 = vunpack.c.h.b16 %v458
    %v2671 = vunpack.c.l.b16 %v459
    %v2672 = vunpack.c.h.b16 %v459
    %v2673 = vunpack.c.l.b16 %v460
    %v2674 = vunpack.c.h.b16 %v460
    %v2675 = vunpack.c.l.b16 %v461
    %v2676 = vunpack.c.h.b16 %v461
    %v2677 = vunpack.c.l.b16 %v462
    %v2678 = vunpack.c.h.b16 %v462
    %v2679 = vunpack.c.l.b16 %v463
    %v2680 = vunpack.c.h.b16 %v463
    %v2681 = vunpack.c.l.b16 %v464
    %v2682 = vunpack.c.h.b16 %v464
    %v2683 = vunpack.c.l.b16 %v465
    %v2684 = vunpack.c.h.b16 %v465
    %v2685 = vunpack.c.l.b16 %v466
    %v2686 = vunpack.c.h.b16 %v466
    %v2687 = vunpack.c.l.b16 %v467
    %v2688 = vunpack.c.h.b16 %v467
    %v2689 = vunpack.c.l.b16 %v468
    %v2690 = vunpack.c.h.b16 %v468
    %v2691 = vunpack.c.l.b16 %v469
    %v2692 = vunpack.c.h.b16 %v469
    %v2693 = vunpack.c.l.b16 %v470
    %v2694 = vunpack.c.h.b16 %v470
    %v2695 = vunpack.c.l.b16 %v471
    %v2696 = vunpack.c.h.b16 %v471
    %v2697 = vunpack.c.l.b16 %v472
    %v2698 = vunpack.c.h.b16 %v472
    %v2699 = vunpack.c.l.b16 %v473
    %v2700 = vunpack.c.h.b16 %v473
    %v2701 = vunpack.c.l.b16 %v474
    %v2702 = vunpack.c.h.b16 %v474
    %v2703 = vunpack.c.l.b16 %v475
    %v2704 = vunpack.c.h.b16 %v475
    %v2705 = vunpack.c.l.b16 %v476
    %v2706 = vunpack.c.h.b16 %v476
    %v2707 = vunpack.c.l.b16 %v477
    %v2708 = vunpack.c.h.b16 %v477
    %v2709 = vunpack.c.l.b16 %v478
    %v2710 = vunpack.c.h.b16 %v478
    %v2711 = vunpack.c.l.b16 %v479
    %v2712 = vunpack.c.h.b16 %v479
    %v2713 = vunpack.c.l.b16 %v480
    %v2714 = vunpack.c.h.b16 %v480
    %v2715 = vunpack.c.l.b16 %v481
    %v2716 = vunpack.c.h.b16 %v481
    %v2717 = vunpack.c.l.b16 %v482
    %v2718 = vunpack.c.h.b16 %v482
    %v2719 = vunpack.c.l.b16 %v483
    %v2720 = vunpack.c.h.b16 %v483
    %v2721 = vunpack.c.l.b16 %v484
    %v2722 = vunpack.c.h.b16 %v484
    %v2723 = vunpack.c.l.b16 %v485
    %v2724 = vunpack.c.h.b16 %v485
    %v2725 = vunpack.c.l.b16 %v486
    %v2726 = vunpack.c.h.b16 %v486
    %v2727 = vunpack.c.l.b16 %v487
    %v2728 = vunpack.c.h.b16 %v487
    %v2729 = vunpack.c.l.b16 %v488
    %v2730 = vunpack.c.h.b16 %v488
    %v2731 = vunpack.c.l.b16 %v489
    %v2732 = vunpack.c.h.b16 %v489
    %v2733 = vunpack.c.l.b16 %v490
    %v2734 = vunpack.c.h.b16 %v490
    %v2735 = vunpack.c.l.b16 %v491
    %v2736 = vunpack.c.h.b16 %v491
    %v2737 = vunpack.c.l.b16 %v492
    %v2738 = vunpack.c.h.b16 %v492
    %v2739 = vunpack.c.l.b16 %v493
    %v2740 = vunpack.c.h.b16 %v493
    %v2741 = vunpack.c.l.b16 %v494
    %v2742 = vunpack.c.h.b16 %v494
    %v2743 = vunpack.c.l.b16 %v495
    %v2744 = vunpack.c.h.b16 %v495
    %v2745 = vunpack.c.l.b16 %v496
    %v2746 = vunpack.c.h.b16 %v496
    %v2747 = vunpack.c.l.b16 %v497
    %v2748 = vunpack.c.h.b16 %v497
    %v2749 = vunpack.c.l.b16 %v498
    %v2750 = vunpack.c.h.b16 %v498
    %v2751 = vunpack.c.l.b16 %v499
    %v2752 = vunpack.c.h.b16 %v499
    %v2753 = vunpack.c.l.b16 %v500
    %v2754 = vunpack.c.h.b16 %v500
    %v2755 = vunpack.c.l.b16 %v501
    %v2756 = vunpack.c.h.b16 %v501
    %v2757 = vunpack.c.l.b16 %v502
    %v2758 = vunpack.c.h.b16 %v502
    %v2759 = vunpack.c.l.b16 %v503
    %v2760 = vunpack.c.h.b16 %v503
    %v2761 = vunpack.c.l.b16 %v504
    %v2762 = vunpack.c.h.b16 %v504
    %v2763 = vunpack.c.l.b16 %v505
    %v2764 = vunpack.c.h.b16 %v505
    %v2765 = vunpack.c.l.b16 %v506
    %v2766 = vunpack.c.h.b16 %v506
    %v2767 = vunpack.c.l.b16 %v507
    %v2768 = vunpack.c.h.b16 %v507
    %v2769 = vunpack.c.l.b16 %v508
    %v2770 = vunpack.c.h.b16 %v508
    %v2771 = vunpack.c.l.b16 %v509
    %v2772 = vunpack.c.h.b16 %v509
    %v2773 = vunpack.c.l.b16 %v510
    %v2774 = vunpack.c.h.b16 %v510
    %v2775 = vunpack.c.l.b16 %v511
    %v2776 = vunpack.c.h.b16 %v511
    %v2777 = vunpack.c.l.b16 %v512
    %v2778 = vunpack.c.h.b16 %v512
    %v2779 = vunpack.c.l.b16 %v513
    %v2780 = vunpack.c.h.b16 %v513
    %v2781 = vunpack.c.l.b16 %v514
    %v2782 = vunpack.c.h.b16 %v514
    %v2783 = vunpack.c.l.b16 %v515
    %v2784 = vunpack.c.h.b16 %v515
    %v2785 = vunpack.c.l.b16 %v516
    %v2786 = vunpack.c.h.b16 %v516
    %v2787 = vunpack.c.l.b16 %v517
    %v2788 = vunpack.c.h.b16 %v517
    %v2789 = vunpack.c.l.b16 %v518
    %v2790 = vunpack.c.h.b16 %v518
    %v2791 = vunpack.c.l.b16 %v519
    %v2792 = vunpack.c.h.b16 %v519
    %v2793 = vunpack.c.l.b16 %v520
    %v2794 = vunpack.c.h.b16 %v520
    %v2795 = vunpack.c.l.b16 %v521
    %v2796 = vunpack.c.h.b16 %v521
    %v2797 = vunpack.c.l.b16 %v522
    %v2798 = vunpack.c.h.b16 %v522
    %v2799 = vunpack.c.l.b16 %v523
    %v2800 = vunpack.c.h.b16 %v523
    %v2801 = vunpack.c.l.b16 %v524
    %v2802 = vunpack.c.h.b16 %v524
    %v2803 = vunpack.c.l.b16 %v525
    %v2804 = vunpack.c.h.b16 %v525
    %v2805 = vunpack.c.l.b16 %v526
    %v2806 = vunpack.c.h.b16 %v526
    %v2807 = vunpack.c.l.b16 %v527
    %v2808 = vunpack.c.h.b16 %v527
    %v2809 = vunpack.c.l.b16 %v528
    %v2810 = vunpack.c.h.b16 %v528
    %v2811 = vunpack.c.l.b16 %v529
    %v2812 = vunpack.c.h.b16 %v529
    %v2813 = vunpack.c.l.b16 %v530
    %v2814 = vunpack.c.h.b16 %v530
    %v2815 = vunpack.c.l.b16 %v531
    %v2816 = vunpack.c.h.b16 %v531
    %v2817 = vunpack.c.l.b16 %v532
    %v2818 = vunpack.c.h.b16 %v532
    %v2819 = vunpack.c.l.b16 %v533
    %v2820 = vunpack.c.h.b16 %v533
    %v2821 = vunpack.c.l.b16 %v534
    %v2822 = vunpack.c.h.b16 %v534
    %v2823 = vunpack.c.l.b16 %v535
    %v2824 = vunpack.c.h.b16 %v535
    %v2825 = vunpack.c.l.b16 %v536
    %v2826 = vunpack.c.h.b16 %v536
    %v2827 = vunpack.c.l.b16 %v537
    %v2828 = vunpack.c.h.b16 %v537
    %v2829 = vunpack.c.l.b16 %v538
    %v2830 = vunpack.c.h.b16 %v538
    %v2831 = vunpack.c.l.b16 %v539
    %v2832 = vunpack.c.h.b16 %v539
    %v2833 = vunpack.c.l.b16 %v540
    %v2834 = vunpack.c.h.b16 %v540
    %v2835 = vunpack.c.l.b16 %v541
    %v2836 = vunpack.c.h.b16 %v541
    %v2837 = vunpack.c.l.b16 %v542
    %v2838 = vunpack.c.h.b16 %v542
    %v2839 = vunpack.c.l.b16 %v543
    %v2840 = vunpack.c.h.b16 %v543
    %v2841 = vunpack.c.l.b16 %v544
    %v2842 = vunpack.c.h.b16 %v544
    %v2843 = vunpack.c.l.b16 %v545
    %v2844 = vunpack.c.h.b16 %v545
    %v2845 = vunpack.c.l.b16 %v546
    %v2846 = vunpack.c.h.b16 %v546
    %v2847 = vunpack.c.l.b16 %v547
    %v2848 = vunpack.c.h.b16 %v547
    %v2849 = vunpack.c.l.b16 %v548
    %v2850 = vunpack.c.h.b16 %v548
    %v2851 = vunpack.c.l.b16 %v549
    %v2852 = vunpack.c.h.b16 %v549
    %v2853 = vunpack.c.l.b16 %v550
    %v2854 = vunpack.c.h.b16 %v550
    %v2855 = vunpack.c.l.b16 %v551
    %v2856 = vunpack.c.h.b16 %v551
    %v2857 = vunpack.c.l.b16 %v552
    %v2858 = vunpack.c.h.b16 %v552
    %v2859 = vunpack.c.l.b16 %v553
    %v2860 = vunpack.c.h.b16 %v553
    %v2861 = vunpack.c.l.b16 %v554
    %v2862 = vunpack.c.h.b16 %v554
    %v2863 = vunpack.c.l.b16 %v555
    %v2864 = vunpack.c.h.b16 %v555
    %v2865 = vunpack.c.l.b16 %v556
    %v2866 = vunpack.c.h.b16 %v556
    %v2867 = vunpack.c.l.b16 %v557
    %v2868 = vunpack.c.h.b16 %v557
    %v2869 = vunpack.c.l.b16 %v558
    %v2870 = vunpack.c.h.b16 %v558
    %v2871 = vunpack.c.l.b16 %v559
    %v2872 = vunpack.c.h.b16 %v559
    %v2873 = vunpack.c.l.b16 %v560
    %v2874 = vunpack.c.h.b16 %v560
    %v2875 = vunpack.c.l.b16 %v561
    %v2876 = vunpack.c.h.b16 %v561
    %v2877 = vunpack.c.l.b16 %v562
    %v2878 = vunpack.c.h.b16 %v562
    %v2879 = vunpack.c.l.b16 %v563
    %v2880 = vunpack.c.h.b16 %v563
    %v2881 = vunpack.c.l.b16 %v564
    %v2882 = vunpack.c.h.b16 %v564
    %v2883 = vunpack.c.l.b16 %v565
    %v2884 = vunpack.c.h.b16 %v565
    %v2885 = vunpack.c.l.b16 %v566
    %v2886 = vunpack.c.h.b16 %v566
    %v2887 = vunpack.c.l.b16 %v567
    %v2888 = vunpack.c.h.b16 %v567
    %v2889 = vunpack.c.l.b16 %v568
    %v2890 = vunpack.c.h.b16 %v568
    %v2891 = vunpack.c.l.b16 %v569
    %v2892 = vunpack.c.h.b16 %v569
    %v2893 = vunpack.c.l.b16 %v570
    %v2894 = vunpack.c.h.b16 %v570
    %v2895 = vunpack.c.l.b16 %v571
    %v2896 = vunpack.c.h.b16 %v571
    %v2897 = vunpack.c.l.b16 %v572
    %v2898 = vunpack.c.h.b16 %v572
    %v2899 = vunpack.c.l.b16 %v573
    %v2900 = vunpack.c.h.b16 %v573
    %v2901 = vunpack.c.l.b16 %v574
    %v2902 = vunpack.c.h.b16 %v574
    %v2903 = vunpack.c.l.b16 %v575
    %v2904 = vunpack.c.h.b16 %v575
    %v2905 = vunpack.c.l.b16 %v576
    %v2906 = vunpack.c.h.b16 %v576
    %v2907 = vunpack.c.l.b16 %v577
    %v2908 = vunpack.c.h.b16 %v577
    %v2909 = vunpack.c.l.b16 %v578
    %v2910 = vunpack.c.h.b16 %v578
    %v2911 = vunpack.c.l.b16 %v579
    %v2912 = vunpack.c.h.b16 %v579
    %v2913 = vunpack.c.l.b16 %v580
    %v2914 = vunpack.c.h.b16 %v580
    %v2915 = vunpack.c.l.b16 %v581
    %v2916 = vunpack.c.h.b16 %v581
    %v2917 = vunpack.c.l.b16 %v582
    %v2918 = vunpack.c.h.b16 %v582
    %v2919 = vunpack.c.l.b16 %v583
    %v2920 = vunpack.c.h.b16 %v583
    %v2921 = vunpack.c.l.b16 %v584
    %v2922 = vunpack.c.h.b16 %v584
    %v2923 = vunpack.c.l.b16 %v585
    %v2924 = vunpack.c.h.b16 %v585
    %v2925 = vunpack.c.l.b16 %v586
    %v2926 = vunpack.c.h.b16 %v586
    %v2927 = vunpack.c.l.b16 %v587
    %v2928 = vunpack.c.h.b16 %v587
    %v2929 = vunpack.c.l.b16 %v588
    %v2930 = vunpack.c.h.b16 %v588
    %v2931 = vunpack.c.l.b16 %v589
    %v2932 = vunpack.c.h.b16 %v589
    %v2933 = vunpack.c.l.b16 %v590
    %v2934 = vunpack.c.h.b16 %v590
    %v2935 = vunpack.c.l.b16 %v591
    %v2936 = vunpack.c.h.b16 %v591
    %v2937 = vunpack.c.l.b16 %v592
    %v2938 = vunpack.c.h.b16 %v592
    %v2939 = vunpack.c.l.b16 %v593
    %v2940 = vunpack.c.h.b16 %v593
    %v2941 = vunpack.c.l.b16 %v594
    %v2942 = vunpack.c.h.b16 %v594
    %v2943 = vunpack.c.l.b16 %v595
    %v2944 = vunpack.c.h.b16 %v595
    %v2945 = vunpack.c.l.b16 %v596
    %v2946 = vunpack.c.h.b16 %v596
    %v2947 = vunpack.c.l.b16 %v597
    %v2948 = vunpack.c.h.b16 %v597
    %v2949 = vunpack.c.l.b16 %v598
    %v2950 = vunpack.c.h.b16 %v598
    %v2951 = vunpack.c.l.b16 %v599
    %v2952 = vunpack.c.h.b16 %v599
    %v2953 = vunpack.c.l.b16 %v600
    %v2954 = vunpack.c.h.b16 %v600
    %v2955 = vunpack.c.l.b16 %v601
    %v2956 = vunpack.c.h.b16 %v601
    %v2957 = vunpack.c.l.b16 %v602
    %v2958 = vunpack.c.h.b16 %v602
    %v2959 = vunpack.c.l.b16 %v603
    %v2960 = vunpack.c.h.b16 %v603
    %v2961 = vunpack.c.l.b16 %v604
    %v2962 = vunpack.c.h.b16 %v604
    %v2963 = vunpack.c.l.b16 %v605
    %v2964 = vunpack.c.h.b16 %v605
    %v2965 = vunpack.c.l.b16 %v606
    %v2966 = vunpack.c.h.b16 %v606
    %v2967 = vunpack.c.l.b16 %v607
    %v2968 = vunpack.c.h.b16 %v607
    %v2969 = vunpack.c.l.b16 %v608
    %v2970 = vunpack.c.h.b16 %v608
    %v2971 = vunpack.c.l.b16 %v609
    %v2972 = vunpack.c.h.b16 %v609
    %v2973 = vunpack.c.l.b16 %v610
    %v2974 = vunpack.c.h.b16 %v610
    %v2975 = vunpack.c.l.b16 %v611
    %v2976 = vunpack.c.h.b16 %v611
    %v2977 = vunpack.c.l.b16 %v612
    %v2978 = vunpack.c.h.b16 %v612
    %v2979 = vunpack.c.l.b16 %v613
    %v2980 = vunpack.c.h.b16 %v613
    %v2981 = vunpack.c.l.b16 %v614
    %v2982 = vunpack.c.h.b16 %v614
    %v2983 = vunpack.c.l.b16 %v615
    %v2984 = vunpack.c.h.b16 %v615
    %v2985 = vunpack.c.l.b16 %v616
    %v2986 = vunpack.c.h.b16 %v616
    %v2987 = vunpack.c.l.b16 %v617
    %v2988 = vunpack.c.h.b16 %v617
    %v2989 = vunpack.c.l.b16 %v618
    %v2990 = vunpack.c.h.b16 %v618
    %v2991 = vunpack.c.l.b16 %v619
    %v2992 = vunpack.c.h.b16 %v619
    %v2993 = vunpack.c.l.b16 %v620
    %v2994 = vunpack.c.h.b16 %v620
    %v2995 = vunpack.c.l.b16 %v621
    %v2996 = vunpack.c.h.b16 %v621
    %v2997 = vunpack.c.l.b16 %v622
    %v2998 = vunpack.c.h.b16 %v622
    %v2999 = vunpack.c.l.b16 %v623
    %v3000 = vunpack.c.h.b16 %v623
    %v3001 = vunpack.c.l.b16 %v624
    %v3002 = vunpack.c.h.b16 %v624
    %v3003 = vunpack.c.l.b16 %v625
    %v3004 = vunpack.c.h.b16 %v625
    %v3005 = vunpack.c.l.b16 %v626
    %v3006 = vunpack.c.h.b16 %v626
    %v3007 = vunpack.c.l.b16 %v627
    %v3008 = vunpack.c.h.b16 %v627
    %v3009 = vunpack.c.l.b16 %v628
    %v3010 = vunpack.c.h.b16 %v628
    %v3011 = vunpack.c.l.b16 %v629
    %v3012 = vunpack.c.h.b16 %v629
    %v3013 = vunpack.c.l.b16 %v630
    %v3014 = vunpack.c.h.b16 %v630
    %v3015 = vunpack.c.l.b16 %v631
    %v3016 = vunpack.c.h.b16 %v631
    %v3017 = vunpack.c.l.b16 %v632
    %v3018 = vunpack.c.h.b16 %v632
    %v3019 = vunpack.c.l.b16 %v633
    %v3020 = vunpack.c.h.b16 %v633
    %v3021 = vunpack.c.l.b16 %v634
    %v3022 = vunpack.c.h.b16 %v634
    %v3023 = vunpack.c.l.b16 %v635
    %v3024 = vunpack.c.h.b16 %v635
    %v3025 = vunpack.c.l.b16 %v636
    %v3026 = vunpack.c.h.b16 %v636
    %v3027 = vunpack.c.l.b16 %v637
    %v3028 = vunpack.c.h.b16 %v637
    %v3029 = vunpack.c.l.b16 %v638
    %v3030 = vunpack.c.h.b16 %v638
    %v3031 = vunpack.c.l.b16 %v639
    %v3032 = vunpack.c.h.b16 %v639
    %v3033 = vunpack.c.l.b16 %v640
    %v3034 = vunpack.c.h.b16 %v640
    %v3035 = vunpack.c.l.b16 %v641
    %v3036 = vunpack.c.h.b16 %v641
    %v3037 = vunpack.c.l.b16 %v642
    %v3038 = vunpack.c.h.b16 %v642
    %v3039 = vunpack.c.l.b16 %v643
    %v3040 = vunpack.c.h.b16 %v643
    %v3041 = vunpack.c.l.b16 %v644
    %v3042 = vunpack.c.h.b16 %v644
    %v3043 = vunpack.c.l.b16 %v645
    %v3044 = vunpack.c.h.b16 %v645
    %v3045 = vunpack.c.l.b16 %v646
    %v3046 = vunpack.c.h.b16 %v646
    %v3047 = vunpack.c.l.b16 %v647
    %v3048 = vunpack.c.h.b16 %v647
    %v3049 = vunpack.c.l.b16 %v648
    %v3050 = vunpack.c.h.b16 %v648
    %v3051 = vunpack.c.l.b16 %v649
    %v3052 = vunpack.c.h.b16 %v649
    %v3053 = vunpack.c.l.b16 %v650
    %v3054 = vunpack.c.h.b16 %v650
    %v3055 = vunpack.c.l.b16 %v651
    %v3056 = vunpack.c.h.b16 %v651
    %v3057 = vunpack.c.l.b16 %v652
    %v3058 = vunpack.c.h.b16 %v652
    %v3059 = vunpack.c.l.b16 %v653
    %v3060 = vunpack.c.h.b16 %v653
    %v3061 = vunpack.c.l.b16 %v654
    %v3062 = vunpack.c.h.b16 %v654
    %v3063 = vunpack.c.l.b16 %v655
    %v3064 = vunpack.c.h.b16 %v655
    %v3065 = vunpack.c.l.b16 %v656
    %v3066 = vunpack.c.h.b16 %v656
    %v3067 = vunpack.c.l.b16 %v657
    %v3068 = vunpack.c.h.b16 %v657
    %v3069 = vunpack.c.l.b16 %v658
    %v3070 = vunpack.c.h.b16 %v658
    %v3071 = vunpack.c.l.b16 %v659
    %v3072 = vunpack.c.h.b16 %v659
    %v3073 = vunpack.c.l.b16 %v660
    %v3074 = vunpack.c.h.b16 %v660
    %v3075 = vunpack.c.l.b16 %v661
    %v3076 = vunpack.c.h.b16 %v661
    %v3077 = vunpack.c.l.b16 %v662
    %v3078 = vunpack.c.h.b16 %v662
    %v3079 = vunpack.c.l.b16 %v663
    %v3080 = vunpack.c.h.b16 %v663
    %v3081 = vunpack.c.l.b16 %v664
    %v3082 = vunpack.c.h.b16 %v664
    %v3083 = vunpack.c.l.b16 %v665
    %v3084 = vunpack.c.h.b16 %v665
    %v3085 = vunpack.c.l.b16 %v666
    %v3086 = vunpack.c.h.b16 %v666
    %v3087 = vunpack.c.l.b16 %v667
    %v3088 = vunpack.c.h.b16 %v667
    %v3089 = vunpack.c.l.b16 %v668
    %v3090 = vunpack.c.h.b16 %v668
    %v3091 = vunpack.c.l.b16 %v669
    %v3092 = vunpack.c.h.b16 %v669
    %v3093 = vunpack.c.l.b16 %v670
    %v3094 = vunpack.c.h.b16 %v670
    %v3095 = vunpack.c.l.b16 %v671
    %v3096 = vunpack.c.h.b16 %v671
    %v3097 = vunpack.c.l.b16 %v672
    %v3098 = vunpack.c.h.b16 %v672
    %v3099 = vunpack.c.l.b16 %v673
    %v3100 = vunpack.c.h.b16 %v673
    %v3101 = vunpack.c.l.b16 %v674
    %v3102 = vunpack.c.h.b16 %v674
    %v3103 = vunpack.c.l.b16 %v675
    %v3104 = vunpack.c.h.b16 %v675
    %v3105 = vunpack.c.l.b16 %v676
    %v3106 = vunpack.c.h.b16 %v676
    %v3107 = vunpack.c.l.b16 %v677
    %v3108 = vunpack.c.h.b16 %v677
    %v3109 = vunpack.c.l.b16 %v678
    %v3110 = vunpack.c.h.b16 %v678
    %v3111 = vunpack.c.l.b16 %v679
    %v3112 = vunpack.c.h.b16 %v679
    %v3113 = vunpack.c.l.b16 %v680
    %v3114 = vunpack.c.h.b16 %v680
    %v3115 = vunpack.c.l.b16 %v681
    %v3116 = vunpack.c.h.b16 %v681
    %v3117 = vunpack.c.l.b16 %v682
    %v3118 = vunpack.c.h.b16 %v682
    %v3119 = vunpack.c.l.b16 %v683
    %v3120 = vunpack.c.h.b16 %v683
    %v3121 = vunpack.c.l.b16 %v684
    %v3122 = vunpack.c.h.b16 %v684
    %v3123 = vunpack.c.l.b16 %v685
    %v3124 = vunpack.c.h.b16 %v685
    %v3125 = vunpack.c.l.b16 %v686
    %v3126 = vunpack.c.h.b16 %v686
    %v3127 = vunpack.c.l.b16 %v687
    %v3128 = vunpack.c.h.b16 %v687
    %v3129 = vunpack.c.l.b16 %v688
    %v3130 = vunpack.c.h.b16 %v688
    %v3131 = vunpack.c.l.b16 %v689
    %v3132 = vunpack.c.h.b16 %v689
    %v3133 = vunpack.c.l.b16 %v690
    %v3134 = vunpack.c.h.b16 %v690
    %v3135 = vunpack.c.l.b16 %v691
    %v3136 = vunpack.c.h.b16 %v691
    %v3137 = vunpack.c.l.b16 %v692
    %v3138 = vunpack.c.h.b16 %v692
    %v3139 = vunpack.c.l.b16 %v693
    %v3140 = vunpack.c.h.b16 %v693
    %v3141 = vunpack.c.l.b16 %v694
    %v3142 = vunpack.c.h.b16 %v694
    %v3143 = vunpack.c.l.b16 %v695
    %v3144 = vunpack.c.h.b16 %v695
    %v3145 = vunpack.c.l.b16 %v696
    %v3146 = vunpack.c.h.b16 %v696
    %v3147 = vunpack.c.l.b16 %v697
    %v3148 = vunpack.c.h.b16 %v697
    %v3149 = vunpack.c.l.b16 %v698
    %v3150 = vunpack.c.h.b16 %v698
    %v3151 = vunpack.c.l.b16 %v699
    %v3152 = vunpack.c.h.b16 %v699
    %v3153 = vunpack.c.l.b16 %v700
    %v3154 = vunpack.c.h.b16 %v700
    %v3155 = vunpack.c.l.b16 %v701
    %v3156 = vunpack.c.h.b16 %v701
    %v3157 = vunpack.c.l.b16 %v702
    %v3158 = vunpack.c.h.b16 %v702
    %v3159 = vunpack.c.l.b16 %v703
    %v3160 = vunpack.c.h.b16 %v703
    %v3161 = vunpack.c.l.b16 %v704
    %v3162 = vunpack.c.h.b16 %v704
    %v3163 = vunpack.c.l.b16 %v705
    %v3164 = vunpack.c.h.b16 %v705
    %v3165 = vunpack.c.l.b16 %v706
    %v3166 = vunpack.c.h.b16 %v706
    %v3167 = vunpack.c.l.b16 %v707
    %v3168 = vunpack.c.h.b16 %v707
    %v3169 = vunpack.c.l.b16 %v708
    %v3170 = vunpack.c.h.b16 %v708
    %v3171 = vunpack.c.l.b16 %v709
    %v3172 = vunpack.c.h.b16 %v709
    %v3173 = vunpack.c.l.b16 %v710
    %v3174 = vunpack.c.h.b16 %v710
    %v3175 = vunpack.c.l.b16 %v711
    %v3176 = vunpack.c.h.b16 %v711
    %v3177 = vunpack.c.l.b16 %v712
    %v3178 = vunpack.c.h.b16 %v712
    %v3179 = vunpack.c.l.b16 %v713
    %v3180 = vunpack.c.h.b16 %v713
    %v3181 = vunpack.c.l.b16 %v714
    %v3182 = vunpack.c.h.b16 %v714
    %v3183 = vunpack.c.l.b16 %v715
    %v3184 = vunpack.c.h.b16 %v715
    %v3185 = vunpack.c.l.b16 %v716
    %v3186 = vunpack.c.h.b16 %v716
    %v3187 = vunpack.c.l.b16 %v717
    %v3188 = vunpack.c.h.b16 %v717
    %v3189 = vunpack.c.l.b16 %v718
    %v3190 = vunpack.c.h.b16 %v718
    %v3191 = vunpack.c.l.b16 %v719
    %v3192 = vunpack.c.h.b16 %v719
    %v3193 = vunpack.c.l.b16 %v720
    %v3194 = vunpack.c.h.b16 %v720
    %v3195 = vunpack.c.l.b16 %v721
    %v3196 = vunpack.c.h.b16 %v721
    %v3197 = vunpack.c.l.b16 %v722
    %v3198 = vunpack.c.h.b16 %v722
    %v3199 = vunpack.c.l.b16 %v723
    %v3200 = vunpack.c.h.b16 %v723
    %v3201 = vunpack.c.l.b16 %v724
    %v3202 = vunpack.c.h.b16 %v724
    %v3203 = vunpack.c.l.b16 %v725
    %v3204 = vunpack.c.h.b16 %v725
    %v3205 = vunpack.c.l.b16 %v726
    %v3206 = vunpack.c.h.b16 %v726
    %v3207 = vunpack.c.l.b16 %v727
    %v3208 = vunpack.c.h.b16 %v727
    %v3209 = vunpack.c.l.b16 %v728
    %v3210 = vunpack.c.h.b16 %v728
    %v3211 = vunpack.c.l.b16 %v729
    %v3212 = vunpack.c.h.b16 %v729
    %v3213 = vunpack.c.l.b16 %v730
    %v3214 = vunpack.c.h.b16 %v730
    %v3215 = vunpack.c.l.b16 %v731
    %v3216 = vunpack.c.h.b16 %v731
    %v3217 = vunpack.c.l.b16 %v732
    %v3218 = vunpack.c.h.b16 %v732
    %v3219 = vunpack.c.l.b16 %v733
    %v3220 = vunpack.c.h.b16 %v733
    %v3221 = vunpack.c.l.b16 %v734
    %v3222 = vunpack.c.h.b16 %v734
    %v3223 = vunpack.c.l.b16 %v735
    %v3224 = vunpack.c.h.b16 %v735
    %v3225 = vunpack.c.l.b16 %v736
    %v3226 = vunpack.c.h.b16 %v736
    %v3227 = vunpack.c.l.b16 %v737
    %v3228 = vunpack.c.h.b16 %v737
    %v3229 = vunpack.c.l.b16 %v738
    %v3230 = vunpack.c.h.b16 %v738
    %v3231 = vunpack.c.l.b16 %v739
    %v3232 = vunpack.c.h.b16 %v739
    %v3233 = vunpack.c.l.b16 %v740
    %v3234 = vunpack.c.h.b16 %v740
    %v3235 = vunpack.c.l.b16 %v741
    %v3236 = vunpack.c.h.b16 %v741
    %v3237 = vunpack.c.l.b16 %v742
    %v3238 = vunpack.c.h.b16 %v742
    %v3239 = vunpack.c.l.b16 %v743
    %v3240 = vunpack.c.h.b16 %v743
    %v3241 = vunpack.c.l.b16 %v744
    %v3242 = vunpack.c.h.b16 %v744
    %v3243 = vunpack.c.l.b16 %v745
    %v3244 = vunpack.c.h.b16 %v745
    %v3245 = vunpack.c.l.b16 %v746
    %v3246 = vunpack.c.h.b16 %v746
    %v3247 = vunpack.c.l.b16 %v747
    %v3248 = vunpack.c.h.b16 %v747
    %v3249 = vunpack.c.l.b16 %v748
    %v3250 = vunpack.c.h.b16 %v748
    %v3251 = vunpack.c.l.b16 %v749
    %v3252 = vunpack.c.h.b16 %v749
    %v3253 = vunpack.c.l.b16 %v750
    %v3254 = vunpack.c.h.b16 %v750
    %v3255 = vunpack.c.l.b16 %v751
    %v3256 = vunpack.c.h.b16 %v751
    %v3257 = vunpack.c.l.b16 %v752
    %v3258 = vunpack.c.h.b16 %v752
    %v3259 = vunpack.c.l.b16 %v753
    %v3260 = vunpack.c.h.b16 %v753
    %v3261 = vunpack.c.l.b16 %v754
    %v3262 = vunpack.c.h.b16 %v754
    %v3263 = vunpack.c.l.b16 %v755
    %v3264 = vunpack.c.h.b16 %v755
    %v3265 = vunpack.c.l.b16 %v756
    %v3266 = vunpack.c.h.b16 %v756
    %v3267 = vunpack.c.l.b16 %v757
    %v3268 = vunpack.c.h.b16 %v757
    %v3269 = vunpack.c.l.b16 %v758
    %v3270 = vunpack.c.h.b16 %v758
    %v3271 = vunpack.c.l.b16 %v759
    %v3272 = vunpack.c.h.b16 %v759
    %v3273 = vunpack.c.l.b16 %v760
    %v3274 = vunpack.c.h.b16 %v760
    %v3275 = vunpack.c.l.b16 %v761
    %v3276 = vunpack.c.h.b16 %v761
    %v3277 = vunpack.c.l.b16 %v762
    %v3278 = vunpack.c.h.b16 %v762
    %v3279 = vunpack.c.l.b16 %v763
    %v3280 = vunpack.c.h.b16 %v763
    %v3281 = vunpack.c.l.b16 %v764
    %v3282 = vunpack.c.h.b16 %v764
    %v3283 = vunpack.c.l.b16 %v765
    %v3284 = vunpack.c.h.b16 %v765
    %v3285 = vunpack.c.l.b16 %v766
    %v3286 = vunpack.c.h.b16 %v766
    %v3287 = vunpack.c.l.b16 %v767
    %v3288 = vunpack.c.h.b16 %v767
    %v3289 = vunpack.c.l.b16 %v768
    %v3290 = vunpack.c.h.b16 %v768
    %v3291 = vunpack.c.l.b16 %v769
    %v3292 = vunpack.c.h.b16 %v769
    %v3293 = vunpack.c.l.b16 %v770
    %v3294 = vunpack.c.h.b16 %v770
    %v3295 = vunpack.c.l.b16 %v771
    %v3296 = vunpack.c.h.b16 %v771
    %v3297 = vunpack.c.l.b16 %v772
    %v3298 = vunpack.c.h.b16 %v772
    %v3299 = vunpack.c.l.b16 %v773
    %v3300 = vunpack.c.h.b16 %v773
    %v3301 = vunpack.c.l.b16 %v774
    %v3302 = vunpack.c.h.b16 %v774
    %v3303 = vunpack.c.l.b16 %v775
    %v3304 = vunpack.c.h.b16 %v775
    %v3305 = vunpack.c.l.b16 %v776
    %v3306 = vunpack.c.h.b16 %v776
    %v3307 = vunpack.c.l.b16 %v777
    %v3308 = vunpack.c.h.b16 %v777
    %v3309 = vunpack.c.l.b16 %v778
    %v3310 = vunpack.c.h.b16 %v778
    %v3311 = vunpack.c.l.b16 %v779
    %v3312 = vunpack.c.h.b16 %v779
    %v3313 = vunpack.c.l.b16 %v780
    %v3314 = vunpack.c.h.b16 %v780
    %v3315 = vunpack.c.l.b16 %v781
    %v3316 = vunpack.c.h.b16 %v781
    %v3317 = vunpack.c.l.b16 %v782
    %v3318 = vunpack.c.h.b16 %v782
    %v3319 = vunpack.c.l.b16 %v783
    %v3320 = vunpack.c.h.b16 %v783
    %v3321 = vunpack.c.l.b16 %v784
    %v3322 = vunpack.c.h.b16 %v784
    %v3323 = vunpack.c.l.b16 %v785
    %v3324 = vunpack.c.h.b16 %v785
    %v3325 = vunpack.c.l.b16 %v786
    %v3326 = vunpack.c.h.b16 %v786
    %v3327 = vunpack.c.l.b16 %v787
    %v3328 = vunpack.c.h.b16 %v787
    %v3329 = vunpack.c.l.b16 %v788
    %v3330 = vunpack.c.h.b16 %v788
    %v3331 = vunpack.c.l.b16 %v789
    %v3332 = vunpack.c.h.b16 %v789
    %v3333 = vunpack.c.l.b16 %v790
    %v3334 = vunpack.c.h.b16 %v790
    %v3335 = vunpack.c.l.b16 %v791
    %v3336 = vunpack.c.h.b16 %v791
    %v3337 = vunpack.c.l.b16 %v792
    %v3338 = vunpack.c.h.b16 %v792
    %v3339 = vunpack.c.l.b16 %v793
    %v3340 = vunpack.c.h.b16 %v793
    %v3341 = vunpack.c.l.b16 %v794
    %v3342 = vunpack.c.h.b16 %v794
    %v3343 = vunpack.c.l.b16 %v795
    %v3344 = vunpack.c.h.b16 %v795
    %v3345 = vunpack.c.l.b16 %v796
    %v3346 = vunpack.c.h.b16 %v796
    %v3347 = vunpack.c.l.b16 %v797
    %v3348 = vunpack.c.h.b16 %v797
    %v3349 = vunpack.c.l.b16 %v798
    %v3350 = vunpack.c.h.b16 %v798
    %v3351 = vunpack.c.l.b16 %v799
    %v3352 = vunpack.c.h.b16 %v799
    %v3353 = vunpack.c.l.b16 %v800
    %v3354 = vunpack.c.h.b16 %v800
    %v3355 = vunpack.c.l.b16 %v801
    %v3356 = vunpack.c.h.b16 %v801
    %v3357 = vunpack.c.l.b16 %v802
    %v3358 = vunpack.c.h.b16 %v802
    %v3359 = vunpack.c.l.b16 %v803
    %v3360 = vunpack.c.h.b16 %v803
    %v3361 = vunpack.c.l.b16 %v804
    %v3362 = vunpack.c.h.b16 %v804
    %v3363 = vunpack.c.l.b16 %v805
    %v3364 = vunpack.c.h.b16 %v805
    %v3365 = vunpack.c.l.b16 %v806
    %v3366 = vunpack.c.h.b16 %v806
    %v3367 = vunpack.c.l.b16 %v807
    %v3368 = vunpack.c.h.b16 %v807
    %v3369 = vunpack.c.l.b16 %v808
    %v3370 = vunpack.c.h.b16 %v808
    %v3371 = vunpack.c.l.b16 %v809
    %v3372 = vunpack.c.h.b16 %v809
    %v3373 = vpack.c.b16 %v1809, %v1805
    %v3374 = vpack.c.b16 %v1810, %v1806
    %v3375 = vpack.c.b16 %v1811, %v1807
    %v3376 = vpack.c.b16 %v1812, %v1808
    %v3377 = vpack.c.b16 %v1817, %v1813
    %v3378 = vpack.c.b16 %v1818, %v1814
    %v3379 = vpack.c.b16 %v1819, %v1815
    %v3380 = vpack.c.b16 %v1820, %v1816
    %v3381 = vpack.c.b16 %v1825, %v1821
    %v3382 = vpack.c.b16 %v1826, %v1822
    %v3383 = vpack.c.b16 %v1827, %v1823
    %v3384 = vpack.c.b16 %v1828, %v1824
    %v3385 = vpack.c.b16 %v1833, %v1829
    %v3386 = vpack.c.b16 %v1834, %v1830
    %v3387 = vpack.c.b16 %v1835, %v1831
    %v3388 = vpack.c.b16 %v1836, %v1832
    %v3389 = vpack.c.b16 %v1841, %v1837
    %v3390 = vpack.c.b16 %v1842, %v1838
    %v3391 = vpack.c.b16 %v1843, %v1839
    %v3392 = vpack.c.b16 %v1844, %v1840
    %v3393 = vpack.c.b16 %v1849, %v1845
    %v3394 = vpack.c.b16 %v1850, %v1846
    %v3395 = vpack.c.b16 %v1851, %v1847
    %v3396 = vpack.c.b16 %v1852, %v1848
    %v3397 = vpack.c.b16 %v1857, %v1853
    %v3398 = vpack.c.b16 %v1858, %v1854
    %v3399 = vpack.c.b16 %v1859, %v1855
    %v3400 = vpack.c.b16 %v1860, %v1856
    %v3401 = vpack.c.b16 %v1865, %v1861
    %v3402 = vpack.c.b16 %v1866, %v1862
    %v3403 = vpack.c.b16 %v1867, %v1863
    %v3404 = vpack.c.b16 %v1868, %v1864
    %v3405 = vpack.c.b16 %v1873, %v1869
    %v3406 = vpack.c.b16 %v1874, %v1870
    %v3407 = vpack.c.b16 %v1875, %v1871
    %v3408 = vpack.c.b16 %v1876, %v1872
    %v3409 = vpack.c.b16 %v1881, %v1877
    %v3410 = vpack.c.b16 %v1882, %v1878
    %v3411 = vpack.c.b16 %v1883, %v1879
    %v3412 = vpack.c.b16 %v1884, %v1880
    %v3413 = vpack.c.b16 %v1889, %v1885
    %v3414 = vpack.c.b16 %v1890, %v1886
    %v3415 = vpack.c.b16 %v1891, %v1887
    %v3416 = vpack.c.b16 %v1892, %v1888
    %v3417 = vpack.c.b16 %v1897, %v1893
    %v3418 = vpack.c.b16 %v1898, %v1894
    %v3419 = vpack.c.b16 %v1899, %v1895
    %v3420 = vpack.c.b16 %v1900, %v1896
    %v3421 = vpack.c.b16 %v1905, %v1901
    %v3422 = vpack.c.b16 %v1906, %v1902
    %v3423 = vpack.c.b16 %v1907, %v1903
    %v3424 = vpack.c.b16 %v1908, %v1904
    %v3425 = vpack.c.b16 %v1913, %v1909
    %v3426 = vpack.c.b16 %v1914, %v1910
    %v3427 = vpack.c.b16 %v1915, %v1911
    %v3428 = vpack.c.b16 %v1916, %v1912
    %v3429 = vpack.c.b16 %v1921, %v1917
    %v3430 = vpack.c.b16 %v1922, %v1918
    %v3431 = vpack.c.b16 %v1923, %v1919
    %v3432 = vpack.c.b16 %v1924, %v1920
    %v3433 = vpack.c.b16 %v1929, %v1925
    %v3434 = vpack.c.b16 %v1930, %v1926
    %v3435 = vpack.c.b16 %v1931, %v1927
    %v3436 = vpack.c.b16 %v1932, %v1928
    %v3437 = vpack.c.b16 %v1937, %v1933
    %v3438 = vpack.c.b16 %v1938, %v1934
    %v3439 = vpack.c.b16 %v1939, %v1935
    %v3440 = vpack.c.b16 %v1940, %v1936
    %v3441 = vpack.c.b16 %v1945, %v1941
    %v3442 = vpack.c.b16 %v1946, %v1942
    %v3443 = vpack.c.b16 %v1947, %v1943
    %v3444 = vpack.c.b16 %v1948, %v1944
    %v3445 = vpack.c.b16 %v1953, %v1949
    %v3446 = vpack.c.b16 %v1954, %v1950
    %v3447 = vpack.c.b16 %v1955, %v1951
    %v3448 = vpack.c.b16 %v1956, %v1952
    %v3449 = vpack.c.b16 %v1961, %v1957
    %v3450 = vpack.c.b16 %v1962, %v1958
    %v3451 = vpack.c.b16 %v1963, %v1959
    %v3452 = vpack.c.b16 %v1964, %v1960
    %v3453 = vpack.c.b16 %v1969, %v1965
    %v3454 = vpack.c.b16 %v1970, %v1966
    %v3455 = vpack.c.b16 %v1971, %v1967
    %v3456 = vpack.c.b16 %v1972, %v1968
    %v3457 = vpack.c.b16 %v1977, %v1973
    %v3458 = vpack.c.b16 %v1978, %v1974
    %v3459 = vpack.c.b16 %v1979, %v1975
    %v3460 = vpack.c.b16 %v1980, %v1976
    %v3461 = vpack.c.b16 %v1985, %v1981
    %v3462 = vpack.c.b16 %v1986, %v1982
    %v3463 = vpack.c.b16 %v1987, %v1983
    %v3464 = vpack.c.b16 %v1988, %v1984
    %v3465 = vpack.c.b16 %v1993, %v1989
    %v3466 = vpack.c.b16 %v1994, %v1990
    %v3467 = vpack.c.b16 %v1995, %v1991
    %v3468 = vpack.c.b16 %v1996, %v1992
    %v3469 = vpack.c.b16 %v2001, %v1997
    %v3470 = vpack.c.b16 %v2002, %v1998
    %v3471 = vpack.c.b16 %v2003, %v1999
    %v3472 = vpack.c.b16 %v2004, %v2000
    %v3473 = vpack.c.b16 %v2009, %v2005
    %v3474 = vpack.c.b16 %v2010, %v2006
    %v3475 = vpack.c.b16 %v2011, %v2007
    %v3476 = vpack.c.b16 %v2012, %v2008
    %v3477 = vpack.c.b16 %v2017, %v2013
    %v3478 = vpack.c.b16 %v2018, %v2014
    %v3479 = vpack.c.b16 %v2019, %v2015
    %v3480 = vpack.c.b16 %v2020, %v2016
    %v3481 = vpack.c.b16 %v2025, %v2021
    %v3482 = vpack.c.b16 %v2026, %v2022
    %v3483 = vpack.c.b16 %v2027, %v2023
    %v3484 = vpack.c.b16 %v2028, %v2024
    %v3485 = vpack.c.b16 %v2033, %v2029
    %v3486 = vpack.c.b16 %v2034, %v2030
    %v3487 = vpack.c.b16 %v2035, %v2031
    %v3488 = vpack.c.b16 %v2036, %v2032
    %v3489 = vpack.c.b16 %v2041, %v2037
    %v3490 = vpack.c.b16 %v2042, %v2038
    %v3491 = vpack.c.b16 %v2043, %v2039
    %v3492 = vpack.c.b16 %v2044, %v2040
    %v3493 = vpack.c.b16 %v2049, %v2045
    %v3494 = vpack.c.b16 %v2050, %v2046
    %v3495 = vpack.c.b16 %v2051, %v2047
    %v3496 = vpack.c.b16 %v2052, %v2048
    %v3497 = vpack.c.b16 %v2057, %v2053
    %v3498 = vpack.c.b16 %v2058, %v2054
    %v3499 = vpack.c.b16 %v2059, %v2055
    %v3500 = vpack.c.b16 %v2060, %v2056
    %v3501 = vpack.c.b16 %v2065, %v2061
    %v3502 = vpack.c.b16 %v2066, %v2062
    %v3503 = vpack.c.b16 %v2067, %v2063
    %v3504 = vpack.c.b16 %v2068, %v2064
    %v3505 = vpack.c.b16 %v2073, %v2069
    %v3506 = vpack.c.b16 %v2074, %v2070
    %v3507 = vpack.c.b16 %v2075, %v2071
    %v3508 = vpack.c.b16 %v2076, %v2072
    %v3509 = vpack.c.b16 %v2081, %v2077
    %v3510 = vpack.c.b16 %v2082, %v2078
    %v3511 = vpack.c.b16 %v2083, %v2079
    %v3512 = vpack.c.b16 %v2084, %v2080
    %v3513 = vpack.c.b16 %v2089, %v2085
    %v3514 = vpack.c.b16 %v2090, %v2086
    %v3515 = vpack.c.b16 %v2091, %v2087
    %v3516 = vpack.c.b16 %v2092, %v2088
    %v3517 = vpack.c.b16 %v2097, %v2093
    %v3518 = vpack.c.b16 %v2098, %v2094
    %v3519 = vpack.c.b16 %v2099, %v2095
    %v3520 = vpack.c.b16 %v2100, %v2096
    %v3521 = vpack.c.b16 %v2105, %v2101
    %v3522 = vpack.c.b16 %v2106, %v2102
    %v3523 = vpack.c.b16 %v2107, %v2103
    %v3524 = vpack.c.b16 %v2108, %v2104
    %v3525 = vpack.c.b16 %v2113, %v2109
    %v3526 = vpack.c.b16 %v2114, %v2110
    %v3527 = vpack.c.b16 %v2115, %v2111
    %v3528 = vpack.c.b16 %v2116, %v2112
    %v3529 = vpack.c.b16 %v2121, %v2117
    %v3530 = vpack.c.b16 %v2122, %v2118
    %v3531 = vpack.c.b16 %v2123, %v2119
    %v3532 = vpack.c.b16 %v2124, %v2120
    %v3533 = vpack.c.b16 %v2129, %v2125
    %v3534 = vpack.c.b16 %v2130, %v2126
    %v3535 = vpack.c.b16 %v2131, %v2127
    %v3536 = vpack.c.b16 %v2132, %v2128
    %v3537 = vpack.c.b16 %v2137, %v2133
    %v3538 = vpack.c.b16 %v2138, %v2134
    %v3539 = vpack.c.b16 %v2139, %v2135
    %v3540 = vpack.c.b16 %v2140, %v2136
    %v3541 = vpack.c.b16 %v2145, %v2141
    %v3542 = vpack.c.b16 %v2146, %v2142
    %v3543 = vpack.c.b16 %v2147, %v2143
    %v3544 = vpack.c.b16 %v2148, %v2144
    %v3545 = vpack.c.b16 %v2153, %v2149
    %v3546 = vpack.c.b16 %v2154, %v2150
    %v3547 = vpack.c.b16 %v2155, %v2151
    %v3548 = vpack.c.b16 %v2156, %v2152
    %v3549 = vpack.c.b16 %v2161, %v2157
    %v3550 = vpack.c.b16 %v2162, %v2158
    %v3551 = vpack.c.b16 %v2163, %v2159
    %v3552 = vpack.c.b16 %v2164, %v2160
    %v3553 = vpack.c.b16 %v2169, %v2165
    %v3554 = vpack.c.b16 %v2170, %v2166
    %v3555 = vpack.c.b16 %v2171, %v2167
    %v3556 = vpack.c.b16 %v2172, %v2168
    %v3557 = vpack.c.b16 %v2177, %v2173
    %v3558 = vpack.c.b16 %v2178, %v2174
    %v3559 = vpack.c.b16 %v2179, %v2175
    %v3560 = vpack.c.b16 %v2180, %v2176
    %v3561 = vpack.c.b16 %v2185, %v2181
    %v3562 = vpack.c.b16 %v2186, %v2182
    %v3563 = vpack.c.b16 %v2187, %v2183
    %v3564 = vpack.c.b16 %v2188, %v2184
    %v3565 = vpack.c.b16 %v2193, %v2189
    %v3566 = vpack.c.b16 %v2194, %v2190
    %v3567 = vpack.c.b16 %v2195, %v2191
    %v3568 = vpack.c.b16 %v2196, %v2192
    %v3569 = vpack.c.b16 %v2201, %v2197
    %v3570 = vpack.c.b16 %v2202, %v2198
    %v3571 = vpack.c.b16 %v2203, %v2199
    %v3572 = vpack.c.b16 %v2204, %v2200
    %v3573 = vpack.c.b16 %v2209, %v2205
    %v3574 = vpack.c.b16 %v2210, %v2206
    %v3575 = vpack.c.b16 %v2211, %v2207
    %v3576 = vpack.c.b16 %v2212, %v2208
    %v3577 = vpack.c.b16 %v2217, %v2213
    %v3578 = vpack.c.b16 %v2218, %v2214
    %v3579 = vpack.c.b16 %v2219, %v2215
    %v3580 = vpack.c.b16 %v2220, %v2216
    %v3581 = vpack.c.b16 %v2225, %v2221
    %v3582 = vpack.c.b16 %v2226, %v2222
    %v3583 = vpack.c.b16 %v2227, %v2223
    %v3584 = vpack.c.b16 %v2228, %v2224
    %v3585 = vpack.c.b16 %v2233, %v2229
    %v3586 = vpack.c.b16 %v2234, %v2230
    %v3587 = vpack.c.b16 %v2235, %v2231
    %v3588 = vpack.c.b16 %v2236, %v2232
    %v3589 = vpack.c.b16 %v2241, %v2237
    %v3590 = vpack.c.b16 %v2242, %v2238
    %v3591 = vpack.c.b16 %v2243, %v2239
    %v3592 = vpack.c.b16 %v2244, %v2240
    %v3593 = vpack.c.b16 %v2249, %v2245
    %v3594 = vpack.c.b16 %v2250, %v2246
    %v3595 = vpack.c.b16 %v2251, %v2247
    %v3596 = vpack.c.b16 %v2252, %v2248
    %v3597 = vpack.c.b16 %v2257, %v2253
    %v3598 = vpack.c.b16 %v2258, %v2254
    %v3599 = vpack.c.b16 %v2259, %v2255
    %v3600 = vpack.c.b16 %v2260, %v2256
    %v3601 = vpack.c.b16 %v2265, %v2261
    %v3602 = vpack.c.b16 %v2266, %v2262
    %v3603 = vpack.c.b16 %v2267, %v2263
    %v3604 = vpack.c.b16 %v2268, %v2264
    %v3605 = vpack.c.b16 %v2273, %v2269
    %v3606 = vpack.c.b16 %v2274, %v2270
    %v3607 = vpack.c.b16 %v2275, %v2271
    %v3608 = vpack.c.b16 %v2276, %v2272
    %v3609 = vpack.c.b16 %v2281, %v2277
    %v3610 = vpack.c.b16 %v2282, %v2278
    %v3611 = vpack.c.b16 %v2283, %v2279
    %v3612 = vpack.c.b16 %v2284, %v2280
    %v3613 = vpack.c.b16 %v2289, %v2285
    %v3614 = vpack.c.b16 %v2290, %v2286
    %v3615 = vpack.c.b16 %v2291, %v2287
    %v3616 = vpack.c.b16 %v2292, %v2288
    %v3617 = vpack.c.b16 %v2297, %v2293
    %v3618 = vpack.c.b16 %v2298, %v2294
    %v3619 = vpack.c.b16 %v2299, %v2295
    %v3620 = vpack.c.b16 %v2300, %v2296
    %v3621 = vpack.c.b16 %v2305, %v2301
    %v3622 = vpack.c.b16 %v2306, %v2302
    %v3623 = vpack.c.b16 %v2307, %v2303
    %v3624 = vpack.c.b16 %v2308, %v2304
    %v3625 = vpack.c.b16 %v2313, %v2309
    %v3626 = vpack.c.b16 %v2314, %v2310
    %v3627 = vpack.c.b16 %v2315, %v2311
    %v3628 = vpack.c.b16 %v2316, %v2312
    %v3629 = vpack.c.b16 %v2321, %v2317
    %v3630 = vpack.c.b16 %v2322, %v2318
    %v3631 = vpack.c.b16 %v2323, %v2319
    %v3632 = vpack.c.b16 %v2324, %v2320
    %v3633 = vpack.c.b16 %v2329, %v2325
    %v3634 = vpack.c.b16 %v2330, %v2326
    %v3635 = vpack.c.b16 %v2331, %v2327
    %v3636 = vpack.c.b16 %v2332, %v2328
    %v3637 = vpack.c.b16 %v2337, %v2333
    %v3638 = vpack.c.b16 %v2338, %v2334
    %v3639 = vpack.c.b16 %v2339, %v2335
    %v3640 = vpack.c.b16 %v2340, %v2336
    %v3641 = vpack.c.b16 %v2345, %v2341
    %v3642 = vpack.c.b16 %v2346, %v2342
    %v3643 = vpack.c.b16 %v2347, %v2343
    %v3644 = vpack.c.b16 %v2348, %v2344
    %v3645 = vpack.c.b16 %v2353, %v2349
    %v3646 = vpack.c.b16 %v2354, %v2350
    %v3647 = vpack.c.b16 %v2355, %v2351
    %v3648 = vpack.c.b16 %v2356, %v2352
    %v3649 = vpack.c.b16 %v2361, %v2357
    %v3650 = vpack.c.b16 %v2362, %v2358
    %v3651 = vpack.c.b16 %v2363, %v2359
    %v3652 = vpack.c.b16 %v2364, %v2360
    %v3653 = vpack.c.b16 %v2369, %v2365
    %v3654 = vpack.c.b16 %v2370, %v2366
    %v3655 = vpack.c.b16 %v2371, %v2367
    %v3656 = vpack.c.b16 %v2372, %v2368
    %v3657 = vpack.c.b16 %v2377, %v2373
    %v3658 = vpack.c.b16 %v2378, %v2374
    %v3659 = vpack.c.b16 %v2379, %v2375
    %v3660 = vpack.c.b16 %v2380, %v2376
    %v3661 = vpack.c.b16 %v2385, %v2381
    %v3662 = vpack.c.b16 %v2386, %v2382
    %v3663 = vpack.c.b16 %v2387, %v2383
    %v3664 = vpack.c.b16 %v2388, %v2384
    %v3665 = vpack.c.b16 %v2393, %v2389
    %v3666 = vpack.c.b16 %v2394, %v2390
    %v3667 = vpack.c.b16 %v2395, %v2391
    %v3668 = vpack.c.b16 %v2396, %v2392
    %v3669 = vpack.c.b16 %v2401, %v2397
    %v3670 = vpack.c.b16 %v2402, %v2398
    %v3671 = vpack.c.b16 %v2403, %v2399
    %v3672 = vpack.c.b16 %v2404, %v2400
    %v3673 = vpack.c.b16 %v2409, %v2405
    %v3674 = vpack.c.b16 %v2410, %v2406
    %v3675 = vpack.c.b16 %v2411, %v2407
    %v3676 = vpack.c.b16 %v2412, %v2408
    %v3677 = vpack.c.b16 %v2417, %v2413
    %v3678 = vpack.c.b16 %v2418, %v2414
    %v3679 = vpack.c.b16 %v2419, %v2415
    %v3680 = vpack.c.b16 %v2420, %v2416
    %v3681 = vpack.c.b16 %v2425, %v2421
    %v3682 = vpack.c.b16 %v2426, %v2422
    %v3683 = vpack.c.b16 %v2427, %v2423
    %v3684 = vpack.c.b16 %v2428, %v2424
    %v3685 = vpack.c.b16 %v2433, %v2429
    %v3686 = vpack.c.b16 %v2434, %v2430
    %v3687 = vpack.c.b16 %v2435, %v2431
    %v3688 = vpack.c.b16 %v2436, %v2432
    %v3689 = vpack.c.b16 %v2441, %v2437
    %v3690 = vpack.c.b16 %v2442, %v2438
    %v3691 = vpack.c.b16 %v2443, %v2439
    %v3692 = vpack.c.b16 %v2444, %v2440
    %v3693 = vpack.c.b16 %v2449, %v2445
    %v3694 = vpack.c.b16 %v2450, %v2446
    %v3695 = vpack.c.b16 %v2451, %v2447
    %v3696 = vpack.c.b16 %v2452, %v2448
    %v3697 = vpack.c.b16 %v2457, %v2453
    %v3698 = vpack.c.b16 %v2458, %v2454
    %v3699 = vpack.c.b16 %v2459, %v2455
    %v3700 = vpack.c.b16 %v2460, %v2456
    %v3701 = vpack.c.b16 %v2465, %v2461
    %v3702 = vpack.c.b16 %v2466, %v2462
    %v3703 = vpack.c.b16 %v2467, %v2463
    %v3704 = vpack.c.b16 %v2468, %v2464
    %v3705 = vpack.c.b16 %v2473, %v2469
    %v3706 = vpack.c.b16 %v2474, %v2470
    %v3707 = vpack.c.b16 %v2475, %v2471
    %v3708 = vpack.c.b16 %v2476, %v2472
    %v3709 = vpack.c.b16 %v2481, %v2477
    %v3710 = vpack.c.b16 %v2482, %v2478
    %v3711 = vpack.c.b16 %v2483, %v2479
    %v3712 = vpack.c.b16 %v2484, %v2480
    %v3713 = vpack.c.b16 %v2489, %v2485
    %v3714 = vpack.c.b16 %v2490, %v2486
    %v3715 = vpack.c.b16 %v2491, %v2487
    %v3716 = vpack.c.b16 %v2492, %v2488
    %v3717 = vpack.c.b16 %v2497, %v2493
    %v3718 = vpack.c.b16 %v2498, %v2494
    %v3719 = vpack.c.b16 %v2499, %v2495
    %v3720 = vpack.c.b16 %v2500, %v2496
    %v3721 = vpack.c.b16 %v2505, %v2501
    %v3722 = vpack.c.b16 %v2506, %v2502
    %v3723 = vpack.c.b16 %v2507, %v2503
    %v3724 = vpack.c.b16 %v2508, %v2504
    %v3725 = vpack.c.b16 %v2513, %v2509
    %v3726 = vpack.c.b16 %v2514, %v2510
    %v3727 = vpack.c.b16 %v2515, %v2511
    %v3728 = vpack.c.b16 %v2516, %v2512
    %v3729 = vpack.c.b16 %v2521, %v2517
    %v3730 = vpack.c.b16 %v2522, %v2518
    %v3731 = vpack.c.b16 %v2523, %v2519
    %v3732 = vpack.c.b16 %v2524, %v2520
    %v3733 = vpack.c.b16 %v2529, %v2525
    %v3734 = vpack.c.b16 %v2530, %v2526
    %v3735 = vpack.c.b16 %v2531, %v2527
    %v3736 = vpack.c.b16 %v2532, %v2528
    %v3737 = vpack.c.b16 %v2537, %v2533
    %v3738 = vpack.c.b16 %v2538, %v2534
    %v3739 = vpack.c.b16 %v2539, %v2535
    %v3740 = vpack.c.b16 %v2540, %v2536
    %v3741 = vpack.c.b16 %v2545, %v2541
    %v3742 = vpack.c.b16 %v2546, %v2542
    %v3743 = vpack.c.b16 %v2547, %v2543
    %v3744 = vpack.c.b16 %v2548, %v2544
    %v3745 = vpack.c.b16 %v2553, %v2549
    %v3746 = vpack.c.b16 %v2554, %v2550
    %v3747 = vpack.c.b16 %v2555, %v2551
    %v3748 = vpack.c.b16 %v2556, %v2552
    %v3749 = vpack.c.b16 %v2561, %v2557
    %v3750 = vpack.c.b16 %v2562, %v2558
    %v3751 = vpack.c.b16 %v2563, %v2559
    %v3752 = vpack.c.b16 %v2564, %v2560
    %v3753 = vpack.c.b16 %v2569, %v2565
    %v3754 = vpack.c.b16 %v2570, %v2566
    %v3755 = vpack.c.b16 %v2571, %v2567
    %v3756 = vpack.c.b16 %v2572, %v2568
    %v3757 = vpack.c.b16 %v2577, %v2573
    %v3758 = vpack.c.b16 %v2578, %v2574
    %v3759 = vpack.c.b16 %v2579, %v2575
    %v3760 = vpack.c.b16 %v2580, %v2576
    %v3761 = vpack.c.b16 %v2585, %v2581
    %v3762 = vpack.c.b16 %v2586, %v2582
    %v3763 = vpack.c.b16 %v2587, %v2583
    %v3764 = vpack.c.b16 %v2588, %v2584
    %v3765 = vpack.c.b16 %v2593, %v2589
    %v3766 = vpack.c.b16 %v2594, %v2590
    %v3767 = vpack.c.b16 %v2595, %v2591
    %v3768 = vpack.c.b16 %v2596, %v2592
    %v3769 = vpack.c.b16 %v2601, %v2597
    %v3770 = vpack.c.b16 %v2602, %v2598
    %v3771 = vpack.c.b16 %v2603, %v2599
    %v3772 = vpack.c.b16 %v2604, %v2600
    %v3773 = vpack.c.b16 %v2609, %v2605
    %v3774 = vpack.c.b16 %v2610, %v2606
    %v3775 = vpack.c.b16 %v2611, %v2607
    %v3776 = vpack.c.b16 %v2612, %v2608
    %v3777 = vpack.c.b16 %v2617, %v2613
    %v3778 = vpack.c.b16 %v2618, %v2614
    %v3779 = vpack.c.b16 %v2619, %v2615
    %v3780 = vpack.c.b16 %v2620, %v2616
    %v3781 = vpack.c.b16 %v2625, %v2621
    %v3782 = vpack.c.b16 %v2626, %v2622
    %v3783 = vpack.c.b16 %v2627, %v2623
    %v3784 = vpack.c.b16 %v2628, %v2624
    %v3785 = vpack.c.b16 %v2633, %v2629
    %v3786 = vpack.c.b16 %v2634, %v2630
    %v3787 = vpack.c.b16 %v2635, %v2631
    %v3788 = vpack.c.b16 %v2636, %v2632
    %v3789 = vpack.c.b16 %v2641, %v2637
    %v3790 = vpack.c.b16 %v2642, %v2638
    %v3791 = vpack.c.b16 %v2643, %v2639
    %v3792 = vpack.c.b16 %v2644, %v2640
    %v3793 = vpack.c.b16 %v2649, %v2645
    %v3794 = vpack.c.b16 %v2650, %v2646
    %v3795 = vpack.c.b16 %v2651, %v2647
    %v3796 = vpack.c.b16 %v2652, %v2648
    %v3797 = vpack.c.b16 %v2657, %v2653
    %v3798 = vpack.c.b16 %v2658, %v2654
    %v3799 = vpack.c.b16 %v2659, %v2655
    %v3800 = vpack.c.b16 %v2660, %v2656
    %v3801 = vpack.c.b16 %v2665, %v2661
    %v3802 = vpack.c.b16 %v2666, %v2662
    %v3803 = vpack.c.b16 %v2667, %v2663
    %v3804 = vpack.c.b16 %v2668, %v2664
    %v3805 = vpack.c.b16 %v2673, %v2669
    %v3806 = vpack.c.b16 %v2674, %v2670
    %v3807 = vpack.c.b16 %v2675, %v2671
    %v3808 = vpack.c.b16 %v2676, %v2672
    %v3809 = vpack.c.b16 %v2681, %v2677
    %v3810 = vpack.c.b16 %v2682, %v2678
    %v3811 = vpack.c.b16 %v2683, %v2679
    %v3812 = vpack.c.b16 %v2684, %v2680
    %v3813 = vpack.c.b16 %v2689, %v2685
    %v3814 = vpack.c.b16 %v2690, %v2686
    %v3815 = vpack.c.b16 %v2691, %v2687
    %v3816 = vpack.c.b16 %v2692, %v2688
    %v3817 = vpack.c.b16 %v2697, %v2693
    %v3818 = vpack.c.b16 %v2698, %v2694
    %v3819 = vpack.c.b16 %v2699, %v2695
    %v3820 = vpack.c.b16 %v2700, %v2696
    %v3821 = vpack.c.b16 %v2705, %v2701
    %v3822 = vpack.c.b16 %v2706, %v2702
    %v3823 = vpack.c.b16 %v2707, %v2703
    %v3824 = vpack.c.b16 %v2708, %v2704
    %v3825 = vpack.c.b16 %v2713, %v2709
    %v3826 = vpack.c.b16 %v2714, %v2710
    %v3827 = vpack.c.b16 %v2715, %v2711
    %v3828 = vpack.c.b16 %v2716, %v2712
    %v3829 = vpack.c.b16 %v2721, %v2717
    %v3830 = vpack.c.b16 %v2722, %v2718
    %v3831 = vpack.c.b16 %v2723, %v2719
    %v3832 = vpack.c.b16 %v2724, %v2720
    %v3833 = vpack.c.b16 %v2729, %v2725
    %v3834 = vpack.c.b16 %v2730, %v2726
    %v3835 = vpack.c.b16 %v2731, %v2727
    %v3836 = vpack.c.b16 %v2732, %v2728
    %v3837 = vpack.c.b16 %v2737, %v2733
    %v3838 = vpack.c.b16 %v2738, %v2734
    %v3839 = vpack.c.b16 %v2739, %v2735
    %v3840 = vpack.c.b16 %v2740, %v2736
    %v3841 = vpack.c.b16 %v2745, %v2741
    %v3842 = vpack.c.b16 %v2746, %v2742
    %v3843 = vpack.c.b16 %v2747, %v2743
    %v3844 = vpack.c.b16 %v2748, %v2744
    %v3845 = vpack.c.b16 %v2753, %v2749
    %v3846 = vpack.c.b16 %v2754, %v2750
    %v3847 = vpack.c.b16 %v2755, %v2751
    %v3848 = vpack.c.b16 %v2756, %v2752
    %v3849 = vpack.c.b16 %v2761, %v2757
    %v3850 = vpack.c.b16 %v2762, %v2758
    %v3851 = vpack.c.b16 %v2763, %v2759
    %v3852 = vpack.c.b16 %v2764, %v2760
    %v3853 = vpack.c.b16 %v2769, %v2765
    %v3854 = vpack.c.b16 %v2770, %v2766
    %v3855 = vpack.c.b16 %v2771, %v2767
    %v3856 = vpack.c.b16 %v2772, %v2768
    %v3857 = vpack.c.b16 %v2777, %v2773
    %v3858 = vpack.c.b16 %v2778, %v2774
    %v3859 = vpack.c.b16 %v2779, %v2775
    %v3860 = vpack.c.b16 %v2780, %v2776
    %v3861 = vpack.c.b16 %v2785, %v2781
    %v3862 = vpack.c.b16 %v2786, %v2782
    %v3863 = vpack.c.b16 %v2787, %v2783
    %v3864 = vpack.c.b16 %v2788, %v2784
    %v3865 = vpack.c.b16 %v2793, %v2789
    %v3866 = vpack.c.b16 %v2794, %v2790
    %v3867 = vpack.c.b16 %v2795, %v2791
    %v3868 = vpack.c.b16 %v2796, %v2792
    %v3869 = vpack.c.b16 %v2801, %v2797
    %v3870 = vpack.c.b16 %v2802, %v2798
    %v3871 = vpack.c.b16 %v2803, %v2799
    %v3872 = vpack.c.b16 %v2804, %v2800
    %v3873 = vpack.c.b16 %v2809, %v2805
    %v3874 = vpack.c.b16 %v2810, %v2806
    %v3875 = vpack.c.b16 %v2811, %v2807
    %v3876 = vpack.c.b16 %v2812, %v2808
    %v3877 = vpack.c.b16 %v2817, %v2813
    %v3878 = vpack.c.b16 %v2818, %v2814
    %v3879 = vpack.c.b16 %v2819, %v2815
    %v3880 = vpack.c.b16 %v2820, %v2816
    %v3881 = vpack.c.b16 %v2825, %v2821
    %v3882 = vpack.c.b16 %v2826, %v2822
    %v3883 = vpack.c.b16 %v2827, %v2823
    %v3884 = vpack.c.b16 %v2828, %v2824
    %v3885 = vpack.c.b16 %v2833, %v2829
    %v3886 = vpack.c.b16 %v2834, %v2830
    %v3887 = vpack.c.b16 %v2835, %v2831
    %v3888 = vpack.c.b16 %v2836, %v2832
    %v3889 = vpack.c.b16 %v2841, %v2837
    %v3890 = vpack.c.b16 %v2842, %v2838
    %v3891 = vpack.c.b16 %v2843, %v2839
    %v3892 = vpack.c.b16 %v2844, %v2840
    %v3893 = vpack.c.b16 %v2849, %v2845
    %v3894 = vpack.c.b16 %v2850, %v2846
    %v3895 = vpack.c.b16 %v2851, %v2847
    %v3896 = vpack.c.b16 %v2852, %v2848
    %v3897 = vpack.c.b16 %v2857, %v2853
    %v3898 = vpack.c.b16 %v2858, %v2854
    %v3899 = vpack.c.b16 %v2859, %v2855
    %v3900 = vpack.c.b16 %v2860, %v2856
    %v3901 = vpack.c.b16 %v2865, %v2861
    %v3902 = vpack.c.b16 %v2866, %v2862
    %v3903 = vpack.c.b16 %v2867, %v2863
    %v3904 = vpack.c.b16 %v2868, %v2864
    %v3905 = vpack.c.b16 %v2873, %v2869
    %v3906 = vpack.c.b16 %v2874, %v2870
    %v3907 = vpack.c.b16 %v2875, %v2871
    %v3908 = vpack.c.b16 %v2876, %v2872
    %v3909 = vpack.c.b16 %v2881, %v2877
    %v3910 = vpack.c.b16 %v2882, %v2878
    %v3911 = vpack.c.b16 %v2883, %v2879
    %v3912 = vpack.c.b16 %v2884, %v2880
    %v3913 = vpack.c.b16 %v2889, %v2885
    %v3914 = vpack.c.b16 %v2890, %v2886
    %v3915 = vpack.c.b16 %v2891, %v2887
    %v3916 = vpack.c.b16 %v2892, %v2888
    %v3917 = vpack.c.b16 %v2897, %v2893
    %v3918 = vpack.c.b16 %v2898, %v2894
    %v3919 = vpack.c.b16 %v2899, %v2895
    %v3920 = vpack.c.b16 %v2900, %v2896
    %v3921 = vpack.c.b16 %v2905, %v2901
    %v3922 = vpack.c.b16 %v2906, %v2902
    %v3923 = vpack.c.b16 %v2907, %v2903
    %v3924 = vpack.c.b16 %v2908, %v2904
    %v3925 = vpack.c.b16 %v2913, %v2909
    %v3926 = vpack.c.b16 %v2914, %v2910
    %v3927 = vpack.c.b16 %v2915, %v2911
    %v3928 = vpack.c.b16 %v2916, %v2912
    %v3929 = vpack.c.b16 %v2921, %v2917
    %v3930 = vpack.c.b16 %v2922, %v2918
    %v3931 = vpack.c.b16 %v2923, %v2919
    %v3932 = vpack.c.b16 %v2924, %v2920
    %v3933 = vpack.c.b16 %v2929, %v2925
    %v3934 = vpack.c.b16 %v2930, %v2926
    %v3935 = vpack.c.b16 %v2931, %v2927
    %v3936 = vpack.c.b16 %v2932, %v2928
    %v3937 = vpack.c.b16 %v2937, %v2933
    %v3938 = vpack.c.b16 %v2938, %v2934
    %v3939 = vpack.c.b16 %v2939, %v2935
    %v3940 = vpack.c.b16 %v2940, %v2936
    %v3941 = vpack.c.b16 %v2945, %v2941
    %v3942 = vpack.c.b16 %v2946, %v2942
    %v3943 = vpack.c.b16 %v2947, %v2943
    %v3944 = vpack.c.b16 %v2948, %v2944
    %v3945 = vpack.c.b16 %v2953, %v2949
    %v3946 = vpack.c.b16 %v2954, %v2950
    %v3947 = vpack.c.b16 %v2955, %v2951
    %v3948 = vpack.c.b16 %v2956, %v2952
    %v3949 = vpack.c.b16 %v2961, %v2957
    %v3950 = vpack.c.b16 %v2962, %v2958
    %v3951 = vpack.c.b16 %v2963, %v2959
    %v3952 = vpack.c.b16 %v2964, %v2960
    %v3953 = vpack.c.b16 %v2969, %v2965
    %v3954 = vpack.c.b16 %v2970, %v2966
    %v3955 = vpack.c.b16 %v2971, %v2967
    %v3956 = vpack.c.b16 %v2972, %v2968
    %v3957 = vpack.c.b16 %v2977, %v2973
    %v3958 = vpack.c.b16 %v2978, %v2974
    %v3959 = vpack.c.b16 %v2979, %v2975
    %v3960 = vpack.c.b16 %v2980, %v2976
    %v3961 = vpack.c.b16 %v2985, %v2981
    %v3962 = vpack.c.b16 %v2986, %v2982
    %v3963 = vpack.c.b16 %v2987, %v2983
    %v3964 = vpack.c.b16 %v2988, %v2984
    %v3965 = vpack.c.b16 %v2993, %v2989
    %v3966 = vpack.c.b16 %v2994, %v2990
    %v3967 = vpack.c.b16 %v2995, %v2991
    %v3968 = vpack.c.b16 %v2996, %v2992
    %v3969 = vpack.c.b16 %v3001, %v2997
    %v3970 = vpack.c.b16 %v3002, %v2998
    %v3971 = vpack.c.b16 %v3003, %v2999
    %v3972 = vpack.c.b16 %v3004, %v3000
    %v3973 = vpack.c.b16 %v3009, %v3005
    %v3974 = vpack.c.b16 %v3010, %v3006
    %v3975 = vpack.c.b16 %v3011, %v3007
    %v3976 = vpack.c.b16 %v3012, %v3008
    %v3977 = vpack.c.b16 %v3017, %v3013
    %v3978 = vpack.c.b16 %v3018, %v3014
    %v3979 = vpack.c.b16 %v3019, %v3015
    %v3980 = vpack.c.b16 %v3020, %v3016
    %v3981 = vpack.c.b16 %v3025, %v3021
    %v3982 = vpack.c.b16 %v3026, %v3022
    %v3983 = vpack.c.b16 %v3027, %v3023
    %v3984 = vpack.c.b16 %v3028, %v3024
    %v3985 = vpack.c.b16 %v3033, %v3029
    %v3986 = vpack.c.b16 %v3034, %v3030
    %v3987 = vpack.c.b16 %v3035, %v3031
    %v3988 = vpack.c.b16 %v3036, %v3032
    %v3989 = vpack.c.b16 %v3041, %v3037
    %v3990 = vpack.c.b16 %v3042, %v3038
    %v3991 = vpack.c.b16 %v3043, %v3039
    %v3992 = vpack.c.b16 %v3044, %v3040
    %v3993 = vpack.c.b16 %v3049, %v3045
    %v3994 = vpack.c.b16 %v3050, %v3046
    %v3995 = vpack.c.b16 %v3051, %v3047
    %v3996 = vpack.c.b16 %v3052, %v3048
    %v3997 = vpack.c.b16 %v3057, %v3053
    %v3998 = vpack.c.b16 %v3058, %v3054
    %v3999 = vpack.c.b16 %v3059, %v3055
    %v4000 = vpack.c.b16 %v3060, %v3056
    %v4001 = vpack.c.b16 %v3065, %v3061
    %v4002 = vpack.c.b16 %v3066, %v3062
    %v4003 = vpack.c.b16 %v3067, %v3063
    %v4004 = vpack.c.b16 %v3068, %v3064
    %v4005 = vpack.c.b16 %v3073, %v3069
    %v4006 = vpack.c.b16 %v3074, %v3070
    %v4007 = vpack.c.b16 %v3075, %v3071
    %v4008 = vpack.c.b16 %v3076, %v3072
    %v4009 = vpack.c.b16 %v3081, %v3077
    %v4010 = vpack.c.b16 %v3082, %v3078
    %v4011 = vpack.c.b16 %v3083, %v3079
    %v4012 = vpack.c.b16 %v3084, %v3080
    %v4013 = vpack.c.b16 %v3089, %v3085
    %v4014 = vpack.c.b16 %v3090, %v3086
    %v4015 = vpack.c.b16 %v3091, %v3087
    %v4016 = vpack.c.b16 %v3092, %v3088
    %v4017 = vpack.c.b16 %v3097, %v3093
    %v4018 = vpack.c.b16 %v3098, %v3094
    %v4019 = vpack.c.b16 %v3099, %v3095
    %v4020 = vpack.c.b16 %v3100, %v3096
    %v4021 = vpack.c.b16 %v3105, %v3101
    %v4022 = vpack.c.b16 %v3106, %v3102
    %v4023 = vpack.c.b16 %v3107, %v3103
    %v4024 = vpack.c.b16 %v3108, %v3104
    %v4025 = vpack.c.b16 %v3113, %v3109
    %v4026 = vpack.c.b16 %v3114, %v3110
    %v4027 = vpack.c.b16 %v3115, %v3111
    %v4028 = vpack.c.b16 %v3116, %v3112
    %v4029 = vpack.c.b16 %v3121, %v3117
    %v4030 = vpack.c.b16 %v3122, %v3118
    %v4031 = vpack.c.b16 %v3123, %v3119
    %v4032 = vpack.c.b16 %v3124, %v3120
    %v4033 = vpack.c.b16 %v3129, %v3125
    %v4034 = vpack.c.b16 %v3130, %v3126
    %v4035 = vpack.c.b16 %v3131, %v3127
    %v4036 = vpack.c.b16 %v3132, %v3128
    %v4037 = vpack.c.b16 %v3137, %v3133
    %v4038 = vpack.c.b16 %v3138, %v3134
    %v4039 = vpack.c.b16 %v3139, %v3135
    %v4040 = vpack.c.b16 %v3140, %v3136
    %v4041 = vpack.c.b16 %v3145, %v3141
    %v4042 = vpack.c.b16 %v3146, %v3142
    %v4043 = vpack.c.b16 %v3147, %v3143
    %v4044 = vpack.c.b16 %v3148, %v3144
    %v4045 = vpack.c.b16 %v3153, %v3149
    %v4046 = vpack.c.b16 %v3154, %v3150
    %v4047 = vpack.c.b16 %v3155, %v3151
    %v4048 = vpack.c.b16 %v3156, %v3152
    %v4049 = vpack.c.b16 %v3161, %v3157
    %v4050 = vpack.c.b16 %v3162, %v3158
    %v4051 = vpack.c.b16 %v3163, %v3159
    %v4052 = vpack.c.b16 %v3164, %v3160
    %v4053 = vpack.c.b16 %v3169, %v3165
    %v4054 = vpack.c.b16 %v3170, %v3166
    %v4055 = vpack.c.b16 %v3171, %v3167
    %v4056 = vpack.c.b16 %v3172, %v3168
    %v4057 = vpack.c.b16 %v3177, %v3173
    %v4058 = vpack.c.b16 %v3178, %v3174
    %v4059 = vpack.c.b16 %v3179, %v3175
    %v4060 = vpack.c.b16 %v3180, %v3176
    %v4061 = vpack.c.b16 %v3185, %v3181
    %v4062 = vpack.c.b16 %v3186, %v3182
    %v4063 = vpack.c.b16 %v3187, %v3183
    %v4064 = vpack.c.b16 %v3188, %v3184
    %v4065 = vpack.c.b16 %v3193, %v3189
    %v4066 = vpack.c.b16 %v3194, %v3190
    %v4067 = vpack.c.b16 %v3195, %v3191
    %v4068 = vpack.c.b16 %v3196, %v3192
    %v4069 = vpack.c.b16 %v3201, %v3197
    %v4070 = vpack.c.b16 %v3202, %v3198
    %v4071 = vpack.c.b16 %v3203, %v3199
    %v4072 = vpack.c.b16 %v3204, %v3200
    %v4073 = vpack.c.b16 %v3209, %v3205
    %v4074 = vpack.c.b16 %v3210, %v3206
    %v4075 = vpack.c.b16 %v3211, %v3207
    %v4076 = vpack.c.b16 %v3212, %v3208
    %v4077 = vpack.c.b16 %v3217, %v3213
    %v4078 = vpack.c.b16 %v3218, %v3214
    %v4079 = vpack.c.b16 %v3219, %v3215
    %v4080 = vpack.c.b16 %v3220, %v3216
    %v4081 = vpack.c.b16 %v3225, %v3221
    %v4082 = vpack.c.b16 %v3226, %v3222
    %v4083 = vpack.c.b16 %v3227, %v3223
    %v4084 = vpack.c.b16 %v3228, %v3224
    %v4085 = vpack.c.b16 %v3233, %v3229
    %v4086 = vpack.c.b16 %v3234, %v3230
    %v4087 = vpack.c.b16 %v3235, %v3231
    %v4088 = vpack.c.b16 %v3236, %v3232
    %v4089 = vpack.c.b16 %v3241, %v3237
    %v4090 = vpack.c.b16 %v3242, %v3238
    %v4091 = vpack.c.b16 %v3243, %v3239
    %v4092 = vpack.c.b16 %v3244, %v3240
    %v4093 = vpack.c.b16 %v3249, %v3245
    %v4094 = vpack.c.b16 %v3250, %v3246
    %v4095 = vpack.c.b16 %v3251, %v3247
    %v4096 = vpack.c.b16 %v3252, %v3248
    %v4097 = vpack.c.b16 %v3257, %v3253
    %v4098 = vpack.c.b16 %v3258, %v3254
    %v4099 = vpack.c.b16 %v3259, %v3255
    %v4100 = vpack.c.b16 %v3260, %v3256
    %v4101 = vpack.c.b16 %v3265, %v3261
    %v4102 = vpack.c.b16 %v3266, %v3262
    %v4103 = vpack.c.b16 %v3267, %v3263
    %v4104 = vpack.c.b16 %v3268, %v3264
    %v4105 = vpack.c.b16 %v3273, %v3269
    %v4106 = vpack.c.b16 %v3274, %v3270
    %v4107 = vpack.c.b16 %v3275, %v3271
    %v4108 = vpack.c.b16 %v3276, %v3272
    %v4109 = vpack.c.b16 %v3281, %v3277
    %v4110 = vpack.c.b16 %v3282, %v3278
    %v4111 = vpack.c.b16 %v3283, %v3279
    %v4112 = vpack.c.b16 %v3284, %v3280
    %v4113 = vpack.c.b16 %v3289, %v3285
    %v4114 = vpack.c.b16 %v3290, %v3286
    %v4115 = vpack.c.b16 %v3291, %v3287
    %v4116 = vpack.c.b16 %v3292, %v3288
    %v4117 = vpack.c.b16 %v3297, %v3293
    %v4118 = vpack.c.b16 %v3298, %v3294
    %v4119 = vpack.c.b16 %v3299, %v3295
    %v4120 = vpack.c.b16 %v3300, %v3296
    %v4121 = vpack.c.b16 %v3305, %v3301
    %v4122 = vpack.c.b16 %v3306, %v3302
    %v4123 = vpack.c.b16 %v3307, %v3303
    %v4124 = vpack.c.b16 %v3308, %v3304
    %v4125 = vpack.c.b16 %v3313, %v3309
    %v4126 = vpack.c.b16 %v3314, %v3310
    %v4127 = vpack.c.b16 %v3315, %v3311
    %v4128 = vpack.c.b16 %v3316, %v3312
    %v4129 = vpack.c.b16 %v3321, %v3317
    %v4130 = vpack.c.b16 %v3322, %v3318
    %v4131 = vpack.c.b16 %v3323, %v3319
    %v4132 = vpack.c.b16 %v3324, %v3320
    %v4133 = vpack.c.b16 %v3329, %v3325
    %v4134 = vpack.c.b16 %v3330, %v3326
    %v4135 = vpack.c.b16 %v3331, %v3327
    %v4136 = vpack.c.b16 %v3332, %v3328
    %v4137 = vpack.c.b16 %v3337, %v3333
    %v4138 = vpack.c.b16 %v3338, %v3334
    %v4139 = vpack.c.b16 %v3339, %v3335
    %v4140 = vpack.c.b16 %v3340, %v3336
    %v4141 = vpack.c.b16 %v3345, %v3341
    %v4142 = vpack.c.b16 %v3346, %v3342
    %v4143 = vpack.c.b16 %v3347, %v3343
    %v4144 = vpack.c.b16 %v3348, %v3344
    %v4145 = vpack.c.b16 %v3353, %v3349
    %v4146 = vpack.c.b16 %v3354, %v3350
    %v4147 = vpack.c.b16 %v3355, %v3351
    %v4148 = vpack.c.b16 %v3356, %v3352
    %v4149 = vpack.c.b16 %v3361, %v3357
    %v4150 = vpack.c.b16 %v3362, %v3358
    %v4151 = vpack.c.b16 %v3363, %v3359
    %v4152 = vpack.c.b16 %v3364, %v3360
    %v4153 = vpack.c.b16 %v3369, %v3365
    %v4154 = vpack.c.b16 %v3370, %v3366
    %v4155 = vpack.c.b16 %v3371, %v3367
    %v4156 = vpack.c.b16 %v3372, %v3368
    %vm4941 = vcmask 523264
    %v4943 = vsel %vm4941, %v996, 0
    %4945 = vmatprep.subr.bf16.mxu0 %v3402
    %4946 = vmatpush1.bf16.msra.mxu0 %v3401
    %4947 = vmatprep.subr.bf16.mxu0 %v3398
    %4948 = vmatpush1.bf16.msra.mxu0 %v3397
    %4949 = vmatprep.subr.bf16.mxu0 %v3394
    %4950 = vmatpush1.bf16.msra.mxu0 %v3393
    %4951 = vmatprep.subr.bf16.mxu0 %v3390
    %4952 = vmatpush1.bf16.msra.mxu0 %v3389
    %4953 = vmatprep.subr.bf16.mxu0 %v3386
    %4954 = vmatpush1.bf16.msra.mxu0 %v3385
    %4955 = vmatprep.subr.bf16.mxu0 %v3382
    %4956 = vmatpush1.bf16.msra.mxu0 %v3381
    %4957 = vmatprep.subr.bf16.mxu0 %v3378
    %4958 = vmatpush1.bf16.msra.mxu0 %v3377
    %4959 = vmatprep.subr.bf16.mxu0 %v3374
    %4960 = vmatpush1.bf16.msra.mxu0 %v3373
    %4961 = vmatprep.subr.bf16.mxu0 %v3434
    %4962 = vmatpush2.bf16.msra.mxu0 %v3433
    %4963 = vmatprep.subr.bf16.mxu0 %v3430
    %4964 = vmatpush2.bf16.msra.mxu0 %v3429
    %4965 = vmatprep.subr.bf16.mxu0 %v3426
    %4966 = vmatpush2.bf16.msra.mxu0 %v3425
    %4967 = vmatprep.subr.bf16.mxu0 %v3422
    %4968 = vmatpush2.bf16.msra.mxu0 %v3421
    %4969 = vmatprep.subr.bf16.mxu0 %v3418
    %4970 = vmatpush2.bf16.msra.mxu0 %v3417
    %4971 = vmatprep.subr.bf16.mxu0 %v3414
    %4972 = vmatpush2.bf16.msra.mxu0 %v3413
    %4973 = vmatprep.subr.bf16.mxu0 %v3410
    %4974 = vmatpush2.bf16.msra.mxu0 %v3409
    %4975 = vmatprep.subr.bf16.mxu0 %v3406
    %4976 = vmatpush2.bf16.msra.mxu0 %v3405
    %4977 = vmatprep.mubr.bf16.mxu0 %v873
    %4978 = vmatmul.mubr.bf16.gmra.mxu0 %v859
    %v4979 = vpop.f32.mrf.mxu0
    %v4980 = vadd.f32 %v815, %v4979
    %v4981 = vpop.f32.mrf.mxu0
    %v4982 = vadd.f32 %v819, %v4981
    %v4983 = vpop.f32.mrf.mxu0
    %v4984 = vpop.f32.mrf.mxu0
    %4985 = vdwg.mxu0
    %4986 = vmatprep.subr.bf16.mxu0 %v3466
    %4987 = vmatpush1.bf16.msra.mxu0 %v3465
    %4988 = vmatprep.subr.bf16.mxu0 %v3462
    %4989 = vmatpush1.bf16.msra.mxu0 %v3461
    %4990 = vmatprep.subr.bf16.mxu0 %v3458
    %4991 = vmatpush1.bf16.msra.mxu0 %v3457
    %4992 = vmatprep.subr.bf16.mxu0 %v3454
    %4993 = vmatpush1.bf16.msra.mxu0 %v3453
    %4994 = vmatprep.subr.bf16.mxu0 %v3450
    %4995 = vmatpush1.bf16.msra.mxu0 %v3449
    %4996 = vmatprep.subr.bf16.mxu0 %v3446
    %4997 = vmatpush1.bf16.msra.mxu0 %v3445
    %4998 = vmatprep.subr.bf16.mxu0 %v3442
    %4999 = vmatpush1.bf16.msra.mxu0 %v3441
    %5000 = vmatprep.subr.bf16.mxu0 %v3438
    %5001 = vmatpush1.bf16.msra.mxu0 %v3437
    %5002 = vmatprep.subr.bf16.mxu0 %v3498
    %5003 = vmatpush2.bf16.msra.mxu0 %v3497
    %5004 = vmatprep.subr.bf16.mxu0 %v3494
    %5005 = vmatpush2.bf16.msra.mxu0 %v3493
    %5006 = vmatprep.subr.bf16.mxu0 %v3490
    %5007 = vmatpush2.bf16.msra.mxu0 %v3489
    %5008 = vmatprep.subr.bf16.mxu0 %v3486
    %5009 = vmatpush2.bf16.msra.mxu0 %v3485
    %5010 = vmatprep.subr.bf16.mxu0 %v3482
    %5011 = vmatpush2.bf16.msra.mxu0 %v3481
    %5012 = vmatprep.subr.bf16.mxu0 %v3478
    %5013 = vmatpush2.bf16.msra.mxu0 %v3477
    %5014 = vmatprep.subr.bf16.mxu0 %v3474
    %5015 = vmatpush2.bf16.msra.mxu0 %v3473
    %5016 = vmatprep.subr.bf16.mxu0 %v3470
    %5017 = vmatpush2.bf16.msra.mxu0 %v3469
    %5018 = vmatprep.mubr.bf16.mxu0 %v883
    %5019 = vmatmul.mubr.bf16.gmra.mxu0 %v881
    %v5020 = vpop.f32.mrf.mxu0
    %v5021 = vadd.f32 %v4980, %v5020
    %v5022 = vpop.f32.mrf.mxu0
    %v5023 = vadd.f32 %v4982, %v5022
    %v5024 = vpop.f32.mrf.mxu0
    %v5025 = vpop.f32.mrf.mxu0
    %5026 = vdwg.mxu0
    %5027 = vmatprep.subr.bf16.mxu0 %v3530
    %5028 = vmatpush1.bf16.msra.mxu0 %v3529
    %5029 = vmatprep.subr.bf16.mxu0 %v3526
    %5030 = vmatpush1.bf16.msra.mxu0 %v3525
    %5031 = vmatprep.subr.bf16.mxu0 %v3522
    %5032 = vmatpush1.bf16.msra.mxu0 %v3521
    %5033 = vmatprep.subr.bf16.mxu0 %v3518
    %5034 = vmatpush1.bf16.msra.mxu0 %v3517
    %5035 = vmatprep.subr.bf16.mxu0 %v3514
    %5036 = vmatpush1.bf16.msra.mxu0 %v3513
    %5037 = vmatprep.subr.bf16.mxu0 %v3510
    %5038 = vmatpush1.bf16.msra.mxu0 %v3509
    %5039 = vmatprep.subr.bf16.mxu0 %v3506
    %5040 = vmatpush1.bf16.msra.mxu0 %v3505
    %5041 = vmatprep.subr.bf16.mxu0 %v3502
    %5042 = vmatpush1.bf16.msra.mxu0 %v3501
    %5043 = vmatprep.subr.bf16.mxu0 %v3562
    %5044 = vmatpush2.bf16.msra.mxu0 %v3561
    %5045 = vmatprep.subr.bf16.mxu0 %v3558
    %5046 = vmatpush2.bf16.msra.mxu0 %v3557
    %5047 = vmatprep.subr.bf16.mxu0 %v3554
    %5048 = vmatpush2.bf16.msra.mxu0 %v3553
    %5049 = vmatprep.subr.bf16.mxu0 %v3550
    %5050 = vmatpush2.bf16.msra.mxu0 %v3549
    %5051 = vmatprep.subr.bf16.mxu0 %v3546
    %5052 = vmatpush2.bf16.msra.mxu0 %v3545
    %5053 = vmatprep.subr.bf16.mxu0 %v3542
    %5054 = vmatpush2.bf16.msra.mxu0 %v3541
    %5055 = vmatprep.subr.bf16.mxu0 %v3538
    %5056 = vmatpush2.bf16.msra.mxu0 %v3537
    %5057 = vmatprep.subr.bf16.mxu0 %v3534
    %5058 = vmatpush2.bf16.msra.mxu0 %v3533
    %5059 = vmatprep.mubr.bf16.mxu0 %v880
    %5060 = vmatmul.mubr.bf16.gmra.mxu0 %v866
    %v5061 = vpop.f32.mrf.mxu0
    %v5062 = vadd.f32 %v5021, %v5061
    %v5063 = vpop.f32.mrf.mxu0
    %v5064 = vadd.f32 %v5023, %v5063
    %v5065 = vpop.f32.mrf.mxu0
    %v5066 = vpop.f32.mrf.mxu0
    %5067 = vdwg.mxu0
    %5068 = vmatprep.subr.bf16.mxu0 %v3594
    %5069 = vmatpush1.bf16.msra.mxu0 %v3593
    %5070 = vmatprep.subr.bf16.mxu0 %v3590
    %5071 = vmatpush1.bf16.msra.mxu0 %v3589
    %5072 = vmatprep.subr.bf16.mxu0 %v3586
    %5073 = vmatpush1.bf16.msra.mxu0 %v3585
    %5074 = vmatprep.subr.bf16.mxu0 %v3582
    %5075 = vmatpush1.bf16.msra.mxu0 %v3581
    %5076 = vmatprep.subr.bf16.mxu0 %v3578
    %5077 = vmatpush1.bf16.msra.mxu0 %v3577
    %5078 = vmatprep.subr.bf16.mxu0 %v3574
    %5079 = vmatpush1.bf16.msra.mxu0 %v3573
    %5080 = vmatprep.subr.bf16.mxu0 %v3570
    %5081 = vmatpush1.bf16.msra.mxu0 %v3569
    %5082 = vmatprep.subr.bf16.mxu0 %v3566
    %5083 = vmatpush1.bf16.msra.mxu0 %v3565
    %5084 = vmatprep.subr.bf16.mxu0 %v3626
    %5085 = vmatpush2.bf16.msra.mxu0 %v3625
    %5086 = vmatprep.subr.bf16.mxu0 %v3622
    %5087 = vmatpush2.bf16.msra.mxu0 %v3621
    %5088 = vmatprep.subr.bf16.mxu0 %v3618
    %5089 = vmatpush2.bf16.msra.mxu0 %v3617
    %5090 = vmatprep.subr.bf16.mxu0 %v3614
    %5091 = vmatpush2.bf16.msra.mxu0 %v3613
    %5092 = vmatprep.subr.bf16.mxu0 %v3610
    %5093 = vmatpush2.bf16.msra.mxu0 %v3609
    %5094 = vmatprep.subr.bf16.mxu0 %v3606
    %5095 = vmatpush2.bf16.msra.mxu0 %v3605
    %5096 = vmatprep.subr.bf16.mxu0 %v3602
    %5097 = vmatpush2.bf16.msra.mxu0 %v3601
    %5098 = vmatprep.subr.bf16.mxu0 %v3598
    %5099 = vmatpush2.bf16.msra.mxu0 %v3597
    %5100 = vmatprep.mubr.bf16.mxu0 %v884
    %5101 = vmatmul.mubr.bf16.gmra.mxu0 %v882
    %v5102 = vpop.f32.mrf.mxu0
    %v5103 = vadd.f32 %v5062, %v5102
    %v5104 = vpop.f32.mrf.mxu0
    %v5105 = vadd.f32 %v5064, %v5104
    %v5106 = vpop.f32.mrf.mxu0
    %v5107 = vpop.f32.mrf.mxu0
    %5108 = vdwg.mxu0
    %5109 = vmatprep.subr.bf16.mxu0 %v3658
    %5110 = vmatpush1.bf16.msra.mxu0 %v3657
    %5111 = vmatprep.subr.bf16.mxu0 %v3654
    %5112 = vmatpush1.bf16.msra.mxu0 %v3653
    %5113 = vmatprep.subr.bf16.mxu0 %v3650
    %5114 = vmatpush1.bf16.msra.mxu0 %v3649
    %5115 = vmatprep.subr.bf16.mxu0 %v3646
    %5116 = vmatpush1.bf16.msra.mxu0 %v3645
    %5117 = vmatprep.subr.bf16.mxu0 %v3642
    %5118 = vmatpush1.bf16.msra.mxu0 %v3641
    %5119 = vmatprep.subr.bf16.mxu0 %v3638
    %5120 = vmatpush1.bf16.msra.mxu0 %v3637
    %5121 = vmatprep.subr.bf16.mxu0 %v3634
    %5122 = vmatpush1.bf16.msra.mxu0 %v3633
    %5123 = vmatprep.subr.bf16.mxu0 %v3630
    %5124 = vmatpush1.bf16.msra.mxu0 %v3629
    %5125 = vmatprep.subr.bf16.mxu0 %v3690
    %5126 = vmatpush2.bf16.msra.mxu0 %v3689
    %5127 = vmatprep.subr.bf16.mxu0 %v3686
    %5128 = vmatpush2.bf16.msra.mxu0 %v3685
    %5129 = vmatprep.subr.bf16.mxu0 %v3682
    %5130 = vmatpush2.bf16.msra.mxu0 %v3681
    %5131 = vmatprep.subr.bf16.mxu0 %v3678
    %5132 = vmatpush2.bf16.msra.mxu0 %v3677
    %5133 = vmatprep.subr.bf16.mxu0 %v3674
    %5134 = vmatpush2.bf16.msra.mxu0 %v3673
    %5135 = vmatprep.subr.bf16.mxu0 %v3670
    %5136 = vmatpush2.bf16.msra.mxu0 %v3669
    %5137 = vmatprep.subr.bf16.mxu0 %v3666
    %5138 = vmatpush2.bf16.msra.mxu0 %v3665
    %5139 = vmatprep.subr.bf16.mxu0 %v3662
    %5140 = vmatpush2.bf16.msra.mxu0 %v3661
    %5141 = vmatprep.mubr.bf16.mxu0 %v922
    %5142 = vmatmul.mubr.bf16.gmra.mxu0 %v908
    %v5143 = vpop.f32.mrf.mxu0
    %v5144 = vadd.f32 %v5103, %v5143
    %v5145 = vpop.f32.mrf.mxu0
    %v5146 = vadd.f32 %v5105, %v5145
    %v5147 = vpop.f32.mrf.mxu0
    %v5148 = vpop.f32.mrf.mxu0
    %5149 = vdwg.mxu0
    %5150 = vmatprep.subr.bf16.mxu0 %v3722
    %5151 = vmatpush1.bf16.msra.mxu0 %v3721
    %5152 = vmatprep.subr.bf16.mxu0 %v3718
    %5153 = vmatpush1.bf16.msra.mxu0 %v3717
    %5154 = vmatprep.subr.bf16.mxu0 %v3714
    %5155 = vmatpush1.bf16.msra.mxu0 %v3713
    %5156 = vmatprep.subr.bf16.mxu0 %v3710
    %5157 = vmatpush1.bf16.msra.mxu0 %v3709
    %5158 = vmatprep.subr.bf16.mxu0 %v3706
    %5159 = vmatpush1.bf16.msra.mxu0 %v3705
    %5160 = vmatprep.subr.bf16.mxu0 %v3702
    %5161 = vmatpush1.bf16.msra.mxu0 %v3701
    %5162 = vmatprep.subr.bf16.mxu0 %v3698
    %5163 = vmatpush1.bf16.msra.mxu0 %v3697
    %5164 = vmatprep.subr.bf16.mxu0 %v3694
    %5165 = vmatpush1.bf16.msra.mxu0 %v3693
    %5166 = vmatprep.subr.bf16.mxu0 %v3754
    %5167 = vmatpush2.bf16.msra.mxu0 %v3753
    %5168 = vmatprep.subr.bf16.mxu0 %v3750
    %5169 = vmatpush2.bf16.msra.mxu0 %v3749
    %5170 = vmatprep.subr.bf16.mxu0 %v3746
    %5171 = vmatpush2.bf16.msra.mxu0 %v3745
    %5172 = vmatprep.subr.bf16.mxu0 %v3742
    %5173 = vmatpush2.bf16.msra.mxu0 %v3741
    %5174 = vmatprep.subr.bf16.mxu0 %v3738
    %5175 = vmatpush2.bf16.msra.mxu0 %v3737
    %5176 = vmatprep.subr.bf16.mxu0 %v3734
    %5177 = vmatpush2.bf16.msra.mxu0 %v3733
    %5178 = vmatprep.subr.bf16.mxu0 %v3730
    %5179 = vmatpush2.bf16.msra.mxu0 %v3729
    %5180 = vmatprep.subr.bf16.mxu0 %v3726
    %5181 = vmatpush2.bf16.msra.mxu0 %v3725
    %5182 = vmatprep.mubr.bf16.mxu0 %v932
    %5183 = vmatmul.mubr.bf16.gmra.mxu0 %v930
    %v5184 = vpop.f32.mrf.mxu0
    %v5185 = vadd.f32 %v5144, %v5184
    %v5186 = vpop.f32.mrf.mxu0
    %v5187 = vadd.f32 %v5146, %v5186
    %v5188 = vpop.f32.mrf.mxu0
    %v5189 = vpop.f32.mrf.mxu0
    %5190 = vdwg.mxu0
    %5191 = vmatprep.subr.bf16.mxu0 %v3786
    %5192 = vmatpush1.bf16.msra.mxu0 %v3785
    %5193 = vmatprep.subr.bf16.mxu0 %v3782
    %5194 = vmatpush1.bf16.msra.mxu0 %v3781
    %5195 = vmatprep.subr.bf16.mxu0 %v3778
    %5196 = vmatpush1.bf16.msra.mxu0 %v3777
    %5197 = vmatprep.subr.bf16.mxu0 %v3774
    %5198 = vmatpush1.bf16.msra.mxu0 %v3773
    %5199 = vmatprep.subr.bf16.mxu0 %v3770
    %5200 = vmatpush1.bf16.msra.mxu0 %v3769
    %5201 = vmatprep.subr.bf16.mxu0 %v3766
    %5202 = vmatpush1.bf16.msra.mxu0 %v3765
    %5203 = vmatprep.subr.bf16.mxu0 %v3762
    %5204 = vmatpush1.bf16.msra.mxu0 %v3761
    %5205 = vmatprep.subr.bf16.mxu0 %v3758
    %5206 = vmatpush1.bf16.msra.mxu0 %v3757
    %5207 = vmatprep.subr.bf16.mxu0 %v3818
    %5208 = vmatpush2.bf16.msra.mxu0 %v3817
    %5209 = vmatprep.subr.bf16.mxu0 %v3814
    %5210 = vmatpush2.bf16.msra.mxu0 %v3813
    %5211 = vmatprep.subr.bf16.mxu0 %v3810
    %5212 = vmatpush2.bf16.msra.mxu0 %v3809
    %5213 = vmatprep.subr.bf16.mxu0 %v3806
    %5214 = vmatpush2.bf16.msra.mxu0 %v3805
    %5215 = vmatprep.subr.bf16.mxu0 %v3802
    %5216 = vmatpush2.bf16.msra.mxu0 %v3801
    %5217 = vmatprep.subr.bf16.mxu0 %v3798
    %5218 = vmatpush2.bf16.msra.mxu0 %v3797
    %5219 = vmatprep.subr.bf16.mxu0 %v3794
    %5220 = vmatpush2.bf16.msra.mxu0 %v3793
    %5221 = vmatprep.subr.bf16.mxu0 %v3790
    %5222 = vmatpush2.bf16.msra.mxu0 %v3789
    %5223 = vmatprep.mubr.bf16.mxu0 %v929
    %5224 = vmatmul.mubr.bf16.gmra.mxu0 %v915
    %v5225 = vpop.f32.mrf.mxu0
    %v5226 = vadd.f32 %v5185, %v5225
    %v5227 = vpop.f32.mrf.mxu0
    %v5228 = vadd.f32 %v5187, %v5227
    %v5229 = vpop.f32.mrf.mxu0
    %v5230 = vpop.f32.mrf.mxu0
    %5231 = vdwg.mxu0
    %5232 = vmatprep.subr.bf16.mxu0 %v3850
    %5233 = vmatpush1.bf16.msra.mxu0 %v3849
    %5234 = vmatprep.subr.bf16.mxu0 %v3846
    %5235 = vmatpush1.bf16.msra.mxu0 %v3845
    %5236 = vmatprep.subr.bf16.mxu0 %v3842
    %5237 = vmatpush1.bf16.msra.mxu0 %v3841
    %5238 = vmatprep.subr.bf16.mxu0 %v3838
    %5239 = vmatpush1.bf16.msra.mxu0 %v3837
    %5240 = vmatprep.subr.bf16.mxu0 %v3834
    %5241 = vmatpush1.bf16.msra.mxu0 %v3833
    %5242 = vmatprep.subr.bf16.mxu0 %v3830
    %5243 = vmatpush1.bf16.msra.mxu0 %v3829
    %5244 = vmatprep.subr.bf16.mxu0 %v3826
    %5245 = vmatpush1.bf16.msra.mxu0 %v3825
    %5246 = vmatprep.subr.bf16.mxu0 %v3822
    %5247 = vmatpush1.bf16.msra.mxu0 %v3821
    %5248 = vmatprep.subr.bf16.mxu0 %v3882
    %5249 = vmatpush2.bf16.msra.mxu0 %v3881
    %5250 = vmatprep.subr.bf16.mxu0 %v3878
    %5251 = vmatpush2.bf16.msra.mxu0 %v3877
    %5252 = vmatprep.subr.bf16.mxu0 %v3874
    %5253 = vmatpush2.bf16.msra.mxu0 %v3873
    %5254 = vmatprep.subr.bf16.mxu0 %v3870
    %5255 = vmatpush2.bf16.msra.mxu0 %v3869
    %5256 = vmatprep.subr.bf16.mxu0 %v3866
    %5257 = vmatpush2.bf16.msra.mxu0 %v3865
    %5258 = vmatprep.subr.bf16.mxu0 %v3862
    %5259 = vmatpush2.bf16.msra.mxu0 %v3861
    %5260 = vmatprep.subr.bf16.mxu0 %v3858
    %5261 = vmatpush2.bf16.msra.mxu0 %v3857
    %5262 = vmatprep.subr.bf16.mxu0 %v3854
    %5263 = vmatpush2.bf16.msra.mxu0 %v3853
    %5264 = vmatprep.mubr.bf16.mxu0 %v933
    %5265 = vmatmul.mubr.bf16.gmra.mxu0 %v931
    %v5266 = vpop.f32.mrf.mxu0
    %v5267 = vadd.f32 %v5226, %v5266
    %v5268 = vpop.f32.mrf.mxu0
    %v5269 = vadd.f32 %v5228, %v5268
    %v5270 = vpop.f32.mrf.mxu0
    %v5271 = vpop.f32.mrf.mxu0
    %5272 = vdwg.mxu0
    %5273 = vmatprep.subr.bf16.mxu0 %v3914
    %5274 = vmatpush1.bf16.msra.mxu0 %v3913
    %5275 = vmatprep.subr.bf16.mxu0 %v3910
    %5276 = vmatpush1.bf16.msra.mxu0 %v3909
    %5277 = vmatprep.subr.bf16.mxu0 %v3906
    %5278 = vmatpush1.bf16.msra.mxu0 %v3905
    %5279 = vmatprep.subr.bf16.mxu0 %v3902
    %5280 = vmatpush1.bf16.msra.mxu0 %v3901
    %5281 = vmatprep.subr.bf16.mxu0 %v3898
    %5282 = vmatpush1.bf16.msra.mxu0 %v3897
    %5283 = vmatprep.subr.bf16.mxu0 %v3894
    %5284 = vmatpush1.bf16.msra.mxu0 %v3893
    %5285 = vmatprep.subr.bf16.mxu0 %v3890
    %5286 = vmatpush1.bf16.msra.mxu0 %v3889
    %5287 = vmatprep.subr.bf16.mxu0 %v3886
    %5288 = vmatpush1.bf16.msra.mxu0 %v3885
    %5289 = vmatprep.subr.bf16.mxu0 %v3946
    %5290 = vmatpush2.bf16.msra.mxu0 %v3945
    %5291 = vmatprep.subr.bf16.mxu0 %v3942
    %5292 = vmatpush2.bf16.msra.mxu0 %v3941
    %5293 = vmatprep.subr.bf16.mxu0 %v3938
    %5294 = vmatpush2.bf16.msra.mxu0 %v3937
    %5295 = vmatprep.subr.bf16.mxu0 %v3934
    %5296 = vmatpush2.bf16.msra.mxu0 %v3933
    %5297 = vmatprep.subr.bf16.mxu0 %v3930
    %5298 = vmatpush2.bf16.msra.mxu0 %v3929
    %5299 = vmatprep.subr.bf16.mxu0 %v3926
    %5300 = vmatpush2.bf16.msra.mxu0 %v3925
    %5301 = vmatprep.subr.bf16.mxu0 %v3922
    %5302 = vmatpush2.bf16.msra.mxu0 %v3921
    %5303 = vmatprep.subr.bf16.mxu0 %v3918
    %5304 = vmatpush2.bf16.msra.mxu0 %v3917
    %5305 = vmatprep.mubr.bf16.mxu0 %v971
    %5306 = vmatmul.mubr.bf16.gmra.mxu0 %v957
    %v5307 = vpop.f32.mrf.mxu0
    %v5308 = vadd.f32 %v5267, %v5307
    %v5309 = vpop.f32.mrf.mxu0
    %v5310 = vadd.f32 %v5269, %v5309
    %v5311 = vpop.f32.mrf.mxu0
    %v5312 = vpop.f32.mrf.mxu0
    %5313 = vdwg.mxu0
    %5314 = vmatprep.subr.bf16.mxu0 %v3978
    %5315 = vmatpush1.bf16.msra.mxu0 %v3977
    %5316 = vmatprep.subr.bf16.mxu0 %v3974
    %5317 = vmatpush1.bf16.msra.mxu0 %v3973
    %5318 = vmatprep.subr.bf16.mxu0 %v3970
    %5319 = vmatpush1.bf16.msra.mxu0 %v3969
    %5320 = vmatprep.subr.bf16.mxu0 %v3966
    %5321 = vmatpush1.bf16.msra.mxu0 %v3965
    %5322 = vmatprep.subr.bf16.mxu0 %v3962
    %5323 = vmatpush1.bf16.msra.mxu0 %v3961
    %5324 = vmatprep.subr.bf16.mxu0 %v3958
    %5325 = vmatpush1.bf16.msra.mxu0 %v3957
    %5326 = vmatprep.subr.bf16.mxu0 %v3954
    %5327 = vmatpush1.bf16.msra.mxu0 %v3953
    %5328 = vmatprep.subr.bf16.mxu0 %v3950
    %5329 = vmatpush1.bf16.msra.mxu0 %v3949
    %5330 = vmatprep.subr.bf16.mxu0 %v4010
    %5331 = vmatpush2.bf16.msra.mxu0 %v4009
    %5332 = vmatprep.subr.bf16.mxu0 %v4006
    %5333 = vmatpush2.bf16.msra.mxu0 %v4005
    %5334 = vmatprep.subr.bf16.mxu0 %v4002
    %5335 = vmatpush2.bf16.msra.mxu0 %v4001
    %5336 = vmatprep.subr.bf16.mxu0 %v3998
    %5337 = vmatpush2.bf16.msra.mxu0 %v3997
    %5338 = vmatprep.subr.bf16.mxu0 %v3994
    %5339 = vmatpush2.bf16.msra.mxu0 %v3993
    %5340 = vmatprep.subr.bf16.mxu0 %v3990
    %5341 = vmatpush2.bf16.msra.mxu0 %v3989
    %5342 = vmatprep.subr.bf16.mxu0 %v3986
    %5343 = vmatpush2.bf16.msra.mxu0 %v3985
    %5344 = vmatprep.subr.bf16.mxu0 %v3982
    %5345 = vmatpush2.bf16.msra.mxu0 %v3981
    %5346 = vmatprep.mubr.bf16.mxu0 %v981
    %5347 = vmatmul.mubr.bf16.gmra.mxu0 %v979
    %v5348 = vpop.f32.mrf.mxu0
    %v5349 = vadd.f32 %v5308, %v5348
    %v5350 = vpop.f32.mrf.mxu0
    %v5351 = vadd.f32 %v5310, %v5350
    %v5352 = vpop.f32.mrf.mxu0
    %v5353 = vpop.f32.mrf.mxu0
    %5354 = vdwg.mxu0
    %5355 = vmatprep.subr.bf16.mxu0 %v4042
    %5356 = vmatpush1.bf16.msra.mxu0 %v4041
    %5357 = vmatprep.subr.bf16.mxu0 %v4038
    %5358 = vmatpush1.bf16.msra.mxu0 %v4037
    %5359 = vmatprep.subr.bf16.mxu0 %v4034
    %5360 = vmatpush1.bf16.msra.mxu0 %v4033
    %5361 = vmatprep.subr.bf16.mxu0 %v4030
    %5362 = vmatpush1.bf16.msra.mxu0 %v4029
    %5363 = vmatprep.subr.bf16.mxu0 %v4026
    %5364 = vmatpush1.bf16.msra.mxu0 %v4025
    %5365 = vmatprep.subr.bf16.mxu0 %v4022
    %5366 = vmatpush1.bf16.msra.mxu0 %v4021
    %5367 = vmatprep.subr.bf16.mxu0 %v4018
    %5368 = vmatpush1.bf16.msra.mxu0 %v4017
    %5369 = vmatprep.subr.bf16.mxu0 %v4014
    %5370 = vmatpush1.bf16.msra.mxu0 %v4013
    %5371 = vmatprep.subr.bf16.mxu0 %v4074
    %5372 = vmatpush2.bf16.msra.mxu0 %v4073
    %5373 = vmatprep.subr.bf16.mxu0 %v4070
    %5374 = vmatpush2.bf16.msra.mxu0 %v4069
    %5375 = vmatprep.subr.bf16.mxu0 %v4066
    %5376 = vmatpush2.bf16.msra.mxu0 %v4065
    %5377 = vmatprep.subr.bf16.mxu0 %v4062
    %5378 = vmatpush2.bf16.msra.mxu0 %v4061
    %5379 = vmatprep.subr.bf16.mxu0 %v4058
    %5380 = vmatpush2.bf16.msra.mxu0 %v4057
    %5381 = vmatprep.subr.bf16.mxu0 %v4054
    %5382 = vmatpush2.bf16.msra.mxu0 %v4053
    %5383 = vmatprep.subr.bf16.mxu0 %v4050
    %5384 = vmatpush2.bf16.msra.mxu0 %v4049
    %5385 = vmatprep.subr.bf16.mxu0 %v4046
    %5386 = vmatpush2.bf16.msra.mxu0 %v4045
    %5387 = vmatprep.mubr.bf16.mxu0 %v978
    %5388 = vmatmul.mubr.bf16.gmra.mxu0 %v964
    %v5389 = vpop.f32.mrf.mxu0
    %v5390 = vadd.f32 %v5349, %v5389
    %v5391 = vpop.f32.mrf.mxu0
    %v5392 = vadd.f32 %v5351, %v5391
    %v5393 = vpop.f32.mrf.mxu0
    %v5394 = vpop.f32.mrf.mxu0
    %5395 = vdwg.mxu0
    %5396 = vmatprep.subr.bf16.mxu0 %v4106
    %5397 = vmatpush1.bf16.msra.mxu0 %v4105
    %5398 = vmatprep.subr.bf16.mxu0 %v4102
    %5399 = vmatpush1.bf16.msra.mxu0 %v4101
    %5400 = vmatprep.subr.bf16.mxu0 %v4098
    %5401 = vmatpush1.bf16.msra.mxu0 %v4097
    %5402 = vmatprep.subr.bf16.mxu0 %v4094
    %5403 = vmatpush1.bf16.msra.mxu0 %v4093
    %5404 = vmatprep.subr.bf16.mxu0 %v4090
    %5405 = vmatpush1.bf16.msra.mxu0 %v4089
    %5406 = vmatprep.subr.bf16.mxu0 %v4086
    %5407 = vmatpush1.bf16.msra.mxu0 %v4085
    %5408 = vmatprep.subr.bf16.mxu0 %v4082
    %5409 = vmatpush1.bf16.msra.mxu0 %v4081
    %5410 = vmatprep.subr.bf16.mxu0 %v4078
    %5411 = vmatpush1.bf16.msra.mxu0 %v4077
    %5412 = vmatprep.subr.bf16.mxu0 %v4138
    %5413 = vmatpush2.bf16.msra.mxu0 %v4137
    %5414 = vmatprep.subr.bf16.mxu0 %v4134
    %5415 = vmatpush2.bf16.msra.mxu0 %v4133
    %5416 = vmatprep.subr.bf16.mxu0 %v4130
    %5417 = vmatpush2.bf16.msra.mxu0 %v4129
    %5418 = vmatprep.subr.bf16.mxu0 %v4126
    %5419 = vmatpush2.bf16.msra.mxu0 %v4125
    %5420 = vmatprep.subr.bf16.mxu0 %v4122
    %5421 = vmatpush2.bf16.msra.mxu0 %v4121
    %5422 = vmatprep.subr.bf16.mxu0 %v4118
    %5423 = vmatpush2.bf16.msra.mxu0 %v4117
    %5424 = vmatprep.subr.bf16.mxu0 %v4114
    %5425 = vmatpush2.bf16.msra.mxu0 %v4113
    %5426 = vmatprep.subr.bf16.mxu0 %v4110
    %5427 = vmatpush2.bf16.msra.mxu0 %v4109
    %5428 = vmatprep.mubr.bf16.mxu0 %v982
    %5429 = vmatmul.mubr.bf16.gmra.mxu0 %v980
    %v5430 = vpop.f32.mrf.mxu0
    %v5431 = vadd.f32 %v5390, %v5430
    %v5432 = vpop.f32.mrf.mxu0
    %v5433 = vadd.f32 %v5392, %v5432
    %v5434 = vpop.f32.mrf.mxu0
    %v5435 = vpop.f32.mrf.mxu0
    %5436 = vdwg.mxu0
    %5437 = vmatprep.subr.bf16.mxu0 0
    %5438 = vmatpush1.bf16.msra.mxu0 0
    %5439 = vmatprep.subr.bf16.mxu0 0
    %5440 = vmatpush1.bf16.msra.mxu0 0
    %5441 = vmatprep.subr.bf16.mxu0 0
    %5442 = vmatpush1.bf16.msra.mxu0 0
    %5443 = vmatprep.subr.bf16.mxu0 0
    %5444 = vmatpush1.bf16.msra.mxu0 0
    %5445 = vmatprep.subr.bf16.mxu0 %v4154
    %5446 = vmatpush1.bf16.msra.mxu0 %v4153
    %5447 = vmatprep.subr.bf16.mxu0 %v4150
    %5448 = vmatpush1.bf16.msra.mxu0 %v4149
    %5449 = vmatprep.subr.bf16.mxu0 %v4146
    %5450 = vmatpush1.bf16.msra.mxu0 %v4145
    %5451 = vmatprep.subr.bf16.mxu0 %v4142
    %5452 = vmatpush1.bf16.msra.mxu0 %v4141
    %5453 = vmatprep.subr.bf16.mxu0 0
    %5454 = vmatpush2.bf16.msra.mxu0 0
    %5455 = vmatprep.subr.bf16.mxu0 0
    %5456 = vmatpush2.bf16.msra.mxu0 0
    %5457 = vmatprep.subr.bf16.mxu0 0
    %5458 = vmatpush2.bf16.msra.mxu0 0
    %5459 = vmatprep.subr.bf16.mxu0 0
    %5460 = vmatpush2.bf16.msra.mxu0 0
    %5461 = vmatprep.subr.bf16.mxu0 0
    %5462 = vmatpush2.bf16.msra.mxu0 0
    %5463 = vmatprep.subr.bf16.mxu0 0
    %5464 = vmatpush2.bf16.msra.mxu0 0
    %5465 = vmatprep.subr.bf16.mxu0 0
    %5466 = vmatpush2.bf16.msra.mxu0 0
    %5467 = vmatprep.subr.bf16.mxu0 0
    %5468 = vmatpush2.bf16.msra.mxu0 0
    %5469 = vmatprep.mubr.bf16.mxu0 0
    %5470 = vmatmul.mubr.bf16.gmra.mxu0 %v4943
    %v5471 = vpop.f32.mrf.mxu0
    %v5472 = vadd.f32 %v5431, %v5471
    %v5473 = vpop.f32.mrf.mxu0
    %v5474 = vadd.f32 %v5433, %v5473
    %v5475 = vpop.f32.mrf.mxu0
    %v5476 = vpop.f32.mrf.mxu0
    %5477 = vdwg.mxu0
    %5478 = vmatprep.subr.bf16.mxu0 %v3404
    %5479 = vmatpush1.bf16.msra.mxu0 %v3403
    %5480 = vmatprep.subr.bf16.mxu0 %v3400
    %5481 = vmatpush1.bf16.msra.mxu0 %v3399
    %5482 = vmatprep.subr.bf16.mxu0 %v3396
    %5483 = vmatpush1.bf16.msra.mxu0 %v3395
    %5484 = vmatprep.subr.bf16.mxu0 %v3392
    %5485 = vmatpush1.bf16.msra.mxu0 %v3391
    %5486 = vmatprep.subr.bf16.mxu0 %v3388
    %5487 = vmatpush1.bf16.msra.mxu0 %v3387
    %5488 = vmatprep.subr.bf16.mxu0 %v3384
    %5489 = vmatpush1.bf16.msra.mxu0 %v3383
    %5490 = vmatprep.subr.bf16.mxu0 %v3380
    %5491 = vmatpush1.bf16.msra.mxu0 %v3379
    %5492 = vmatprep.subr.bf16.mxu0 %v3376
    %5493 = vmatpush1.bf16.msra.mxu0 %v3375
    %5494 = vmatprep.subr.bf16.mxu0 %v3436
    %5495 = vmatpush2.bf16.msra.mxu0 %v3435
    %5496 = vmatprep.subr.bf16.mxu0 %v3432
    %5497 = vmatpush2.bf16.msra.mxu0 %v3431
    %5498 = vmatprep.subr.bf16.mxu0 %v3428
    %5499 = vmatpush2.bf16.msra.mxu0 %v3427
    %5500 = vmatprep.subr.bf16.mxu0 %v3424
    %5501 = vmatpush2.bf16.msra.mxu0 %v3423
    %5502 = vmatprep.subr.bf16.mxu0 %v3420
    %5503 = vmatpush2.bf16.msra.mxu0 %v3419
    %5504 = vmatprep.subr.bf16.mxu0 %v3416
    %5505 = vmatpush2.bf16.msra.mxu0 %v3415
    %5506 = vmatprep.subr.bf16.mxu0 %v3412
    %5507 = vmatpush2.bf16.msra.mxu0 %v3411
    %5508 = vmatprep.subr.bf16.mxu0 %v3408
    %5509 = vmatpush2.bf16.msra.mxu0 %v3407
    %5510 = vmatprep.mubr.bf16.mxu0 %v873
    %5511 = vmatmul.mubr.bf16.gmra.mxu0 %v859
    %v5512 = vpop.f32.mrf.mxu0
    %v5513 = vadd.f32 %v823, %v5512
    %v5514 = vpop.f32.mrf.mxu0
    %v5515 = vadd.f32 %v827, %v5514
    %v5516 = vpop.f32.mrf.mxu0
    %v5517 = vpop.f32.mrf.mxu0
    %5518 = vdwg.mxu0
    %5519 = vmatprep.subr.bf16.mxu0 %v3468
    %5520 = vmatpush1.bf16.msra.mxu0 %v3467
    %5521 = vmatprep.subr.bf16.mxu0 %v3464
    %5522 = vmatpush1.bf16.msra.mxu0 %v3463
    %5523 = vmatprep.subr.bf16.mxu0 %v3460
    %5524 = vmatpush1.bf16.msra.mxu0 %v3459
    %5525 = vmatprep.subr.bf16.mxu0 %v3456
    %5526 = vmatpush1.bf16.msra.mxu0 %v3455
    %5527 = vmatprep.subr.bf16.mxu0 %v3452
    %5528 = vmatpush1.bf16.msra.mxu0 %v3451
    %5529 = vmatprep.subr.bf16.mxu0 %v3448
    %5530 = vmatpush1.bf16.msra.mxu0 %v3447
    %5531 = vmatprep.subr.bf16.mxu0 %v3444
    %5532 = vmatpush1.bf16.msra.mxu0 %v3443
    %5533 = vmatprep.subr.bf16.mxu0 %v3440
    %5534 = vmatpush1.bf16.msra.mxu0 %v3439
    %5535 = vmatprep.subr.bf16.mxu0 %v3500
    %5536 = vmatpush2.bf16.msra.mxu0 %v3499
    %5537 = vmatprep.subr.bf16.mxu0 %v3496
    %5538 = vmatpush2.bf16.msra.mxu0 %v3495
    %5539 = vmatprep.subr.bf16.mxu0 %v3492
    %5540 = vmatpush2.bf16.msra.mxu0 %v3491
    %5541 = vmatprep.subr.bf16.mxu0 %v3488
    %5542 = vmatpush2.bf16.msra.mxu0 %v3487
    %5543 = vmatprep.subr.bf16.mxu0 %v3484
    %5544 = vmatpush2.bf16.msra.mxu0 %v3483
    %5545 = vmatprep.subr.bf16.mxu0 %v3480
    %5546 = vmatpush2.bf16.msra.mxu0 %v3479
    %5547 = vmatprep.subr.bf16.mxu0 %v3476
    %5548 = vmatpush2.bf16.msra.mxu0 %v3475
    %5549 = vmatprep.subr.bf16.mxu0 %v3472
    %5550 = vmatpush2.bf16.msra.mxu0 %v3471
    %5551 = vmatprep.mubr.bf16.mxu0 %v883
    %5552 = vmatmul.mubr.bf16.gmra.mxu0 %v881
    %v5553 = vpop.f32.mrf.mxu0
    %v5554 = vadd.f32 %v5513, %v5553
    %v5555 = vpop.f32.mrf.mxu0
    %v5556 = vadd.f32 %v5515, %v5555
    %v5557 = vpop.f32.mrf.mxu0
    %v5558 = vpop.f32.mrf.mxu0
    %5559 = vdwg.mxu0
    %5560 = vmatprep.subr.bf16.mxu0 %v3532
    %5561 = vmatpush1.bf16.msra.mxu0 %v3531
    %5562 = vmatprep.subr.bf16.mxu0 %v3528
    %5563 = vmatpush1.bf16.msra.mxu0 %v3527
    %5564 = vmatprep.subr.bf16.mxu0 %v3524
    %5565 = vmatpush1.bf16.msra.mxu0 %v3523
    %5566 = vmatprep.subr.bf16.mxu0 %v3520
    %5567 = vmatpush1.bf16.msra.mxu0 %v3519
    %5568 = vmatprep.subr.bf16.mxu0 %v3516
    %5569 = vmatpush1.bf16.msra.mxu0 %v3515
    %5570 = vmatprep.subr.bf16.mxu0 %v3512
    %5571 = vmatpush1.bf16.msra.mxu0 %v3511
    %5572 = vmatprep.subr.bf16.mxu0 %v3508
    %5573 = vmatpush1.bf16.msra.mxu0 %v3507
    %5574 = vmatprep.subr.bf16.mxu0 %v3504
    %5575 = vmatpush1.bf16.msra.mxu0 %v3503
    %5576 = vmatprep.subr.bf16.mxu0 %v3564
    %5577 = vmatpush2.bf16.msra.mxu0 %v3563
    %5578 = vmatprep.subr.bf16.mxu0 %v3560
    %5579 = vmatpush2.bf16.msra.mxu0 %v3559
    %5580 = vmatprep.subr.bf16.mxu0 %v3556
    %5581 = vmatpush2.bf16.msra.mxu0 %v3555
    %5582 = vmatprep.subr.bf16.mxu0 %v3552
    %5583 = vmatpush2.bf16.msra.mxu0 %v3551
    %5584 = vmatprep.subr.bf16.mxu0 %v3548
    %5585 = vmatpush2.bf16.msra.mxu0 %v3547
    %5586 = vmatprep.subr.bf16.mxu0 %v3544
    %5587 = vmatpush2.bf16.msra.mxu0 %v3543
    %5588 = vmatprep.subr.bf16.mxu0 %v3540
    %5589 = vmatpush2.bf16.msra.mxu0 %v3539
    %5590 = vmatprep.subr.bf16.mxu0 %v3536
    %5591 = vmatpush2.bf16.msra.mxu0 %v3535
    %5592 = vmatprep.mubr.bf16.mxu0 %v880
    %5593 = vmatmul.mubr.bf16.gmra.mxu0 %v866
    %v5594 = vpop.f32.mrf.mxu0
    %v5595 = vadd.f32 %v5554, %v5594
    %v5596 = vpop.f32.mrf.mxu0
    %v5597 = vadd.f32 %v5556, %v5596
    %v5598 = vpop.f32.mrf.mxu0
    %v5599 = vpop.f32.mrf.mxu0
    %5600 = vdwg.mxu0
    %5601 = vmatprep.subr.bf16.mxu0 %v3596
    %5602 = vmatpush1.bf16.msra.mxu0 %v3595
    %5603 = vmatprep.subr.bf16.mxu0 %v3592
    %5604 = vmatpush1.bf16.msra.mxu0 %v3591
    %5605 = vmatprep.subr.bf16.mxu0 %v3588
    %5606 = vmatpush1.bf16.msra.mxu0 %v3587
    %5607 = vmatprep.subr.bf16.mxu0 %v3584
    %5608 = vmatpush1.bf16.msra.mxu0 %v3583
    %5609 = vmatprep.subr.bf16.mxu0 %v3580
    %5610 = vmatpush1.bf16.msra.mxu0 %v3579
    %5611 = vmatprep.subr.bf16.mxu0 %v3576
    %5612 = vmatpush1.bf16.msra.mxu0 %v3575
    %5613 = vmatprep.subr.bf16.mxu0 %v3572
    %5614 = vmatpush1.bf16.msra.mxu0 %v3571
    %5615 = vmatprep.subr.bf16.mxu0 %v3568
    %5616 = vmatpush1.bf16.msra.mxu0 %v3567
    %5617 = vmatprep.subr.bf16.mxu0 %v3628
    %5618 = vmatpush2.bf16.msra.mxu0 %v3627
    %5619 = vmatprep.subr.bf16.mxu0 %v3624
    %5620 = vmatpush2.bf16.msra.mxu0 %v3623
    %5621 = vmatprep.subr.bf16.mxu0 %v3620
    %5622 = vmatpush2.bf16.msra.mxu0 %v3619
    %5623 = vmatprep.subr.bf16.mxu0 %v3616
    %5624 = vmatpush2.bf16.msra.mxu0 %v3615
    %5625 = vmatprep.subr.bf16.mxu0 %v3612
    %5626 = vmatpush2.bf16.msra.mxu0 %v3611
    %5627 = vmatprep.subr.bf16.mxu0 %v3608
    %5628 = vmatpush2.bf16.msra.mxu0 %v3607
    %5629 = vmatprep.subr.bf16.mxu0 %v3604
    %5630 = vmatpush2.bf16.msra.mxu0 %v3603
    %5631 = vmatprep.subr.bf16.mxu0 %v3600
    %5632 = vmatpush2.bf16.msra.mxu0 %v3599
    %5633 = vmatprep.mubr.bf16.mxu0 %v884
    %5634 = vmatmul.mubr.bf16.gmra.mxu0 %v882
    %v5635 = vpop.f32.mrf.mxu0
    %v5636 = vadd.f32 %v5595, %v5635
    %v5637 = vpop.f32.mrf.mxu0
    %v5638 = vadd.f32 %v5597, %v5637
    %v5639 = vpop.f32.mrf.mxu0
    %v5640 = vpop.f32.mrf.mxu0
    %5641 = vdwg.mxu0
    %5642 = vmatprep.subr.bf16.mxu0 %v3660
    %5643 = vmatpush1.bf16.msra.mxu0 %v3659
    %5644 = vmatprep.subr.bf16.mxu0 %v3656
    %5645 = vmatpush1.bf16.msra.mxu0 %v3655
    %5646 = vmatprep.subr.bf16.mxu0 %v3652
    %5647 = vmatpush1.bf16.msra.mxu0 %v3651
    %5648 = vmatprep.subr.bf16.mxu0 %v3648
    %5649 = vmatpush1.bf16.msra.mxu0 %v3647
    %5650 = vmatprep.subr.bf16.mxu0 %v3644
    %5651 = vmatpush1.bf16.msra.mxu0 %v3643
    %5652 = vmatprep.subr.bf16.mxu0 %v3640
    %5653 = vmatpush1.bf16.msra.mxu0 %v3639
    %5654 = vmatprep.subr.bf16.mxu0 %v3636
    %5655 = vmatpush1.bf16.msra.mxu0 %v3635
    %5656 = vmatprep.subr.bf16.mxu0 %v3632
    %5657 = vmatpush1.bf16.msra.mxu0 %v3631
    %5658 = vmatprep.subr.bf16.mxu0 %v3692
    %5659 = vmatpush2.bf16.msra.mxu0 %v3691
    %5660 = vmatprep.subr.bf16.mxu0 %v3688
    %5661 = vmatpush2.bf16.msra.mxu0 %v3687
    %5662 = vmatprep.subr.bf16.mxu0 %v3684
    %5663 = vmatpush2.bf16.msra.mxu0 %v3683
    %5664 = vmatprep.subr.bf16.mxu0 %v3680
    %5665 = vmatpush2.bf16.msra.mxu0 %v3679
    %5666 = vmatprep.subr.bf16.mxu0 %v3676
    %5667 = vmatpush2.bf16.msra.mxu0 %v3675
    %5668 = vmatprep.subr.bf16.mxu0 %v3672
    %5669 = vmatpush2.bf16.msra.mxu0 %v3671
    %5670 = vmatprep.subr.bf16.mxu0 %v3668
    %5671 = vmatpush2.bf16.msra.mxu0 %v3667
    %5672 = vmatprep.subr.bf16.mxu0 %v3664
    %5673 = vmatpush2.bf16.msra.mxu0 %v3663
    %5674 = vmatprep.mubr.bf16.mxu0 %v922
    %5675 = vmatmul.mubr.bf16.gmra.mxu0 %v908
    %v5676 = vpop.f32.mrf.mxu0
    %v5677 = vadd.f32 %v5636, %v5676
    %v5678 = vpop.f32.mrf.mxu0
    %v5679 = vadd.f32 %v5638, %v5678
    %v5680 = vpop.f32.mrf.mxu0
    %v5681 = vpop.f32.mrf.mxu0
    %5682 = vdwg.mxu0
    %5683 = vmatprep.subr.bf16.mxu0 %v3724
    %5684 = vmatpush1.bf16.msra.mxu0 %v3723
    %5685 = vmatprep.subr.bf16.mxu0 %v3720
    %5686 = vmatpush1.bf16.msra.mxu0 %v3719
    %5687 = vmatprep.subr.bf16.mxu0 %v3716
    %5688 = vmatpush1.bf16.msra.mxu0 %v3715
    %5689 = vmatprep.subr.bf16.mxu0 %v3712
    %5690 = vmatpush1.bf16.msra.mxu0 %v3711
    %5691 = vmatprep.subr.bf16.mxu0 %v3708
    %5692 = vmatpush1.bf16.msra.mxu0 %v3707
    %5693 = vmatprep.subr.bf16.mxu0 %v3704
    %5694 = vmatpush1.bf16.msra.mxu0 %v3703
    %5695 = vmatprep.subr.bf16.mxu0 %v3700
    %5696 = vmatpush1.bf16.msra.mxu0 %v3699
    %5697 = vmatprep.subr.bf16.mxu0 %v3696
    %5698 = vmatpush1.bf16.msra.mxu0 %v3695
    %5699 = vmatprep.subr.bf16.mxu0 %v3756
    %5700 = vmatpush2.bf16.msra.mxu0 %v3755
    %5701 = vmatprep.subr.bf16.mxu0 %v3752
    %5702 = vmatpush2.bf16.msra.mxu0 %v3751
    %5703 = vmatprep.subr.bf16.mxu0 %v3748
    %5704 = vmatpush2.bf16.msra.mxu0 %v3747
    %5705 = vmatprep.subr.bf16.mxu0 %v3744
    %5706 = vmatpush2.bf16.msra.mxu0 %v3743
    %5707 = vmatprep.subr.bf16.mxu0 %v3740
    %5708 = vmatpush2.bf16.msra.mxu0 %v3739
    %5709 = vmatprep.subr.bf16.mxu0 %v3736
    %5710 = vmatpush2.bf16.msra.mxu0 %v3735
    %5711 = vmatprep.subr.bf16.mxu0 %v3732
    %5712 = vmatpush2.bf16.msra.mxu0 %v3731
    %5713 = vmatprep.subr.bf16.mxu0 %v3728
    %5714 = vmatpush2.bf16.msra.mxu0 %v3727
    %5715 = vmatprep.mubr.bf16.mxu0 %v932
    %5716 = vmatmul.mubr.bf16.gmra.mxu0 %v930
    %v5717 = vpop.f32.mrf.mxu0
    %v5718 = vadd.f32 %v5677, %v5717
    %v5719 = vpop.f32.mrf.mxu0
    %v5720 = vadd.f32 %v5679, %v5719
    %v5721 = vpop.f32.mrf.mxu0
    %v5722 = vpop.f32.mrf.mxu0
    %5723 = vdwg.mxu0
    %5724 = vmatprep.subr.bf16.mxu0 %v3788
    %5725 = vmatpush1.bf16.msra.mxu0 %v3787
    %5726 = vmatprep.subr.bf16.mxu0 %v3784
    %5727 = vmatpush1.bf16.msra.mxu0 %v3783
    %5728 = vmatprep.subr.bf16.mxu0 %v3780
    %5729 = vmatpush1.bf16.msra.mxu0 %v3779
    %5730 = vmatprep.subr.bf16.mxu0 %v3776
    %5731 = vmatpush1.bf16.msra.mxu0 %v3775
    %5732 = vmatprep.subr.bf16.mxu0 %v3772
    %5733 = vmatpush1.bf16.msra.mxu0 %v3771
    %5734 = vmatprep.subr.bf16.mxu0 %v3768
    %5735 = vmatpush1.bf16.msra.mxu0 %v3767
    %5736 = vmatprep.subr.bf16.mxu0 %v3764
    %5737 = vmatpush1.bf16.msra.mxu0 %v3763
    %5738 = vmatprep.subr.bf16.mxu0 %v3760
    %5739 = vmatpush1.bf16.msra.mxu0 %v3759
    %5740 = vmatprep.subr.bf16.mxu0 %v3820
    %5741 = vmatpush2.bf16.msra.mxu0 %v3819
    %5742 = vmatprep.subr.bf16.mxu0 %v3816
    %5743 = vmatpush2.bf16.msra.mxu0 %v3815
    %5744 = vmatprep.subr.bf16.mxu0 %v3812
    %5745 = vmatpush2.bf16.msra.mxu0 %v3811
    %5746 = vmatprep.subr.bf16.mxu0 %v3808
    %5747 = vmatpush2.bf16.msra.mxu0 %v3807
    %5748 = vmatprep.subr.bf16.mxu0 %v3804
    %5749 = vmatpush2.bf16.msra.mxu0 %v3803
    %5750 = vmatprep.subr.bf16.mxu0 %v3800
    %5751 = vmatpush2.bf16.msra.mxu0 %v3799
    %5752 = vmatprep.subr.bf16.mxu0 %v3796
    %5753 = vmatpush2.bf16.msra.mxu0 %v3795
    %5754 = vmatprep.subr.bf16.mxu0 %v3792
    %5755 = vmatpush2.bf16.msra.mxu0 %v3791
    %5756 = vmatprep.mubr.bf16.mxu0 %v929
    %5757 = vmatmul.mubr.bf16.gmra.mxu0 %v915
    %v5758 = vpop.f32.mrf.mxu0
    %v5759 = vadd.f32 %v5718, %v5758
    %v5760 = vpop.f32.mrf.mxu0
    %v5761 = vadd.f32 %v5720, %v5760
    %v5762 = vpop.f32.mrf.mxu0
    %v5763 = vpop.f32.mrf.mxu0
    %5764 = vdwg.mxu0
    %5765 = vmatprep.subr.bf16.mxu0 %v3852
    %5766 = vmatpush1.bf16.msra.mxu0 %v3851
    %5767 = vmatprep.subr.bf16.mxu0 %v3848
    %5768 = vmatpush1.bf16.msra.mxu0 %v3847
    %5769 = vmatprep.subr.bf16.mxu0 %v3844
    %5770 = vmatpush1.bf16.msra.mxu0 %v3843
    %5771 = vmatprep.subr.bf16.mxu0 %v3840
    %5772 = vmatpush1.bf16.msra.mxu0 %v3839
    %5773 = vmatprep.subr.bf16.mxu0 %v3836
    %5774 = vmatpush1.bf16.msra.mxu0 %v3835
    %5775 = vmatprep.subr.bf16.mxu0 %v3832
    %5776 = vmatpush1.bf16.msra.mxu0 %v3831
    %5777 = vmatprep.subr.bf16.mxu0 %v3828
    %5778 = vmatpush1.bf16.msra.mxu0 %v3827
    %5779 = vmatprep.subr.bf16.mxu0 %v3824
    %5780 = vmatpush1.bf16.msra.mxu0 %v3823
    %5781 = vmatprep.subr.bf16.mxu0 %v3884
    %5782 = vmatpush2.bf16.msra.mxu0 %v3883
    %5783 = vmatprep.subr.bf16.mxu0 %v3880
    %5784 = vmatpush2.bf16.msra.mxu0 %v3879
    %5785 = vmatprep.subr.bf16.mxu0 %v3876
    %5786 = vmatpush2.bf16.msra.mxu0 %v3875
    %5787 = vmatprep.subr.bf16.mxu0 %v3872
    %5788 = vmatpush2.bf16.msra.mxu0 %v3871
    %5789 = vmatprep.subr.bf16.mxu0 %v3868
    %5790 = vmatpush2.bf16.msra.mxu0 %v3867
    %5791 = vmatprep.subr.bf16.mxu0 %v3864
    %5792 = vmatpush2.bf16.msra.mxu0 %v3863
    %5793 = vmatprep.subr.bf16.mxu0 %v3860
    %5794 = vmatpush2.bf16.msra.mxu0 %v3859
    %5795 = vmatprep.subr.bf16.mxu0 %v3856
    %5796 = vmatpush2.bf16.msra.mxu0 %v3855
    %5797 = vmatprep.mubr.bf16.mxu0 %v933
    %5798 = vmatmul.mubr.bf16.gmra.mxu0 %v931
    %v5799 = vpop.f32.mrf.mxu0
    %v5800 = vadd.f32 %v5759, %v5799
    %v5801 = vpop.f32.mrf.mxu0
    %v5802 = vadd.f32 %v5761, %v5801
    %v5803 = vpop.f32.mrf.mxu0
    %v5804 = vpop.f32.mrf.mxu0
    %5805 = vdwg.mxu0
    %5806 = vmatprep.subr.bf16.mxu0 %v3916
    %5807 = vmatpush1.bf16.msra.mxu0 %v3915
    %5808 = vmatprep.subr.bf16.mxu0 %v3912
    %5809 = vmatpush1.bf16.msra.mxu0 %v3911
    %5810 = vmatprep.subr.bf16.mxu0 %v3908
    %5811 = vmatpush1.bf16.msra.mxu0 %v3907
    %5812 = vmatprep.subr.bf16.mxu0 %v3904
    %5813 = vmatpush1.bf16.msra.mxu0 %v3903
    %5814 = vmatprep.subr.bf16.mxu0 %v3900
    %5815 = vmatpush1.bf16.msra.mxu0 %v3899
    %5816 = vmatprep.subr.bf16.mxu0 %v3896
    %5817 = vmatpush1.bf16.msra.mxu0 %v3895
    %5818 = vmatprep.subr.bf16.mxu0 %v3892
    %5819 = vmatpush1.bf16.msra.mxu0 %v3891
    %5820 = vmatprep.subr.bf16.mxu0 %v3888
    %5821 = vmatpush1.bf16.msra.mxu0 %v3887
    %5822 = vmatprep.subr.bf16.mxu0 %v3948
    %5823 = vmatpush2.bf16.msra.mxu0 %v3947
    %5824 = vmatprep.subr.bf16.mxu0 %v3944
    %5825 = vmatpush2.bf16.msra.mxu0 %v3943
    %5826 = vmatprep.subr.bf16.mxu0 %v3940
    %5827 = vmatpush2.bf16.msra.mxu0 %v3939
    %5828 = vmatprep.subr.bf16.mxu0 %v3936
    %5829 = vmatpush2.bf16.msra.mxu0 %v3935
    %5830 = vmatprep.subr.bf16.mxu0 %v3932
    %5831 = vmatpush2.bf16.msra.mxu0 %v3931
    %5832 = vmatprep.subr.bf16.mxu0 %v3928
    %5833 = vmatpush2.bf16.msra.mxu0 %v3927
    %5834 = vmatprep.subr.bf16.mxu0 %v3924
    %5835 = vmatpush2.bf16.msra.mxu0 %v3923
    %5836 = vmatprep.subr.bf16.mxu0 %v3920
    %5837 = vmatpush2.bf16.msra.mxu0 %v3919
    %5838 = vmatprep.mubr.bf16.mxu0 %v971
    %5839 = vmatmul.mubr.bf16.gmra.mxu0 %v957
    %v5840 = vpop.f32.mrf.mxu0
    %v5841 = vadd.f32 %v5800, %v5840
    %v5842 = vpop.f32.mrf.mxu0
    %v5843 = vadd.f32 %v5802, %v5842
    %v5844 = vpop.f32.mrf.mxu0
    %v5845 = vpop.f32.mrf.mxu0
    %5846 = vdwg.mxu0
    %5847 = vmatprep.subr.bf16.mxu0 %v3980
    %5848 = vmatpush1.bf16.msra.mxu0 %v3979
    %5849 = vmatprep.subr.bf16.mxu0 %v3976
    %5850 = vmatpush1.bf16.msra.mxu0 %v3975
    %5851 = vmatprep.subr.bf16.mxu0 %v3972
    %5852 = vmatpush1.bf16.msra.mxu0 %v3971
    %5853 = vmatprep.subr.bf16.mxu0 %v3968
    %5854 = vmatpush1.bf16.msra.mxu0 %v3967
    %5855 = vmatprep.subr.bf16.mxu0 %v3964
    %5856 = vmatpush1.bf16.msra.mxu0 %v3963
    %5857 = vmatprep.subr.bf16.mxu0 %v3960
    %5858 = vmatpush1.bf16.msra.mxu0 %v3959
    %5859 = vmatprep.subr.bf16.mxu0 %v3956
    %5860 = vmatpush1.bf16.msra.mxu0 %v3955
    %5861 = vmatprep.subr.bf16.mxu0 %v3952
    %5862 = vmatpush1.bf16.msra.mxu0 %v3951
    %5863 = vmatprep.subr.bf16.mxu0 %v4012
    %5864 = vmatpush2.bf16.msra.mxu0 %v4011
    %5865 = vmatprep.subr.bf16.mxu0 %v4008
    %5866 = vmatpush2.bf16.msra.mxu0 %v4007
    %5867 = vmatprep.subr.bf16.mxu0 %v4004
    %5868 = vmatpush2.bf16.msra.mxu0 %v4003
    %5869 = vmatprep.subr.bf16.mxu0 %v4000
    %5870 = vmatpush2.bf16.msra.mxu0 %v3999
    %5871 = vmatprep.subr.bf16.mxu0 %v3996
    %5872 = vmatpush2.bf16.msra.mxu0 %v3995
    %5873 = vmatprep.subr.bf16.mxu0 %v3992
    %5874 = vmatpush2.bf16.msra.mxu0 %v3991
    %5875 = vmatprep.subr.bf16.mxu0 %v3988
    %5876 = vmatpush2.bf16.msra.mxu0 %v3987
    %5877 = vmatprep.subr.bf16.mxu0 %v3984
    %5878 = vmatpush2.bf16.msra.mxu0 %v3983
    %5879 = vmatprep.mubr.bf16.mxu0 %v981
    %5880 = vmatmul.mubr.bf16.gmra.mxu0 %v979
    %v5881 = vpop.f32.mrf.mxu0
    %v5882 = vadd.f32 %v5841, %v5881
    %v5883 = vpop.f32.mrf.mxu0
    %v5884 = vadd.f32 %v5843, %v5883
    %v5885 = vpop.f32.mrf.mxu0
    %v5886 = vpop.f32.mrf.mxu0
    %5887 = vdwg.mxu0
    %5888 = vmatprep.subr.bf16.mxu0 %v4044
    %5889 = vmatpush1.bf16.msra.mxu0 %v4043
    %5890 = vmatprep.subr.bf16.mxu0 %v4040
    %5891 = vmatpush1.bf16.msra.mxu0 %v4039
    %5892 = vmatprep.subr.bf16.mxu0 %v4036
    %5893 = vmatpush1.bf16.msra.mxu0 %v4035
    %5894 = vmatprep.subr.bf16.mxu0 %v4032
    %5895 = vmatpush1.bf16.msra.mxu0 %v4031
    %5896 = vmatprep.subr.bf16.mxu0 %v4028
    %5897 = vmatpush1.bf16.msra.mxu0 %v4027
    %5898 = vmatprep.subr.bf16.mxu0 %v4024
    %5899 = vmatpush1.bf16.msra.mxu0 %v4023
    %5900 = vmatprep.subr.bf16.mxu0 %v4020
    %5901 = vmatpush1.bf16.msra.mxu0 %v4019
    %5902 = vmatprep.subr.bf16.mxu0 %v4016
    %5903 = vmatpush1.bf16.msra.mxu0 %v4015
    %5904 = vmatprep.subr.bf16.mxu0 %v4076
    %5905 = vmatpush2.bf16.msra.mxu0 %v4075
    %5906 = vmatprep.subr.bf16.mxu0 %v4072
    %5907 = vmatpush2.bf16.msra.mxu0 %v4071
    %5908 = vmatprep.subr.bf16.mxu0 %v4068
    %5909 = vmatpush2.bf16.msra.mxu0 %v4067
    %5910 = vmatprep.subr.bf16.mxu0 %v4064
    %5911 = vmatpush2.bf16.msra.mxu0 %v4063
    %5912 = vmatprep.subr.bf16.mxu0 %v4060
    %5913 = vmatpush2.bf16.msra.mxu0 %v4059
    %5914 = vmatprep.subr.bf16.mxu0 %v4056
    %5915 = vmatpush2.bf16.msra.mxu0 %v4055
    %5916 = vmatprep.subr.bf16.mxu0 %v4052
    %5917 = vmatpush2.bf16.msra.mxu0 %v4051
    %5918 = vmatprep.subr.bf16.mxu0 %v4048
    %5919 = vmatpush2.bf16.msra.mxu0 %v4047
    %5920 = vmatprep.mubr.bf16.mxu0 %v978
    %5921 = vmatmul.mubr.bf16.gmra.mxu0 %v964
    %v5922 = vpop.f32.mrf.mxu0
    %v5923 = vadd.f32 %v5882, %v5922
    %v5924 = vpop.f32.mrf.mxu0
    %v5925 = vadd.f32 %v5884, %v5924
    %v5926 = vpop.f32.mrf.mxu0
    %v5927 = vpop.f32.mrf.mxu0
    %5928 = vdwg.mxu0
    %5929 = vmatprep.subr.bf16.mxu0 %v4108
    %5930 = vmatpush1.bf16.msra.mxu0 %v4107
    %5931 = vmatprep.subr.bf16.mxu0 %v4104
    %5932 = vmatpush1.bf16.msra.mxu0 %v4103
    %5933 = vmatprep.subr.bf16.mxu0 %v4100
    %5934 = vmatpush1.bf16.msra.mxu0 %v4099
    %5935 = vmatprep.subr.bf16.mxu0 %v4096
    %5936 = vmatpush1.bf16.msra.mxu0 %v4095
    %5937 = vmatprep.subr.bf16.mxu0 %v4092
    %5938 = vmatpush1.bf16.msra.mxu0 %v4091
    %5939 = vmatprep.subr.bf16.mxu0 %v4088
    %5940 = vmatpush1.bf16.msra.mxu0 %v4087
    %5941 = vmatprep.subr.bf16.mxu0 %v4084
    %5942 = vmatpush1.bf16.msra.mxu0 %v4083
    %5943 = vmatprep.subr.bf16.mxu0 %v4080
    %5944 = vmatpush1.bf16.msra.mxu0 %v4079
    %5945 = vmatprep.subr.bf16.mxu0 %v4140
    %5946 = vmatpush2.bf16.msra.mxu0 %v4139
    %5947 = vmatprep.subr.bf16.mxu0 %v4136
    %5948 = vmatpush2.bf16.msra.mxu0 %v4135
    %5949 = vmatprep.subr.bf16.mxu0 %v4132
    %5950 = vmatpush2.bf16.msra.mxu0 %v4131
    %5951 = vmatprep.subr.bf16.mxu0 %v4128
    %5952 = vmatpush2.bf16.msra.mxu0 %v4127
    %5953 = vmatprep.subr.bf16.mxu0 %v4124
    %5954 = vmatpush2.bf16.msra.mxu0 %v4123
    %5955 = vmatprep.subr.bf16.mxu0 %v4120
    %5956 = vmatpush2.bf16.msra.mxu0 %v4119
    %5957 = vmatprep.subr.bf16.mxu0 %v4116
    %5958 = vmatpush2.bf16.msra.mxu0 %v4115
    %5959 = vmatprep.subr.bf16.mxu0 %v4112
    %5960 = vmatpush2.bf16.msra.mxu0 %v4111
    %5961 = vmatprep.mubr.bf16.mxu0 %v982
    %5962 = vmatmul.mubr.bf16.gmra.mxu0 %v980
    %v5963 = vpop.f32.mrf.mxu0
    %v5964 = vadd.f32 %v5923, %v5963
    %v5965 = vpop.f32.mrf.mxu0
    %v5966 = vadd.f32 %v5925, %v5965
    %v5967 = vpop.f32.mrf.mxu0
    %v5968 = vpop.f32.mrf.mxu0
    %5969 = vdwg.mxu0
    %5970 = vmatprep.subr.bf16.mxu0 0
    %5971 = vmatpush1.bf16.msra.mxu0 0
    %5972 = vmatprep.subr.bf16.mxu0 0
    %5973 = vmatpush1.bf16.msra.mxu0 0
    %5974 = vmatprep.subr.bf16.mxu0 0
    %5975 = vmatpush1.bf16.msra.mxu0 0
    %5976 = vmatprep.subr.bf16.mxu0 0
    %5977 = vmatpush1.bf16.msra.mxu0 0
    %5978 = vmatprep.subr.bf16.mxu0 %v4156
    %5979 = vmatpush1.bf16.msra.mxu0 %v4155
    %5980 = vmatprep.subr.bf16.mxu0 %v4152
    %5981 = vmatpush1.bf16.msra.mxu0 %v4151
    %5982 = vmatprep.subr.bf16.mxu0 %v4148
    %5983 = vmatpush1.bf16.msra.mxu0 %v4147
    %5984 = vmatprep.subr.bf16.mxu0 %v4144
    %5985 = vmatpush1.bf16.msra.mxu0 %v4143
    %5986 = vmatprep.subr.bf16.mxu0 0
    %5987 = vmatpush2.bf16.msra.mxu0 0
    %5988 = vmatprep.subr.bf16.mxu0 0
    %5989 = vmatpush2.bf16.msra.mxu0 0
    %5990 = vmatprep.subr.bf16.mxu0 0
    %5991 = vmatpush2.bf16.msra.mxu0 0
    %5992 = vmatprep.subr.bf16.mxu0 0
    %5993 = vmatpush2.bf16.msra.mxu0 0
    %5994 = vmatprep.subr.bf16.mxu0 0
    %5995 = vmatpush2.bf16.msra.mxu0 0
    %5996 = vmatprep.subr.bf16.mxu0 0
    %5997 = vmatpush2.bf16.msra.mxu0 0
    %5998 = vmatprep.subr.bf16.mxu0 0
    %5999 = vmatpush2.bf16.msra.mxu0 0
    %6000 = vmatprep.subr.bf16.mxu0 0
    %6001 = vmatpush2.bf16.msra.mxu0 0
    %6002 = vmatprep.mubr.bf16.mxu0 0
    %6003 = vmatmul.mubr.bf16.gmra.mxu0 %v4943
    %v6004 = vpop.f32.mrf.mxu0
    %v6005 = vadd.f32 %v5964, %v6004
    %v6006 = vpop.f32.mrf.mxu0
    %v6007 = vadd.f32 %v5966, %v6006
    %v6008 = vpop.f32.mrf.mxu0
    %v6009 = vpop.f32.mrf.mxu0
    %6010 = vdwg.mxu0
    %v6011 = vmax.f32 %v5472, 0.0
    %v6012 = vmax.f32 %v5474, 0.0
    %v6013 = vmax.f32 %v6005, 0.0
    %v6014 = vmax.f32 %v6007, 0.0
    %v6015 = vpack.c.bf16 %v6011, %v6011
    %v6016 = vpack.c.bf16 %v6012, %v6012
    %v6017 = vpack.c.bf16 %v6013, %v6013
    %v6018 = vpack.c.bf16 %v6014, %v6014
    %v6019 = vld [vmem:[%s3] sm:$0xf]
    %v6020 = vld [vmem:[%s3 + $0x4] sm:$0xf]
    %v6021 = vld [vmem:[%s3 + $0x8] sm:$0xf]
    %v6022 = vld [vmem:[%s3 + $0xc] sm:$0xf]
    %v6023 = vld [vmem:[%s3 + $0x10] sm:$0xf]
    %v6024 = vld [vmem:[%s3 + $0x14] sm:$0xf]
    %v6025 = vld [vmem:[%s3 + $0x18] sm:$0xf]
    %v6026 = vld [vmem:[%s3 + $0x1c] sm:$0xf]
    %v6027 = vld [vmem:[%s3 + $0x20] sm:$0xf]
    %v6028 = vld [vmem:[%s3 + $0x24] sm:$0xf]
    %v6029 = vld [vmem:[%s3 + $0x28] sm:$0xf]
    %v6030 = vld [vmem:[%s3 + $0x2c] sm:$0xf]
    %v6031 = vld [vmem:[%s3 + $0x30] sm:$0xf]
    %v6032 = vld [vmem:[%s3 + $0x34] sm:$0xf]
    %v6033 = vld [vmem:[%s3 + $0x38] sm:$0xf]
    %v6034 = vld [vmem:[%s3 + $0x3c] sm:$0xf]
    %v6035 = vld [vmem:[%s3 + $0x40] sm:$0xf]
    %v6036 = vld [vmem:[%s3 + $0x44] sm:$0xf]
    %v6037 = vld [vmem:[%s3 + $0x48] sm:$0xf]
    %v6038 = vld [vmem:[%s3 + $0x4c] sm:$0xf]
    %v6039 = vld [vmem:[%s3 + $0x50] sm:$0xf]
    %v6040 = vld [vmem:[%s3 + $0x54] sm:$0xf]
    %v6041 = vld [vmem:[%s3 + $0x58] sm:$0xf]
    %v6042 = vld [vmem:[%s3 + $0x5c] sm:$0xf]
    %v6043 = vld [vmem:[%s3 + $0x60] sm:$0xf]
    %v6044 = vld [vmem:[%s3 + $0x64] sm:$0xf]
    %v6045 = vld [vmem:[%s3 + $0x68] sm:$0xf]
    %v6046 = vld [vmem:[%s3 + $0x6c] sm:$0xf]
    %v6047 = vld [vmem:[%s3 + $0x70] sm:$0xf]
    %v6048 = vld [vmem:[%s3 + $0x74] sm:$0xf]
    %v6049 = vld [vmem:[%s3 + $0x78] sm:$0xf]
    %v6050 = vld [vmem:[%s3 + $0x7c] sm:$0xf]
    %v6051 = vld [vmem:[%s3 + $0x80] sm:$0xf]
    %v6052 = vld [vmem:[%s3 + $0x84] sm:$0xf]
    %v6053 = vld [vmem:[%s3 + $0x88] sm:$0xf]
    %v6054 = vld [vmem:[%s3 + $0x8c] sm:$0xf]
    %v6055 = vld [vmem:[%s3 + $0x90] sm:$0xf]
    %v6056 = vld [vmem:[%s3 + $0x94] sm:$0xf]
    %v6057 = vld [vmem:[%s3 + $0x98] sm:$0xf]
    %v6058 = vld [vmem:[%s3 + $0x9c] sm:$0xf]
    %v6059 = vld [vmem:[%s3 + $0xa0] sm:$0xf]
    %v6060 = vld [vmem:[%s3 + $0xa4] sm:$0xf]
    %v6061 = vld [vmem:[%s3 + $0xa8] sm:$0xf]
    %v6062 = vld [vmem:[%s3 + $0xac] sm:$0xf]
    %v6063 = vld [vmem:[%s3 + $0xb0] sm:$0xf]
    %v6064 = vld [vmem:[%s3 + $0xb4] sm:$0xf]
    %v6065 = vld [vmem:[%s3 + $0xb8] sm:$0xf]
    %v6066 = vld [vmem:[%s3 + $0xbc] sm:$0xf]
    %v6067 = vld [vmem:[%s3 + $0xc0] sm:$0xf]
    %v6068 = vld [vmem:[%s3 + $0xc4] sm:$0xf]
    %v6069 = vld [vmem:[%s3 + $0xc8] sm:$0xf]
    %v6070 = vld [vmem:[%s3 + $0xcc] sm:$0xf]
    %v6071 = vld [vmem:[%s3 + $0xd0] sm:$0xf]
    %v6072 = vld [vmem:[%s3 + $0xd4] sm:$0xf]
    %v6073 = vld [vmem:[%s3 + $0xd8] sm:$0xf]
    %v6074 = vld [vmem:[%s3 + $0xdc] sm:$0xf]
    %v6075 = vld [vmem:[%s3 + $0xe0] sm:$0xf]
    %v6076 = vld [vmem:[%s3 + $0xe4] sm:$0xf]
    %v6077 = vld [vmem:[%s3 + $0xe8] sm:$0xf]
    %v6078 = vld [vmem:[%s3 + $0xec] sm:$0xf]
    %v6079 = vld [vmem:[%s3 + $0xf0] sm:$0xf]
    %v6080 = vld [vmem:[%s3 + $0xf4] sm:$0xf]
    %v6081 = vld [vmem:[%s3 + $0xf8] sm:$0xf]
    %v6082 = vld [vmem:[%s3 + $0xfc] sm:$0xf]
    %v6083 = vld [vmem:[%s4] sm:$0x1]
    %v6085 = vlaneseq
    %v6086 = vshrl.u32 %v6085, 7
    %v6087 = vsub.s32 0, %v6086
    %v6088 = vrot.slane %v6083, %v6087
    %v6154 = vunpack.c.l.b16 %v6019
    %v6155 = vunpack.c.l.b16 %v6020
    %v6156 = vunpack.c.l.b16 %v6021
    %v6157 = vunpack.c.l.b16 %v6022
    %v6158 = vunpack.c.l.b16 %v6023
    %v6159 = vunpack.c.l.b16 %v6024
    %v6160 = vunpack.c.l.b16 %v6025
    %v6161 = vunpack.c.l.b16 %v6026
    %v6162 = vunpack.c.l.b16 %v6027
    %v6163 = vunpack.c.l.b16 %v6028
    %v6164 = vunpack.c.l.b16 %v6029
    %v6165 = vunpack.c.l.b16 %v6030
    %v6166 = vunpack.c.l.b16 %v6031
    %v6167 = vunpack.c.l.b16 %v6032
    %v6168 = vunpack.c.l.b16 %v6033
    %v6169 = vunpack.c.l.b16 %v6034
    %v6170 = vunpack.c.l.b16 %v6035
    %v6171 = vunpack.c.l.b16 %v6036
    %v6172 = vunpack.c.l.b16 %v6037
    %v6173 = vunpack.c.l.b16 %v6038
    %v6174 = vunpack.c.l.b16 %v6039
    %v6175 = vunpack.c.l.b16 %v6040
    %v6176 = vunpack.c.l.b16 %v6041
    %v6177 = vunpack.c.l.b16 %v6042
    %v6178 = vunpack.c.l.b16 %v6043
    %v6179 = vunpack.c.l.b16 %v6044
    %v6180 = vunpack.c.l.b16 %v6045
    %v6181 = vunpack.c.l.b16 %v6046
    %v6182 = vunpack.c.l.b16 %v6047
    %v6183 = vunpack.c.l.b16 %v6048
    %v6184 = vunpack.c.l.b16 %v6049
    %v6185 = vunpack.c.l.b16 %v6050
    %v6186 = vunpack.c.l.b16 %v6051
    %v6187 = vunpack.c.l.b16 %v6052
    %v6188 = vunpack.c.l.b16 %v6053
    %v6189 = vunpack.c.l.b16 %v6054
    %v6190 = vunpack.c.l.b16 %v6055
    %v6191 = vunpack.c.l.b16 %v6056
    %v6192 = vunpack.c.l.b16 %v6057
    %v6193 = vunpack.c.l.b16 %v6058
    %v6194 = vunpack.c.l.b16 %v6059
    %v6195 = vunpack.c.l.b16 %v6060
    %v6196 = vunpack.c.l.b16 %v6061
    %v6197 = vunpack.c.l.b16 %v6062
    %v6198 = vunpack.c.l.b16 %v6063
    %v6199 = vunpack.c.l.b16 %v6064
    %v6200 = vunpack.c.l.b16 %v6065
    %v6201 = vunpack.c.l.b16 %v6066
    %v6202 = vunpack.c.l.b16 %v6067
    %v6203 = vunpack.c.l.b16 %v6068
    %v6204 = vunpack.c.l.b16 %v6069
    %v6205 = vunpack.c.l.b16 %v6070
    %v6206 = vunpack.c.l.b16 %v6071
    %v6207 = vunpack.c.l.b16 %v6072
    %v6208 = vunpack.c.l.b16 %v6073
    %v6209 = vunpack.c.l.b16 %v6074
    %v6210 = vunpack.c.l.b16 %v6075
    %v6211 = vunpack.c.l.b16 %v6076
    %v6212 = vunpack.c.l.b16 %v6077
    %v6213 = vunpack.c.l.b16 %v6078
    %v6214 = vunpack.c.l.b16 %v6079
    %v6215 = vunpack.c.l.b16 %v6080
    %v6216 = vunpack.c.l.b16 %v6081
    %v6217 = vunpack.c.l.b16 %v6082
    %v6218 = vpack.c.b16 %v6155, %v6154
    %v6219 = vpack.c.b16 %v6157, %v6156
    %v6220 = vpack.c.b16 %v6159, %v6158
    %v6221 = vpack.c.b16 %v6161, %v6160
    %v6222 = vpack.c.b16 %v6163, %v6162
    %v6223 = vpack.c.b16 %v6165, %v6164
    %v6224 = vpack.c.b16 %v6167, %v6166
    %v6225 = vpack.c.b16 %v6169, %v6168
    %v6226 = vpack.c.b16 %v6171, %v6170
    %v6227 = vpack.c.b16 %v6173, %v6172
    %v6228 = vpack.c.b16 %v6175, %v6174
    %v6229 = vpack.c.b16 %v6177, %v6176
    %v6230 = vpack.c.b16 %v6179, %v6178
    %v6231 = vpack.c.b16 %v6181, %v6180
    %v6232 = vpack.c.b16 %v6183, %v6182
    %v6233 = vpack.c.b16 %v6185, %v6184
    %v6234 = vpack.c.b16 %v6187, %v6186
    %v6235 = vpack.c.b16 %v6189, %v6188
    %v6236 = vpack.c.b16 %v6191, %v6190
    %v6237 = vpack.c.b16 %v6193, %v6192
    %v6238 = vpack.c.b16 %v6195, %v6194
    %v6239 = vpack.c.b16 %v6197, %v6196
    %v6240 = vpack.c.b16 %v6199, %v6198
    %v6241 = vpack.c.b16 %v6201, %v6200
    %v6242 = vpack.c.b16 %v6203, %v6202
    %v6243 = vpack.c.b16 %v6205, %v6204
    %v6244 = vpack.c.b16 %v6207, %v6206
    %v6245 = vpack.c.b16 %v6209, %v6208
    %v6246 = vpack.c.b16 %v6211, %v6210
    %v6247 = vpack.c.b16 %v6213, %v6212
    %v6248 = vpack.c.b16 %v6215, %v6214
    %v6249 = vpack.c.b16 %v6217, %v6216
    %6282 = vmatprep.subr.bf16.mxu0 0
    %6283 = vmatpush1.bf16.msra.mxu0 %v6225
    %6284 = vmatprep.subr.bf16.mxu0 0
    %6285 = vmatpush1.bf16.msra.mxu0 %v6224
    %6286 = vmatprep.subr.bf16.mxu0 0
    %6287 = vmatpush1.bf16.msra.mxu0 %v6223
    %6288 = vmatprep.subr.bf16.mxu0 0
    %6289 = vmatpush1.bf16.msra.mxu0 %v6222
    %6290 = vmatprep.subr.bf16.mxu0 0
    %6291 = vmatpush1.bf16.msra.mxu0 %v6221
    %6292 = vmatprep.subr.bf16.mxu0 0
    %6293 = vmatpush1.bf16.msra.mxu0 %v6220
    %6294 = vmatprep.subr.bf16.mxu0 0
    %6295 = vmatpush1.bf16.msra.mxu0 %v6219
    %6296 = vmatprep.subr.bf16.mxu0 0
    %6297 = vmatpush1.bf16.msra.mxu0 %v6218
    %6298 = vmatprep.subr.bf16.mxu0 0
    %6299 = vmatpush2.bf16.msra.mxu0 %v6233
    %6300 = vmatprep.subr.bf16.mxu0 0
    %6301 = vmatpush2.bf16.msra.mxu0 %v6232
    %6302 = vmatprep.subr.bf16.mxu0 0
    %6303 = vmatpush2.bf16.msra.mxu0 %v6231
    %6304 = vmatprep.subr.bf16.mxu0 0
    %6305 = vmatpush2.bf16.msra.mxu0 %v6230
    %6306 = vmatprep.subr.bf16.mxu0 0
    %6307 = vmatpush2.bf16.msra.mxu0 %v6229
    %6308 = vmatprep.subr.bf16.mxu0 0
    %6309 = vmatpush2.bf16.msra.mxu0 %v6228
    %6310 = vmatprep.subr.bf16.mxu0 0
    %6311 = vmatpush2.bf16.msra.mxu0 %v6227
    %6312 = vmatprep.subr.bf16.mxu0 0
    %6313 = vmatpush2.bf16.msra.mxu0 %v6226
    %6314 = vmatprep.mubr.bf16.mxu0 %v6016
    %6315 = vmatmul.mubr.bf16.gmra.mxu0 %v6015
    %v6316 = vpop.f32.mrf.mxu0
    %v6317 = vadd.f32 %v6088, %v6316
    %v6318 = vpop.f32.mrf.mxu0
    %v6319 = vpop.f32.mrf.mxu0
    %v6320 = vpop.f32.mrf.mxu0
    %6321 = vdwg.mxu0
    %6322 = vmatprep.subr.bf16.mxu0 0
    %6323 = vmatpush1.bf16.msra.mxu0 %v6241
    %6324 = vmatprep.subr.bf16.mxu0 0
    %6325 = vmatpush1.bf16.msra.mxu0 %v6240
    %6326 = vmatprep.subr.bf16.mxu0 0
    %6327 = vmatpush1.bf16.msra.mxu0 %v6239
    %6328 = vmatprep.subr.bf16.mxu0 0
    %6329 = vmatpush1.bf16.msra.mxu0 %v6238
    %6330 = vmatprep.subr.bf16.mxu0 0
    %6331 = vmatpush1.bf16.msra.mxu0 %v6237
    %6332 = vmatprep.subr.bf16.mxu0 0
    %6333 = vmatpush1.bf16.msra.mxu0 %v6236
    %6334 = vmatprep.subr.bf16.mxu0 0
    %6335 = vmatpush1.bf16.msra.mxu0 %v6235
    %6336 = vmatprep.subr.bf16.mxu0 0
    %6337 = vmatpush1.bf16.msra.mxu0 %v6234
    %6338 = vmatprep.subr.bf16.mxu0 0
    %6339 = vmatpush2.bf16.msra.mxu0 %v6249
    %6340 = vmatprep.subr.bf16.mxu0 0
    %6341 = vmatpush2.bf16.msra.mxu0 %v6248
    %6342 = vmatprep.subr.bf16.mxu0 0
    %6343 = vmatpush2.bf16.msra.mxu0 %v6247
    %6344 = vmatprep.subr.bf16.mxu0 0
    %6345 = vmatpush2.bf16.msra.mxu0 %v6246
    %6346 = vmatprep.subr.bf16.mxu0 0
    %6347 = vmatpush2.bf16.msra.mxu0 %v6245
    %6348 = vmatprep.subr.bf16.mxu0 0
    %6349 = vmatpush2.bf16.msra.mxu0 %v6244
    %6350 = vmatprep.subr.bf16.mxu0 0
    %6351 = vmatpush2.bf16.msra.mxu0 %v6243
    %6352 = vmatprep.subr.bf16.mxu0 0
    %6353 = vmatpush2.bf16.msra.mxu0 %v6242
    %6354 = vmatprep.mubr.bf16.mxu0 %v6018
    %6355 = vmatmul.mubr.bf16.gmra.mxu0 %v6017
    %v6356 = vpop.f32.mrf.mxu0
    %v6357 = vadd.f32 %v6317, %v6356
    %v6358 = vpop.f32.mrf.mxu0
    %v6359 = vpop.f32.mrf.mxu0
    %v6360 = vpop.f32.mrf.mxu0
    %6361 = vdwg.mxu0
    %6362 = vst [vmem:[#allocation2] sm:$0x3] %v6357
    // Predicated region
    $region22: #{dqn_forward.3} parent=1 // pred_check
      _
    $region23: #{dqn_forward.3} parent=1 // pred_check_branch
      %6364 = sbr.rel (0) target = $region25
    $region24: #{dqn_forward.3} parent=1 // pred_region
      %s6366 = ssub.s32 32, 32
      %6367 = vsyncadd [#allocation3], %s6366
      %s6369 = sshll.u32 [#allocation2], 4
      %s6370 = int_to_ptr.vmem [resolvable:$true] %s6369
      %6372 = dma.vmem_to_hbm [thread:$0]  %s6370, 32, %s5, [#allocation3]
    $region25: #{dqn_forward.3} parent=1 // pred_fallthru
      _
    // Predicated region
    $region26: #{dqn_forward.3} parent=1 // pred_check
      _
    $region27: #{dqn_forward.3} parent=1 // pred_check_branch
      %6374 = sbr.rel (0) target = $region29
    $region28: #{dqn_forward.3} parent=1 // pred_region
      %6375 = dma.done [#allocation3], 32
    $region29: #{dqn_forward.3} parent=1 // pred_fallthru
      _
    %6376 = vsyncpa [#allocation3], 1

</llo_original>
